<compile_context>
chip_gen: v6e
topology: v6e:2x2x1
jax: 0.10.0
libtpu: 0.0.40
codegen_flags: <defaults>
</compile_context>

<pallas_src>
import functools

import jax
import jax.numpy as jnp
from jax import lax
from jax.experimental import pallas as pl
from jax.experimental.pallas import tpu as pltpu

EPS_LN = 1e-5


# --------------------------------------------------------------------------- in-kernel helpers

def _layernorm(x, g, b):
    """PyTorch-style LayerNorm (biased variance, eps added to var)."""
    mu = jnp.mean(x, axis=-1, keepdims=True)
    xc = x - mu
    var = jnp.mean(xc * xc, axis=-1, keepdims=True)
    return xc * lax.rsqrt(var + EPS_LN) * g + b


def _mha_core(q, k, v, num_heads):
    """Multi-head scaled-dot-product attention for one batch element.
    q: (L, E), k/v: (S, E). The 1/sqrt(d) scale is already folded into Q."""
    L, E = q.shape
    d = E // num_heads
    outs = []
    for hd in range(num_heads):                       # static, unrolled
        sl = slice(hd * d, (hd + 1) * d)
        qh, kh, vh = q[:, sl], k[:, sl], v[:, sl]
        # contract last dims directly — no materialized k.T
        s = lax.dot_general(qh, kh, (((1,), (1,)), ((), ())),
                            preferred_element_type=jnp.float32)       # (L, S)
        s = s - jnp.max(s, axis=-1, keepdims=True)
        p = jnp.exp(s)
        p = p * pl.reciprocal(jnp.sum(p, axis=-1, keepdims=True), approx=True)
        outs.append(jnp.dot(p, vh, preferred_element_type=jnp.float32))
    return jnp.concatenate(outs, axis=-1)             # (L, E)


# --------------------------------------------------------------------------- fused layer kernels

def _encoder_layer_kernel(x_ref, pos_ref,
                          wqkv_ref, bqkv_ref, wo_ref, bo_ref,
                          g1_ref, b1_ref,
                          w1_ref, bf1_ref, w2_ref, bf2_ref,
                          g2_ref, b2_ref,
                          o_ref, *, num_heads, dim):
    E = dim
    xb = x_ref[0]                                     # (S, E)
    sp = xb + pos_ref[0]                              # q/k input (with pos)

    # fused QKV projection: wqkv is (E, 3E) with scale pre-folded into Q slab.
    q = jnp.dot(sp, wqkv_ref[:, 0:E], preferred_element_type=jnp.float32) + bqkv_ref[:, 0:E]
    k = jnp.dot(sp, wqkv_ref[:, E:2 * E], preferred_element_type=jnp.float32) + bqkv_ref[:, E:2 * E]
    v = jnp.dot(xb, wqkv_ref[:, 2 * E:3 * E], preferred_element_type=jnp.float32) + bqkv_ref[:, 2 * E:3 * E]

    a = _mha_core(q, k, v, num_heads)
    a = jnp.dot(a, wo_ref[...], preferred_element_type=jnp.float32) + bo_ref[...]
    x1 = _layernorm(xb + a, g1_ref[...], b1_ref[...])          # fused residual + LN

    f = jnp.dot(x1, w1_ref[...], preferred_element_type=jnp.float32) + bf1_ref[...]
    f = jnp.maximum(f, 0.0)
    f = jnp.dot(f, w2_ref[...], preferred_element_type=jnp.float32) + bf2_ref[...]
    o_ref[0] = _layernorm(x1 + f, g2_ref[...], b2_ref[...]).astype(o_ref.dtype)


def _decoder_layer_kernel(h_ref, mem_ref, qe_ref, pos_ref,
                          swqkv_ref, sbqkv_ref, swo_ref, sbo_ref,
                          cwqkv_ref, cbqkv_ref, cwo_ref, cbo_ref,
                          g1_ref, b1_ref, g2_ref, b2_ref, g3_ref, b3_ref,
                          w1_ref, bf1_ref, w2_ref, bf2_ref,
                          o_ref, *, num_heads, dim):
    E = dim
    hb = h_ref[0]                                     # (L, E) target
    xb = mem_ref[0]                                   # (S, E) memory
    qe = qe_ref[0]                                    # (L, E)
    pb = pos_ref[0]                                   # (S, E)

    # ---- self attention (q = k = h + query_embed, v = h) ----
    tp = hb + qe
    q = jnp.dot(tp, swqkv_ref[:, 0:E], preferred_element_type=jnp.float32) + sbqkv_ref[:, 0:E]
    k = jnp.dot(tp, swqkv_ref[:, E:2 * E], preferred_element_type=jnp.float32) + sbqkv_ref[:, E:2 * E]
    v = jnp.dot(hb, swqkv_ref[:, 2 * E:3 * E], preferred_element_type=jnp.float32) + sbqkv_ref[:, 2 * E:3 * E]
    sa = _mha_core(q, k, v, num_heads)
    sa = jnp.dot(sa, swo_ref[...], preferred_element_type=jnp.float32) + sbo_ref[...]
    h1 = _layernorm(hb + sa, g1_ref[...], b1_ref[...])

    # ---- cross attention (q = h + query_embed, k = mem + pos, v = mem) ----
    mp = xb + pb
    q = jnp.dot(h1 + qe, cwqkv_ref[:, 0:E], preferred_element_type=jnp.float32) + cbqkv_ref[:, 0:E]
    k = jnp.dot(mp, cwqkv_ref[:, E:2 * E], preferred_element_type=jnp.float32) + cbqkv_ref[:, E:2 * E]
    v = jnp.dot(xb, cwqkv_ref[:, 2 * E:3 * E], preferred_element_type=jnp.float32) + cbqkv_ref[:, 2 * E:3 * E]
    ca = _mha_core(q, k, v, num_heads)
    ca = jnp.dot(ca, cwo_ref[...], preferred_element_type=jnp.float32) + cbo_ref[...]
    h2 = _layernorm(h1 + ca, g2_ref[...], b2_ref[...])

    # ---- feed forward (relu) ----
    f = jnp.dot(h2, w1_ref[...], preferred_element_type=jnp.float32) + bf1_ref[...]
    f = jnp.maximum(f, 0.0)
    f = jnp.dot(f, w2_ref[...], preferred_element_type=jnp.float32) + bf2_ref[...]
    o_ref[0] = _layernorm(h2 + f, g3_ref[...], b3_ref[...]).astype(o_ref.dtype)


# --------------------------------------------------------------------------- layer wrappers

def _seq_spec(T, E):
    return pl.BlockSpec((1, T, E), lambda n: (n, 0, 0))


def encoder_layer_forward(x, pos, lp, num_heads):
    """x, pos: (N, S, E) -> (N, S, E).  One fused pallas_call, grid over batch."""
    N, S, E = x.shape
    args = [x, pos,
            lp["attn_wqkv"], lp["attn_bqkv"], lp["attn_wo"], lp["attn_bo"],
            lp["g1"], lp["b1"],
            lp["w1"], lp["bf1"], lp["w2"], lp["bf2"],
            lp["g2"], lp["b2"]]
    in_specs = ([_seq_spec(S, E), _seq_spec(S, E)] +
                [pl.BlockSpec(a.shape, lambda n: (0, 0)) for a in args[2:]])
    return pl.pallas_call(
        functools.partial(_encoder_layer_kernel, num_heads=num_heads, dim=E),
        out_shape=jax.ShapeDtypeStruct((N, S, E), jnp.float32),
        grid=(N,),
        in_specs=in_specs,
        out_specs=_seq_spec(S, E),
        compiler_params=pltpu.CompilerParams(dimension_semantics=("parallel",)),
    )(*args)


def decoder_layer_forward(h, mem, qe, pos, lp, num_heads):
    """h, qe: (N, L, E); mem, pos: (N, S, E) -> (N, L, E)."""
    N, L, E = h.shape
    S = mem.shape[1]
    args = [h, mem, qe, pos,
            lp["sa_wqkv"], lp["sa_bqkv"], lp["sa_wo"], lp["sa_bo"],
            lp["ca_wqkv"], lp["ca_bqkv"], lp["ca_wo"], lp["ca_bo"],
            lp["g1"], lp["b1"], lp["g2"], lp["b2"], lp["g3"], lp["b3"],
            lp["w1"], lp["bf1"], lp["w2"], lp["bf2"]]
    in_specs = ([_seq_spec(L, E), _seq_spec(S, E), _seq_spec(L, E), _seq_spec(S, E)] +
                [pl.BlockSpec(a.shape, lambda n: (0, 0)) for a in args[4:]])
    return pl.pallas_call(
        functools.partial(_decoder_layer_kernel, num_heads=num_heads, dim=E),
        out_shape=jax.ShapeDtypeStruct((N, L, E), jnp.float32),
        grid=(N,),
        in_specs=in_specs,
        out_specs=_seq_spec(L, E),
        compiler_params=pltpu.CompilerParams(dimension_semantics=("parallel",)),
    )(*args)


# --------------------------------------------------------------------------- full Transformer forward

def transformer_forward(x_img, mask, query_embed, pos_img, params, *, num_heads):
    """DETR Transformer.forward (eval). Returns hs: (num_dec_layers, bs, num_queries, E)."""
    # TODO(synk): key_padding_mask is not implemented (mask arg ignored; test uses all-False mask).
    bs, c, hh, ww = x_img.shape
    S = hh * ww
    x = x_img.reshape(bs, c, S).transpose(0, 2, 1)        # (N, S, E) batch-first
    pos = pos_img.reshape(bs, c, S).transpose(0, 2, 1)    # (N, S, E)
    L = query_embed.shape[0]
    qe = jnp.broadcast_to(query_embed[None, :, :], (bs, L, c))   # (N, L, E)

    mem = x
    for lp in params["encoder_layers"]:
        mem = encoder_layer_forward(mem, pos, lp, num_heads)

    h = jnp.zeros_like(qe)
    intermediates = []
    for lp in params["decoder_layers"]:
        h = decoder_layer_forward(h, mem, qe, pos, lp, num_heads)
        intermediates.append(h)
    # matches torch: stack + permute(0,2,1,3) == (layers, bs, num_queries, E)
    return jnp.stack(intermediates, axis=0)


# --------------------------------------------------------------------------- params (pre-fused / pre-transposed)

def init_params(key, dim_hidden, num_heads, dim_feedforward,
                num_encoder_layers, num_decoder_layers):
    E, FF = dim_hidden, dim_feedforward
    d = E // num_heads
    scale = 1.0 / (d ** 0.5)

    def mha_params(k):
        k1, k2 = jax.random.split(k)
        w_in = jax.random.normal(k1, (3 * E, E), jnp.float32) * 0.02   # PyTorch in_proj layout
        b_in = jnp.zeros((3 * E,), jnp.float32)
        wqkv = w_in.T                                   # (E, 3E), transposed once at init
        bqkv = b_in.reshape(1, 3 * E)
        wqkv = wqkv.at[:, :E].multiply(scale)           # fold 1/sqrt(head_dim) into Q proj
        bqkv = bqkv.at[:, :E].multiply(scale)
        wo = (jax.random.normal(k2, (E, E), jnp.float32) * 0.02).T
        bo = jnp.zeros((1, E), jnp.float32)
        return wqkv, bqkv, wo, bo

    def ln_params():
        return jnp.ones((1, E), jnp.float32), jnp.zeros((1, E), jnp.float32)

    def ffn_params(k):
        k1, k2 = jax.random.split(k)
        w1 = (jax.random.normal(k1, (FF, E), jnp.float32) * 0.02).T    # (E, FF)
        b1 = jnp.zeros((1, FF), jnp.float32)
        w2 = (jax.random.normal(k2, (E, FF), jnp.float32) * 0.02).T    # (FF, E)
        b2 = jnp.zeros((1, E), jnp.float32)
        return w1, b1, w2, b2

    def enc_layer(k):
        k1, k2 = jax.random.split(k)
        wqkv, bqkv, wo, bo = mha_params(k1)
        w1, bf1, w2, bf2 = ffn_params(k2)
        g1, b1 = ln_params(); g2, b2 = ln_params()
        return dict(attn_wqkv=wqkv, attn_bqkv=bqkv, attn_wo=wo, attn_bo=bo,
                    g1=g1, b1=b1, w1=w1, bf1=bf1, w2=w2, bf2=bf2, g2=g2, b2=b2)

    def dec_layer(k):
        k1, k2, k3 = jax.random.split(k, 3)
        s_wqkv, s_bqkv, s_wo, s_bo = mha_params(k1)
        c_wqkv, c_bqkv, c_wo, c_bo = mha_params(k2)
        w1, bf1, w2, bf2 = ffn_params(k3)
        g1, b1 = ln_params(); g2, b2 = ln_params(); g3, b3 = ln_params()
        return dict(sa_wqkv=s_wqkv, sa_bqkv=s_bqkv, sa_wo=s_wo, sa_bo=s_bo,
                    ca_wqkv=c_wqkv, ca_bqkv=c_bqkv, ca_wo=c_wo, ca_bo=c_bo,
                    g1=g1, b1=b1, g2=g2, b2=b2, g3=g3, b3=b3,
                    w1=w1, bf1=bf1, w2=w2, bf2=bf2)

    keys = jax.random.split(key, num_encoder_layers + num_decoder_layers)
    return {
        "encoder_layers": [enc_layer(keys[i]) for i in range(num_encoder_layers)],
        "decoder_layers": [dec_layer(keys[num_encoder_layers + i]) for i in range(num_decoder_layers)],
    }


# --------------------------------------------------------------------------- pure-JAX reference

def _ref_layernorm(x, g, b):
    mu = jnp.mean(x, axis=-1, keepdims=True)
    var = jnp.mean((x - mu) ** 2, axis=-1, keepdims=True)
    return (x - mu) / jnp.sqrt(var + EPS_LN) * g + b


def _ref_mha(qin, kin, vin, wqkv, bqkv, wo, bo, H):
    E = qin.shape[-1]
    d = E // H
    q = qin @ wqkv[:, :E] + bqkv[:, :E]
    k = kin @ wqkv[:, E:2 * E] + bqkv[:, E:2 * E]
    v = vin @ wqkv[:, 2 * E:] + bqkv[:, 2 * E:]
    N, L, _ = q.shape
    S = k.shape[1]
    qh = q.reshape(N, L, H, d)
    kh = k.reshape(N, S, H, d)
    vh = v.reshape(N, S, H, d)
    s = jnp.einsum("nlhd,nshd->nhls", qh, kh)
    p = jax.nn.softmax(s, axis=-1)
    o = jnp.einsum("nhls,nshd->nlhd", p, vh).reshape(N, L, E)
    return o @ wo + bo


def _ref_encoder_layer(x, pos, lp, H):
    src = x + pos
    a = _ref_mha(src, src, x, lp["attn_wqkv"], lp["attn_bqkv"], lp["attn_wo"], lp["attn_bo"], H)
    x = _ref_layernorm(x + a, lp["g1"], lp["b1"])
    f = jax.nn.relu(x @ lp["w1"] + lp["bf1"]) @ lp["w2"] + lp["bf2"]
    return _ref_layernorm(x + f, lp["g2"], lp["b2"])


def _ref_decoder_layer(h, mem, qe, pos, lp, H):
    tp = h + qe
    sa = _ref_mha(tp, tp, h, lp["sa_wqkv"], lp["sa_bqkv"], lp["sa_wo"], lp["sa_bo"], H)
    h = _ref_layernorm(h + sa, lp["g1"], lp["b1"])
    ca = _ref_mha(h + qe, mem + pos, mem, lp["ca_wqkv"], lp["ca_bqkv"], lp["ca_wo"], lp["ca_bo"], H)
    h = _ref_layernorm(h + ca, lp["g2"], lp["b2"])
    f = jax.nn.relu(h @ lp["w1"] + lp["bf1"]) @ lp["w2"] + lp["bf2"]
    return _ref_layernorm(h + f, lp["g3"], lp["b3"])


def _ref_transformer_forward(x_img, mask, query_embed, pos_img, params, num_heads):
    bs, c, hh, ww = x_img.shape
    S = hh * ww
    x = x_img.reshape(bs, c, S).transpose(0, 2, 1)
    pos = pos_img.reshape(bs, c, S).transpose(0, 2, 1)
    L = query_embed.shape[0]
    qe = jnp.broadcast_to(query_embed[None, :, :], (bs, L, c))
    mem = x
    for lp in params["encoder_layers"]:
        mem = _ref_encoder_layer(mem, pos, lp, num_heads)
    h = jnp.zeros_like(qe)
    outs = []
    for lp in params["decoder_layers"]:
        h = _ref_decoder_layer(h, mem, qe, pos, lp, num_heads)
        outs.append(h)
    return jnp.stack(outs, axis=0)


# --------------------------------------------------------------------------- main

if __name__ == "__main__":
    dim_hidden = 32
    num_heads = 4
    dim_feedforward = 64
    num_encoder_layers = 2
    num_decoder_layers = 2
    bs, hh, ww = 2, 4, 4          # memory seq S = 16
    num_queries = 8               # target seq L = 8

    key = jax.random.PRNGKey(0)
    kp, kx, kq, kpos = jax.random.split(key, 4)

    params = init_params(kp, dim_hidden, num_heads, dim_feedforward,
                         num_encoder_layers, num_decoder_layers)
    x = jax.random.normal(kx, (bs, dim_hidden, hh, ww), jnp.float32)
    pos_encoding = jax.random.normal(kpos, (bs, dim_hidden, hh, ww), jnp.float32)
    query_embed = jax.random.normal(kq, (num_queries, dim_hidden), jnp.float32)
    mask = jnp.zeros((bs, hh, ww), dtype=jnp.bool_)   # no padding

    fwd = jax.jit(functools.partial(transformer_forward, num_heads=num_heads))
    hs = fwd(x, mask, query_embed, pos_encoding, params)
    jax.block_until_ready(hs)
    assert hs.shape == (num_decoder_layers, bs, num_queries, dim_hidden)

    ref = _ref_transformer_forward(x, mask, query_embed, pos_encoding, params, num_heads)
    max_err = float(jnp.max(jnp.abs(hs - ref)))
    assert max_err < 5e-2, f"max abs error vs reference: {max_err}"
    print("KERNEL_OK")
</pallas_src>

<mosaic_0001>
module attributes {stable_mosaic.version = 11 : i64} {
  func.func @_encoder_layer_kernel(%arg0: i32, %arg1: memref<1x16x32xf32, #tpu.memory_space<vmem>>, %arg2: memref<1x16x32xf32, #tpu.memory_space<vmem>>, %arg3: memref<32x96xf32, #tpu.memory_space<vmem>>, %arg4: memref<1x96xf32, #tpu.memory_space<vmem>>, %arg5: memref<32x32xf32, #tpu.memory_space<vmem>>, %arg6: memref<1x32xf32, #tpu.memory_space<vmem>>, %arg7: memref<1x32xf32, #tpu.memory_space<vmem>>, %arg8: memref<1x32xf32, #tpu.memory_space<vmem>>, %arg9: memref<32x64xf32, #tpu.memory_space<vmem>>, %arg10: memref<1x64xf32, #tpu.memory_space<vmem>>, %arg11: memref<64x32xf32, #tpu.memory_space<vmem>>, %arg12: memref<1x32xf32, #tpu.memory_space<vmem>>, %arg13: memref<1x32xf32, #tpu.memory_space<vmem>>, %arg14: memref<1x32xf32, #tpu.memory_space<vmem>>, %arg15: memref<1x16x32xf32, #tpu.memory_space<vmem>>) attributes {dimension_semantics = [#tpu.dimension_semantics<parallel>], iteration_bounds = array<i64: 2>, scalar_prefetch = 0 : i64, scratch_operands = 0 : i64, tpu.core_type = #tpu.core_type<tc>, window_params = [{transform_indices = @transform_0, window_bounds = array<i64: 1, 16, 32>}, {transform_indices = @transform_1, window_bounds = array<i64: 1, 16, 32>}, {pipeline_mode = #tpu.pipeline_mode<synchronous>, transform_indices = @transform_2, window_bounds = array<i64: 32, 96>}, {pipeline_mode = #tpu.pipeline_mode<synchronous>, transform_indices = @transform_3, window_bounds = array<i64: 1, 96>}, {pipeline_mode = #tpu.pipeline_mode<synchronous>, transform_indices = @transform_4, window_bounds = array<i64: 32, 32>}, {pipeline_mode = #tpu.pipeline_mode<synchronous>, transform_indices = @transform_5, window_bounds = array<i64: 1, 32>}, {pipeline_mode = #tpu.pipeline_mode<synchronous>, transform_indices = @transform_6, window_bounds = array<i64: 1, 32>}, {pipeline_mode = #tpu.pipeline_mode<synchronous>, transform_indices = @transform_7, window_bounds = array<i64: 1, 32>}, {pipeline_mode = #tpu.pipeline_mode<synchronous>, transform_indices = @transform_8, window_bounds = array<i64: 32, 64>}, {pipeline_mode = #tpu.pipeline_mode<synchronous>, transform_indices = @transform_9, window_bounds = array<i64: 1, 64>}, {pipeline_mode = #tpu.pipeline_mode<synchronous>, transform_indices = @transform_10, window_bounds = array<i64: 64, 32>}, {pipeline_mode = #tpu.pipeline_mode<synchronous>, transform_indices = @transform_11, window_bounds = array<i64: 1, 32>}, {pipeline_mode = #tpu.pipeline_mode<synchronous>, transform_indices = @transform_12, window_bounds = array<i64: 1, 32>}, {pipeline_mode = #tpu.pipeline_mode<synchronous>, transform_indices = @transform_13, window_bounds = array<i64: 1, 32>}, {transform_indices = @transform_14, window_bounds = array<i64: 1, 16, 32>}]} {
    %c0 = arith.constant 0 : index
    %c0_0 = arith.constant 0 : index
    %c0_1 = arith.constant 0 : index
    %0 = vector.load %arg1[%c0, %c0_0, %c0_1] : memref<1x16x32xf32, #tpu.memory_space<vmem>>, vector<1x16x32xf32>
    %1 = vector.shape_cast %0 : vector<1x16x32xf32> to vector<16x32xf32>
    %c0_2 = arith.constant 0 : index
    %c0_3 = arith.constant 0 : index
    %c0_4 = arith.constant 0 : index
    %2 = vector.load %arg2[%c0_2, %c0_3, %c0_4] : memref<1x16x32xf32, #tpu.memory_space<vmem>>, vector<1x16x32xf32>
    %3 = vector.shape_cast %2 : vector<1x16x32xf32> to vector<16x32xf32>
    %4 = arith.addf %1, %3 : vector<16x32xf32>
    %c0_5 = arith.constant 0 : index
    %c0_6 = arith.constant 0 : index
    %5 = vector.load %arg3[%c0_5, %c0_6] : memref<32x96xf32, #tpu.memory_space<vmem>>, vector<32x32xf32>
    %cst = arith.constant dense<0.000000e+00> : vector<16x32xf32>
    %6 = tpu.matmul %4, %5, %cst {dimension_numbers = #tpu.dot_dimension_numbers<[1], [0], [0], [1], [0, 0, 1, 1], [], []>} : vector<16x32xf32>, vector<32x32xf32>, vector<16x32xf32> -> vector<16x32xf32>
    %c0_7 = arith.constant 0 : index
    %c0_8 = arith.constant 0 : index
    %7 = vector.load %arg4[%c0_7, %c0_8] : memref<1x96xf32, #tpu.memory_space<vmem>>, vector<1x32xf32>
    %8 = vector.broadcast %7 : vector<1x32xf32> to vector<16x32xf32>
    %9 = arith.addf %6, %8 : vector<16x32xf32>
    %c0_9 = arith.constant 0 : index
    %c32 = arith.constant 32 : index
    %10 = vector.load %arg3[%c0_9, %c32] : memref<32x96xf32, #tpu.memory_space<vmem>>, vector<32x32xf32>
    %cst_10 = arith.constant dense<0.000000e+00> : vector<16x32xf32>
    %11 = tpu.matmul %4, %10, %cst_10 {dimension_numbers = #tpu.dot_dimension_numbers<[1], [0], [0], [1], [0, 0, 1, 1], [], []>} : vector<16x32xf32>, vector<32x32xf32>, vector<16x32xf32> -> vector<16x32xf32>
    %c0_11 = arith.constant 0 : index
    %c32_12 = arith.constant 32 : index
    %12 = vector.load %arg4[%c0_11, %c32_12] : memref<1x96xf32, #tpu.memory_space<vmem>>, vector<1x32xf32>
    %13 = vector.broadcast %12 : vector<1x32xf32> to vector<16x32xf32>
    %14 = arith.addf %11, %13 : vector<16x32xf32>
    %c0_13 = arith.constant 0 : index
    %c64 = arith.constant 64 : index
    %15 = vector.load %arg3[%c0_13, %c64] : memref<32x96xf32, #tpu.memory_space<vmem>>, vector<32x32xf32>
    %cst_14 = arith.constant dense<0.000000e+00> : vector<16x32xf32>
    %16 = tpu.matmul %1, %15, %cst_14 {dimension_numbers = #tpu.dot_dimension_numbers<[1], [0], [0], [1], [0, 0, 1, 1], [], []>} : vector<16x32xf32>, vector<32x32xf32>, vector<16x32xf32> -> vector<16x32xf32>
    %c0_15 = arith.constant 0 : index
    %c64_16 = arith.constant 64 : index
    %17 = vector.load %arg4[%c0_15, %c64_16] : memref<1x96xf32, #tpu.memory_space<vmem>>, vector<1x32xf32>
    %18 = vector.broadcast %17 : vector<1x32xf32> to vector<16x32xf32>
    %19 = arith.addf %16, %18 : vector<16x32xf32>
    %20 = vector.extract_strided_slice %9 {offsets = [0, 0], sizes = [16, 8], strides = [1, 1]} : vector<16x32xf32> to vector<16x8xf32>
    %21 = vector.extract_strided_slice %14 {offsets = [0, 0], sizes = [16, 8], strides = [1, 1]} : vector<16x32xf32> to vector<16x8xf32>
    %22 = vector.extract_strided_slice %19 {offsets = [0, 0], sizes = [16, 8], strides = [1, 1]} : vector<16x32xf32> to vector<16x8xf32>
    %cst_17 = arith.constant dense<0.000000e+00> : vector<16x16xf32>
    %23 = tpu.matmul %20, %21, %cst_17 {dimension_numbers = #tpu.dot_dimension_numbers<[1], [1], [0], [0], [0, 0, 1, 0], [], []>} : vector<16x8xf32>, vector<16x8xf32>, vector<16x16xf32> -> vector<16x16xf32>
    %cst_18 = arith.constant dense<0xFF800000> : vector<16xf32>
    %24 = vector.multi_reduction <maximumf>, %23, %cst_18 [1] : vector<16x16xf32> to vector<16xf32>
    %25 = vector.shape_cast %24 : vector<16xf32> to vector<16x1xf32>
    %26 = vector.broadcast %25 : vector<16x1xf32> to vector<16x16xf32>
    %27 = arith.subf %23, %26 : vector<16x16xf32>
    %28 = math.exp %27 : vector<16x16xf32>
    %cst_19 = arith.constant dense<0.000000e+00> : vector<16xf32>
    %29 = vector.multi_reduction <add>, %28, %cst_19 [1] : vector<16x16xf32> to vector<16xf32>
    %30 = vector.shape_cast %29 : vector<16xf32> to vector<16x1xf32>
    %31 = tpu.reciprocal %30 {approx = true} : vector<16x1xf32> -> vector<16x1xf32>
    %32 = vector.broadcast %31 : vector<16x1xf32> to vector<16x16xf32>
    %33 = arith.mulf %28, %32 : vector<16x16xf32>
    %cst_20 = arith.constant dense<0.000000e+00> : vector<16x8xf32>
    %34 = tpu.matmul %33, %22, %cst_20 {dimension_numbers = #tpu.dot_dimension_numbers<[1], [0], [0], [1], [0, 0, 1, 1], [], []>} : vector<16x16xf32>, vector<16x8xf32>, vector<16x8xf32> -> vector<16x8xf32>
    %35 = vector.extract_strided_slice %9 {offsets = [0, 8], sizes = [16, 8], strides = [1, 1]} : vector<16x32xf32> to vector<16x8xf32>
    %36 = vector.extract_strided_slice %14 {offsets = [0, 8], sizes = [16, 8], strides = [1, 1]} : vector<16x32xf32> to vector<16x8xf32>
    %37 = vector.extract_strided_slice %19 {offsets = [0, 8], sizes = [16, 8], strides = [1, 1]} : vector<16x32xf32> to vector<16x8xf32>
    %cst_21 = arith.constant dense<0.000000e+00> : vector<16x16xf32>
    %38 = tpu.matmul %35, %36, %cst_21 {dimension_numbers = #tpu.dot_dimension_numbers<[1], [1], [0], [0], [0, 0, 1, 0], [], []>} : vector<16x8xf32>, vector<16x8xf32>, vector<16x16xf32> -> vector<16x16xf32>
    %cst_22 = arith.constant dense<0xFF800000> : vector<16xf32>
    %39 = vector.multi_reduction <maximumf>, %38, %cst_22 [1] : vector<16x16xf32> to vector<16xf32>
    %40 = vector.shape_cast %39 : vector<16xf32> to vector<16x1xf32>
    %41 = vector.broadcast %40 : vector<16x1xf32> to vector<16x16xf32>
    %42 = arith.subf %38, %41 : vector<16x16xf32>
    %43 = math.exp %42 : vector<16x16xf32>
    %cst_23 = arith.constant dense<0.000000e+00> : vector<16xf32>
    %44 = vector.multi_reduction <add>, %43, %cst_23 [1] : vector<16x16xf32> to vector<16xf32>
    %45 = vector.shape_cast %44 : vector<16xf32> to vector<16x1xf32>
    %46 = tpu.reciprocal %45 {approx = true} : vector<16x1xf32> -> vector<16x1xf32>
    %47 = vector.broadcast %46 : vector<16x1xf32> to vector<16x16xf32>
    %48 = arith.mulf %43, %47 : vector<16x16xf32>
    %cst_24 = arith.constant dense<0.000000e+00> : vector<16x8xf32>
    %49 = tpu.matmul %48, %37, %cst_24 {dimension_numbers = #tpu.dot_dimension_numbers<[1], [0], [0], [1], [0, 0, 1, 1], [], []>} : vector<16x16xf32>, vector<16x8xf32>, vector<16x8xf32> -> vector<16x8xf32>
    %50 = vector.extract_strided_slice %9 {offsets = [0, 16], sizes = [16, 8], strides = [1, 1]} : vector<16x32xf32> to vector<16x8xf32>
    %51 = vector.extract_strided_slice %14 {offsets = [0, 16], sizes = [16, 8], strides = [1, 1]} : vector<16x32xf32> to vector<16x8xf32>
    %52 = vector.extract_strided_slice %19 {offsets = [0, 16], sizes = [16, 8], strides = [1, 1]} : vector<16x32xf32> to vector<16x8xf32>
    %cst_25 = arith.constant dense<0.000000e+00> : vector<16x16xf32>
    %53 = tpu.matmul %50, %51, %cst_25 {dimension_numbers = #tpu.dot_dimension_numbers<[1], [1], [0], [0], [0, 0, 1, 0], [], []>} : vector<16x8xf32>, vector<16x8xf32>, vector<16x16xf32> -> vector<16x16xf32>
    %cst_26 = arith.constant dense<0xFF800000> : vector<16xf32>
    %54 = vector.multi_reduction <maximumf>, %53, %cst_26 [1] : vector<16x16xf32> to vector<16xf32>
    %55 = vector.shape_cast %54 : vector<16xf32> to vector<16x1xf32>
    %56 = vector.broadcast %55 : vector<16x1xf32> to vector<16x16xf32>
    %57 = arith.subf %53, %56 : vector<16x16xf32>
    %58 = math.exp %57 : vector<16x16xf32>
    %cst_27 = arith.constant dense<0.000000e+00> : vector<16xf32>
    %59 = vector.multi_reduction <add>, %58, %cst_27 [1] : vector<16x16xf32> to vector<16xf32>
    %60 = vector.shape_cast %59 : vector<16xf32> to vector<16x1xf32>
    %61 = tpu.reciprocal %60 {approx = true} : vector<16x1xf32> -> vector<16x1xf32>
    %62 = vector.broadcast %61 : vector<16x1xf32> to vector<16x16xf32>
    %63 = arith.mulf %58, %62 : vector<16x16xf32>
    %cst_28 = arith.constant dense<0.000000e+00> : vector<16x8xf32>
    %64 = tpu.matmul %63, %52, %cst_28 {dimension_numbers = #tpu.dot_dimension_numbers<[1], [0], [0], [1], [0, 0, 1, 1], [], []>} : vector<16x16xf32>, vector<16x8xf32>, vector<16x8xf32> -> vector<16x8xf32>
    %65 = vector.extract_strided_slice %9 {offsets = [0, 24], sizes = [16, 8], strides = [1, 1]} : vector<16x32xf32> to vector<16x8xf32>
    %66 = vector.extract_strided_slice %14 {offsets = [0, 24], sizes = [16, 8], strides = [1, 1]} : vector<16x32xf32> to vector<16x8xf32>
    %67 = vector.extract_strided_slice %19 {offsets = [0, 24], sizes = [16, 8], strides = [1, 1]} : vector<16x32xf32> to vector<16x8xf32>
    %cst_29 = arith.constant dense<0.000000e+00> : vector<16x16xf32>
    %68 = tpu.matmul %65, %66, %cst_29 {dimension_numbers = #tpu.dot_dimension_numbers<[1], [1], [0], [0], [0, 0, 1, 0], [], []>} : vector<16x8xf32>, vector<16x8xf32>, vector<16x16xf32> -> vector<16x16xf32>
    %cst_30 = arith.constant dense<0xFF800000> : vector<16xf32>
    %69 = vector.multi_reduction <maximumf>, %68, %cst_30 [1] : vector<16x16xf32> to vector<16xf32>
    %70 = vector.shape_cast %69 : vector<16xf32> to vector<16x1xf32>
    %71 = vector.broadcast %70 : vector<16x1xf32> to vector<16x16xf32>
    %72 = arith.subf %68, %71 : vector<16x16xf32>
    %73 = math.exp %72 : vector<16x16xf32>
    %cst_31 = arith.constant dense<0.000000e+00> : vector<16xf32>
    %74 = vector.multi_reduction <add>, %73, %cst_31 [1] : vector<16x16xf32> to vector<16xf32>
    %75 = vector.shape_cast %74 : vector<16xf32> to vector<16x1xf32>
    %76 = tpu.reciprocal %75 {approx = true} : vector<16x1xf32> -> vector<16x1xf32>
    %77 = vector.broadcast %76 : vector<16x1xf32> to vector<16x16xf32>
    %78 = arith.mulf %73, %77 : vector<16x16xf32>
    %cst_32 = arith.constant dense<0.000000e+00> : vector<16x8xf32>
    %79 = tpu.matmul %78, %67, %cst_32 {dimension_numbers = #tpu.dot_dimension_numbers<[1], [0], [0], [1], [0, 0, 1, 1], [], []>} : vector<16x16xf32>, vector<16x8xf32>, vector<16x8xf32> -> vector<16x8xf32>
    %80 = tpu.concatenate %34, %49, %64, %79 in 1 : vector<16x8xf32>, vector<16x8xf32>, vector<16x8xf32>, vector<16x8xf32> -> vector<16x32xf32>
    %c0_33 = arith.constant 0 : index
    %c0_34 = arith.constant 0 : index
    %81 = vector.load %arg5[%c0_33, %c0_34] : memref<32x32xf32, #tpu.memory_space<vmem>>, vector<32x32xf32>
    %cst_35 = arith.constant dense<0.000000e+00> : vector<16x32xf32>
    %82 = tpu.matmul %80, %81, %cst_35 {dimension_numbers = #tpu.dot_dimension_numbers<[1], [0], [0], [1], [0, 0, 1, 1], [], []>} : vector<16x32xf32>, vector<32x32xf32>, vector<16x32xf32> -> vector<16x32xf32>
    %c0_36 = arith.constant 0 : index
    %c0_37 = arith.constant 0 : index
    %83 = vector.load %arg6[%c0_36, %c0_37] : memref<1x32xf32, #tpu.memory_space<vmem>>, vector<1x32xf32>
    %84 = vector.broadcast %83 : vector<1x32xf32> to vector<16x32xf32>
    %85 = arith.addf %82, %84 : vector<16x32xf32>
    %86 = arith.addf %1, %85 : vector<16x32xf32>
    %c0_38 = arith.constant 0 : index
    %c0_39 = arith.constant 0 : index
    %87 = vector.load %arg7[%c0_38, %c0_39] : memref<1x32xf32, #tpu.memory_space<vmem>>, vector<1x32xf32>
    %c0_40 = arith.constant 0 : index
    %c0_41 = arith.constant 0 : index
    %88 = vector.load %arg8[%c0_40, %c0_41] : memref<1x32xf32, #tpu.memory_space<vmem>>, vector<1x32xf32>
    %cst_42 = arith.constant dense<0.000000e+00> : vector<16xf32>
    %89 = vector.multi_reduction <add>, %86, %cst_42 [1] : vector<16x32xf32> to vector<16xf32>
    %90 = vector.shape_cast %89 : vector<16xf32> to vector<16x1xf32>
    %cst_43 = arith.constant 3.200000e+01 : f32
    %91 = vector.broadcast %cst_43 : f32 to vector<16x1xf32>
    %92 = arith.divf %90, %91 : vector<16x1xf32>
    %93 = vector.broadcast %92 : vector<16x1xf32> to vector<16x32xf32>
    %94 = arith.subf %86, %93 : vector<16x32xf32>
    %95 = arith.mulf %94, %94 : vector<16x32xf32>
    %cst_44 = arith.constant dense<0.000000e+00> : vector<16xf32>
    %96 = vector.multi_reduction <add>, %95, %cst_44 [1] : vector<16x32xf32> to vector<16xf32>
    %97 = vector.shape_cast %96 : vector<16xf32> to vector<16x1xf32>
    %cst_45 = arith.constant 3.200000e+01 : f32
    %98 = vector.broadcast %cst_45 : f32 to vector<16x1xf32>
    %99 = arith.divf %97, %98 : vector<16x1xf32>
    %cst_46 = arith.constant 9.99999974E-6 : f32
    %100 = vector.broadcast %cst_46 : f32 to vector<16x1xf32>
    %101 = arith.addf %99, %100 : vector<16x1xf32>
    %102 = math.rsqrt %101 : vector<16x1xf32>
    %103 = vector.broadcast %102 : vector<16x1xf32> to vector<16x32xf32>
    %104 = arith.mulf %94, %103 : vector<16x32xf32>
    %105 = vector.broadcast %87 : vector<1x32xf32> to vector<16x32xf32>
    %106 = arith.mulf %104, %105 : vector<16x32xf32>
    %107 = vector.broadcast %88 : vector<1x32xf32> to vector<16x32xf32>
    %108 = arith.addf %106, %107 : vector<16x32xf32>
    %c0_47 = arith.constant 0 : index
    %c0_48 = arith.constant 0 : index
    %109 = vector.load %arg9[%c0_47, %c0_48] : memref<32x64xf32, #tpu.memory_space<vmem>>, vector<32x64xf32>
    %cst_49 = arith.constant dense<0.000000e+00> : vector<16x64xf32>
    %110 = tpu.matmul %108, %109, %cst_49 {dimension_numbers = #tpu.dot_dimension_numbers<[1], [0], [0], [1], [0, 0, 1, 1], [], []>} : vector<16x32xf32>, vector<32x64xf32>, vector<16x64xf32> -> vector<16x64xf32>
    %c0_50 = arith.constant 0 : index
    %c0_51 = arith.constant 0 : index
    %111 = vector.load %arg10[%c0_50, %c0_51] : memref<1x64xf32, #tpu.memory_space<vmem>>, vector<1x64xf32>
    %112 = vector.broadcast %111 : vector<1x64xf32> to vector<16x64xf32>
    %113 = arith.addf %110, %112 : vector<16x64xf32>
    %cst_52 = arith.constant 0.000000e+00 : f32
    %114 = vector.broadcast %cst_52 : f32 to vector<16x64xf32>
    %115 = arith.maximumf %113, %114 : vector<16x64xf32>
    %c0_53 = arith.constant 0 : index
    %c0_54 = arith.constant 0 : index
    %116 = vector.load %arg11[%c0_53, %c0_54] : memref<64x32xf32, #tpu.memory_space<vmem>>, vector<64x32xf32>
    %cst_55 = arith.constant dense<0.000000e+00> : vector<16x32xf32>
    %117 = tpu.matmul %115, %116, %cst_55 {dimension_numbers = #tpu.dot_dimension_numbers<[1], [0], [0], [1], [0, 0, 1, 1], [], []>} : vector<16x64xf32>, vector<64x32xf32>, vector<16x32xf32> -> vector<16x32xf32>
    %c0_56 = arith.constant 0 : index
    %c0_57 = arith.constant 0 : index
    %118 = vector.load %arg12[%c0_56, %c0_57] : memref<1x32xf32, #tpu.memory_space<vmem>>, vector<1x32xf32>
    %119 = vector.broadcast %118 : vector<1x32xf32> to vector<16x32xf32>
    %120 = arith.addf %117, %119 : vector<16x32xf32>
    %121 = arith.addf %108, %120 : vector<16x32xf32>
    %c0_58 = arith.constant 0 : index
    %c0_59 = arith.constant 0 : index
    %122 = vector.load %arg13[%c0_58, %c0_59] : memref<1x32xf32, #tpu.memory_space<vmem>>, vector<1x32xf32>
    %c0_60 = arith.constant 0 : index
    %c0_61 = arith.constant 0 : index
    %123 = vector.load %arg14[%c0_60, %c0_61] : memref<1x32xf32, #tpu.memory_space<vmem>>, vector<1x32xf32>
    %cst_62 = arith.constant dense<0.000000e+00> : vector<16xf32>
    %124 = vector.multi_reduction <add>, %121, %cst_62 [1] : vector<16x32xf32> to vector<16xf32>
    %125 = vector.shape_cast %124 : vector<16xf32> to vector<16x1xf32>
    %cst_63 = arith.constant 3.200000e+01 : f32
    %126 = vector.broadcast %cst_63 : f32 to vector<16x1xf32>
    %127 = arith.divf %125, %126 : vector<16x1xf32>
    %128 = vector.broadcast %127 : vector<16x1xf32> to vector<16x32xf32>
    %129 = arith.subf %121, %128 : vector<16x32xf32>
    %130 = arith.mulf %129, %129 : vector<16x32xf32>
    %cst_64 = arith.constant dense<0.000000e+00> : vector<16xf32>
    %131 = vector.multi_reduction <add>, %130, %cst_64 [1] : vector<16x32xf32> to vector<16xf32>
    %132 = vector.shape_cast %131 : vector<16xf32> to vector<16x1xf32>
    %cst_65 = arith.constant 3.200000e+01 : f32
    %133 = vector.broadcast %cst_65 : f32 to vector<16x1xf32>
    %134 = arith.divf %132, %133 : vector<16x1xf32>
    %cst_66 = arith.constant 9.99999974E-6 : f32
    %135 = vector.broadcast %cst_66 : f32 to vector<16x1xf32>
    %136 = arith.addf %134, %135 : vector<16x1xf32>
    %137 = math.rsqrt %136 : vector<16x1xf32>
    %138 = vector.broadcast %137 : vector<16x1xf32> to vector<16x32xf32>
    %139 = arith.mulf %129, %138 : vector<16x32xf32>
    %140 = vector.broadcast %122 : vector<1x32xf32> to vector<16x32xf32>
    %141 = arith.mulf %139, %140 : vector<16x32xf32>
    %142 = vector.broadcast %123 : vector<1x32xf32> to vector<16x32xf32>
    %143 = arith.addf %141, %142 : vector<16x32xf32>
    %c0_67 = arith.constant 0 : index
    %c0_68 = arith.constant 0 : index
    %c0_69 = arith.constant 0 : index
    %144 = vector.load %arg15[%c0_67, %c0_68, %c0_69] : memref<1x16x32xf32, #tpu.memory_space<vmem>>, vector<1x16x32xf32>
    %145 = vector.shape_cast %144 : vector<1x16x32xf32> to vector<16x32xf32>
    %146 = vector.shape_cast %143 : vector<16x32xf32> to vector<1x16x32xf32>
    tpu.vector_store %arg15[%c0_67, %c0_68, %c0_69], %146 {strides = array<i32>} : memref<1x16x32xf32, #tpu.memory_space<vmem>>, vector<1x16x32xf32>,
    return
  }
  func.func @transform_0(%arg0: i32) -> (i32, i32, i32) {
    %c0_i32 = arith.constant 0 : i32
    %c0_i32_0 = arith.constant 0 : i32
    %c0_i32_1 = arith.constant 0 : i32
    return %arg0, %c0_i32, %c0_i32_0 : i32, i32, i32
  }
  func.func @transform_1(%arg0: i32) -> (i32, i32, i32) {
    %c0_i32 = arith.constant 0 : i32
    %c0_i32_0 = arith.constant 0 : i32
    %c0_i32_1 = arith.constant 0 : i32
    return %arg0, %c0_i32, %c0_i32_0 : i32, i32, i32
  }
  func.func @transform_2(%arg0: i32) -> (i32, i32) {
    %c0_i32 = arith.constant 0 : i32
    %c0_i32_0 = arith.constant 0 : i32
    %c0_i32_1 = arith.constant 0 : i32
    return %c0_i32, %c0_i32_0 : i32, i32
  }
  func.func @transform_3(%arg0: i32) -> (i32, i32) {
    %c0_i32 = arith.constant 0 : i32
    %c0_i32_0 = arith.constant 0 : i32
    %c0_i32_1 = arith.constant 0 : i32
    return %c0_i32, %c0_i32_0 : i32, i32
  }
  func.func @transform_4(%arg0: i32) -> (i32, i32) {
    %c0_i32 = arith.constant 0 : i32
    %c0_i32_0 = arith.constant 0 : i32
    %c0_i32_1 = arith.constant 0 : i32
    return %c0_i32, %c0_i32_0 : i32, i32
  }
  func.func @transform_5(%arg0: i32) -> (i32, i32) {
    %c0_i32 = arith.constant 0 : i32
    %c0_i32_0 = arith.constant 0 : i32
    %c0_i32_1 = arith.constant 0 : i32
    return %c0_i32, %c0_i32_0 : i32, i32
  }
  func.func @transform_6(%arg0: i32) -> (i32, i32) {
    %c0_i32 = arith.constant 0 : i32
    %c0_i32_0 = arith.constant 0 : i32
    %c0_i32_1 = arith.constant 0 : i32
    return %c0_i32, %c0_i32_0 : i32, i32
  }
  func.func @transform_7(%arg0: i32) -> (i32, i32) {
    %c0_i32 = arith.constant 0 : i32
    %c0_i32_0 = arith.constant 0 : i32
    %c0_i32_1 = arith.constant 0 : i32
    return %c0_i32, %c0_i32_0 : i32, i32
  }
  func.func @transform_8(%arg0: i32) -> (i32, i32) {
    %c0_i32 = arith.constant 0 : i32
    %c0_i32_0 = arith.constant 0 : i32
    %c0_i32_1 = arith.constant 0 : i32
    return %c0_i32, %c0_i32_0 : i32, i32
  }
  func.func @transform_9(%arg0: i32) -> (i32, i32) {
    %c0_i32 = arith.constant 0 : i32
    %c0_i32_0 = arith.constant 0 : i32
    %c0_i32_1 = arith.constant 0 : i32
    return %c0_i32, %c0_i32_0 : i32, i32
  }
  func.func @transform_10(%arg0: i32) -> (i32, i32) {
    %c0_i32 = arith.constant 0 : i32
    %c0_i32_0 = arith.constant 0 : i32
    %c0_i32_1 = arith.constant 0 : i32
    return %c0_i32, %c0_i32_0 : i32, i32
  }
  func.func @transform_11(%arg0: i32) -> (i32, i32) {
    %c0_i32 = arith.constant 0 : i32
    %c0_i32_0 = arith.constant 0 : i32
    %c0_i32_1 = arith.constant 0 : i32
    return %c0_i32, %c0_i32_0 : i32, i32
  }
  func.func @transform_12(%arg0: i32) -> (i32, i32) {
    %c0_i32 = arith.constant 0 : i32
    %c0_i32_0 = arith.constant 0 : i32
    %c0_i32_1 = arith.constant 0 : i32
    return %c0_i32, %c0_i32_0 : i32, i32
  }
  func.func @transform_13(%arg0: i32) -> (i32, i32) {
    %c0_i32 = arith.constant 0 : i32
    %c0_i32_0 = arith.constant 0 : i32
    %c0_i32_1 = arith.constant 0 : i32
    return %c0_i32, %c0_i32_0 : i32, i32
  }
  func.func @transform_14(%arg0: i32) -> (i32, i32, i32) {
    %c0_i32 = arith.constant 0 : i32
    %c0_i32_0 = arith.constant 0 : i32
    %c0_i32_1 = arith.constant 0 : i32
    return %arg0, %c0_i32, %c0_i32_0 : i32, i32, i32
  }
}

module attributes {stable_mosaic.version = 11 : i64} {
  func.func @_encoder_layer_kernel(%arg0: i32, %arg1: memref<1x16x32xf32, #tpu.memory_space<vmem>>, %arg2: memref<1x16x32xf32, #tpu.memory_space<vmem>>, %arg3: memref<32x96xf32, #tpu.memory_space<vmem>>, %arg4: memref<1x96xf32, #tpu.memory_space<vmem>>, %arg5: memref<32x32xf32, #tpu.memory_space<vmem>>, %arg6: memref<1x32xf32, #tpu.memory_space<vmem>>, %arg7: memref<1x32xf32, #tpu.memory_space<vmem>>, %arg8: memref<1x32xf32, #tpu.memory_space<vmem>>, %arg9: memref<32x64xf32, #tpu.memory_space<vmem>>, %arg10: memref<1x64xf32, #tpu.memory_space<vmem>>, %arg11: memref<64x32xf32, #tpu.memory_space<vmem>>, %arg12: memref<1x32xf32, #tpu.memory_space<vmem>>, %arg13: memref<1x32xf32, #tpu.memory_space<vmem>>, %arg14: memref<1x32xf32, #tpu.memory_space<vmem>>, %arg15: memref<1x16x32xf32, #tpu.memory_space<vmem>>) attributes {dimension_semantics = [#tpu.dimension_semantics<parallel>], iteration_bounds = array<i64: 2>, scalar_prefetch = 0 : i64, scratch_operands = 0 : i64, tpu.core_type = #tpu.core_type<tc>, window_params = [{transform_indices = @transform_0, window_bounds = array<i64: 1, 16, 32>}, {transform_indices = @transform_1, window_bounds = array<i64: 1, 16, 32>}, {pipeline_mode = #tpu.pipeline_mode<synchronous>, transform_indices = @transform_2, window_bounds = array<i64: 32, 96>}, {pipeline_mode = #tpu.pipeline_mode<synchronous>, transform_indices = @transform_3, window_bounds = array<i64: 1, 96>}, {pipeline_mode = #tpu.pipeline_mode<synchronous>, transform_indices = @transform_4, window_bounds = array<i64: 32, 32>}, {pipeline_mode = #tpu.pipeline_mode<synchronous>, transform_indices = @transform_5, window_bounds = array<i64: 1, 32>}, {pipeline_mode = #tpu.pipeline_mode<synchronous>, transform_indices = @transform_6, window_bounds = array<i64: 1, 32>}, {pipeline_mode = #tpu.pipeline_mode<synchronous>, transform_indices = @transform_7, window_bounds = array<i64: 1, 32>}, {pipeline_mode = #tpu.pipeline_mode<synchronous>, transform_indices = @transform_8, window_bounds = array<i64: 32, 64>}, {pipeline_mode = #tpu.pipeline_mode<synchronous>, transform_indices = @transform_9, window_bounds = array<i64: 1, 64>}, {pipeline_mode = #tpu.pipeline_mode<synchronous>, transform_indices = @transform_10, window_bounds = array<i64: 64, 32>}, {pipeline_mode = #tpu.pipeline_mode<synchronous>, transform_indices = @transform_11, window_bounds = array<i64: 1, 32>}, {pipeline_mode = #tpu.pipeline_mode<synchronous>, transform_indices = @transform_12, window_bounds = array<i64: 1, 32>}, {pipeline_mode = #tpu.pipeline_mode<synchronous>, transform_indices = @transform_13, window_bounds = array<i64: 1, 32>}, {transform_indices = @transform_14, window_bounds = array<i64: 1, 16, 32>}]} {
    %c0 = arith.constant 0 : index
    %c0_0 = arith.constant 0 : index
    %c0_1 = arith.constant 0 : index
    %0 = vector.load %arg1[%c0, %c0_0, %c0_1] : memref<1x16x32xf32, #tpu.memory_space<vmem>>, vector<1x16x32xf32>
    %1 = vector.shape_cast %0 : vector<1x16x32xf32> to vector<16x32xf32>
    %c0_2 = arith.constant 0 : index
    %c0_3 = arith.constant 0 : index
    %c0_4 = arith.constant 0 : index
    %2 = vector.load %arg2[%c0_2, %c0_3, %c0_4] : memref<1x16x32xf32, #tpu.memory_space<vmem>>, vector<1x16x32xf32>
    %3 = vector.shape_cast %2 : vector<1x16x32xf32> to vector<16x32xf32>
    %4 = arith.addf %1, %3 : vector<16x32xf32>
    %c0_5 = arith.constant 0 : index
    %c0_6 = arith.constant 0 : index
    %5 = vector.load %arg3[%c0_5, %c0_6] : memref<32x96xf32, #tpu.memory_space<vmem>>, vector<32x32xf32>
    %cst = arith.constant dense<0.000000e+00> : vector<16x32xf32>
    %6 = tpu.matmul %4, %5, %cst {dimension_numbers = #tpu.dot_dimension_numbers<[1], [0], [0], [1], [0, 0, 1, 1], [], []>} : vector<16x32xf32>, vector<32x32xf32>, vector<16x32xf32> -> vector<16x32xf32>
    %c0_7 = arith.constant 0 : index
    %c0_8 = arith.constant 0 : index
    %7 = vector.load %arg4[%c0_7, %c0_8] : memref<1x96xf32, #tpu.memory_space<vmem>>, vector<1x32xf32>
    %8 = vector.broadcast %7 : vector<1x32xf32> to vector<16x32xf32>
    %9 = arith.addf %6, %8 : vector<16x32xf32>
    %c0_9 = arith.constant 0 : index
    %c32 = arith.constant 32 : index
    %10 = vector.load %arg3[%c0_9, %c32] : memref<32x96xf32, #tpu.memory_space<vmem>>, vector<32x32xf32>
    %cst_10 = arith.constant dense<0.000000e+00> : vector<16x32xf32>
    %11 = tpu.matmul %4, %10, %cst_10 {dimension_numbers = #tpu.dot_dimension_numbers<[1], [0], [0], [1], [0, 0, 1, 1], [], []>} : vector<16x32xf32>, vector<32x32xf32>, vector<16x32xf32> -> vector<16x32xf32>
    %c0_11 = arith.constant 0 : index
    %c32_12 = arith.constant 32 : index
    %12 = vector.load %arg4[%c0_11, %c32_12] : memref<1x96xf32, #tpu.memory_space<vmem>>, vector<1x32xf32>
    %13 = vector.broadcast %12 : vector<1x32xf32> to vector<16x32xf32>
    %14 = arith.addf %11, %13 : vector<16x32xf32>
    %c0_13 = arith.constant 0 : index
    %c64 = arith.constant 64 : index
    %15 = vector.load %arg3[%c0_13, %c64] : memref<32x96xf32, #tpu.memory_space<vmem>>, vector<32x32xf32>
    %cst_14 = arith.constant dense<0.000000e+00> : vector<16x32xf32>
    %16 = tpu.matmul %1, %15, %cst_14 {dimension_numbers = #tpu.dot_dimension_numbers<[1], [0], [0], [1], [0, 0, 1, 1], [], []>} : vector<16x32xf32>, vector<32x32xf32>, vector<16x32xf32> -> vector<16x32xf32>
    %c0_15 = arith.constant 0 : index
    %c64_16 = arith.constant 64 : index
    %17 = vector.load %arg4[%c0_15, %c64_16] : memref<1x96xf32, #tpu.memory_space<vmem>>, vector<1x32xf32>
    %18 = vector.broadcast %17 : vector<1x32xf32> to vector<16x32xf32>
    %19 = arith.addf %16, %18 : vector<16x32xf32>
    %20 = vector.extract_strided_slice %9 {offsets = [0, 0], sizes = [16, 8], strides = [1, 1]} : vector<16x32xf32> to vector<16x8xf32>
    %21 = vector.extract_strided_slice %14 {offsets = [0, 0], sizes = [16, 8], strides = [1, 1]} : vector<16x32xf32> to vector<16x8xf32>
    %22 = vector.extract_strided_slice %19 {offsets = [0, 0], sizes = [16, 8], strides = [1, 1]} : vector<16x32xf32> to vector<16x8xf32>
    %cst_17 = arith.constant dense<0.000000e+00> : vector<16x16xf32>
    %23 = tpu.matmul %20, %21, %cst_17 {dimension_numbers = #tpu.dot_dimension_numbers<[1], [1], [0], [0], [0, 0, 1, 0], [], []>} : vector<16x8xf32>, vector<16x8xf32>, vector<16x16xf32> -> vector<16x16xf32>
    %cst_18 = arith.constant dense<0xFF800000> : vector<16xf32>
    %24 = vector.multi_reduction <maximumf>, %23, %cst_18 [1] : vector<16x16xf32> to vector<16xf32>
    %25 = vector.shape_cast %24 : vector<16xf32> to vector<16x1xf32>
    %26 = vector.broadcast %25 : vector<16x1xf32> to vector<16x16xf32>
    %27 = arith.subf %23, %26 : vector<16x16xf32>
    %28 = math.exp %27 : vector<16x16xf32>
    %cst_19 = arith.constant dense<0.000000e+00> : vector<16xf32>
    %29 = vector.multi_reduction <add>, %28, %cst_19 [1] : vector<16x16xf32> to vector<16xf32>
    %30 = vector.shape_cast %29 : vector<16xf32> to vector<16x1xf32>
    %31 = tpu.reciprocal %30 {approx = true} : vector<16x1xf32> -> vector<16x1xf32>
    %32 = vector.broadcast %31 : vector<16x1xf32> to vector<16x16xf32>
    %33 = arith.mulf %28, %32 : vector<16x16xf32>
    %cst_20 = arith.constant dense<0.000000e+00> : vector<16x8xf32>
    %34 = tpu.matmul %33, %22, %cst_20 {dimension_numbers = #tpu.dot_dimension_numbers<[1], [0], [0], [1], [0, 0, 1, 1], [], []>} : vector<16x16xf32>, vector<16x8xf32>, vector<16x8xf32> -> vector<16x8xf32>
    %35 = vector.extract_strided_slice %9 {offsets = [0, 8], sizes = [16, 8], strides = [1, 1]} : vector<16x32xf32> to vector<16x8xf32>
    %36 = vector.extract_strided_slice %14 {offsets = [0, 8], sizes = [16, 8], strides = [1, 1]} : vector<16x32xf32> to vector<16x8xf32>
    %37 = vector.extract_strided_slice %19 {offsets = [0, 8], sizes = [16, 8], strides = [1, 1]} : vector<16x32xf32> to vector<16x8xf32>
    %cst_21 = arith.constant dense<0.000000e+00> : vector<16x16xf32>
    %38 = tpu.matmul %35, %36, %cst_21 {dimension_numbers = #tpu.dot_dimension_numbers<[1], [1], [0], [0], [0, 0, 1, 0], [], []>} : vector<16x8xf32>, vector<16x8xf32>, vector<16x16xf32> -> vector<16x16xf32>
    %cst_22 = arith.constant dense<0xFF800000> : vector<16xf32>
    %39 = vector.multi_reduction <maximumf>, %38, %cst_22 [1] : vector<16x16xf32> to vector<16xf32>
    %40 = vector.shape_cast %39 : vector<16xf32> to vector<16x1xf32>
    %41 = vector.broadcast %40 : vector<16x1xf32> to vector<16x16xf32>
    %42 = arith.subf %38, %41 : vector<16x16xf32>
    %43 = math.exp %42 : vector<16x16xf32>
    %cst_23 = arith.constant dense<0.000000e+00> : vector<16xf32>
    %44 = vector.multi_reduction <add>, %43, %cst_23 [1] : vector<16x16xf32> to vector<16xf32>
    %45 = vector.shape_cast %44 : vector<16xf32> to vector<16x1xf32>
    %46 = tpu.reciprocal %45 {approx = true} : vector<16x1xf32> -> vector<16x1xf32>
    %47 = vector.broadcast %46 : vector<16x1xf32> to vector<16x16xf32>
    %48 = arith.mulf %43, %47 : vector<16x16xf32>
    %cst_24 = arith.constant dense<0.000000e+00> : vector<16x8xf32>
    %49 = tpu.matmul %48, %37, %cst_24 {dimension_numbers = #tpu.dot_dimension_numbers<[1], [0], [0], [1], [0, 0, 1, 1], [], []>} : vector<16x16xf32>, vector<16x8xf32>, vector<16x8xf32> -> vector<16x8xf32>
    %50 = vector.extract_strided_slice %9 {offsets = [0, 16], sizes = [16, 8], strides = [1, 1]} : vector<16x32xf32> to vector<16x8xf32>
    %51 = vector.extract_strided_slice %14 {offsets = [0, 16], sizes = [16, 8], strides = [1, 1]} : vector<16x32xf32> to vector<16x8xf32>
    %52 = vector.extract_strided_slice %19 {offsets = [0, 16], sizes = [16, 8], strides = [1, 1]} : vector<16x32xf32> to vector<16x8xf32>
    %cst_25 = arith.constant dense<0.000000e+00> : vector<16x16xf32>
    %53 = tpu.matmul %50, %51, %cst_25 {dimension_numbers = #tpu.dot_dimension_numbers<[1], [1], [0], [0], [0, 0, 1, 0], [], []>} : vector<16x8xf32>, vector<16x8xf32>, vector<16x16xf32> -> vector<16x16xf32>
    %cst_26 = arith.constant dense<0xFF800000> : vector<16xf32>
    %54 = vector.multi_reduction <maximumf>, %53, %cst_26 [1] : vector<16x16xf32> to vector<16xf32>
    %55 = vector.shape_cast %54 : vector<16xf32> to vector<16x1xf32>
    %56 = vector.broadcast %55 : vector<16x1xf32> to vector<16x16xf32>
    %57 = arith.subf %53, %56 : vector<16x16xf32>
    %58 = math.exp %57 : vector<16x16xf32>
    %cst_27 = arith.constant dense<0.000000e+00> : vector<16xf32>
    %59 = vector.multi_reduction <add>, %58, %cst_27 [1] : vector<16x16xf32> to vector<16xf32>
    %60 = vector.shape_cast %59 : vector<16xf32> to vector<16x1xf32>
    %61 = tpu.reciprocal %60 {approx = true} : vector<16x1xf32> -> vector<16x1xf32>
    %62 = vector.broadcast %61 : vector<16x1xf32> to vector<16x16xf32>
    %63 = arith.mulf %58, %62 : vector<16x16xf32>
    %cst_28 = arith.constant dense<0.000000e+00> : vector<16x8xf32>
    %64 = tpu.matmul %63, %52, %cst_28 {dimension_numbers = #tpu.dot_dimension_numbers<[1], [0], [0], [1], [0, 0, 1, 1], [], []>} : vector<16x16xf32>, vector<16x8xf32>, vector<16x8xf32> -> vector<16x8xf32>
    %65 = vector.extract_strided_slice %9 {offsets = [0, 24], sizes = [16, 8], strides = [1, 1]} : vector<16x32xf32> to vector<16x8xf32>
    %66 = vector.extract_strided_slice %14 {offsets = [0, 24], sizes = [16, 8], strides = [1, 1]} : vector<16x32xf32> to vector<16x8xf32>
    %67 = vector.extract_strided_slice %19 {offsets = [0, 24], sizes = [16, 8], strides = [1, 1]} : vector<16x32xf32> to vector<16x8xf32>
    %cst_29 = arith.constant dense<0.000000e+00> : vector<16x16xf32>
    %68 = tpu.matmul %65, %66, %cst_29 {dimension_numbers = #tpu.dot_dimension_numbers<[1], [1], [0], [0], [0, 0, 1, 0], [], []>} : vector<16x8xf32>, vector<16x8xf32>, vector<16x16xf32> -> vector<16x16xf32>
    %cst_30 = arith.constant dense<0xFF800000> : vector<16xf32>
    %69 = vector.multi_reduction <maximumf>, %68, %cst_30 [1] : vector<16x16xf32> to vector<16xf32>
    %70 = vector.shape_cast %69 : vector<16xf32> to vector<16x1xf32>
    %71 = vector.broadcast %70 : vector<16x1xf32> to vector<16x16xf32>
    %72 = arith.subf %68, %71 : vector<16x16xf32>
    %73 = math.exp %72 : vector<16x16xf32>
    %cst_31 = arith.constant dense<0.000000e+00> : vector<16xf32>
    %74 = vector.multi_reduction <add>, %73, %cst_31 [1] : vector<16x16xf32> to vector<16xf32>
    %75 = vector.shape_cast %74 : vector<16xf32> to vector<16x1xf32>
    %76 = tpu.reciprocal %75 {approx = true} : vector<16x1xf32> -> vector<16x1xf32>
    %77 = vector.broadcast %76 : vector<16x1xf32> to vector<16x16xf32>
    %78 = arith.mulf %73, %77 : vector<16x16xf32>
    %cst_32 = arith.constant dense<0.000000e+00> : vector<16x8xf32>
    %79 = tpu.matmul %78, %67, %cst_32 {dimension_numbers = #tpu.dot_dimension_numbers<[1], [0], [0], [1], [0, 0, 1, 1], [], []>} : vector<16x16xf32>, vector<16x8xf32>, vector<16x8xf32> -> vector<16x8xf32>
    %80 = tpu.concatenate %34, %49, %64, %79 in 1 : vector<16x8xf32>, vector<16x8xf32>, vector<16x8xf32>, vector<16x8xf32> -> vector<16x32xf32>
    %c0_33 = arith.constant 0 : index
    %c0_34 = arith.constant 0 : index
    %81 = vector.load %arg5[%c0_33, %c0_34] : memref<32x32xf32, #tpu.memory_space<vmem>>, vector<32x32xf32>
    %cst_35 = arith.constant dense<0.000000e+00> : vector<16x32xf32>
    %82 = tpu.matmul %80, %81, %cst_35 {dimension_numbers = #tpu.dot_dimension_numbers<[1], [0], [0], [1], [0, 0, 1, 1], [], []>} : vector<16x32xf32>, vector<32x32xf32>, vector<16x32xf32> -> vector<16x32xf32>
    %c0_36 = arith.constant 0 : index
    %c0_37 = arith.constant 0 : index
    %83 = vector.load %arg6[%c0_36, %c0_37] : memref<1x32xf32, #tpu.memory_space<vmem>>, vector<1x32xf32>
    %84 = vector.broadcast %83 : vector<1x32xf32> to vector<16x32xf32>
    %85 = arith.addf %82, %84 : vector<16x32xf32>
    %86 = arith.addf %1, %85 : vector<16x32xf32>
    %c0_38 = arith.constant 0 : index
    %c0_39 = arith.constant 0 : index
    %87 = vector.load %arg7[%c0_38, %c0_39] : memref<1x32xf32, #tpu.memory_space<vmem>>, vector<1x32xf32>
    %c0_40 = arith.constant 0 : index
    %c0_41 = arith.constant 0 : index
    %88 = vector.load %arg8[%c0_40, %c0_41] : memref<1x32xf32, #tpu.memory_space<vmem>>, vector<1x32xf32>
    %cst_42 = arith.constant dense<0.000000e+00> : vector<16xf32>
    %89 = vector.multi_reduction <add>, %86, %cst_42 [1] : vector<16x32xf32> to vector<16xf32>
    %90 = vector.shape_cast %89 : vector<16xf32> to vector<16x1xf32>
    %cst_43 = arith.constant 3.200000e+01 : f32
    %91 = vector.broadcast %cst_43 : f32 to vector<16x1xf32>
    %92 = arith.divf %90, %91 : vector<16x1xf32>
    %93 = vector.broadcast %92 : vector<16x1xf32> to vector<16x32xf32>
    %94 = arith.subf %86, %93 : vector<16x32xf32>
    %95 = arith.mulf %94, %94 : vector<16x32xf32>
    %cst_44 = arith.constant dense<0.000000e+00> : vector<16xf32>
    %96 = vector.multi_reduction <add>, %95, %cst_44 [1] : vector<16x32xf32> to vector<16xf32>
    %97 = vector.shape_cast %96 : vector<16xf32> to vector<16x1xf32>
    %cst_45 = arith.constant 3.200000e+01 : f32
    %98 = vector.broadcast %cst_45 : f32 to vector<16x1xf32>
    %99 = arith.divf %97, %98 : vector<16x1xf32>
    %cst_46 = arith.constant 9.99999974E-6 : f32
    %100 = vector.broadcast %cst_46 : f32 to vector<16x1xf32>
    %101 = arith.addf %99, %100 : vector<16x1xf32>
    %102 = math.rsqrt %101 : vector<16x1xf32>
    %103 = vector.broadcast %102 : vector<16x1xf32> to vector<16x32xf32>
    %104 = arith.mulf %94, %103 : vector<16x32xf32>
    %105 = vector.broadcast %87 : vector<1x32xf32> to vector<16x32xf32>
    %106 = arith.mulf %104, %105 : vector<16x32xf32>
    %107 = vector.broadcast %88 : vector<1x32xf32> to vector<16x32xf32>
    %108 = arith.addf %106, %107 : vector<16x32xf32>
    %c0_47 = arith.constant 0 : index
    %c0_48 = arith.constant 0 : index
    %109 = vector.load %arg9[%c0_47, %c0_48] : memref<32x64xf32, #tpu.memory_space<vmem>>, vector<32x64xf32>
    %cst_49 = arith.constant dense<0.000000e+00> : vector<16x64xf32>
    %110 = tpu.matmul %108, %109, %cst_49 {dimension_numbers = #tpu.dot_dimension_numbers<[1], [0], [0], [1], [0, 0, 1, 1], [], []>} : vector<16x32xf32>, vector<32x64xf32>, vector<16x64xf32> -> vector<16x64xf32>
    %c0_50 = arith.constant 0 : index
    %c0_51 = arith.constant 0 : index
    %111 = vector.load %arg10[%c0_50, %c0_51] : memref<1x64xf32, #tpu.memory_space<vmem>>, vector<1x64xf32>
    %112 = vector.broadcast %111 : vector<1x64xf32> to vector<16x64xf32>
    %113 = arith.addf %110, %112 : vector<16x64xf32>
    %cst_52 = arith.constant 0.000000e+00 : f32
    %114 = vector.broadcast %cst_52 : f32 to vector<16x64xf32>
    %115 = arith.maximumf %113, %114 : vector<16x64xf32>
    %c0_53 = arith.constant 0 : index
    %c0_54 = arith.constant 0 : index
    %116 = vector.load %arg11[%c0_53, %c0_54] : memref<64x32xf32, #tpu.memory_space<vmem>>, vector<64x32xf32>
    %cst_55 = arith.constant dense<0.000000e+00> : vector<16x32xf32>
    %117 = tpu.matmul %115, %116, %cst_55 {dimension_numbers = #tpu.dot_dimension_numbers<[1], [0], [0], [1], [0, 0, 1, 1], [], []>} : vector<16x64xf32>, vector<64x32xf32>, vector<16x32xf32> -> vector<16x32xf32>
    %c0_56 = arith.constant 0 : index
    %c0_57 = arith.constant 0 : index
    %118 = vector.load %arg12[%c0_56, %c0_57] : memref<1x32xf32, #tpu.memory_space<vmem>>, vector<1x32xf32>
    %119 = vector.broadcast %118 : vector<1x32xf32> to vector<16x32xf32>
    %120 = arith.addf %117, %119 : vector<16x32xf32>
    %121 = arith.addf %108, %120 : vector<16x32xf32>
    %c0_58 = arith.constant 0 : index
    %c0_59 = arith.constant 0 : index
    %122 = vector.load %arg13[%c0_58, %c0_59] : memref<1x32xf32, #tpu.memory_space<vmem>>, vector<1x32xf32>
    %c0_60 = arith.constant 0 : index
    %c0_61 = arith.constant 0 : index
    %123 = vector.load %arg14[%c0_60, %c0_61] : memref<1x32xf32, #tpu.memory_space<vmem>>, vector<1x32xf32>
    %cst_62 = arith.constant dense<0.000000e+00> : vector<16xf32>
    %124 = vector.multi_reduction <add>, %121, %cst_62 [1] : vector<16x32xf32> to vector<16xf32>
    %125 = vector.shape_cast %124 : vector<16xf32> to vector<16x1xf32>
    %cst_63 = arith.constant 3.200000e+01 : f32
    %126 = vector.broadcast %cst_63 : f32 to vector<16x1xf32>
    %127 = arith.divf %125, %126 : vector<16x1xf32>
    %128 = vector.broadcast %127 : vector<16x1xf32> to vector<16x32xf32>
    %129 = arith.subf %121, %128 : vector<16x32xf32>
    %130 = arith.mulf %129, %129 : vector<16x32xf32>
    %cst_64 = arith.constant dense<0.000000e+00> : vector<16xf32>
    %131 = vector.multi_reduction <add>, %130, %cst_64 [1] : vector<16x32xf32> to vector<16xf32>
    %132 = vector.shape_cast %131 : vector<16xf32> to vector<16x1xf32>
    %cst_65 = arith.constant 3.200000e+01 : f32
    %133 = vector.broadcast %cst_65 : f32 to vector<16x1xf32>
    %134 = arith.divf %132, %133 : vector<16x1xf32>
    %cst_66 = arith.constant 9.99999974E-6 : f32
    %135 = vector.broadcast %cst_66 : f32 to vector<16x1xf32>
    %136 = arith.addf %134, %135 : vector<16x1xf32>
    %137 = math.rsqrt %136 : vector<16x1xf32>
    %138 = vector.broadcast %137 : vector<16x1xf32> to vector<16x32xf32>
    %139 = arith.mulf %129, %138 : vector<16x32xf32>
    %140 = vector.broadcast %122 : vector<1x32xf32> to vector<16x32xf32>
    %141 = arith.mulf %139, %140 : vector<16x32xf32>
    %142 = vector.broadcast %123 : vector<1x32xf32> to vector<16x32xf32>
    %143 = arith.addf %141, %142 : vector<16x32xf32>
    %c0_67 = arith.constant 0 : index
    %c0_68 = arith.constant 0 : index
    %c0_69 = arith.constant 0 : index
    %144 = vector.load %arg15[%c0_67, %c0_68, %c0_69] : memref<1x16x32xf32, #tpu.memory_space<vmem>>, vector<1x16x32xf32>
    %145 = vector.shape_cast %144 : vector<1x16x32xf32> to vector<16x32xf32>
    %146 = vector.shape_cast %143 : vector<16x32xf32> to vector<1x16x32xf32>
    tpu.vector_store %arg15[%c0_67, %c0_68, %c0_69], %146 {strides = array<i32>} : memref<1x16x32xf32, #tpu.memory_space<vmem>>, vector<1x16x32xf32>,
    return
  }
  func.func @transform_0(%arg0: i32) -> (i32, i32, i32) {
    %c0_i32 = arith.constant 0 : i32
    %c0_i32_0 = arith.constant 0 : i32
    %c0_i32_1 = arith.constant 0 : i32
    return %arg0, %c0_i32, %c0_i32_0 : i32, i32, i32
  }
  func.func @transform_1(%arg0: i32) -> (i32, i32, i32) {
    %c0_i32 = arith.constant 0 : i32
    %c0_i32_0 = arith.constant 0 : i32
    %c0_i32_1 = arith.constant 0 : i32
    return %arg0, %c0_i32, %c0_i32_0 : i32, i32, i32
  }
  func.func @transform_2(%arg0: i32) -> (i32, i32) {
    %c0_i32 = arith.constant 0 : i32
    %c0_i32_0 = arith.constant 0 : i32
    %c0_i32_1 = arith.constant 0 : i32
    return %c0_i32, %c0_i32_0 : i32, i32
  }
  func.func @transform_3(%arg0: i32) -> (i32, i32) {
    %c0_i32 = arith.constant 0 : i32
    %c0_i32_0 = arith.constant 0 : i32
    %c0_i32_1 = arith.constant 0 : i32
    return %c0_i32, %c0_i32_0 : i32, i32
  }
  func.func @transform_4(%arg0: i32) -> (i32, i32) {
    %c0_i32 = arith.constant 0 : i32
    %c0_i32_0 = arith.constant 0 : i32
    %c0_i32_1 = arith.constant 0 : i32
    return %c0_i32, %c0_i32_0 : i32, i32
  }
  func.func @transform_5(%arg0: i32) -> (i32, i32) {
    %c0_i32 = arith.constant 0 : i32
    %c0_i32_0 = arith.constant 0 : i32
    %c0_i32_1 = arith.constant 0 : i32
    return %c0_i32, %c0_i32_0 : i32, i32
  }
  func.func @transform_6(%arg0: i32) -> (i32, i32) {
    %c0_i32 = arith.constant 0 : i32
    %c0_i32_0 = arith.constant 0 : i32
    %c0_i32_1 = arith.constant 0 : i32
    return %c0_i32, %c0_i32_0 : i32, i32
  }
  func.func @transform_7(%arg0: i32) -> (i32, i32) {
    %c0_i32 = arith.constant 0 : i32
    %c0_i32_0 = arith.constant 0 : i32
    %c0_i32_1 = arith.constant 0 : i32
    return %c0_i32, %c0_i32_0 : i32, i32
  }
  func.func @transform_8(%arg0: i32) -> (i32, i32) {
    %c0_i32 = arith.constant 0 : i32
    %c0_i32_0 = arith.constant 0 : i32
    %c0_i32_1 = arith.constant 0 : i32
    return %c0_i32, %c0_i32_0 : i32, i32
  }
  func.func @transform_9(%arg0: i32) -> (i32, i32) {
    %c0_i32 = arith.constant 0 : i32
    %c0_i32_0 = arith.constant 0 : i32
    %c0_i32_1 = arith.constant 0 : i32
    return %c0_i32, %c0_i32_0 : i32, i32
  }
  func.func @transform_10(%arg0: i32) -> (i32, i32) {
    %c0_i32 = arith.constant 0 : i32
    %c0_i32_0 = arith.constant 0 : i32
    %c0_i32_1 = arith.constant 0 : i32
    return %c0_i32, %c0_i32_0 : i32, i32
  }
  func.func @transform_11(%arg0: i32) -> (i32, i32) {
    %c0_i32 = arith.constant 0 : i32
    %c0_i32_0 = arith.constant 0 : i32
    %c0_i32_1 = arith.constant 0 : i32
    return %c0_i32, %c0_i32_0 : i32, i32
  }
  func.func @transform_12(%arg0: i32) -> (i32, i32) {
    %c0_i32 = arith.constant 0 : i32
    %c0_i32_0 = arith.constant 0 : i32
    %c0_i32_1 = arith.constant 0 : i32
    return %c0_i32, %c0_i32_0 : i32, i32
  }
  func.func @transform_13(%arg0: i32) -> (i32, i32) {
    %c0_i32 = arith.constant 0 : i32
    %c0_i32_0 = arith.constant 0 : i32
    %c0_i32_1 = arith.constant 0 : i32
    return %c0_i32, %c0_i32_0 : i32, i32
  }
  func.func @transform_14(%arg0: i32) -> (i32, i32, i32) {
    %c0_i32 = arith.constant 0 : i32
    %c0_i32_0 = arith.constant 0 : i32
    %c0_i32_1 = arith.constant 0 : i32
    return %arg0, %c0_i32, %c0_i32_0 : i32, i32, i32
  }
}

module attributes {stable_mosaic.version = 11 : i64} {
  func.func @_decoder_layer_kernel(%arg0: i32, %arg1: memref<1x8x32xf32, #tpu.memory_space<vmem>>, %arg2: memref<1x16x32xf32, #tpu.memory_space<vmem>>, %arg3: memref<1x8x32xf32, #tpu.memory_space<vmem>>, %arg4: memref<1x16x32xf32, #tpu.memory_space<vmem>>, %arg5: memref<32x96xf32, #tpu.memory_space<vmem>>, %arg6: memref<1x96xf32, #tpu.memory_space<vmem>>, %arg7: memref<32x32xf32, #tpu.memory_space<vmem>>, %arg8: memref<1x32xf32, #tpu.memory_space<vmem>>, %arg9: memref<32x96xf32, #tpu.memory_space<vmem>>, %arg10: memref<1x96xf32, #tpu.memory_space<vmem>>, %arg11: memref<32x32xf32, #tpu.memory_space<vmem>>, %arg12: memref<1x32xf32, #tpu.memory_space<vmem>>, %arg13: memref<1x32xf32, #tpu.memory_space<vmem>>, %arg14: memref<1x32xf32, #tpu.memory_space<vmem>>, %arg15: memref<1x32xf32, #tpu.memory_space<vmem>>, %arg16: memref<1x32xf32, #tpu.memory_space<vmem>>, %arg17: memref<1x32xf32, #tpu.memory_space<vmem>>, %arg18: memref<1x32xf32, #tpu.memory_space<vmem>>, %arg19: memref<32x64xf32, #tpu.memory_space<vmem>>, %arg20: memref<1x64xf32, #tpu.memory_space<vmem>>, %arg21: memref<64x32xf32, #tpu.memory_space<vmem>>, %arg22: memref<1x32xf32, #tpu.memory_space<vmem>>, %arg23: memref<1x8x32xf32, #tpu.memory_space<vmem>>) attributes {dimension_semantics = [#tpu.dimension_semantics<parallel>], iteration_bounds = array<i64: 2>, scalar_prefetch = 0 : i64, scratch_operands = 0 : i64, tpu.core_type = #tpu.core_type<tc>, window_params = [{transform_indices = @transform_0, window_bounds = array<i64: 1, 8, 32>}, {transform_indices = @transform_1, window_bounds = array<i64: 1, 16, 32>}, {transform_indices = @transform_2, window_bounds = array<i64: 1, 8, 32>}, {transform_indices = @transform_3, window_bounds = array<i64: 1, 16, 32>}, {pipeline_mode = #tpu.pipeline_mode<synchronous>, transform_indices = @transform_4, window_bounds = array<i64: 32, 96>}, {pipeline_mode = #tpu.pipeline_mode<synchronous>, transform_indices = @transform_5, window_bounds = array<i64: 1, 96>}, {pipeline_mode = #tpu.pipeline_mode<synchronous>, transform_indices = @transform_6, window_bounds = array<i64: 32, 32>}, {pipeline_mode = #tpu.pipeline_mode<synchronous>, transform_indices = @transform_7, window_bounds = array<i64: 1, 32>}, {pipeline_mode = #tpu.pipeline_mode<synchronous>, transform_indices = @transform_8, window_bounds = array<i64: 32, 96>}, {pipeline_mode = #tpu.pipeline_mode<synchronous>, transform_indices = @transform_9, window_bounds = array<i64: 1, 96>}, {pipeline_mode = #tpu.pipeline_mode<synchronous>, transform_indices = @transform_10, window_bounds = array<i64: 32, 32>}, {pipeline_mode = #tpu.pipeline_mode<synchronous>, transform_indices = @transform_11, window_bounds = array<i64: 1, 32>}, {pipeline_mode = #tpu.pipeline_mode<synchronous>, transform_indices = @transform_12, window_bounds = array<i64: 1, 32>}, {pipeline_mode = #tpu.pipeline_mode<synchronous>, transform_indices = @transform_13, window_bounds = array<i64: 1, 32>}, {pipeline_mode = #tpu.pipeline_mode<synchronous>, transform_indices = @transform_14, window_bounds = array<i64: 1, 32>}, {pipeline_mode = #tpu.pipeline_mode<synchronous>, transform_indices = @transform_15, window_bounds = array<i64: 1, 32>}, {pipeline_mode = #tpu.pipeline_mode<synchronous>, transform_indices = @transform_16, window_bounds = array<i64: 1, 32>}, {pipeline_mode = #tpu.pipeline_mode<synchronous>, transform_indices = @transform_17, window_bounds = array<i64: 1, 32>}, {pipeline_mode = #tpu.pipeline_mode<synchronous>, transform_indices = @transform_18, window_bounds = array<i64: 32, 64>}, {pipeline_mode = #tpu.pipeline_mode<synchronous>, transform_indices = @transform_19, window_bounds = array<i64: 1, 64>}, {pipeline_mode = #tpu.pipeline_mode<synchronous>, transform_indices = @transform_20, window_bounds = array<i64: 64, 32>}, {pipeline_mode = #tpu.pipeline_mode<synchronous>, transform_indices = @transform_21, window_bounds = array<i64: 1, 32>}, {transform_indices = @transform_22, window_bounds = array<i64: 1, 8, 32>}]} {
    %c0 = arith.constant 0 : index
    %c0_0 = arith.constant 0 : index
    %c0_1 = arith.constant 0 : index
    %0 = vector.load %arg1[%c0, %c0_0, %c0_1] : memref<1x8x32xf32, #tpu.memory_space<vmem>>, vector<1x8x32xf32>
    %1 = vector.shape_cast %0 : vector<1x8x32xf32> to vector<8x32xf32>
    %c0_2 = arith.constant 0 : index
    %c0_3 = arith.constant 0 : index
    %c0_4 = arith.constant 0 : index
    %2 = vector.load %arg2[%c0_2, %c0_3, %c0_4] : memref<1x16x32xf32, #tpu.memory_space<vmem>>, vector<1x16x32xf32>
    %3 = vector.shape_cast %2 : vector<1x16x32xf32> to vector<16x32xf32>
    %c0_5 = arith.constant 0 : index
    %c0_6 = arith.constant 0 : index
    %c0_7 = arith.constant 0 : index
    %4 = vector.load %arg3[%c0_5, %c0_6, %c0_7] : memref<1x8x32xf32, #tpu.memory_space<vmem>>, vector<1x8x32xf32>
    %5 = vector.shape_cast %4 : vector<1x8x32xf32> to vector<8x32xf32>
    %c0_8 = arith.constant 0 : index
    %c0_9 = arith.constant 0 : index
    %c0_10 = arith.constant 0 : index
    %6 = vector.load %arg4[%c0_8, %c0_9, %c0_10] : memref<1x16x32xf32, #tpu.memory_space<vmem>>, vector<1x16x32xf32>
    %7 = vector.shape_cast %6 : vector<1x16x32xf32> to vector<16x32xf32>
    %8 = arith.addf %1, %5 : vector<8x32xf32>
    %c0_11 = arith.constant 0 : index
    %c0_12 = arith.constant 0 : index
    %9 = vector.load %arg5[%c0_11, %c0_12] : memref<32x96xf32, #tpu.memory_space<vmem>>, vector<32x32xf32>
    %cst = arith.constant dense<0.000000e+00> : vector<8x32xf32>
    %10 = tpu.matmul %8, %9, %cst {dimension_numbers = #tpu.dot_dimension_numbers<[1], [0], [0], [1], [0, 0, 1, 1], [], []>} : vector<8x32xf32>, vector<32x32xf32>, vector<8x32xf32> -> vector<8x32xf32>
    %c0_13 = arith.constant 0 : index
    %c0_14 = arith.constant 0 : index
    %11 = vector.load %arg6[%c0_13, %c0_14] : memref<1x96xf32, #tpu.memory_space<vmem>>, vector<1x32xf32>
    %12 = vector.broadcast %11 : vector<1x32xf32> to vector<8x32xf32>
    %13 = arith.addf %10, %12 : vector<8x32xf32>
    %c0_15 = arith.constant 0 : index
    %c32 = arith.constant 32 : index
    %14 = vector.load %arg5[%c0_15, %c32] : memref<32x96xf32, #tpu.memory_space<vmem>>, vector<32x32xf32>
    %cst_16 = arith.constant dense<0.000000e+00> : vector<8x32xf32>
    %15 = tpu.matmul %8, %14, %cst_16 {dimension_numbers = #tpu.dot_dimension_numbers<[1], [0], [0], [1], [0, 0, 1, 1], [], []>} : vector<8x32xf32>, vector<32x32xf32>, vector<8x32xf32> -> vector<8x32xf32>
    %c0_17 = arith.constant 0 : index
    %c32_18 = arith.constant 32 : index
    %16 = vector.load %arg6[%c0_17, %c32_18] : memref<1x96xf32, #tpu.memory_space<vmem>>, vector<1x32xf32>
    %17 = vector.broadcast %16 : vector<1x32xf32> to vector<8x32xf32>
    %18 = arith.addf %15, %17 : vector<8x32xf32>
    %c0_19 = arith.constant 0 : index
    %c64 = arith.constant 64 : index
    %19 = vector.load %arg5[%c0_19, %c64] : memref<32x96xf32, #tpu.memory_space<vmem>>, vector<32x32xf32>
    %cst_20 = arith.constant dense<0.000000e+00> : vector<8x32xf32>
    %20 = tpu.matmul %1, %19, %cst_20 {dimension_numbers = #tpu.dot_dimension_numbers<[1], [0], [0], [1], [0, 0, 1, 1], [], []>} : vector<8x32xf32>, vector<32x32xf32>, vector<8x32xf32> -> vector<8x32xf32>
    %c0_21 = arith.constant 0 : index
    %c64_22 = arith.constant 64 : index
    %21 = vector.load %arg6[%c0_21, %c64_22] : memref<1x96xf32, #tpu.memory_space<vmem>>, vector<1x32xf32>
    %22 = vector.broadcast %21 : vector<1x32xf32> to vector<8x32xf32>
    %23 = arith.addf %20, %22 : vector<8x32xf32>
    %24 = vector.extract_strided_slice %13 {offsets = [0, 0], sizes = [8, 8], strides = [1, 1]} : vector<8x32xf32> to vector<8x8xf32>
    %25 = vector.extract_strided_slice %18 {offsets = [0, 0], sizes = [8, 8], strides = [1, 1]} : vector<8x32xf32> to vector<8x8xf32>
    %26 = vector.extract_strided_slice %23 {offsets = [0, 0], sizes = [8, 8], strides = [1, 1]} : vector<8x32xf32> to vector<8x8xf32>
    %cst_23 = arith.constant dense<0.000000e+00> : vector<8x8xf32>
    %27 = tpu.matmul %24, %25, %cst_23 {dimension_numbers = #tpu.dot_dimension_numbers<[1], [1], [0], [0], [0, 0, 1, 0], [], []>} : vector<8x8xf32>, vector<8x8xf32>, vector<8x8xf32> -> vector<8x8xf32>
    %cst_24 = arith.constant dense<0xFF800000> : vector<8xf32>
    %28 = vector.multi_reduction <maximumf>, %27, %cst_24 [1] : vector<8x8xf32> to vector<8xf32>
    %29 = vector.shape_cast %28 : vector<8xf32> to vector<8x1xf32>
    %30 = vector.broadcast %29 : vector<8x1xf32> to vector<8x8xf32>
    %31 = arith.subf %27, %30 : vector<8x8xf32>
    %32 = math.exp %31 : vector<8x8xf32>
    %cst_25 = arith.constant dense<0.000000e+00> : vector<8xf32>
    %33 = vector.multi_reduction <add>, %32, %cst_25 [1] : vector<8x8xf32> to vector<8xf32>
    %34 = vector.shape_cast %33 : vector<8xf32> to vector<8x1xf32>
    %35 = tpu.reciprocal %34 {approx = true} : vector<8x1xf32> -> vector<8x1xf32>
    %36 = vector.broadcast %35 : vector<8x1xf32> to vector<8x8xf32>
    %37 = arith.mulf %32, %36 : vector<8x8xf32>
    %cst_26 = arith.constant dense<0.000000e+00> : vector<8x8xf32>
    %38 = tpu.matmul %37, %26, %cst_26 {dimension_numbers = #tpu.dot_dimension_numbers<[1], [0], [0], [1], [0, 0, 1, 1], [], []>} : vector<8x8xf32>, vector<8x8xf32>, vector<8x8xf32> -> vector<8x8xf32>
    %39 = vector.extract_strided_slice %13 {offsets = [0, 8], sizes = [8, 8], strides = [1, 1]} : vector<8x32xf32> to vector<8x8xf32>
    %40 = vector.extract_strided_slice %18 {offsets = [0, 8], sizes = [8, 8], strides = [1, 1]} : vector<8x32xf32> to vector<8x8xf32>
    %41 = vector.extract_strided_slice %23 {offsets = [0, 8], sizes = [8, 8], strides = [1, 1]} : vector<8x32xf32> to vector<8x8xf32>
    %cst_27 = arith.constant dense<0.000000e+00> : vector<8x8xf32>
    %42 = tpu.matmul %39, %40, %cst_27 {dimension_numbers = #tpu.dot_dimension_numbers<[1], [1], [0], [0], [0, 0, 1, 0], [], []>} : vector<8x8xf32>, vector<8x8xf32>, vector<8x8xf32> -> vector<8x8xf32>
    %cst_28 = arith.constant dense<0xFF800000> : vector<8xf32>
    %43 = vector.multi_reduction <maximumf>, %42, %cst_28 [1] : vector<8x8xf32> to vector<8xf32>
    %44 = vector.shape_cast %43 : vector<8xf32> to vector<8x1xf32>
    %45 = vector.broadcast %44 : vector<8x1xf32> to vector<8x8xf32>
    %46 = arith.subf %42, %45 : vector<8x8xf32>
    %47 = math.exp %46 : vector<8x8xf32>
    %cst_29 = arith.constant dense<0.000000e+00> : vector<8xf32>
    %48 = vector.multi_reduction <add>, %47, %cst_29 [1] : vector<8x8xf32> to vector<8xf32>
    %49 = vector.shape_cast %48 : vector<8xf32> to vector<8x1xf32>
    %50 = tpu.reciprocal %49 {approx = true} : vector<8x1xf32> -> vector<8x1xf32>
    %51 = vector.broadcast %50 : vector<8x1xf32> to vector<8x8xf32>
    %52 = arith.mulf %47, %51 : vector<8x8xf32>
    %cst_30 = arith.constant dense<0.000000e+00> : vector<8x8xf32>
    %53 = tpu.matmul %52, %41, %cst_30 {dimension_numbers = #tpu.dot_dimension_numbers<[1], [0], [0], [1], [0, 0, 1, 1], [], []>} : vector<8x8xf32>, vector<8x8xf32>, vector<8x8xf32> -> vector<8x8xf32>
    %54 = vector.extract_strided_slice %13 {offsets = [0, 16], sizes = [8, 8], strides = [1, 1]} : vector<8x32xf32> to vector<8x8xf32>
    %55 = vector.extract_strided_slice %18 {offsets = [0, 16], sizes = [8, 8], strides = [1, 1]} : vector<8x32xf32> to vector<8x8xf32>
    %56 = vector.extract_strided_slice %23 {offsets = [0, 16], sizes = [8, 8], strides = [1, 1]} : vector<8x32xf32> to vector<8x8xf32>
    %cst_31 = arith.constant dense<0.000000e+00> : vector<8x8xf32>
    %57 = tpu.matmul %54, %55, %cst_31 {dimension_numbers = #tpu.dot_dimension_numbers<[1], [1], [0], [0], [0, 0, 1, 0], [], []>} : vector<8x8xf32>, vector<8x8xf32>, vector<8x8xf32> -> vector<8x8xf32>
    %cst_32 = arith.constant dense<0xFF800000> : vector<8xf32>
    %58 = vector.multi_reduction <maximumf>, %57, %cst_32 [1] : vector<8x8xf32> to vector<8xf32>
    %59 = vector.shape_cast %58 : vector<8xf32> to vector<8x1xf32>
    %60 = vector.broadcast %59 : vector<8x1xf32> to vector<8x8xf32>
    %61 = arith.subf %57, %60 : vector<8x8xf32>
    %62 = math.exp %61 : vector<8x8xf32>
    %cst_33 = arith.constant dense<0.000000e+00> : vector<8xf32>
    %63 = vector.multi_reduction <add>, %62, %cst_33 [1] : vector<8x8xf32> to vector<8xf32>
    %64 = vector.shape_cast %63 : vector<8xf32> to vector<8x1xf32>
    %65 = tpu.reciprocal %64 {approx = true} : vector<8x1xf32> -> vector<8x1xf32>
    %66 = vector.broadcast %65 : vector<8x1xf32> to vector<8x8xf32>
    %67 = arith.mulf %62, %66 : vector<8x8xf32>
    %cst_34 = arith.constant dense<0.000000e+00> : vector<8x8xf32>
    %68 = tpu.matmul %67, %56, %cst_34 {dimension_numbers = #tpu.dot_dimension_numbers<[1], [0], [0], [1], [0, 0, 1, 1], [], []>} : vector<8x8xf32>, vector<8x8xf32>, vector<8x8xf32> -> vector<8x8xf32>
    %69 = vector.extract_strided_slice %13 {offsets = [0, 24], sizes = [8, 8], strides = [1, 1]} : vector<8x32xf32> to vector<8x8xf32>
    %70 = vector.extract_strided_slice %18 {offsets = [0, 24], sizes = [8, 8], strides = [1, 1]} : vector<8x32xf32> to vector<8x8xf32>
    %71 = vector.extract_strided_slice %23 {offsets = [0, 24], sizes = [8, 8], strides = [1, 1]} : vector<8x32xf32> to vector<8x8xf32>
    %cst_35 = arith.constant dense<0.000000e+00> : vector<8x8xf32>
    %72 = tpu.matmul %69, %70, %cst_35 {dimension_numbers = #tpu.dot_dimension_numbers<[1], [1], [0], [0], [0, 0, 1, 0], [], []>} : vector<8x8xf32>, vector<8x8xf32>, vector<8x8xf32> -> vector<8x8xf32>
    %cst_36 = arith.constant dense<0xFF800000> : vector<8xf32>
    %73 = vector.multi_reduction <maximumf>, %72, %cst_36 [1] : vector<8x8xf32> to vector<8xf32>
    %74 = vector.shape_cast %73 : vector<8xf32> to vector<8x1xf32>
    %75 = vector.broadcast %74 : vector<8x1xf32> to vector<8x8xf32>
    %76 = arith.subf %72, %75 : vector<8x8xf32>
    %77 = math.exp %76 : vector<8x8xf32>
    %cst_37 = arith.constant dense<0.000000e+00> : vector<8xf32>
    %78 = vector.multi_reduction <add>, %77, %cst_37 [1] : vector<8x8xf32> to vector<8xf32>
    %79 = vector.shape_cast %78 : vector<8xf32> to vector<8x1xf32>
    %80 = tpu.reciprocal %79 {approx = true} : vector<8x1xf32> -> vector<8x1xf32>
    %81 = vector.broadcast %80 : vector<8x1xf32> to vector<8x8xf32>
    %82 = arith.mulf %77, %81 : vector<8x8xf32>
    %cst_38 = arith.constant dense<0.000000e+00> : vector<8x8xf32>
    %83 = tpu.matmul %82, %71, %cst_38 {dimension_numbers = #tpu.dot_dimension_numbers<[1], [0], [0], [1], [0, 0, 1, 1], [], []>} : vector<8x8xf32>, vector<8x8xf32>, vector<8x8xf32> -> vector<8x8xf32>
    %84 = tpu.concatenate %38, %53, %68, %83 in 1 : vector<8x8xf32>, vector<8x8xf32>, vector<8x8xf32>, vector<8x8xf32> -> vector<8x32xf32>
    %c0_39 = arith.constant 0 : index
    %c0_40 = arith.constant 0 : index
    %85 = vector.load %arg7[%c0_39, %c0_40] : memref<32x32xf32, #tpu.memory_space<vmem>>, vector<32x32xf32>
    %cst_41 = arith.constant dense<0.000000e+00> : vector<8x32xf32>
    %86 = tpu.matmul %84, %85, %cst_41 {dimension_numbers = #tpu.dot_dimension_numbers<[1], [0], [0], [1], [0, 0, 1, 1], [], []>} : vector<8x32xf32>, vector<32x32xf32>, vector<8x32xf32> -> vector<8x32xf32>
    %c0_42 = arith.constant 0 : index
    %c0_43 = arith.constant 0 : index
    %87 = vector.load %arg8[%c0_42, %c0_43] : memref<1x32xf32, #tpu.memory_space<vmem>>, vector<1x32xf32>
    %88 = vector.broadcast %87 : vector<1x32xf32> to vector<8x32xf32>
    %89 = arith.addf %86, %88 : vector<8x32xf32>
    %90 = arith.addf %1, %89 : vector<8x32xf32>
    %c0_44 = arith.constant 0 : index
    %c0_45 = arith.constant 0 : index
    %91 = vector.load %arg13[%c0_44, %c0_45] : memref<1x32xf32, #tpu.memory_space<vmem>>, vector<1x32xf32>
    %c0_46 = arith.constant 0 : index
    %c0_47 = arith.constant 0 : index
    %92 = vector.load %arg14[%c0_46, %c0_47] : memref<1x32xf32, #tpu.memory_space<vmem>>, vector<1x32xf32>
    %cst_48 = arith.constant dense<0.000000e+00> : vector<8xf32>
    %93 = vector.multi_reduction <add>, %90, %cst_48 [1] : vector<8x32xf32> to vector<8xf32>
    %94 = vector.shape_cast %93 : vector<8xf32> to vector<8x1xf32>
    %cst_49 = arith.constant 3.200000e+01 : f32
    %95 = vector.broadcast %cst_49 : f32 to vector<8x1xf32>
    %96 = arith.divf %94, %95 : vector<8x1xf32>
    %97 = vector.broadcast %96 : vector<8x1xf32> to vector<8x32xf32>
    %98 = arith.subf %90, %97 : vector<8x32xf32>
    %99 = arith.mulf %98, %98 : vector<8x32xf32>
    %cst_50 = arith.constant dense<0.000000e+00> : vector<8xf32>
    %100 = vector.multi_reduction <add>, %99, %cst_50 [1] : vector<8x32xf32> to vector<8xf32>
    %101 = vector.shape_cast %100 : vector<8xf32> to vector<8x1xf32>
    %cst_51 = arith.constant 3.200000e+01 : f32
    %102 = vector.broadcast %cst_51 : f32 to vector<8x1xf32>
    %103 = arith.divf %101, %102 : vector<8x1xf32>
    %cst_52 = arith.constant 9.99999974E-6 : f32
    %104 = vector.broadcast %cst_52 : f32 to vector<8x1xf32>
    %105 = arith.addf %103, %104 : vector<8x1xf32>
    %106 = math.rsqrt %105 : vector<8x1xf32>
    %107 = vector.broadcast %106 : vector<8x1xf32> to vector<8x32xf32>
    %108 = arith.mulf %98, %107 : vector<8x32xf32>
    %109 = vector.broadcast %91 : vector<1x32xf32> to vector<8x32xf32>
    %110 = arith.mulf %108, %109 : vector<8x32xf32>
    %111 = vector.broadcast %92 : vector<1x32xf32> to vector<8x32xf32>
    %112 = arith.addf %110, %111 : vector<8x32xf32>
    %113 = arith.addf %3, %7 : vector<16x32xf32>
    %114 = arith.addf %112, %5 : vector<8x32xf32>
    %c0_53 = arith.constant 0 : index
    %c0_54 = arith.constant 0 : index
    %115 = vector.load %arg9[%c0_53, %c0_54] : memref<32x96xf32, #tpu.memory_space<vmem>>, vector<32x32xf32>
    %cst_55 = arith.constant dense<0.000000e+00> : vector<8x32xf32>
    %116 = tpu.matmul %114, %115, %cst_55 {dimension_numbers = #tpu.dot_dimension_numbers<[1], [0], [0], [1], [0, 0, 1, 1], [], []>} : vector<8x32xf32>, vector<32x32xf32>, vector<8x32xf32> -> vector<8x32xf32>
    %c0_56 = arith.constant 0 : index
    %c0_57 = arith.constant 0 : index
    %117 = vector.load %arg10[%c0_56, %c0_57] : memref<1x96xf32, #tpu.memory_space<vmem>>, vector<1x32xf32>
    %118 = vector.broadcast %117 : vector<1x32xf32> to vector<8x32xf32>
    %119 = arith.addf %116, %118 : vector<8x32xf32>
    %c0_58 = arith.constant 0 : index
    %c32_59 = arith.constant 32 : index
    %120 = vector.load %arg9[%c0_58, %c32_59] : memref<32x96xf32, #tpu.memory_space<vmem>>, vector<32x32xf32>
    %cst_60 = arith.constant dense<0.000000e+00> : vector<16x32xf32>
    %121 = tpu.matmul %113, %120, %cst_60 {dimension_numbers = #tpu.dot_dimension_numbers<[1], [0], [0], [1], [0, 0, 1, 1], [], []>} : vector<16x32xf32>, vector<32x32xf32>, vector<16x32xf32> -> vector<16x32xf32>
    %c0_61 = arith.constant 0 : index
    %c32_62 = arith.constant 32 : index
    %122 = vector.load %arg10[%c0_61, %c32_62] : memref<1x96xf32, #tpu.memory_space<vmem>>, vector<1x32xf32>
    %123 = vector.broadcast %122 : vector<1x32xf32> to vector<16x32xf32>
    %124 = arith.addf %121, %123 : vector<16x32xf32>
    %c0_63 = arith.constant 0 : index
    %c64_64 = arith.constant 64 : index
    %125 = vector.load %arg9[%c0_63, %c64_64] : memref<32x96xf32, #tpu.memory_space<vmem>>, vector<32x32xf32>
    %cst_65 = arith.constant dense<0.000000e+00> : vector<16x32xf32>
    %126 = tpu.matmul %3, %125, %cst_65 {dimension_numbers = #tpu.dot_dimension_numbers<[1], [0], [0], [1], [0, 0, 1, 1], [], []>} : vector<16x32xf32>, vector<32x32xf32>, vector<16x32xf32> -> vector<16x32xf32>
    %c0_66 = arith.constant 0 : index
    %c64_67 = arith.constant 64 : index
    %127 = vector.load %arg10[%c0_66, %c64_67] : memref<1x96xf32, #tpu.memory_space<vmem>>, vector<1x32xf32>
    %128 = vector.broadcast %127 : vector<1x32xf32> to vector<16x32xf32>
    %129 = arith.addf %126, %128 : vector<16x32xf32>
    %130 = vector.extract_strided_slice %119 {offsets = [0, 0], sizes = [8, 8], strides = [1, 1]} : vector<8x32xf32> to vector<8x8xf32>
    %131 = vector.extract_strided_slice %124 {offsets = [0, 0], sizes = [16, 8], strides = [1, 1]} : vector<16x32xf32> to vector<16x8xf32>
    %132 = vector.extract_strided_slice %129 {offsets = [0, 0], sizes = [16, 8], strides = [1, 1]} : vector<16x32xf32> to vector<16x8xf32>
    %cst_68 = arith.constant dense<0.000000e+00> : vector<8x16xf32>
    %133 = tpu.matmul %130, %131, %cst_68 {dimension_numbers = #tpu.dot_dimension_numbers<[1], [1], [0], [0], [0, 0, 1, 0], [], []>} : vector<8x8xf32>, vector<16x8xf32>, vector<8x16xf32> -> vector<8x16xf32>
    %cst_69 = arith.constant dense<0xFF800000> : vector<8xf32>
    %134 = vector.multi_reduction <maximumf>, %133, %cst_69 [1] : vector<8x16xf32> to vector<8xf32>
    %135 = vector.shape_cast %134 : vector<8xf32> to vector<8x1xf32>
    %136 = vector.broadcast %135 : vector<8x1xf32> to vector<8x16xf32>
    %137 = arith.subf %133, %136 : vector<8x16xf32>
    %138 = math.exp %137 : vector<8x16xf32>
    %cst_70 = arith.constant dense<0.000000e+00> : vector<8xf32>
    %139 = vector.multi_reduction <add>, %138, %cst_70 [1] : vector<8x16xf32> to vector<8xf32>
    %140 = vector.shape_cast %139 : vector<8xf32> to vector<8x1xf32>
    %141 = tpu.reciprocal %140 {approx = true} : vector<8x1xf32> -> vector<8x1xf32>
    %142 = vector.broadcast %141 : vector<8x1xf32> to vector<8x16xf32>
    %143 = arith.mulf %138, %142 : vector<8x16xf32>
    %cst_71 = arith.constant dense<0.000000e+00> : vector<8x8xf32>
    %144 = tpu.matmul %143, %132, %cst_71 {dimension_numbers = #tpu.dot_dimension_numbers<[1], [0], [0], [1], [0, 0, 1, 1], [], []>} : vector<8x16xf32>, vector<16x8xf32>, vector<8x8xf32> -> vector<8x8xf32>
    %145 = vector.extract_strided_slice %119 {offsets = [0, 8], sizes = [8, 8], strides = [1, 1]} : vector<8x32xf32> to vector<8x8xf32>
    %146 = vector.extract_strided_slice %124 {offsets = [0, 8], sizes = [16, 8], strides = [1, 1]} : vector<16x32xf32> to vector<16x8xf32>
    %147 = vector.extract_strided_slice %129 {offsets = [0, 8], sizes = [16, 8], strides = [1, 1]} : vector<16x32xf32> to vector<16x8xf32>
    %cst_72 = arith.constant dense<0.000000e+00> : vector<8x16xf32>
    %148 = tpu.matmul %145, %146, %cst_72 {dimension_numbers = #tpu.dot_dimension_numbers<[1], [1], [0], [0], [0, 0, 1, 0], [], []>} : vector<8x8xf32>, vector<16x8xf32>, vector<8x16xf32> -> vector<8x16xf32>
    %cst_73 = arith.constant dense<0xFF800000> : vector<8xf32>
    %149 = vector.multi_reduction <maximumf>, %148, %cst_73 [1] : vector<8x16xf32> to vector<8xf32>
    %150 = vector.shape_cast %149 : vector<8xf32> to vector<8x1xf32>
    %151 = vector.broadcast %150 : vector<8x1xf32> to vector<8x16xf32>
    %152 = arith.subf %148, %151 : vector<8x16xf32>
    %153 = math.exp %152 : vector<8x16xf32>
    %cst_74 = arith.constant dense<0.000000e+00> : vector<8xf32>
    %154 = vector.multi_reduction <add>, %153, %cst_74 [1] : vector<8x16xf32> to vector<8xf32>
    %155 = vector.shape_cast %154 : vector<8xf32> to vector<8x1xf32>
    %156 = tpu.reciprocal %155 {approx = true} : vector<8x1xf32> -> vector<8x1xf32>
    %157 = vector.broadcast %156 : vector<8x1xf32> to vector<8x16xf32>
    %158 = arith.mulf %153, %157 : vector<8x16xf32>
    %cst_75 = arith.constant dense<0.000000e+00> : vector<8x8xf32>
    %159 = tpu.matmul %158, %147, %cst_75 {dimension_numbers = #tpu.dot_dimension_numbers<[1], [0], [0], [1], [0, 0, 1, 1], [], []>} : vector<8x16xf32>, vector<16x8xf32>, vector<8x8xf32> -> vector<8x8xf32>
    %160 = vector.extract_strided_slice %119 {offsets = [0, 16], sizes = [8, 8], strides = [1, 1]} : vector<8x32xf32> to vector<8x8xf32>
    %161 = vector.extract_strided_slice %124 {offsets = [0, 16], sizes = [16, 8], strides = [1, 1]} : vector<16x32xf32> to vector<16x8xf32>
    %162 = vector.extract_strided_slice %129 {offsets = [0, 16], sizes = [16, 8], strides = [1, 1]} : vector<16x32xf32> to vector<16x8xf32>
    %cst_76 = arith.constant dense<0.000000e+00> : vector<8x16xf32>
    %163 = tpu.matmul %160, %161, %cst_76 {dimension_numbers = #tpu.dot_dimension_numbers<[1], [1], [0], [0], [0, 0, 1, 0], [], []>} : vector<8x8xf32>, vector<16x8xf32>, vector<8x16xf32> -> vector<8x16xf32>
    %cst_77 = arith.constant dense<0xFF800000> : vector<8xf32>
    %164 = vector.multi_reduction <maximumf>, %163, %cst_77 [1] : vector<8x16xf32> to vector<8xf32>
    %165 = vector.shape_cast %164 : vector<8xf32> to vector<8x1xf32>
    %166 = vector.broadcast %165 : vector<8x1xf32> to vector<8x16xf32>
    %167 = arith.subf %163, %166 : vector<8x16xf32>
    %168 = math.exp %167 : vector<8x16xf32>
    %cst_78 = arith.constant dense<0.000000e+00> : vector<8xf32>
    %169 = vector.multi_reduction <add>, %168, %cst_78 [1] : vector<8x16xf32> to vector<8xf32>
    %170 = vector.shape_cast %169 : vector<8xf32> to vector<8x1xf32>
    %171 = tpu.reciprocal %170 {approx = true} : vector<8x1xf32> -> vector<8x1xf32>
    %172 = vector.broadcast %171 : vector<8x1xf32> to vector<8x16xf32>
    %173 = arith.mulf %168, %172 : vector<8x16xf32>
    %cst_79 = arith.constant dense<0.000000e+00> : vector<8x8xf32>
    %174 = tpu.matmul %173, %162, %cst_79 {dimension_numbers = #tpu.dot_dimension_numbers<[1], [0], [0], [1], [0, 0, 1, 1], [], []>} : vector<8x16xf32>, vector<16x8xf32>, vector<8x8xf32> -> vector<8x8xf32>
    %175 = vector.extract_strided_slice %119 {offsets = [0, 24], sizes = [8, 8], strides = [1, 1]} : vector<8x32xf32> to vector<8x8xf32>
    %176 = vector.extract_strided_slice %124 {offsets = [0, 24], sizes = [16, 8], strides = [1, 1]} : vector<16x32xf32> to vector<16x8xf32>
    %177 = vector.extract_strided_slice %129 {offsets = [0, 24], sizes = [16, 8], strides = [1, 1]} : vector<16x32xf32> to vector<16x8xf32>
    %cst_80 = arith.constant dense<0.000000e+00> : vector<8x16xf32>
    %178 = tpu.matmul %175, %176, %cst_80 {dimension_numbers = #tpu.dot_dimension_numbers<[1], [1], [0], [0], [0, 0, 1, 0], [], []>} : vector<8x8xf32>, vector<16x8xf32>, vector<8x16xf32> -> vector<8x16xf32>
    %cst_81 = arith.constant dense<0xFF800000> : vector<8xf32>
    %179 = vector.multi_reduction <maximumf>, %178, %cst_81 [1] : vector<8x16xf32> to vector<8xf32>
    %180 = vector.shape_cast %179 : vector<8xf32> to vector<8x1xf32>
    %181 = vector.broadcast %180 : vector<8x1xf32> to vector<8x16xf32>
    %182 = arith.subf %178, %181 : vector<8x16xf32>
    %183 = math.exp %182 : vector<8x16xf32>
    %cst_82 = arith.constant dense<0.000000e+00> : vector<8xf32>
    %184 = vector.multi_reduction <add>, %183, %cst_82 [1] : vector<8x16xf32> to vector<8xf32>
    %185 = vector.shape_cast %184 : vector<8xf32> to vector<8x1xf32>
    %186 = tpu.reciprocal %185 {approx = true} : vector<8x1xf32> -> vector<8x1xf32>
    %187 = vector.broadcast %186 : vector<8x1xf32> to vector<8x16xf32>
    %188 = arith.mulf %183, %187 : vector<8x16xf32>
    %cst_83 = arith.constant dense<0.000000e+00> : vector<8x8xf32>
    %189 = tpu.matmul %188, %177, %cst_83 {dimension_numbers = #tpu.dot_dimension_numbers<[1], [0], [0], [1], [0, 0, 1, 1], [], []>} : vector<8x16xf32>, vector<16x8xf32>, vector<8x8xf32> -> vector<8x8xf32>
    %190 = tpu.concatenate %144, %159, %174, %189 in 1 : vector<8x8xf32>, vector<8x8xf32>, vector<8x8xf32>, vector<8x8xf32> -> vector<8x32xf32>
    %c0_84 = arith.constant 0 : index
    %c0_85 = arith.constant 0 : index
    %191 = vector.load %arg11[%c0_84, %c0_85] : memref<32x32xf32, #tpu.memory_space<vmem>>, vector<32x32xf32>
    %cst_86 = arith.constant dense<0.000000e+00> : vector<8x32xf32>
    %192 = tpu.matmul %190, %191, %cst_86 {dimension_numbers = #tpu.dot_dimension_numbers<[1], [0], [0], [1], [0, 0, 1, 1], [], []>} : vector<8x32xf32>, vector<32x32xf32>, vector<8x32xf32> -> vector<8x32xf32>
    %c0_87 = arith.constant 0 : index
    %c0_88 = arith.constant 0 : index
    %193 = vector.load %arg12[%c0_87, %c0_88] : memref<1x32xf32, #tpu.memory_space<vmem>>, vector<1x32xf32>
    %194 = vector.broadcast %193 : vector<1x32xf32> to vector<8x32xf32>
    %195 = arith.addf %192, %194 : vector<8x32xf32>
    %196 = arith.addf %112, %195 : vector<8x32xf32>
    %c0_89 = arith.constant 0 : index
    %c0_90 = arith.constant 0 : index
    %197 = vector.load %arg15[%c0_89, %c0_90] : memref<1x32xf32, #tpu.memory_space<vmem>>, vector<1x32xf32>
    %c0_91 = arith.constant 0 : index
    %c0_92 = arith.constant 0 : index
    %198 = vector.load %arg16[%c0_91, %c0_92] : memref<1x32xf32, #tpu.memory_space<vmem>>, vector<1x32xf32>
    %cst_93 = arith.constant dense<0.000000e+00> : vector<8xf32>
    %199 = vector.multi_reduction <add>, %196, %cst_93 [1] : vector<8x32xf32> to vector<8xf32>
    %200 = vector.shape_cast %199 : vector<8xf32> to vector<8x1xf32>
    %cst_94 = arith.constant 3.200000e+01 : f32
    %201 = vector.broadcast %cst_94 : f32 to vector<8x1xf32>
    %202 = arith.divf %200, %201 : vector<8x1xf32>
    %203 = vector.broadcast %202 : vector<8x1xf32> to vector<8x32xf32>
    %204 = arith.subf %196, %203 : vector<8x32xf32>
    %205 = arith.mulf %204, %204 : vector<8x32xf32>
    %cst_95 = arith.constant dense<0.000000e+00> : vector<8xf32>
    %206 = vector.multi_reduction <add>, %205, %cst_95 [1] : vector<8x32xf32> to vector<8xf32>
    %207 = vector.shape_cast %206 : vector<8xf32> to vector<8x1xf32>
    %cst_96 = arith.constant 3.200000e+01 : f32
    %208 = vector.broadcast %cst_96 : f32 to vector<8x1xf32>
    %209 = arith.divf %207, %208 : vector<8x1xf32>
    %cst_97 = arith.constant 9.99999974E-6 : f32
    %210 = vector.broadcast %cst_97 : f32 to vector<8x1xf32>
    %211 = arith.addf %209, %210 : vector<8x1xf32>
    %212 = math.rsqrt %211 : vector<8x1xf32>
    %213 = vector.broadcast %212 : vector<8x1xf32> to vector<8x32xf32>
    %214 = arith.mulf %204, %213 : vector<8x32xf32>
    %215 = vector.broadcast %197 : vector<1x32xf32> to vector<8x32xf32>
    %216 = arith.mulf %214, %215 : vector<8x32xf32>
    %217 = vector.broadcast %198 : vector<1x32xf32> to vector<8x32xf32>
    %218 = arith.addf %216, %217 : vector<8x32xf32>
    %c0_98 = arith.constant 0 : index
    %c0_99 = arith.constant 0 : index
    %219 = vector.load %arg19[%c0_98, %c0_99] : memref<32x64xf32, #tpu.memory_space<vmem>>, vector<32x64xf32>
    %cst_100 = arith.constant dense<0.000000e+00> : vector<8x64xf32>
    %220 = tpu.matmul %218, %219, %cst_100 {dimension_numbers = #tpu.dot_dimension_numbers<[1], [0], [0], [1], [0, 0, 1, 1], [], []>} : vector<8x32xf32>, vector<32x64xf32>, vector<8x64xf32> -> vector<8x64xf32>
    %c0_101 = arith.constant 0 : index
    %c0_102 = arith.constant 0 : index
    %221 = vector.load %arg20[%c0_101, %c0_102] : memref<1x64xf32, #tpu.memory_space<vmem>>, vector<1x64xf32>
    %222 = vector.broadcast %221 : vector<1x64xf32> to vector<8x64xf32>
    %223 = arith.addf %220, %222 : vector<8x64xf32>
    %cst_103 = arith.constant 0.000000e+00 : f32
    %224 = vector.broadcast %cst_103 : f32 to vector<8x64xf32>
    %225 = arith.maximumf %223, %224 : vector<8x64xf32>
    %c0_104 = arith.constant 0 : index
    %c0_105 = arith.constant 0 : index
    %226 = vector.load %arg21[%c0_104, %c0_105] : memref<64x32xf32, #tpu.memory_space<vmem>>, vector<64x32xf32>
    %cst_106 = arith.constant dense<0.000000e+00> : vector<8x32xf32>
    %227 = tpu.matmul %225, %226, %cst_106 {dimension_numbers = #tpu.dot_dimension_numbers<[1], [0], [0], [1], [0, 0, 1, 1], [], []>} : vector<8x64xf32>, vector<64x32xf32>, vector<8x32xf32> -> vector<8x32xf32>
    %c0_107 = arith.constant 0 : index
    %c0_108 = arith.constant 0 : index
    %228 = vector.load %arg22[%c0_107, %c0_108] : memref<1x32xf32, #tpu.memory_space<vmem>>, vector<1x32xf32>
    %229 = vector.broadcast %228 : vector<1x32xf32> to vector<8x32xf32>
    %230 = arith.addf %227, %229 : vector<8x32xf32>
    %231 = arith.addf %218, %230 : vector<8x32xf32>
    %c0_109 = arith.constant 0 : index
    %c0_110 = arith.constant 0 : index
    %232 = vector.load %arg17[%c0_109, %c0_110] : memref<1x32xf32, #tpu.memory_space<vmem>>, vector<1x32xf32>
    %c0_111 = arith.constant 0 : index
    %c0_112 = arith.constant 0 : index
    %233 = vector.load %arg18[%c0_111, %c0_112] : memref<1x32xf32, #tpu.memory_space<vmem>>, vector<1x32xf32>
    %cst_113 = arith.constant dense<0.000000e+00> : vector<8xf32>
    %234 = vector.multi_reduction <add>, %231, %cst_113 [1] : vector<8x32xf32> to vector<8xf32>
    %235 = vector.shape_cast %234 : vector<8xf32> to vector<8x1xf32>
    %cst_114 = arith.constant 3.200000e+01 : f32
    %236 = vector.broadcast %cst_114 : f32 to vector<8x1xf32>
    %237 = arith.divf %235, %236 : vector<8x1xf32>
    %238 = vector.broadcast %237 : vector<8x1xf32> to vector<8x32xf32>
    %239 = arith.subf %231, %238 : vector<8x32xf32>
    %240 = arith.mulf %239, %239 : vector<8x32xf32>
    %cst_115 = arith.constant dense<0.000000e+00> : vector<8xf32>
    %241 = vector.multi_reduction <add>, %240, %cst_115 [1] : vector<8x32xf32> to vector<8xf32>
    %242 = vector.shape_cast %241 : vector<8xf32> to vector<8x1xf32>
    %cst_116 = arith.constant 3.200000e+01 : f32
    %243 = vector.broadcast %cst_116 : f32 to vector<8x1xf32>
    %244 = arith.divf %242, %243 : vector<8x1xf32>
    %cst_117 = arith.constant 9.99999974E-6 : f32
    %245 = vector.broadcast %cst_117 : f32 to vector<8x1xf32>
    %246 = arith.addf %244, %245 : vector<8x1xf32>
    %247 = math.rsqrt %246 : vector<8x1xf32>
    %248 = vector.broadcast %247 : vector<8x1xf32> to vector<8x32xf32>
    %249 = arith.mulf %239, %248 : vector<8x32xf32>
    %250 = vector.broadcast %232 : vector<1x32xf32> to vector<8x32xf32>
    %251 = arith.mulf %249, %250 : vector<8x32xf32>
    %252 = vector.broadcast %233 : vector<1x32xf32> to vector<8x32xf32>
    %253 = arith.addf %251, %252 : vector<8x32xf32>
    %c0_118 = arith.constant 0 : index
    %c0_119 = arith.constant 0 : index
    %c0_120 = arith.constant 0 : index
    %254 = vector.load %arg23[%c0_118, %c0_119, %c0_120] : memref<1x8x32xf32, #tpu.memory_space<vmem>>, vector<1x8x32xf32>
    %255 = vector.shape_cast %254 : vector<1x8x32xf32> to vector<8x32xf32>
    %256 = vector.shape_cast %253 : vector<8x32xf32> to vector<1x8x32xf32>
    tpu.vector_store %arg23[%c0_118, %c0_119, %c0_120], %256 {strides = array<i32>} : memref<1x8x32xf32, #tpu.memory_space<vmem>>, vector<1x8x32xf32>,
    return
  }
  func.func @transform_0(%arg0: i32) -> (i32, i32, i32) {
    %c0_i32 = arith.constant 0 : i32
    %c0_i32_0 = arith.constant 0 : i32
    %c0_i32_1 = arith.constant 0 : i32
    return %arg0, %c0_i32, %c0_i32_0 : i32, i32, i32
  }
  func.func @transform_1(%arg0: i32) -> (i32, i32, i32) {
    %c0_i32 = arith.constant 0 : i32
    %c0_i32_0 = arith.constant 0 : i32
    %c0_i32_1 = arith.constant 0 : i32
    return %arg0, %c0_i32, %c0_i32_0 : i32, i32, i32
  }
  func.func @transform_2(%arg0: i32) -> (i32, i32, i32) {
    %c0_i32 = arith.constant 0 : i32
    %c0_i32_0 = arith.constant 0 : i32
    %c0_i32_1 = arith.constant 0 : i32
    return %arg0, %c0_i32, %c0_i32_0 : i32, i32, i32
  }
  func.func @transform_3(%arg0: i32) -> (i32, i32, i32) {
    %c0_i32 = arith.constant 0 : i32
    %c0_i32_0 = arith.constant 0 : i32
    %c0_i32_1 = arith.constant 0 : i32
    return %arg0, %c0_i32, %c0_i32_0 : i32, i32, i32
  }
  func.func @transform_4(%arg0: i32) -> (i32, i32) {
    %c0_i32 = arith.constant 0 : i32
    %c0_i32_0 = arith.constant 0 : i32
    %c0_i32_1 = arith.constant 0 : i32
    return %c0_i32, %c0_i32_0 : i32, i32
  }
  func.func @transform_5(%arg0: i32) -> (i32, i32) {
    %c0_i32 = arith.constant 0 : i32
    %c0_i32_0 = arith.constant 0 : i32
    %c0_i32_1 = arith.constant 0 : i32
    return %c0_i32, %c0_i32_0 : i32, i32
  }
  func.func @transform_6(%arg0: i32) -> (i32, i32) {
    %c0_i32 = arith.constant 0 : i32
    %c0_i32_0 = arith.constant 0 : i32
    %c0_i32_1 = arith.constant 0 : i32
    return %c0_i32, %c0_i32_0 : i32, i32
  }
  func.func @transform_7(%arg0: i32) -> (i32, i32) {
    %c0_i32 = arith.constant 0 : i32
    %c0_i32_0 = arith.constant 0 : i32
    %c0_i32_1 = arith.constant 0 : i32
    return %c0_i32, %c0_i32_0 : i32, i32
  }
  func.func @transform_8(%arg0: i32) -> (i32, i32) {
    %c0_i32 = arith.constant 0 : i32
    %c0_i32_0 = arith.constant 0 : i32
    %c0_i32_1 = arith.constant 0 : i32
    return %c0_i32, %c0_i32_0 : i32, i32
  }
  func.func @transform_9(%arg0: i32) -> (i32, i32) {
    %c0_i32 = arith.constant 0 : i32
    %c0_i32_0 = arith.constant 0 : i32
    %c0_i32_1 = arith.constant 0 : i32
    return %c0_i32, %c0_i32_0 : i32, i32
  }
  func.func @transform_10(%arg0: i32) -> (i32, i32) {
    %c0_i32 = arith.constant 0 : i32
    %c0_i32_0 = arith.constant 0 : i32
    %c0_i32_1 = arith.constant 0 : i32
    return %c0_i32, %c0_i32_0 : i32, i32
  }
  func.func @transform_11(%arg0: i32) -> (i32, i32) {
    %c0_i32 = arith.constant 0 : i32
    %c0_i32_0 = arith.constant 0 : i32
    %c0_i32_1 = arith.constant 0 : i32
    return %c0_i32, %c0_i32_0 : i32, i32
  }
  func.func @transform_12(%arg0: i32) -> (i32, i32) {
    %c0_i32 = arith.constant 0 : i32
    %c0_i32_0 = arith.constant 0 : i32
    %c0_i32_1 = arith.constant 0 : i32
    return %c0_i32, %c0_i32_0 : i32, i32
  }
  func.func @transform_13(%arg0: i32) -> (i32, i32) {
    %c0_i32 = arith.constant 0 : i32
    %c0_i32_0 = arith.constant 0 : i32
    %c0_i32_1 = arith.constant 0 : i32
    return %c0_i32, %c0_i32_0 : i32, i32
  }
  func.func @transform_14(%arg0: i32) -> (i32, i32) {
    %c0_i32 = arith.constant 0 : i32
    %c0_i32_0 = arith.constant 0 : i32
    %c0_i32_1 = arith.constant 0 : i32
    return %c0_i32, %c0_i32_0 : i32, i32
  }
  func.func @transform_15(%arg0: i32) -> (i32, i32) {
    %c0_i32 = arith.constant 0 : i32
    %c0_i32_0 = arith.constant 0 : i32
    %c0_i32_1 = arith.constant 0 : i32
    return %c0_i32, %c0_i32_0 : i32, i32
  }
  func.func @transform_16(%arg0: i32) -> (i32, i32) {
    %c0_i32 = arith.constant 0 : i32
    %c0_i32_0 = arith.constant 0 : i32
    %c0_i32_1 = arith.constant 0 : i32
    return %c0_i32, %c0_i32_0 : i32, i32
  }
  func.func @transform_17(%arg0: i32) -> (i32, i32) {
    %c0_i32 = arith.constant 0 : i32
    %c0_i32_0 = arith.constant 0 : i32
    %c0_i32_1 = arith.constant 0 : i32
    return %c0_i32, %c0_i32_0 : i32, i32
  }
  func.func @transform_18(%arg0: i32) -> (i32, i32) {
    %c0_i32 = arith.constant 0 : i32
    %c0_i32_0 = arith.constant 0 : i32
    %c0_i32_1 = arith.constant 0 : i32
    return %c0_i32, %c0_i32_0 : i32, i32
  }
  func.func @transform_19(%arg0: i32) -> (i32, i32) {
    %c0_i32 = arith.constant 0 : i32
    %c0_i32_0 = arith.constant 0 : i32
    %c0_i32_1 = arith.constant 0 : i32
    return %c0_i32, %c0_i32_0 : i32, i32
  }
  func.func @transform_20(%arg0: i32) -> (i32, i32) {
    %c0_i32 = arith.constant 0 : i32
    %c0_i32_0 = arith.constant 0 : i32
    %c0_i32_1 = arith.constant 0 : i32
    return %c0_i32, %c0_i32_0 : i32, i32
  }
  func.func @transform_21(%arg0: i32) -> (i32, i32) {
    %c0_i32 = arith.constant 0 : i32
    %c0_i32_0 = arith.constant 0 : i32
    %c0_i32_1 = arith.constant 0 : i32
    return %c0_i32, %c0_i32_0 : i32, i32
  }
  func.func @transform_22(%arg0: i32) -> (i32, i32, i32) {
    %c0_i32 = arith.constant 0 : i32
    %c0_i32_0 = arith.constant 0 : i32
    %c0_i32_1 = arith.constant 0 : i32
    return %arg0, %c0_i32, %c0_i32_0 : i32, i32, i32
  }
}

</mosaic_0001>

<llo_original>
// kernel: transformer_forward.5
$region0: #{transformer_forward.5}
  #allocation0 [shape = 'u32[]', space=smem, size = 0x4, offset = 0x4, fixed_abs, tag = 'smem constant byte address 0x4 - core index']
  #allocation1 [shape = 'u32[144,128]{1,0:T(1,128)}', space=vmem, size = 0x12000, scoped, tag = 'internal scratch']
  %s0 = inlined_call_operand.vmem [shape: f32[2,16,32], index: 0, kind: input, shape index: {}]
  %s1 = inlined_call_operand.vmem [shape: f32[2,16,32], index: 1, kind: input, shape index: {}]
  %s2 = inlined_call_operand.vmem [shape: f32[32,96], index: 2, kind: input, shape index: {}]
  %s3 = inlined_call_operand.vmem [shape: f32[1,96], index: 3, kind: input, shape index: {}]
  %s4 = inlined_call_operand.vmem [shape: f32[32,32], index: 4, kind: input, shape index: {}]
  %s5 = inlined_call_operand.vmem [shape: f32[1,32], index: 5, kind: input, shape index: {}]
  %s6 = inlined_call_operand.vmem [shape: f32[1,32], index: 6, kind: input, shape index: {}]
  %s7 = inlined_call_operand.vmem [shape: f32[1,32], index: 7, kind: input, shape index: {}]
  %s8 = inlined_call_operand.vmem [shape: f32[32,64], index: 8, kind: input, shape index: {}]
  %s9 = inlined_call_operand.vmem [shape: f32[1,64], index: 9, kind: input, shape index: {}]
  %s10 = inlined_call_operand.vmem [shape: f32[64,32], index: 10, kind: input, shape index: {}]
  %s11 = inlined_call_operand.vmem [shape: f32[1,32], index: 11, kind: input, shape index: {}]
  %s12 = inlined_call_operand.vmem [shape: f32[1,32], index: 12, kind: input, shape index: {}]
  %s13 = inlined_call_operand.vmem [shape: f32[1,32], index: 13, kind: input, shape index: {}]
  %s14 = inlined_call_operand.vmem [shape: f32[2,16,32], index: 14, kind: output, shape index: {}]
  %s15 = sld [smem:[#allocation0]]
  $region89: #{transformer_forward.5} parent=0
    _
  %s17 = ssub.s32 1, %s15
  %s18 = scalar_select 0, %s17, %s15
  loop: start=0, step=1, limit=4
  $region2: #{transformer_forward.5} parent=0 // loop_pre_header
    _
  $region3: #{transformer_forward.5} parent=0 // loop_header
    %s20 = sphi 0, %s24
    %p21 = scmp.ge.s32.totalorder %s20, 4
    %s30 = sphi 0, %s32
    %s33 = sphi 0, %s30
    %s34 = sphi 0, %s33
    %s50 = sphi 0, %s34
    %s56 = sphi 0, %s58
    %s59 = sphi 0, %s56
    %s60 = sphi 0, %s59
    %s76 = sphi 0, %s60
    %s80 = sphi 0, %s80
    %s82 = sphi 0, %s80
    %s83 = sphi 0, %s82
    %s97 = sphi 0, %s83
    %s101 = sphi 0, %s101
    %s103 = sphi 0, %s101
    %s104 = sphi 0, %s103
    %s118 = sphi 0, %s104
    %s122 = sphi 0, %s122
    %s124 = sphi 0, %s122
    %s125 = sphi 0, %s124
    %s139 = sphi 0, %s125
    %s143 = sphi 0, %s143
    %s145 = sphi 0, %s143
    %s146 = sphi 0, %s145
    %s160 = sphi 0, %s146
    %s164 = sphi 0, %s164
    %s166 = sphi 0, %s164
    %s167 = sphi 0, %s166
    %s181 = sphi 0, %s167
    %s185 = sphi 0, %s185
    %s187 = sphi 0, %s185
    %s188 = sphi 0, %s187
    %s202 = sphi 0, %s188
    %s206 = sphi 0, %s206
    %s208 = sphi 0, %s206
    %s209 = sphi 0, %s208
    %s223 = sphi 0, %s209
    %s227 = sphi 0, %s227
    %s229 = sphi 0, %s227
    %s230 = sphi 0, %s229
    %s244 = sphi 0, %s230
    %s248 = sphi 0, %s248
    %s250 = sphi 0, %s248
    %s251 = sphi 0, %s250
    %s265 = sphi 0, %s251
    %s269 = sphi 0, %s269
    %s271 = sphi 0, %s269
    %s272 = sphi 0, %s271
    %s286 = sphi 0, %s272
    %s290 = sphi 0, %s290
    %s292 = sphi 0, %s290
    %s293 = sphi 0, %s292
    %s307 = sphi 0, %s293
    %s311 = sphi 0, %s311
    %s313 = sphi 0, %s311
    %s314 = sphi 0, %s313
    %s328 = sphi 0, %s314
    %s334 = sphi 0, %s336
    %s337 = sphi 0, %s334
    %s338 = sphi 0, %s337
    %s354 = sphi 0, %s338
  $region4: #{transformer_forward.5} parent=0 // loop_header_branch
    %23 = sbr.rel (%p21) target = $region8
  $region5: #{transformer_forward.5} parent=0 // loop_body
    %s25 = ssub.s32 %s20, 1
    %s26 = ssub.s32 %s20, 2
    %s27 = sadd.s32 %s20, 1
    %s28 = ssub.s32 %s20, %s27
    %p29 = scmp.eq.s32.totalorder %s28, 0
    %s31 = sadd.s32 %s30, 1
    %s32 = scalar_select %p29, %s30, %s31
    %p35 = pneg %p29
    %p36 = scmp.eq.s32.totalorder %s20, 1
    %p37 = por %p35, %p36
    %p38 = scmp.ne.s32.totalorder %s30, %s33
    %p39 = scmp.eq.s32.totalorder %s20, 0
    %p40 = por %p38, %p39
    %p41 = scmp.ne.s32.totalorder %s30, %s33
    %p42 = scmp.eq.s32.totalorder %s25, 1
    %p43 = por %p41, %p42
    %p44 = scmp.ne.s32.totalorder %s33, %s34
    %p45 = scmp.eq.s32.totalorder %s25, 0
    %p46 = por %p44, %p45
    %p47 = scmp.ne.s32.totalorder %s33, %s34
    %p48 = scmp.eq.s32.totalorder %s26, 1
    %p49 = por %p47, %p48
    %p51 = scmp.ne.s32.totalorder %s34, %s50
    %p52 = scmp.eq.s32.totalorder %s26, 0
    %p53 = por %p51, %p52
    %s54 = ssub.s32 %s20, %s27
    %p55 = scmp.eq.s32.totalorder %s54, 0
    %s57 = sadd.s32 %s56, 1
    %s58 = scalar_select %p55, %s56, %s57
    %p61 = pneg %p55
    %p62 = scmp.eq.s32.totalorder %s20, 1
    %p63 = por %p61, %p62
    %p64 = scmp.ne.s32.totalorder %s56, %s59
    %p65 = scmp.eq.s32.totalorder %s20, 0
    %p66 = por %p64, %p65
    %p67 = scmp.ne.s32.totalorder %s56, %s59
    %p68 = scmp.eq.s32.totalorder %s25, 1
    %p69 = por %p67, %p68
    %p70 = scmp.ne.s32.totalorder %s59, %s60
    %p71 = scmp.eq.s32.totalorder %s25, 0
    %p72 = por %p70, %p71
    %p73 = scmp.ne.s32.totalorder %s59, %s60
    %p74 = scmp.eq.s32.totalorder %s26, 1
    %p75 = por %p73, %p74
    %p77 = scmp.ne.s32.totalorder %s60, %s76
    %p78 = scmp.eq.s32.totalorder %s26, 0
    %p79 = por %p77, %p78
    %s81 = sadd.s32 %s80, 1
    %p84 = scmp.eq.s32.totalorder %s20, 1
    %p85 = scmp.ne.s32.totalorder %s80, %s82
    %p86 = scmp.eq.s32.totalorder %s20, 0
    %p87 = por %p85, %p86
    %p88 = scmp.ne.s32.totalorder %s80, %s82
    %p89 = scmp.eq.s32.totalorder %s25, 1
    %p90 = por %p88, %p89
    %p91 = scmp.ne.s32.totalorder %s82, %s83
    %p92 = scmp.eq.s32.totalorder %s25, 0
    %p93 = por %p91, %p92
    %p94 = scmp.ne.s32.totalorder %s82, %s83
    %p95 = scmp.eq.s32.totalorder %s26, 1
    %p96 = por %p94, %p95
    %p98 = scmp.ne.s32.totalorder %s83, %s97
    %p99 = scmp.eq.s32.totalorder %s26, 0
    %p100 = por %p98, %p99
    %s102 = sadd.s32 %s101, 1
    %p105 = scmp.eq.s32.totalorder %s20, 1
    %p106 = scmp.ne.s32.totalorder %s101, %s103
    %p107 = scmp.eq.s32.totalorder %s20, 0
    %p108 = por %p106, %p107
    %p109 = scmp.ne.s32.totalorder %s101, %s103
    %p110 = scmp.eq.s32.totalorder %s25, 1
    %p111 = por %p109, %p110
    %p112 = scmp.ne.s32.totalorder %s103, %s104
    %p113 = scmp.eq.s32.totalorder %s25, 0
    %p114 = por %p112, %p113
    %p115 = scmp.ne.s32.totalorder %s103, %s104
    %p116 = scmp.eq.s32.totalorder %s26, 1
    %p117 = por %p115, %p116
    %p119 = scmp.ne.s32.totalorder %s104, %s118
    %p120 = scmp.eq.s32.totalorder %s26, 0
    %p121 = por %p119, %p120
    %s123 = sadd.s32 %s122, 1
    %p126 = scmp.eq.s32.totalorder %s20, 1
    %p127 = scmp.ne.s32.totalorder %s122, %s124
    %p128 = scmp.eq.s32.totalorder %s20, 0
    %p129 = por %p127, %p128
    %p130 = scmp.ne.s32.totalorder %s122, %s124
    %p131 = scmp.eq.s32.totalorder %s25, 1
    %p132 = por %p130, %p131
    %p133 = scmp.ne.s32.totalorder %s124, %s125
    %p134 = scmp.eq.s32.totalorder %s25, 0
    %p135 = por %p133, %p134
    %p136 = scmp.ne.s32.totalorder %s124, %s125
    %p137 = scmp.eq.s32.totalorder %s26, 1
    %p138 = por %p136, %p137
    %p140 = scmp.ne.s32.totalorder %s125, %s139
    %p141 = scmp.eq.s32.totalorder %s26, 0
    %p142 = por %p140, %p141
    %s144 = sadd.s32 %s143, 1
    %p147 = scmp.eq.s32.totalorder %s20, 1
    %p148 = scmp.ne.s32.totalorder %s143, %s145
    %p149 = scmp.eq.s32.totalorder %s20, 0
    %p150 = por %p148, %p149
    %p151 = scmp.ne.s32.totalorder %s143, %s145
    %p152 = scmp.eq.s32.totalorder %s25, 1
    %p153 = por %p151, %p152
    %p154 = scmp.ne.s32.totalorder %s145, %s146
    %p155 = scmp.eq.s32.totalorder %s25, 0
    %p156 = por %p154, %p155
    %p157 = scmp.ne.s32.totalorder %s145, %s146
    %p158 = scmp.eq.s32.totalorder %s26, 1
    %p159 = por %p157, %p158
    %p161 = scmp.ne.s32.totalorder %s146, %s160
    %p162 = scmp.eq.s32.totalorder %s26, 0
    %p163 = por %p161, %p162
    %s165 = sadd.s32 %s164, 1
    %p168 = scmp.eq.s32.totalorder %s20, 1
    %p169 = scmp.ne.s32.totalorder %s164, %s166
    %p170 = scmp.eq.s32.totalorder %s20, 0
    %p171 = por %p169, %p170
    %p172 = scmp.ne.s32.totalorder %s164, %s166
    %p173 = scmp.eq.s32.totalorder %s25, 1
    %p174 = por %p172, %p173
    %p175 = scmp.ne.s32.totalorder %s166, %s167
    %p176 = scmp.eq.s32.totalorder %s25, 0
    %p177 = por %p175, %p176
    %p178 = scmp.ne.s32.totalorder %s166, %s167
    %p179 = scmp.eq.s32.totalorder %s26, 1
    %p180 = por %p178, %p179
    %p182 = scmp.ne.s32.totalorder %s167, %s181
    %p183 = scmp.eq.s32.totalorder %s26, 0
    %p184 = por %p182, %p183
    %s186 = sadd.s32 %s185, 1
    %p189 = scmp.eq.s32.totalorder %s20, 1
    %p190 = scmp.ne.s32.totalorder %s185, %s187
    %p191 = scmp.eq.s32.totalorder %s20, 0
    %p192 = por %p190, %p191
    %p193 = scmp.ne.s32.totalorder %s185, %s187
    %p194 = scmp.eq.s32.totalorder %s25, 1
    %p195 = por %p193, %p194
    %p196 = scmp.ne.s32.totalorder %s187, %s188
    %p197 = scmp.eq.s32.totalorder %s25, 0
    %p198 = por %p196, %p197
    %p199 = scmp.ne.s32.totalorder %s187, %s188
    %p200 = scmp.eq.s32.totalorder %s26, 1
    %p201 = por %p199, %p200
    %p203 = scmp.ne.s32.totalorder %s188, %s202
    %p204 = scmp.eq.s32.totalorder %s26, 0
    %p205 = por %p203, %p204
    %s207 = sadd.s32 %s206, 1
    %p210 = scmp.eq.s32.totalorder %s20, 1
    %p211 = scmp.ne.s32.totalorder %s206, %s208
    %p212 = scmp.eq.s32.totalorder %s20, 0
    %p213 = por %p211, %p212
    %p214 = scmp.ne.s32.totalorder %s206, %s208
    %p215 = scmp.eq.s32.totalorder %s25, 1
    %p216 = por %p214, %p215
    %p217 = scmp.ne.s32.totalorder %s208, %s209
    %p218 = scmp.eq.s32.totalorder %s25, 0
    %p219 = por %p217, %p218
    %p220 = scmp.ne.s32.totalorder %s208, %s209
    %p221 = scmp.eq.s32.totalorder %s26, 1
    %p222 = por %p220, %p221
    %p224 = scmp.ne.s32.totalorder %s209, %s223
    %p225 = scmp.eq.s32.totalorder %s26, 0
    %p226 = por %p224, %p225
    %s228 = sadd.s32 %s227, 1
    %p231 = scmp.eq.s32.totalorder %s20, 1
    %p232 = scmp.ne.s32.totalorder %s227, %s229
    %p233 = scmp.eq.s32.totalorder %s20, 0
    %p234 = por %p232, %p233
    %p235 = scmp.ne.s32.totalorder %s227, %s229
    %p236 = scmp.eq.s32.totalorder %s25, 1
    %p237 = por %p235, %p236
    %p238 = scmp.ne.s32.totalorder %s229, %s230
    %p239 = scmp.eq.s32.totalorder %s25, 0
    %p240 = por %p238, %p239
    %p241 = scmp.ne.s32.totalorder %s229, %s230
    %p242 = scmp.eq.s32.totalorder %s26, 1
    %p243 = por %p241, %p242
    %p245 = scmp.ne.s32.totalorder %s230, %s244
    %p246 = scmp.eq.s32.totalorder %s26, 0
    %p247 = por %p245, %p246
    %s249 = sadd.s32 %s248, 1
    %p252 = scmp.eq.s32.totalorder %s20, 1
    %p253 = scmp.ne.s32.totalorder %s248, %s250
    %p254 = scmp.eq.s32.totalorder %s20, 0
    %p255 = por %p253, %p254
    %p256 = scmp.ne.s32.totalorder %s248, %s250
    %p257 = scmp.eq.s32.totalorder %s25, 1
    %p258 = por %p256, %p257
    %p259 = scmp.ne.s32.totalorder %s250, %s251
    %p260 = scmp.eq.s32.totalorder %s25, 0
    %p261 = por %p259, %p260
    %p262 = scmp.ne.s32.totalorder %s250, %s251
    %p263 = scmp.eq.s32.totalorder %s26, 1
    %p264 = por %p262, %p263
    %p266 = scmp.ne.s32.totalorder %s251, %s265
    %p267 = scmp.eq.s32.totalorder %s26, 0
    %p268 = por %p266, %p267
    %s270 = sadd.s32 %s269, 1
    %p273 = scmp.eq.s32.totalorder %s20, 1
    %p274 = scmp.ne.s32.totalorder %s269, %s271
    %p275 = scmp.eq.s32.totalorder %s20, 0
    %p276 = por %p274, %p275
    %p277 = scmp.ne.s32.totalorder %s269, %s271
    %p278 = scmp.eq.s32.totalorder %s25, 1
    %p279 = por %p277, %p278
    %p280 = scmp.ne.s32.totalorder %s271, %s272
    %p281 = scmp.eq.s32.totalorder %s25, 0
    %p282 = por %p280, %p281
    %p283 = scmp.ne.s32.totalorder %s271, %s272
    %p284 = scmp.eq.s32.totalorder %s26, 1
    %p285 = por %p283, %p284
    %p287 = scmp.ne.s32.totalorder %s272, %s286
    %p288 = scmp.eq.s32.totalorder %s26, 0
    %p289 = por %p287, %p288
    %s291 = sadd.s32 %s290, 1
    %p294 = scmp.eq.s32.totalorder %s20, 1
    %p295 = scmp.ne.s32.totalorder %s290, %s292
    %p296 = scmp.eq.s32.totalorder %s20, 0
    %p297 = por %p295, %p296
    %p298 = scmp.ne.s32.totalorder %s290, %s292
    %p299 = scmp.eq.s32.totalorder %s25, 1
    %p300 = por %p298, %p299
    %p301 = scmp.ne.s32.totalorder %s292, %s293
    %p302 = scmp.eq.s32.totalorder %s25, 0
    %p303 = por %p301, %p302
    %p304 = scmp.ne.s32.totalorder %s292, %s293
    %p305 = scmp.eq.s32.totalorder %s26, 1
    %p306 = por %p304, %p305
    %p308 = scmp.ne.s32.totalorder %s293, %s307
    %p309 = scmp.eq.s32.totalorder %s26, 0
    %p310 = por %p308, %p309
    %s312 = sadd.s32 %s311, 1
    %p315 = scmp.eq.s32.totalorder %s20, 1
    %p316 = scmp.ne.s32.totalorder %s311, %s313
    %p317 = scmp.eq.s32.totalorder %s20, 0
    %p318 = por %p316, %p317
    %p319 = scmp.ne.s32.totalorder %s311, %s313
    %p320 = scmp.eq.s32.totalorder %s25, 1
    %p321 = por %p319, %p320
    %p322 = scmp.ne.s32.totalorder %s313, %s314
    %p323 = scmp.eq.s32.totalorder %s25, 0
    %p324 = por %p322, %p323
    %p325 = scmp.ne.s32.totalorder %s313, %s314
    %p326 = scmp.eq.s32.totalorder %s26, 1
    %p327 = por %p325, %p326
    %p329 = scmp.ne.s32.totalorder %s314, %s328
    %p330 = scmp.eq.s32.totalorder %s26, 0
    %p331 = por %p329, %p330
    %s332 = ssub.s32 %s20, %s27
    %p333 = scmp.eq.s32.totalorder %s332, 0
    %s335 = sadd.s32 %s334, 1
    %s336 = scalar_select %p333, %s334, %s335
    %p339 = pneg %p333
    %p340 = scmp.eq.s32.totalorder %s20, 1
    %p341 = por %p339, %p340
    %p342 = scmp.ne.s32.totalorder %s334, %s337
    %p343 = scmp.eq.s32.totalorder %s20, 0
    %p344 = por %p342, %p343
    %p345 = scmp.ne.s32.totalorder %s334, %s337
    %p346 = scmp.eq.s32.totalorder %s25, 1
    %p347 = por %p345, %p346
    %p348 = scmp.ne.s32.totalorder %s337, %s338
    %p349 = scmp.eq.s32.totalorder %s25, 0
    %p350 = por %p348, %p349
    %p351 = scmp.ne.s32.totalorder %s337, %s338
    %p352 = scmp.eq.s32.totalorder %s26, 1
    %p353 = por %p351, %p352
    %p355 = scmp.ne.s32.totalorder %s338, %s354
    %p356 = scmp.eq.s32.totalorder %s26, 0
    %p357 = por %p355, %p356
    %p358 = scmp.le.s32.totalorder 1, %s20
    %p359 = scmp.lt.s32.totalorder %s20, 3
    %p360 = pnand %p358, %p359
    %p361 = pneg %p360
    // Predicated region
    $region9: #{transformer_forward.5} parent=5 // pred_check
      _
    $region10: #{transformer_forward.5} parent=5 // pred_check_branch
      %363 = sbr.rel (%p360) target = $region12
    $region11: #{transformer_forward.5} parent=5 // pred_region
      %s364 = ssub.s32 %s20, 1
      // Predicated region
      $region13: #{transformer_forward.5} parent=11 // pred_check
        %p365 = pneg %p93
      $region14: #{transformer_forward.5} parent=11 // pred_check_branch
        %367 = sbr.rel (%p365) target = $region16
      $region15: #{transformer_forward.5} parent=11 // pred_region
        _
      $region16: #{transformer_forward.5} parent=11 // pred_fallthru
        _
      // Predicated region
      $region17: #{transformer_forward.5} parent=11 // pred_check
        %p368 = pneg %p114
      $region18: #{transformer_forward.5} parent=11 // pred_check_branch
        %370 = sbr.rel (%p368) target = $region20
      $region19: #{transformer_forward.5} parent=11 // pred_region
        _
      $region20: #{transformer_forward.5} parent=11 // pred_fallthru
        _
      // Predicated region
      $region21: #{transformer_forward.5} parent=11 // pred_check
        %p371 = pneg %p135
      $region22: #{transformer_forward.5} parent=11 // pred_check_branch
        %373 = sbr.rel (%p371) target = $region24
      $region23: #{transformer_forward.5} parent=11 // pred_region
        _
      $region24: #{transformer_forward.5} parent=11 // pred_fallthru
        _
      // Predicated region
      $region25: #{transformer_forward.5} parent=11 // pred_check
        %p374 = pneg %p156
      $region26: #{transformer_forward.5} parent=11 // pred_check_branch
        %376 = sbr.rel (%p374) target = $region28
      $region27: #{transformer_forward.5} parent=11 // pred_region
        _
      $region28: #{transformer_forward.5} parent=11 // pred_fallthru
        _
      // Predicated region
      $region29: #{transformer_forward.5} parent=11 // pred_check
        %p377 = pneg %p177
      $region30: #{transformer_forward.5} parent=11 // pred_check_branch
        %379 = sbr.rel (%p377) target = $region32
      $region31: #{transformer_forward.5} parent=11 // pred_region
        _
      $region32: #{transformer_forward.5} parent=11 // pred_fallthru
        _
      // Predicated region
      $region33: #{transformer_forward.5} parent=11 // pred_check
        %p380 = pneg %p198
      $region34: #{transformer_forward.5} parent=11 // pred_check_branch
        %382 = sbr.rel (%p380) target = $region36
      $region35: #{transformer_forward.5} parent=11 // pred_region
        _
      $region36: #{transformer_forward.5} parent=11 // pred_fallthru
        _
      // Predicated region
      $region37: #{transformer_forward.5} parent=11 // pred_check
        %p383 = pneg %p219
      $region38: #{transformer_forward.5} parent=11 // pred_check_branch
        %385 = sbr.rel (%p383) target = $region40
      $region39: #{transformer_forward.5} parent=11 // pred_region
        _
      $region40: #{transformer_forward.5} parent=11 // pred_fallthru
        _
      // Predicated region
      $region41: #{transformer_forward.5} parent=11 // pred_check
        %p386 = pneg %p240
      $region42: #{transformer_forward.5} parent=11 // pred_check_branch
        %388 = sbr.rel (%p386) target = $region44
      $region43: #{transformer_forward.5} parent=11 // pred_region
        _
      $region44: #{transformer_forward.5} parent=11 // pred_fallthru
        _
      // Predicated region
      $region45: #{transformer_forward.5} parent=11 // pred_check
        %p389 = pneg %p261
      $region46: #{transformer_forward.5} parent=11 // pred_check_branch
        %391 = sbr.rel (%p389) target = $region48
      $region47: #{transformer_forward.5} parent=11 // pred_region
        _
      $region48: #{transformer_forward.5} parent=11 // pred_fallthru
        _
      // Predicated region
      $region49: #{transformer_forward.5} parent=11 // pred_check
        %p392 = pneg %p282
      $region50: #{transformer_forward.5} parent=11 // pred_check_branch
        %394 = sbr.rel (%p392) target = $region52
      $region51: #{transformer_forward.5} parent=11 // pred_region
        _
      $region52: #{transformer_forward.5} parent=11 // pred_fallthru
        _
      // Predicated region
      $region53: #{transformer_forward.5} parent=11 // pred_check
        %p395 = pneg %p303
      $region54: #{transformer_forward.5} parent=11 // pred_check_branch
        %397 = sbr.rel (%p395) target = $region56
      $region55: #{transformer_forward.5} parent=11 // pred_region
        _
      $region56: #{transformer_forward.5} parent=11 // pred_fallthru
        _
      // Predicated region
      $region57: #{transformer_forward.5} parent=11 // pred_check
        %p398 = pneg %p324
      $region58: #{transformer_forward.5} parent=11 // pred_check_branch
        %400 = sbr.rel (%p398) target = $region60
      $region59: #{transformer_forward.5} parent=11 // pred_region
        _
      $region60: #{transformer_forward.5} parent=11 // pred_fallthru
        _
    $region12: #{transformer_forward.5} parent=5 // pred_fallthru
      _
    %p401 = scmp.lt.s32.totalorder %s20, 2
    // Predicated region
    $region61: #{transformer_forward.5} parent=5 // pred_check
      %p402 = pneg %p401
    $region62: #{transformer_forward.5} parent=5 // pred_check_branch
      %404 = sbr.rel (%p402) target = $region64
    $region63: #{transformer_forward.5} parent=5 // pred_region
      // Predicated region
      $region65: #{transformer_forward.5} parent=63 // pred_check
        %p405 = pneg %p40
      $region66: #{transformer_forward.5} parent=63 // pred_check_branch
        %407 = sbr.rel (%p405) target = $region68
      $region67: #{transformer_forward.5} parent=63 // pred_region
        %p408 = scmp.lt.s32.totalorder %s20, 1
        %s409 = scalar_select %p408, %s20, 1
        %s410 = smul.addr %s409, 2
        %s411 = smul.addr %s410, 8
        %s412 = scalar_lea.vmem %s0, %s411
      $region68: #{transformer_forward.5} parent=63 // pred_fallthru
        _
      // Predicated region
      $region69: #{transformer_forward.5} parent=63 // pred_check
        %p413 = pneg %p66
      $region70: #{transformer_forward.5} parent=63 // pred_check_branch
        %415 = sbr.rel (%p413) target = $region72
      $region71: #{transformer_forward.5} parent=63 // pred_region
        %p416 = scmp.lt.s32.totalorder %s20, 1
        %s417 = scalar_select %p416, %s20, 1
        %s418 = smul.addr %s417, 2
        %s419 = smul.addr %s418, 8
        %s420 = scalar_lea.vmem %s1, %s419
      $region72: #{transformer_forward.5} parent=63 // pred_fallthru
        _
    $region64: #{transformer_forward.5} parent=5 // pred_fallthru
      _
    %p421 = scmp.le.s32.totalorder 1, %s20
    %p422 = scmp.lt.s32.totalorder %s20, 3
    %p423 = pnand %p421, %p422
    %p424 = pneg %p423
    // Predicated region
    $region73: #{transformer_forward.5} parent=5 // pred_check
      _
    $region74: #{transformer_forward.5} parent=5 // pred_check_branch
      %426 = sbr.rel (%p423) target = $region76
    $region75: #{transformer_forward.5} parent=5 // pred_region
      %s427 = ssub.s32 %s20, 1
      %p428 = scmp.lt.s32.totalorder %s25, 1
      %s429 = scalar_select %p428, %s25, 1
      %s430 = smul.addr %s429, 2
      %s431 = smul.addr %s430, 8
      %s432 = scalar_lea.vmem %s0, %s431
      %p433 = pneg %p46
      %p434 = pneg %p43
      %p435 = scmp.lt.s32.totalorder %s25, 1
      %s436 = scalar_select %p435, %s25, 1
      %s437 = smul.addr %s436, 2
      %s438 = smul.addr %s437, 8
      %s439 = scalar_lea.vmem %s1, %s438
      %p440 = pneg %p72
      %p441 = pneg %p69
      %p442 = pneg %p93
      %p443 = pneg %p90
      %p444 = pneg %p114
      %p445 = pneg %p111
      %p446 = pneg %p135
      %p447 = pneg %p132
      %p448 = pneg %p156
      %p449 = pneg %p153
      %p450 = pneg %p177
      %p451 = pneg %p174
      %p452 = pneg %p198
      %p453 = pneg %p195
      %p454 = pneg %p219
      %p455 = pneg %p216
      %p456 = pneg %p240
      %p457 = pneg %p237
      %p458 = pneg %p261
      %p459 = pneg %p258
      %p460 = pneg %p282
      %p461 = pneg %p279
      %p462 = pneg %p303
      %p463 = pneg %p300
      %p464 = pneg %p324
      %p465 = pneg %p321
      %p466 = pneg %p350
      %p467 = pneg %p347
      %p468 = scmp.lt.s32.totalorder %s25, 1
      %s469 = scalar_select %p468, %s25, 1
      %s470 = smul.addr %s469, 2
      %s471 = smul.addr %s470, 8
      %s472 = scalar_lea.vmem %s14, %s471
      %p473 = scmp.lt.s32.totalorder %s25, 1
      %s474 = scalar_select %p473, %s25, 1
      %s475 = smul.addr %s474, 2
      %s476 = smul.addr %s475, 8
      %s477 = scalar_lea.vmem %s0, %s476
      %p478 = scmp.lt.s32.totalorder %s25, 1
      %s479 = scalar_select %p478, %s25, 1
      %s480 = smul.addr %s479, 2
      %s481 = smul.addr %s480, 8
      %s482 = scalar_lea.vmem %s1, %s481
      %p483 = scmp.lt.s32.totalorder %s25, 1
      %s484 = scalar_select %p483, %s25, 1
      %s485 = smul.addr %s484, 2
      %s486 = smul.addr %s485, 8
      %s487 = scalar_lea.vmem %s14, %s486
      %v488 = vld [vmem:[%s477] sm:$0xff]
      %v489 = vld [vmem:[%s477 + $0x8] sm:$0xff]
      %v490 = vld [vmem:[%s482] sm:$0xff]
      %v491 = vld [vmem:[%s482 + $0x8] sm:$0xff]
      %v492 = vadd.f32 %v488, %v490
      %v493 = vadd.f32 %v489, %v491
      %v494 = vld [vmem:[%s2] sm:$0xff]
      %v495 = vld [vmem:[%s2 + $0x8] sm:$0xff]
      %v496 = vld [vmem:[%s2 + $0x10] sm:$0xff]
      %v497 = vld [vmem:[%s2 + $0x18] sm:$0xff]
      %v498 = vld [vmem:[%s3] sm:$0x1]
      %v500 = vlaneseq
      %v501 = vshrl.u32 %v500, 7
      %v502 = vsub.s32 0, %v501
      %v503 = vrot.slane %v498, %v502
      %vm505 = vcmask 261120
      %v507 = vsel %vm505, %v492, 0
      %v510 = vsel %vm505, %v493, 0
      %512 = vmatprep.subr.mxu0 0.0
      %513 = vmatpush1.msra.mxu0 0.0
      %514 = vmatprep.subr.mxu0 0.0
      %515 = vmatpush1.msra.mxu0 0.0
      %516 = vmatprep.subr.mxu0 0.0
      %517 = vmatpush1.msra.mxu0 0.0
      %518 = vmatprep.subr.mxu0 0.0
      %519 = vmatpush1.msra.mxu0 0.0
      %520 = vmatprep.subr.mxu0 0.0
      %521 = vmatpush1.msra.mxu0 0.0
      %522 = vmatprep.subr.mxu0 0.0
      %523 = vmatpush1.msra.mxu0 0.0
      %524 = vmatprep.subr.mxu0 0.0
      %525 = vmatpush1.msra.mxu0 0.0
      %526 = vmatprep.subr.mxu0 0.0
      %527 = vmatpush1.msra.mxu0 0.0
      %528 = vmatprep.subr.mxu0 0.0
      %529 = vmatpush1.msra.mxu0 0.0
      %530 = vmatprep.subr.mxu0 0.0
      %531 = vmatpush1.msra.mxu0 0.0
      %532 = vmatprep.subr.mxu0 0.0
      %533 = vmatpush1.msra.mxu0 0.0
      %534 = vmatprep.subr.mxu0 0.0
      %535 = vmatpush1.msra.mxu0 0.0
      %536 = vmatprep.subr.mxu0 0.0
      %537 = vmatpush1.msra.mxu0 %v497
      %538 = vmatprep.subr.mxu0 0.0
      %539 = vmatpush1.msra.mxu0 %v496
      %540 = vmatprep.subr.mxu0 0.0
      %541 = vmatpush1.msra.mxu0 %v495
      %542 = vmatprep.subr.mxu0 0.0
      %543 = vmatpush1.msra.mxu0 %v494
      %544 = vmatprep.subr.mxu0 0.0
      %545 = vmatpush2.msra.mxu0 0.0
      %546 = vmatprep.subr.mxu0 0.0
      %547 = vmatpush2.msra.mxu0 0.0
      %548 = vmatprep.subr.mxu0 0.0
      %549 = vmatpush2.msra.mxu0 0.0
      %550 = vmatprep.subr.mxu0 0.0
      %551 = vmatpush2.msra.mxu0 0.0
      %552 = vmatprep.subr.mxu0 0.0
      %553 = vmatpush2.msra.mxu0 0.0
      %554 = vmatprep.subr.mxu0 0.0
      %555 = vmatpush2.msra.mxu0 0.0
      %556 = vmatprep.subr.mxu0 0.0
      %557 = vmatpush2.msra.mxu0 0.0
      %558 = vmatprep.subr.mxu0 0.0
      %559 = vmatpush2.msra.mxu0 0.0
      %560 = vmatprep.subr.mxu0 0.0
      %561 = vmatpush2.msra.mxu0 0.0
      %562 = vmatprep.subr.mxu0 0.0
      %563 = vmatpush2.msra.mxu0 0.0
      %564 = vmatprep.subr.mxu0 0.0
      %565 = vmatpush2.msra.mxu0 0.0
      %566 = vmatprep.subr.mxu0 0.0
      %567 = vmatpush2.msra.mxu0 0.0
      %568 = vmatprep.subr.mxu0 0.0
      %569 = vmatpush2.msra.mxu0 0.0
      %570 = vmatprep.subr.mxu0 0.0
      %571 = vmatpush2.msra.mxu0 0.0
      %572 = vmatprep.subr.mxu0 0.0
      %573 = vmatpush2.msra.mxu0 0.0
      %574 = vmatprep.subr.mxu0 0.0
      %575 = vmatpush2.msra.mxu0 0.0
      %576 = vmatprep.mubr.f32.mxu0 0.0
      %577 = vmatmul.mubr.f32.gmra.mxu0 %v507
      %v578 = vpop.f32.mrf.mxu0
      %v579 = vadd.f32 %v503, %v578
      %v580 = vpop.f32.mrf.mxu0
      %581 = vmatprep.mubr.f32.mxu0 0.0
      %582 = vmatmul.mubr.f32.gmra.mxu0 %v510
      %v583 = vpop.f32.mrf.mxu0
      %v584 = vadd.f32 %v503, %v583
      %v585 = vpop.f32.mrf.mxu0
      %586 = vdwg.mxu0
      %591 = vrot.lane.b32.xlu0 %v494, 96
      %v592 = vpop.permute.xlu0 %591
      %593 = vrot.lane.b32.xlu0 %v495, 96
      %v594 = vpop.permute.xlu0 %593
      %595 = vrot.lane.b32.xlu0 %v496, 96
      %v596 = vpop.permute.xlu0 %595
      %597 = vrot.lane.b32.xlu0 %v497, 96
      %v598 = vpop.permute.xlu0 %597
      %603 = vrot.lane.b32.xlu0 %v503, 96
      %v604 = vpop.permute.xlu0 %603
      %606 = vmatprep.subr.mxu0 0.0
      %607 = vmatpush1.msra.mxu0 0.0
      %608 = vmatprep.subr.mxu0 0.0
      %609 = vmatpush1.msra.mxu0 0.0
      %610 = vmatprep.subr.mxu0 0.0
      %611 = vmatpush1.msra.mxu0 0.0
      %612 = vmatprep.subr.mxu0 0.0
      %613 = vmatpush1.msra.mxu0 0.0
      %614 = vmatprep.subr.mxu0 0.0
      %615 = vmatpush1.msra.mxu0 0.0
      %616 = vmatprep.subr.mxu0 0.0
      %617 = vmatpush1.msra.mxu0 0.0
      %618 = vmatprep.subr.mxu0 0.0
      %619 = vmatpush1.msra.mxu0 0.0
      %620 = vmatprep.subr.mxu0 0.0
      %621 = vmatpush1.msra.mxu0 0.0
      %622 = vmatprep.subr.mxu0 0.0
      %623 = vmatpush1.msra.mxu0 0.0
      %624 = vmatprep.subr.mxu0 0.0
      %625 = vmatpush1.msra.mxu0 0.0
      %626 = vmatprep.subr.mxu0 0.0
      %627 = vmatpush1.msra.mxu0 0.0
      %628 = vmatprep.subr.mxu0 0.0
      %629 = vmatpush1.msra.mxu0 0.0
      %630 = vmatprep.subr.mxu0 0.0
      %631 = vmatpush1.msra.mxu0 %v598
      %632 = vmatprep.subr.mxu0 0.0
      %633 = vmatpush1.msra.mxu0 %v596
      %634 = vmatprep.subr.mxu0 0.0
      %635 = vmatpush1.msra.mxu0 %v594
      %636 = vmatprep.subr.mxu0 0.0
      %637 = vmatpush1.msra.mxu0 %v592
      %638 = vmatprep.subr.mxu0 0.0
      %639 = vmatpush2.msra.mxu0 0.0
      %640 = vmatprep.subr.mxu0 0.0
      %641 = vmatpush2.msra.mxu0 0.0
      %642 = vmatprep.subr.mxu0 0.0
      %643 = vmatpush2.msra.mxu0 0.0
      %644 = vmatprep.subr.mxu0 0.0
      %645 = vmatpush2.msra.mxu0 0.0
      %646 = vmatprep.subr.mxu0 0.0
      %647 = vmatpush2.msra.mxu0 0.0
      %648 = vmatprep.subr.mxu0 0.0
      %649 = vmatpush2.msra.mxu0 0.0
      %650 = vmatprep.subr.mxu0 0.0
      %651 = vmatpush2.msra.mxu0 0.0
      %652 = vmatprep.subr.mxu0 0.0
      %653 = vmatpush2.msra.mxu0 0.0
      %654 = vmatprep.subr.mxu0 0.0
      %655 = vmatpush2.msra.mxu0 0.0
      %656 = vmatprep.subr.mxu0 0.0
      %657 = vmatpush2.msra.mxu0 0.0
      %658 = vmatprep.subr.mxu0 0.0
      %659 = vmatpush2.msra.mxu0 0.0
      %660 = vmatprep.subr.mxu0 0.0
      %661 = vmatpush2.msra.mxu0 0.0
      %662 = vmatprep.subr.mxu0 0.0
      %663 = vmatpush2.msra.mxu0 0.0
      %664 = vmatprep.subr.mxu0 0.0
      %665 = vmatpush2.msra.mxu0 0.0
      %666 = vmatprep.subr.mxu0 0.0
      %667 = vmatpush2.msra.mxu0 0.0
      %668 = vmatprep.subr.mxu0 0.0
      %669 = vmatpush2.msra.mxu0 0.0
      %670 = vmatprep.mubr.f32.mxu0 0.0
      %671 = vmatmul.mubr.f32.gmra.mxu0 %v507
      %v672 = vpop.f32.mrf.mxu0
      %v673 = vadd.f32 %v604, %v672
      %v674 = vpop.f32.mrf.mxu0
      %675 = vmatprep.mubr.f32.mxu0 0.0
      %676 = vmatmul.mubr.f32.gmra.mxu0 %v510
      %v677 = vpop.f32.mrf.mxu0
      %v678 = vadd.f32 %v604, %v677
      %v679 = vpop.f32.mrf.mxu0
      %680 = vdwg.mxu0
      %681 = vrot.lane.b32.xlu0 %v494, 64
      %v682 = vpop.permute.xlu0 %681
      %683 = vrot.lane.b32.xlu0 %v495, 64
      %v684 = vpop.permute.xlu0 %683
      %685 = vrot.lane.b32.xlu0 %v496, 64
      %v686 = vpop.permute.xlu0 %685
      %687 = vrot.lane.b32.xlu0 %v497, 64
      %v688 = vpop.permute.xlu0 %687
      %693 = vrot.lane.b32.xlu0 %v503, 64
      %v694 = vpop.permute.xlu0 %693
      %v697 = vsel %vm505, %v488, 0
      %v700 = vsel %vm505, %v489, 0
      %702 = vmatprep.subr.mxu0 0.0
      %703 = vmatpush1.msra.mxu0 0.0
      %704 = vmatprep.subr.mxu0 0.0
      %705 = vmatpush1.msra.mxu0 0.0
      %706 = vmatprep.subr.mxu0 0.0
      %707 = vmatpush1.msra.mxu0 0.0
      %708 = vmatprep.subr.mxu0 0.0
      %709 = vmatpush1.msra.mxu0 0.0
      %710 = vmatprep.subr.mxu0 0.0
      %711 = vmatpush1.msra.mxu0 0.0
      %712 = vmatprep.subr.mxu0 0.0
      %713 = vmatpush1.msra.mxu0 0.0
      %714 = vmatprep.subr.mxu0 0.0
      %715 = vmatpush1.msra.mxu0 0.0
      %716 = vmatprep.subr.mxu0 0.0
      %717 = vmatpush1.msra.mxu0 0.0
      %718 = vmatprep.subr.mxu0 0.0
      %719 = vmatpush1.msra.mxu0 0.0
      %720 = vmatprep.subr.mxu0 0.0
      %721 = vmatpush1.msra.mxu0 0.0
      %722 = vmatprep.subr.mxu0 0.0
      %723 = vmatpush1.msra.mxu0 0.0
      %724 = vmatprep.subr.mxu0 0.0
      %725 = vmatpush1.msra.mxu0 0.0
      %726 = vmatprep.subr.mxu0 0.0
      %727 = vmatpush1.msra.mxu0 %v688
      %728 = vmatprep.subr.mxu0 0.0
      %729 = vmatpush1.msra.mxu0 %v686
      %730 = vmatprep.subr.mxu0 0.0
      %731 = vmatpush1.msra.mxu0 %v684
      %732 = vmatprep.subr.mxu0 0.0
      %733 = vmatpush1.msra.mxu0 %v682
      %734 = vmatprep.subr.mxu0 0.0
      %735 = vmatpush2.msra.mxu0 0.0
      %736 = vmatprep.subr.mxu0 0.0
      %737 = vmatpush2.msra.mxu0 0.0
      %738 = vmatprep.subr.mxu0 0.0
      %739 = vmatpush2.msra.mxu0 0.0
      %740 = vmatprep.subr.mxu0 0.0
      %741 = vmatpush2.msra.mxu0 0.0
      %742 = vmatprep.subr.mxu0 0.0
      %743 = vmatpush2.msra.mxu0 0.0
      %744 = vmatprep.subr.mxu0 0.0
      %745 = vmatpush2.msra.mxu0 0.0
      %746 = vmatprep.subr.mxu0 0.0
      %747 = vmatpush2.msra.mxu0 0.0
      %748 = vmatprep.subr.mxu0 0.0
      %749 = vmatpush2.msra.mxu0 0.0
      %750 = vmatprep.subr.mxu0 0.0
      %751 = vmatpush2.msra.mxu0 0.0
      %752 = vmatprep.subr.mxu0 0.0
      %753 = vmatpush2.msra.mxu0 0.0
      %754 = vmatprep.subr.mxu0 0.0
      %755 = vmatpush2.msra.mxu0 0.0
      %756 = vmatprep.subr.mxu0 0.0
      %757 = vmatpush2.msra.mxu0 0.0
      %758 = vmatprep.subr.mxu0 0.0
      %759 = vmatpush2.msra.mxu0 0.0
      %760 = vmatprep.subr.mxu0 0.0
      %761 = vmatpush2.msra.mxu0 0.0
      %762 = vmatprep.subr.mxu0 0.0
      %763 = vmatpush2.msra.mxu0 0.0
      %764 = vmatprep.subr.mxu0 0.0
      %765 = vmatpush2.msra.mxu0 0.0
      %766 = vmatprep.mubr.f32.mxu0 0.0
      %767 = vmatmul.mubr.f32.gmra.mxu0 %v697
      %v768 = vpop.f32.mrf.mxu0
      %v769 = vadd.f32 %v694, %v768
      %v770 = vpop.f32.mrf.mxu0
      %771 = vmatprep.mubr.f32.mxu0 0.0
      %772 = vmatmul.mubr.f32.gmra.mxu0 %v700
      %v773 = vpop.f32.mrf.mxu0
      %v774 = vadd.f32 %v694, %v773
      %v775 = vpop.f32.mrf.mxu0
      %776 = vdwg.mxu0
      %vm777 = vcmask 64512
      %v779 = vsel %vm777, %v579, 0
      %v782 = vsel %vm777, %v584, 0
      %v785 = vsel %vm777, %v673, 0
      %v788 = vsel %vm777, %v678, 0
      %790 = vmatprep.subr.mxu0 0.0
      %791 = vmatpush1.xpose.msra.mxu0 0.0
      %792 = vmatprep.subr.mxu0 0.0
      %793 = vmatpush1.xpose.msra.mxu0 0.0
      %794 = vmatprep.subr.mxu0 0.0
      %795 = vmatpush1.xpose.msra.mxu0 0.0
      %796 = vmatprep.subr.mxu0 0.0
      %797 = vmatpush1.xpose.msra.mxu0 0.0
      %798 = vmatprep.subr.mxu0 0.0
      %799 = vmatpush1.xpose.msra.mxu0 0.0
      %800 = vmatprep.subr.mxu0 0.0
      %801 = vmatpush1.xpose.msra.mxu0 0.0
      %802 = vmatprep.subr.mxu0 0.0
      %803 = vmatpush1.xpose.msra.mxu0 0.0
      %804 = vmatprep.subr.mxu0 0.0
      %805 = vmatpush1.xpose.msra.mxu0 0.0
      %806 = vmatprep.subr.mxu0 0.0
      %807 = vmatpush1.xpose.msra.mxu0 0.0
      %808 = vmatprep.subr.mxu0 0.0
      %809 = vmatpush1.xpose.msra.mxu0 0.0
      %810 = vmatprep.subr.mxu0 0.0
      %811 = vmatpush1.xpose.msra.mxu0 0.0
      %812 = vmatprep.subr.mxu0 0.0
      %813 = vmatpush1.xpose.msra.mxu0 0.0
      %814 = vmatprep.subr.mxu0 0.0
      %815 = vmatpush1.xpose.msra.mxu0 0.0
      %816 = vmatprep.subr.mxu0 0.0
      %817 = vmatpush1.xpose.msra.mxu0 0.0
      %818 = vmatprep.subr.mxu0 0.0
      %819 = vmatpush1.xpose.msra.mxu0 %v788
      %820 = vmatprep.subr.mxu0 0.0
      %821 = vmatpush1.xpose.msra.mxu0 %v785
      %822 = vmatprep.subr.mxu0 0.0
      %823 = vmatpush2.xpose.msra.mxu0 0.0
      %824 = vmatprep.subr.mxu0 0.0
      %825 = vmatpush2.xpose.msra.mxu0 0.0
      %826 = vmatprep.subr.mxu0 0.0
      %827 = vmatpush2.xpose.msra.mxu0 0.0
      %828 = vmatprep.subr.mxu0 0.0
      %829 = vmatpush2.xpose.msra.mxu0 0.0
      %830 = vmatprep.subr.mxu0 0.0
      %831 = vmatpush2.xpose.msra.mxu0 0.0
      %832 = vmatprep.subr.mxu0 0.0
      %833 = vmatpush2.xpose.msra.mxu0 0.0
      %834 = vmatprep.subr.mxu0 0.0
      %835 = vmatpush2.xpose.msra.mxu0 0.0
      %836 = vmatprep.subr.mxu0 0.0
      %837 = vmatpush2.xpose.msra.mxu0 0.0
      %838 = vmatprep.subr.mxu0 0.0
      %839 = vmatpush2.xpose.msra.mxu0 0.0
      %840 = vmatprep.subr.mxu0 0.0
      %841 = vmatpush2.xpose.msra.mxu0 0.0
      %842 = vmatprep.subr.mxu0 0.0
      %843 = vmatpush2.xpose.msra.mxu0 0.0
      %844 = vmatprep.subr.mxu0 0.0
      %845 = vmatpush2.xpose.msra.mxu0 0.0
      %846 = vmatprep.subr.mxu0 0.0
      %847 = vmatpush2.xpose.msra.mxu0 0.0
      %848 = vmatprep.subr.mxu0 0.0
      %849 = vmatpush2.xpose.msra.mxu0 0.0
      %850 = vmatprep.subr.mxu0 0.0
      %851 = vmatpush2.xpose.msra.mxu0 0.0
      %852 = vmatprep.subr.mxu0 0.0
      %853 = vmatpush2.xpose.msra.mxu0 0.0
      %854 = vmatprep.mubr.f32.mxu0 0.0
      %855 = vmatmul.mubr.f32.gmra.mxu0 %v779
      %v856 = vpop.f32.mrf.mxu0
      %v857 = vadd.f32 0.0, %v856
      %v858 = vpop.f32.mrf.mxu0
      %859 = vmatprep.mubr.f32.mxu0 0.0
      %860 = vmatmul.mubr.f32.gmra.mxu0 %v782
      %v861 = vpop.f32.mrf.mxu0
      %v862 = vadd.f32 0.0, %v861
      %v863 = vpop.f32.mrf.mxu0
      %864 = vdwg.mxu0
      %vm865 = vcmask 130048
      %v866 = vsel %vm865, %v857, -inf
      %867 = vmax.xlane.f32.xlu0 %v866
      %v868 = vpop.xlane.xlu0 %867
      %v869 = vsel %vm865, %v862, -inf
      %870 = vmax.xlane.f32.xlu0 %v869
      %v871 = vpop.xlane.xlu0 %870
      %v872 = vsub.f32 %v857, %v868
      %v873 = vsub.f32 %v862, %v871
      %v874 = vmul.f32 %v872, 1.442695
      %v875 = vpow.pop %v874
      %v876 = vmul.f32 %v873, 1.442695
      %v877 = vpow.pop %v876
      %v878 = vsel %vm865, %v875, 0.0
      %879 = vadd.xlane.f32.xlu0 %v878
      %v880 = vpop.xlane.xlu0 %879
      %v881 = vsel %vm865, %v877, 0.0
      %882 = vadd.xlane.f32.xlu0 %v881
      %v883 = vpop.xlane.xlu0 %882
      %v884 = vrcp.pop %v880
      %v885 = vrcp.pop %v883
      %v886 = vmul.f32 %v875, %v884
      %v887 = vmul.f32 %v877, %v885
      %v889 = vsel %vm865, %v886, 0
      %v892 = vsel %vm865, %v887, 0
      %894 = vmatprep.subr.mxu0 0.0
      %895 = vmatpush1.msra.mxu0 0.0
      %896 = vmatprep.subr.mxu0 0.0
      %897 = vmatpush1.msra.mxu0 0.0
      %898 = vmatprep.subr.mxu0 0.0
      %899 = vmatpush1.msra.mxu0 0.0
      %900 = vmatprep.subr.mxu0 0.0
      %901 = vmatpush1.msra.mxu0 0.0
      %902 = vmatprep.subr.mxu0 0.0
      %903 = vmatpush1.msra.mxu0 0.0
      %904 = vmatprep.subr.mxu0 0.0
      %905 = vmatpush1.msra.mxu0 0.0
      %906 = vmatprep.subr.mxu0 0.0
      %907 = vmatpush1.msra.mxu0 0.0
      %908 = vmatprep.subr.mxu0 0.0
      %909 = vmatpush1.msra.mxu0 0.0
      %910 = vmatprep.subr.mxu0 0.0
      %911 = vmatpush1.msra.mxu0 0.0
      %912 = vmatprep.subr.mxu0 0.0
      %913 = vmatpush1.msra.mxu0 0.0
      %914 = vmatprep.subr.mxu0 0.0
      %915 = vmatpush1.msra.mxu0 0.0
      %916 = vmatprep.subr.mxu0 0.0
      %917 = vmatpush1.msra.mxu0 0.0
      %918 = vmatprep.subr.mxu0 0.0
      %919 = vmatpush1.msra.mxu0 0.0
      %920 = vmatprep.subr.mxu0 0.0
      %921 = vmatpush1.msra.mxu0 0.0
      %922 = vmatprep.subr.mxu0 0.0
      %923 = vmatpush1.msra.mxu0 %v774
      %924 = vmatprep.subr.mxu0 0.0
      %925 = vmatpush1.msra.mxu0 %v769
      %926 = vmatprep.subr.mxu0 0.0
      %927 = vmatpush2.msra.mxu0 0.0
      %928 = vmatprep.subr.mxu0 0.0
      %929 = vmatpush2.msra.mxu0 0.0
      %930 = vmatprep.subr.mxu0 0.0
      %931 = vmatpush2.msra.mxu0 0.0
      %932 = vmatprep.subr.mxu0 0.0
      %933 = vmatpush2.msra.mxu0 0.0
      %934 = vmatprep.subr.mxu0 0.0
      %935 = vmatpush2.msra.mxu0 0.0
      %936 = vmatprep.subr.mxu0 0.0
      %937 = vmatpush2.msra.mxu0 0.0
      %938 = vmatprep.subr.mxu0 0.0
      %939 = vmatpush2.msra.mxu0 0.0
      %940 = vmatprep.subr.mxu0 0.0
      %941 = vmatpush2.msra.mxu0 0.0
      %942 = vmatprep.subr.mxu0 0.0
      %943 = vmatpush2.msra.mxu0 0.0
      %944 = vmatprep.subr.mxu0 0.0
      %945 = vmatpush2.msra.mxu0 0.0
      %946 = vmatprep.subr.mxu0 0.0
      %947 = vmatpush2.msra.mxu0 0.0
      %948 = vmatprep.subr.mxu0 0.0
      %949 = vmatpush2.msra.mxu0 0.0
      %950 = vmatprep.subr.mxu0 0.0
      %951 = vmatpush2.msra.mxu0 0.0
      %952 = vmatprep.subr.mxu0 0.0
      %953 = vmatpush2.msra.mxu0 0.0
      %954 = vmatprep.subr.mxu0 0.0
      %955 = vmatpush2.msra.mxu0 0.0
      %956 = vmatprep.subr.mxu0 0.0
      %957 = vmatpush2.msra.mxu0 0.0
      %958 = vmatprep.mubr.f32.mxu0 0.0
      %959 = vmatmul.mubr.f32.gmra.mxu0 %v889
      %v960 = vpop.f32.mrf.mxu0
      %v961 = vadd.f32 0.0, %v960
      %v962 = vpop.f32.mrf.mxu0
      %963 = vmatprep.mubr.f32.mxu0 0.0
      %964 = vmatmul.mubr.f32.gmra.mxu0 %v892
      %v965 = vpop.f32.mrf.mxu0
      %v966 = vadd.f32 0.0, %v965
      %v967 = vpop.f32.mrf.mxu0
      %968 = vdwg.mxu0
      %969 = vrot.lane.b32.xlu0 %v579, 120
      %v970 = vpop.permute.xlu0 %969
      %971 = vrot.lane.b32.xlu0 %v584, 120
      %v972 = vpop.permute.xlu0 %971
      %973 = vrot.lane.b32.xlu0 %v673, 120
      %v974 = vpop.permute.xlu0 %973
      %975 = vrot.lane.b32.xlu0 %v678, 120
      %v976 = vpop.permute.xlu0 %975
      %v977 = vsel %vm777, %v970, 0
      %v979 = vsel %vm777, %v972, 0
      %v981 = vsel %vm777, %v974, 0
      %v983 = vsel %vm777, %v976, 0
      %985 = vmatprep.subr.mxu0 0.0
      %986 = vmatpush1.xpose.msra.mxu0 0.0
      %987 = vmatprep.subr.mxu0 0.0
      %988 = vmatpush1.xpose.msra.mxu0 0.0
      %989 = vmatprep.subr.mxu0 0.0
      %990 = vmatpush1.xpose.msra.mxu0 0.0
      %991 = vmatprep.subr.mxu0 0.0
      %992 = vmatpush1.xpose.msra.mxu0 0.0
      %993 = vmatprep.subr.mxu0 0.0
      %994 = vmatpush1.xpose.msra.mxu0 0.0
      %995 = vmatprep.subr.mxu0 0.0
      %996 = vmatpush1.xpose.msra.mxu0 0.0
      %997 = vmatprep.subr.mxu0 0.0
      %998 = vmatpush1.xpose.msra.mxu0 0.0
      %999 = vmatprep.subr.mxu0 0.0
      %1000 = vmatpush1.xpose.msra.mxu0 0.0
      %1001 = vmatprep.subr.mxu0 0.0
      %1002 = vmatpush1.xpose.msra.mxu0 0.0
      %1003 = vmatprep.subr.mxu0 0.0
      %1004 = vmatpush1.xpose.msra.mxu0 0.0
      %1005 = vmatprep.subr.mxu0 0.0
      %1006 = vmatpush1.xpose.msra.mxu0 0.0
      %1007 = vmatprep.subr.mxu0 0.0
      %1008 = vmatpush1.xpose.msra.mxu0 0.0
      %1009 = vmatprep.subr.mxu0 0.0
      %1010 = vmatpush1.xpose.msra.mxu0 0.0
      %1011 = vmatprep.subr.mxu0 0.0
      %1012 = vmatpush1.xpose.msra.mxu0 0.0
      %1013 = vmatprep.subr.mxu0 0.0
      %1014 = vmatpush1.xpose.msra.mxu0 %v983
      %1015 = vmatprep.subr.mxu0 0.0
      %1016 = vmatpush1.xpose.msra.mxu0 %v981
      %1017 = vmatprep.subr.mxu0 0.0
      %1018 = vmatpush2.xpose.msra.mxu0 0.0
      %1019 = vmatprep.subr.mxu0 0.0
      %1020 = vmatpush2.xpose.msra.mxu0 0.0
      %1021 = vmatprep.subr.mxu0 0.0
      %1022 = vmatpush2.xpose.msra.mxu0 0.0
      %1023 = vmatprep.subr.mxu0 0.0
      %1024 = vmatpush2.xpose.msra.mxu0 0.0
      %1025 = vmatprep.subr.mxu0 0.0
      %1026 = vmatpush2.xpose.msra.mxu0 0.0
      %1027 = vmatprep.subr.mxu0 0.0
      %1028 = vmatpush2.xpose.msra.mxu0 0.0
      %1029 = vmatprep.subr.mxu0 0.0
      %1030 = vmatpush2.xpose.msra.mxu0 0.0
      %1031 = vmatprep.subr.mxu0 0.0
      %1032 = vmatpush2.xpose.msra.mxu0 0.0
      %1033 = vmatprep.subr.mxu0 0.0
      %1034 = vmatpush2.xpose.msra.mxu0 0.0
      %1035 = vmatprep.subr.mxu0 0.0
      %1036 = vmatpush2.xpose.msra.mxu0 0.0
      %1037 = vmatprep.subr.mxu0 0.0
      %1038 = vmatpush2.xpose.msra.mxu0 0.0
      %1039 = vmatprep.subr.mxu0 0.0
      %1040 = vmatpush2.xpose.msra.mxu0 0.0
      %1041 = vmatprep.subr.mxu0 0.0
      %1042 = vmatpush2.xpose.msra.mxu0 0.0
      %1043 = vmatprep.subr.mxu0 0.0
      %1044 = vmatpush2.xpose.msra.mxu0 0.0
      %1045 = vmatprep.subr.mxu0 0.0
      %1046 = vmatpush2.xpose.msra.mxu0 0.0
      %1047 = vmatprep.subr.mxu0 0.0
      %1048 = vmatpush2.xpose.msra.mxu0 0.0
      %1049 = vmatprep.mubr.f32.mxu0 0.0
      %1050 = vmatmul.mubr.f32.gmra.mxu0 %v977
      %v1051 = vpop.f32.mrf.mxu0
      %v1052 = vadd.f32 0.0, %v1051
      %v1053 = vpop.f32.mrf.mxu0
      %1054 = vmatprep.mubr.f32.mxu0 0.0
      %1055 = vmatmul.mubr.f32.gmra.mxu0 %v979
      %v1056 = vpop.f32.mrf.mxu0
      %v1057 = vadd.f32 0.0, %v1056
      %v1058 = vpop.f32.mrf.mxu0
      %1059 = vdwg.mxu0
      %v1060 = vsel %vm865, %v1052, -inf
      %1061 = vmax.xlane.f32.xlu0 %v1060
      %v1062 = vpop.xlane.xlu0 %1061
      %v1063 = vsel %vm865, %v1057, -inf
      %1064 = vmax.xlane.f32.xlu0 %v1063
      %v1065 = vpop.xlane.xlu0 %1064
      %v1066 = vsub.f32 %v1052, %v1062
      %v1067 = vsub.f32 %v1057, %v1065
      %v1068 = vmul.f32 %v1066, 1.442695
      %v1069 = vpow.pop %v1068
      %v1070 = vmul.f32 %v1067, 1.442695
      %v1071 = vpow.pop %v1070
      %v1072 = vsel %vm865, %v1069, 0.0
      %1073 = vadd.xlane.f32.xlu0 %v1072
      %v1074 = vpop.xlane.xlu0 %1073
      %v1075 = vsel %vm865, %v1071, 0.0
      %1076 = vadd.xlane.f32.xlu0 %v1075
      %v1077 = vpop.xlane.xlu0 %1076
      %v1078 = vrcp.pop %v1074
      %v1079 = vrcp.pop %v1077
      %v1080 = vmul.f32 %v1069, %v1078
      %v1081 = vmul.f32 %v1071, %v1079
      %1084 = vrot.lane.b32.xlu0 %v769, 120
      %v1085 = vpop.permute.xlu0 %1084
      %1086 = vrot.lane.b32.xlu0 %v774, 120
      %v1087 = vpop.permute.xlu0 %1086
      %v1091 = vsel %vm865, %v1080, 0
      %v1094 = vsel %vm865, %v1081, 0
      %1096 = vmatprep.subr.mxu0 0.0
      %1097 = vmatpush1.msra.mxu0 0.0
      %1098 = vmatprep.subr.mxu0 0.0
      %1099 = vmatpush1.msra.mxu0 0.0
      %1100 = vmatprep.subr.mxu0 0.0
      %1101 = vmatpush1.msra.mxu0 0.0
      %1102 = vmatprep.subr.mxu0 0.0
      %1103 = vmatpush1.msra.mxu0 0.0
      %1104 = vmatprep.subr.mxu0 0.0
      %1105 = vmatpush1.msra.mxu0 0.0
      %1106 = vmatprep.subr.mxu0 0.0
      %1107 = vmatpush1.msra.mxu0 0.0
      %1108 = vmatprep.subr.mxu0 0.0
      %1109 = vmatpush1.msra.mxu0 0.0
      %1110 = vmatprep.subr.mxu0 0.0
      %1111 = vmatpush1.msra.mxu0 0.0
      %1112 = vmatprep.subr.mxu0 0.0
      %1113 = vmatpush1.msra.mxu0 0.0
      %1114 = vmatprep.subr.mxu0 0.0
      %1115 = vmatpush1.msra.mxu0 0.0
      %1116 = vmatprep.subr.mxu0 0.0
      %1117 = vmatpush1.msra.mxu0 0.0
      %1118 = vmatprep.subr.mxu0 0.0
      %1119 = vmatpush1.msra.mxu0 0.0
      %1120 = vmatprep.subr.mxu0 0.0
      %1121 = vmatpush1.msra.mxu0 0.0
      %1122 = vmatprep.subr.mxu0 0.0
      %1123 = vmatpush1.msra.mxu0 0.0
      %1124 = vmatprep.subr.mxu0 0.0
      %1125 = vmatpush1.msra.mxu0 %v1087
      %1126 = vmatprep.subr.mxu0 0.0
      %1127 = vmatpush1.msra.mxu0 %v1085
      %1128 = vmatprep.subr.mxu0 0.0
      %1129 = vmatpush2.msra.mxu0 0.0
      %1130 = vmatprep.subr.mxu0 0.0
      %1131 = vmatpush2.msra.mxu0 0.0
      %1132 = vmatprep.subr.mxu0 0.0
      %1133 = vmatpush2.msra.mxu0 0.0
      %1134 = vmatprep.subr.mxu0 0.0
      %1135 = vmatpush2.msra.mxu0 0.0
      %1136 = vmatprep.subr.mxu0 0.0
      %1137 = vmatpush2.msra.mxu0 0.0
      %1138 = vmatprep.subr.mxu0 0.0
      %1139 = vmatpush2.msra.mxu0 0.0
      %1140 = vmatprep.subr.mxu0 0.0
      %1141 = vmatpush2.msra.mxu0 0.0
      %1142 = vmatprep.subr.mxu0 0.0
      %1143 = vmatpush2.msra.mxu0 0.0
      %1144 = vmatprep.subr.mxu0 0.0
      %1145 = vmatpush2.msra.mxu0 0.0
      %1146 = vmatprep.subr.mxu0 0.0
      %1147 = vmatpush2.msra.mxu0 0.0
      %1148 = vmatprep.subr.mxu0 0.0
      %1149 = vmatpush2.msra.mxu0 0.0
      %1150 = vmatprep.subr.mxu0 0.0
      %1151 = vmatpush2.msra.mxu0 0.0
      %1152 = vmatprep.subr.mxu0 0.0
      %1153 = vmatpush2.msra.mxu0 0.0
      %1154 = vmatprep.subr.mxu0 0.0
      %1155 = vmatpush2.msra.mxu0 0.0
      %1156 = vmatprep.subr.mxu0 0.0
      %1157 = vmatpush2.msra.mxu0 0.0
      %1158 = vmatprep.subr.mxu0 0.0
      %1159 = vmatpush2.msra.mxu0 0.0
      %1160 = vmatprep.mubr.f32.mxu0 0.0
      %1161 = vmatmul.mubr.f32.gmra.mxu0 %v1091
      %v1162 = vpop.f32.mrf.mxu0
      %v1163 = vadd.f32 0.0, %v1162
      %v1164 = vpop.f32.mrf.mxu0
      %1165 = vmatprep.mubr.f32.mxu0 0.0
      %1166 = vmatmul.mubr.f32.gmra.mxu0 %v1094
      %v1167 = vpop.f32.mrf.mxu0
      %v1168 = vadd.f32 0.0, %v1167
      %v1169 = vpop.f32.mrf.mxu0
      %1170 = vdwg.mxu0
      %1171 = vrot.lane.b32.xlu0 %v579, 112
      %v1172 = vpop.permute.xlu0 %1171
      %1173 = vrot.lane.b32.xlu0 %v584, 112
      %v1174 = vpop.permute.xlu0 %1173
      %1175 = vrot.lane.b32.xlu0 %v673, 112
      %v1176 = vpop.permute.xlu0 %1175
      %1177 = vrot.lane.b32.xlu0 %v678, 112
      %v1178 = vpop.permute.xlu0 %1177
      %v1179 = vsel %vm777, %v1172, 0
      %v1181 = vsel %vm777, %v1174, 0
      %v1183 = vsel %vm777, %v1176, 0
      %v1185 = vsel %vm777, %v1178, 0
      %1187 = vmatprep.subr.mxu0 0.0
      %1188 = vmatpush1.xpose.msra.mxu0 0.0
      %1189 = vmatprep.subr.mxu0 0.0
      %1190 = vmatpush1.xpose.msra.mxu0 0.0
      %1191 = vmatprep.subr.mxu0 0.0
      %1192 = vmatpush1.xpose.msra.mxu0 0.0
      %1193 = vmatprep.subr.mxu0 0.0
      %1194 = vmatpush1.xpose.msra.mxu0 0.0
      %1195 = vmatprep.subr.mxu0 0.0
      %1196 = vmatpush1.xpose.msra.mxu0 0.0
      %1197 = vmatprep.subr.mxu0 0.0
      %1198 = vmatpush1.xpose.msra.mxu0 0.0
      %1199 = vmatprep.subr.mxu0 0.0
      %1200 = vmatpush1.xpose.msra.mxu0 0.0
      %1201 = vmatprep.subr.mxu0 0.0
      %1202 = vmatpush1.xpose.msra.mxu0 0.0
      %1203 = vmatprep.subr.mxu0 0.0
      %1204 = vmatpush1.xpose.msra.mxu0 0.0
      %1205 = vmatprep.subr.mxu0 0.0
      %1206 = vmatpush1.xpose.msra.mxu0 0.0
      %1207 = vmatprep.subr.mxu0 0.0
      %1208 = vmatpush1.xpose.msra.mxu0 0.0
      %1209 = vmatprep.subr.mxu0 0.0
      %1210 = vmatpush1.xpose.msra.mxu0 0.0
      %1211 = vmatprep.subr.mxu0 0.0
      %1212 = vmatpush1.xpose.msra.mxu0 0.0
      %1213 = vmatprep.subr.mxu0 0.0
      %1214 = vmatpush1.xpose.msra.mxu0 0.0
      %1215 = vmatprep.subr.mxu0 0.0
      %1216 = vmatpush1.xpose.msra.mxu0 %v1185
      %1217 = vmatprep.subr.mxu0 0.0
      %1218 = vmatpush1.xpose.msra.mxu0 %v1183
      %1219 = vmatprep.subr.mxu0 0.0
      %1220 = vmatpush2.xpose.msra.mxu0 0.0
      %1221 = vmatprep.subr.mxu0 0.0
      %1222 = vmatpush2.xpose.msra.mxu0 0.0
      %1223 = vmatprep.subr.mxu0 0.0
      %1224 = vmatpush2.xpose.msra.mxu0 0.0
      %1225 = vmatprep.subr.mxu0 0.0
      %1226 = vmatpush2.xpose.msra.mxu0 0.0
      %1227 = vmatprep.subr.mxu0 0.0
      %1228 = vmatpush2.xpose.msra.mxu0 0.0
      %1229 = vmatprep.subr.mxu0 0.0
      %1230 = vmatpush2.xpose.msra.mxu0 0.0
      %1231 = vmatprep.subr.mxu0 0.0
      %1232 = vmatpush2.xpose.msra.mxu0 0.0
      %1233 = vmatprep.subr.mxu0 0.0
      %1234 = vmatpush2.xpose.msra.mxu0 0.0
      %1235 = vmatprep.subr.mxu0 0.0
      %1236 = vmatpush2.xpose.msra.mxu0 0.0
      %1237 = vmatprep.subr.mxu0 0.0
      %1238 = vmatpush2.xpose.msra.mxu0 0.0
      %1239 = vmatprep.subr.mxu0 0.0
      %1240 = vmatpush2.xpose.msra.mxu0 0.0
      %1241 = vmatprep.subr.mxu0 0.0
      %1242 = vmatpush2.xpose.msra.mxu0 0.0
      %1243 = vmatprep.subr.mxu0 0.0
      %1244 = vmatpush2.xpose.msra.mxu0 0.0
      %1245 = vmatprep.subr.mxu0 0.0
      %1246 = vmatpush2.xpose.msra.mxu0 0.0
      %1247 = vmatprep.subr.mxu0 0.0
      %1248 = vmatpush2.xpose.msra.mxu0 0.0
      %1249 = vmatprep.subr.mxu0 0.0
      %1250 = vmatpush2.xpose.msra.mxu0 0.0
      %1251 = vmatprep.mubr.f32.mxu0 0.0
      %1252 = vmatmul.mubr.f32.gmra.mxu0 %v1179
      %v1253 = vpop.f32.mrf.mxu0
      %v1254 = vadd.f32 0.0, %v1253
      %v1255 = vpop.f32.mrf.mxu0
      %1256 = vmatprep.mubr.f32.mxu0 0.0
      %1257 = vmatmul.mubr.f32.gmra.mxu0 %v1181
      %v1258 = vpop.f32.mrf.mxu0
      %v1259 = vadd.f32 0.0, %v1258
      %v1260 = vpop.f32.mrf.mxu0
      %1261 = vdwg.mxu0
      %v1262 = vsel %vm865, %v1254, -inf
      %1263 = vmax.xlane.f32.xlu0 %v1262
      %v1264 = vpop.xlane.xlu0 %1263
      %v1265 = vsel %vm865, %v1259, -inf
      %1266 = vmax.xlane.f32.xlu0 %v1265
      %v1267 = vpop.xlane.xlu0 %1266
      %v1268 = vsub.f32 %v1254, %v1264
      %v1269 = vsub.f32 %v1259, %v1267
      %v1270 = vmul.f32 %v1268, 1.442695
      %v1271 = vpow.pop %v1270
      %v1272 = vmul.f32 %v1269, 1.442695
      %v1273 = vpow.pop %v1272
      %v1274 = vsel %vm865, %v1271, 0.0
      %1275 = vadd.xlane.f32.xlu0 %v1274
      %v1276 = vpop.xlane.xlu0 %1275
      %v1277 = vsel %vm865, %v1273, 0.0
      %1278 = vadd.xlane.f32.xlu0 %v1277
      %v1279 = vpop.xlane.xlu0 %1278
      %v1280 = vrcp.pop %v1276
      %v1281 = vrcp.pop %v1279
      %v1282 = vmul.f32 %v1271, %v1280
      %v1283 = vmul.f32 %v1273, %v1281
      %1284 = vrot.lane.b32.xlu0 %v769, 112
      %v1285 = vpop.permute.xlu0 %1284
      %1286 = vrot.lane.b32.xlu0 %v774, 112
      %v1287 = vpop.permute.xlu0 %1286
      %v1291 = vsel %vm865, %v1282, 0
      %v1294 = vsel %vm865, %v1283, 0
      %1296 = vmatprep.subr.mxu0 0.0
      %1297 = vmatpush1.msra.mxu0 0.0
      %1298 = vmatprep.subr.mxu0 0.0
      %1299 = vmatpush1.msra.mxu0 0.0
      %1300 = vmatprep.subr.mxu0 0.0
      %1301 = vmatpush1.msra.mxu0 0.0
      %1302 = vmatprep.subr.mxu0 0.0
      %1303 = vmatpush1.msra.mxu0 0.0
      %1304 = vmatprep.subr.mxu0 0.0
      %1305 = vmatpush1.msra.mxu0 0.0
      %1306 = vmatprep.subr.mxu0 0.0
      %1307 = vmatpush1.msra.mxu0 0.0
      %1308 = vmatprep.subr.mxu0 0.0
      %1309 = vmatpush1.msra.mxu0 0.0
      %1310 = vmatprep.subr.mxu0 0.0
      %1311 = vmatpush1.msra.mxu0 0.0
      %1312 = vmatprep.subr.mxu0 0.0
      %1313 = vmatpush1.msra.mxu0 0.0
      %1314 = vmatprep.subr.mxu0 0.0
      %1315 = vmatpush1.msra.mxu0 0.0
      %1316 = vmatprep.subr.mxu0 0.0
      %1317 = vmatpush1.msra.mxu0 0.0
      %1318 = vmatprep.subr.mxu0 0.0
      %1319 = vmatpush1.msra.mxu0 0.0
      %1320 = vmatprep.subr.mxu0 0.0
      %1321 = vmatpush1.msra.mxu0 0.0
      %1322 = vmatprep.subr.mxu0 0.0
      %1323 = vmatpush1.msra.mxu0 0.0
      %1324 = vmatprep.subr.mxu0 0.0
      %1325 = vmatpush1.msra.mxu0 %v1287
      %1326 = vmatprep.subr.mxu0 0.0
      %1327 = vmatpush1.msra.mxu0 %v1285
      %1328 = vmatprep.subr.mxu0 0.0
      %1329 = vmatpush2.msra.mxu0 0.0
      %1330 = vmatprep.subr.mxu0 0.0
      %1331 = vmatpush2.msra.mxu0 0.0
      %1332 = vmatprep.subr.mxu0 0.0
      %1333 = vmatpush2.msra.mxu0 0.0
      %1334 = vmatprep.subr.mxu0 0.0
      %1335 = vmatpush2.msra.mxu0 0.0
      %1336 = vmatprep.subr.mxu0 0.0
      %1337 = vmatpush2.msra.mxu0 0.0
      %1338 = vmatprep.subr.mxu0 0.0
      %1339 = vmatpush2.msra.mxu0 0.0
      %1340 = vmatprep.subr.mxu0 0.0
      %1341 = vmatpush2.msra.mxu0 0.0
      %1342 = vmatprep.subr.mxu0 0.0
      %1343 = vmatpush2.msra.mxu0 0.0
      %1344 = vmatprep.subr.mxu0 0.0
      %1345 = vmatpush2.msra.mxu0 0.0
      %1346 = vmatprep.subr.mxu0 0.0
      %1347 = vmatpush2.msra.mxu0 0.0
      %1348 = vmatprep.subr.mxu0 0.0
      %1349 = vmatpush2.msra.mxu0 0.0
      %1350 = vmatprep.subr.mxu0 0.0
      %1351 = vmatpush2.msra.mxu0 0.0
      %1352 = vmatprep.subr.mxu0 0.0
      %1353 = vmatpush2.msra.mxu0 0.0
      %1354 = vmatprep.subr.mxu0 0.0
      %1355 = vmatpush2.msra.mxu0 0.0
      %1356 = vmatprep.subr.mxu0 0.0
      %1357 = vmatpush2.msra.mxu0 0.0
      %1358 = vmatprep.subr.mxu0 0.0
      %1359 = vmatpush2.msra.mxu0 0.0
      %1360 = vmatprep.mubr.f32.mxu0 0.0
      %1361 = vmatmul.mubr.f32.gmra.mxu0 %v1291
      %v1362 = vpop.f32.mrf.mxu0
      %v1363 = vadd.f32 0.0, %v1362
      %v1364 = vpop.f32.mrf.mxu0
      %1365 = vmatprep.mubr.f32.mxu0 0.0
      %1366 = vmatmul.mubr.f32.gmra.mxu0 %v1294
      %v1367 = vpop.f32.mrf.mxu0
      %v1368 = vadd.f32 0.0, %v1367
      %v1369 = vpop.f32.mrf.mxu0
      %1370 = vdwg.mxu0
      %1371 = vrot.lane.b32.xlu0 %v579, 104
      %v1372 = vpop.permute.xlu0 %1371
      %1373 = vrot.lane.b32.xlu0 %v584, 104
      %v1374 = vpop.permute.xlu0 %1373
      %1375 = vrot.lane.b32.xlu0 %v673, 104
      %v1376 = vpop.permute.xlu0 %1375
      %1377 = vrot.lane.b32.xlu0 %v678, 104
      %v1378 = vpop.permute.xlu0 %1377
      %v1379 = vsel %vm777, %v1372, 0
      %v1381 = vsel %vm777, %v1374, 0
      %v1383 = vsel %vm777, %v1376, 0
      %v1385 = vsel %vm777, %v1378, 0
      %1387 = vmatprep.subr.mxu0 0.0
      %1388 = vmatpush1.xpose.msra.mxu0 0.0
      %1389 = vmatprep.subr.mxu0 0.0
      %1390 = vmatpush1.xpose.msra.mxu0 0.0
      %1391 = vmatprep.subr.mxu0 0.0
      %1392 = vmatpush1.xpose.msra.mxu0 0.0
      %1393 = vmatprep.subr.mxu0 0.0
      %1394 = vmatpush1.xpose.msra.mxu0 0.0
      %1395 = vmatprep.subr.mxu0 0.0
      %1396 = vmatpush1.xpose.msra.mxu0 0.0
      %1397 = vmatprep.subr.mxu0 0.0
      %1398 = vmatpush1.xpose.msra.mxu0 0.0
      %1399 = vmatprep.subr.mxu0 0.0
      %1400 = vmatpush1.xpose.msra.mxu0 0.0
      %1401 = vmatprep.subr.mxu0 0.0
      %1402 = vmatpush1.xpose.msra.mxu0 0.0
      %1403 = vmatprep.subr.mxu0 0.0
      %1404 = vmatpush1.xpose.msra.mxu0 0.0
      %1405 = vmatprep.subr.mxu0 0.0
      %1406 = vmatpush1.xpose.msra.mxu0 0.0
      %1407 = vmatprep.subr.mxu0 0.0
      %1408 = vmatpush1.xpose.msra.mxu0 0.0
      %1409 = vmatprep.subr.mxu0 0.0
      %1410 = vmatpush1.xpose.msra.mxu0 0.0
      %1411 = vmatprep.subr.mxu0 0.0
      %1412 = vmatpush1.xpose.msra.mxu0 0.0
      %1413 = vmatprep.subr.mxu0 0.0
      %1414 = vmatpush1.xpose.msra.mxu0 0.0
      %1415 = vmatprep.subr.mxu0 0.0
      %1416 = vmatpush1.xpose.msra.mxu0 %v1385
      %1417 = vmatprep.subr.mxu0 0.0
      %1418 = vmatpush1.xpose.msra.mxu0 %v1383
      %1419 = vmatprep.subr.mxu0 0.0
      %1420 = vmatpush2.xpose.msra.mxu0 0.0
      %1421 = vmatprep.subr.mxu0 0.0
      %1422 = vmatpush2.xpose.msra.mxu0 0.0
      %1423 = vmatprep.subr.mxu0 0.0
      %1424 = vmatpush2.xpose.msra.mxu0 0.0
      %1425 = vmatprep.subr.mxu0 0.0
      %1426 = vmatpush2.xpose.msra.mxu0 0.0
      %1427 = vmatprep.subr.mxu0 0.0
      %1428 = vmatpush2.xpose.msra.mxu0 0.0
      %1429 = vmatprep.subr.mxu0 0.0
      %1430 = vmatpush2.xpose.msra.mxu0 0.0
      %1431 = vmatprep.subr.mxu0 0.0
      %1432 = vmatpush2.xpose.msra.mxu0 0.0
      %1433 = vmatprep.subr.mxu0 0.0
      %1434 = vmatpush2.xpose.msra.mxu0 0.0
      %1435 = vmatprep.subr.mxu0 0.0
      %1436 = vmatpush2.xpose.msra.mxu0 0.0
      %1437 = vmatprep.subr.mxu0 0.0
      %1438 = vmatpush2.xpose.msra.mxu0 0.0
      %1439 = vmatprep.subr.mxu0 0.0
      %1440 = vmatpush2.xpose.msra.mxu0 0.0
      %1441 = vmatprep.subr.mxu0 0.0
      %1442 = vmatpush2.xpose.msra.mxu0 0.0
      %1443 = vmatprep.subr.mxu0 0.0
      %1444 = vmatpush2.xpose.msra.mxu0 0.0
      %1445 = vmatprep.subr.mxu0 0.0
      %1446 = vmatpush2.xpose.msra.mxu0 0.0
      %1447 = vmatprep.subr.mxu0 0.0
      %1448 = vmatpush2.xpose.msra.mxu0 0.0
      %1449 = vmatprep.subr.mxu0 0.0
      %1450 = vmatpush2.xpose.msra.mxu0 0.0
      %1451 = vmatprep.mubr.f32.mxu0 0.0
      %1452 = vmatmul.mubr.f32.gmra.mxu0 %v1379
      %v1453 = vpop.f32.mrf.mxu0
      %v1454 = vadd.f32 0.0, %v1453
      %v1455 = vpop.f32.mrf.mxu0
      %1456 = vmatprep.mubr.f32.mxu0 0.0
      %1457 = vmatmul.mubr.f32.gmra.mxu0 %v1381
      %v1458 = vpop.f32.mrf.mxu0
      %v1459 = vadd.f32 0.0, %v1458
      %v1460 = vpop.f32.mrf.mxu0
      %1461 = vdwg.mxu0
      %v1462 = vsel %vm865, %v1454, -inf
      %1463 = vmax.xlane.f32.xlu0 %v1462
      %v1464 = vpop.xlane.xlu0 %1463
      %v1465 = vsel %vm865, %v1459, -inf
      %1466 = vmax.xlane.f32.xlu0 %v1465
      %v1467 = vpop.xlane.xlu0 %1466
      %v1468 = vsub.f32 %v1454, %v1464
      %v1469 = vsub.f32 %v1459, %v1467
      %v1470 = vmul.f32 %v1468, 1.442695
      %v1471 = vpow.pop %v1470
      %v1472 = vmul.f32 %v1469, 1.442695
      %v1473 = vpow.pop %v1472
      %v1474 = vsel %vm865, %v1471, 0.0
      %1475 = vadd.xlane.f32.xlu0 %v1474
      %v1476 = vpop.xlane.xlu0 %1475
      %v1477 = vsel %vm865, %v1473, 0.0
      %1478 = vadd.xlane.f32.xlu0 %v1477
      %v1479 = vpop.xlane.xlu0 %1478
      %v1480 = vrcp.pop %v1476
      %v1481 = vrcp.pop %v1479
      %v1482 = vmul.f32 %v1471, %v1480
      %v1483 = vmul.f32 %v1473, %v1481
      %1484 = vrot.lane.b32.xlu0 %v769, 104
      %v1485 = vpop.permute.xlu0 %1484
      %1486 = vrot.lane.b32.xlu0 %v774, 104
      %v1487 = vpop.permute.xlu0 %1486
      %v1491 = vsel %vm865, %v1482, 0
      %v1494 = vsel %vm865, %v1483, 0
      %1496 = vmatprep.subr.mxu0 0.0
      %1497 = vmatpush1.msra.mxu0 0.0
      %1498 = vmatprep.subr.mxu0 0.0
      %1499 = vmatpush1.msra.mxu0 0.0
      %1500 = vmatprep.subr.mxu0 0.0
      %1501 = vmatpush1.msra.mxu0 0.0
      %1502 = vmatprep.subr.mxu0 0.0
      %1503 = vmatpush1.msra.mxu0 0.0
      %1504 = vmatprep.subr.mxu0 0.0
      %1505 = vmatpush1.msra.mxu0 0.0
      %1506 = vmatprep.subr.mxu0 0.0
      %1507 = vmatpush1.msra.mxu0 0.0
      %1508 = vmatprep.subr.mxu0 0.0
      %1509 = vmatpush1.msra.mxu0 0.0
      %1510 = vmatprep.subr.mxu0 0.0
      %1511 = vmatpush1.msra.mxu0 0.0
      %1512 = vmatprep.subr.mxu0 0.0
      %1513 = vmatpush1.msra.mxu0 0.0
      %1514 = vmatprep.subr.mxu0 0.0
      %1515 = vmatpush1.msra.mxu0 0.0
      %1516 = vmatprep.subr.mxu0 0.0
      %1517 = vmatpush1.msra.mxu0 0.0
      %1518 = vmatprep.subr.mxu0 0.0
      %1519 = vmatpush1.msra.mxu0 0.0
      %1520 = vmatprep.subr.mxu0 0.0
      %1521 = vmatpush1.msra.mxu0 0.0
      %1522 = vmatprep.subr.mxu0 0.0
      %1523 = vmatpush1.msra.mxu0 0.0
      %1524 = vmatprep.subr.mxu0 0.0
      %1525 = vmatpush1.msra.mxu0 %v1487
      %1526 = vmatprep.subr.mxu0 0.0
      %1527 = vmatpush1.msra.mxu0 %v1485
      %1528 = vmatprep.subr.mxu0 0.0
      %1529 = vmatpush2.msra.mxu0 0.0
      %1530 = vmatprep.subr.mxu0 0.0
      %1531 = vmatpush2.msra.mxu0 0.0
      %1532 = vmatprep.subr.mxu0 0.0
      %1533 = vmatpush2.msra.mxu0 0.0
      %1534 = vmatprep.subr.mxu0 0.0
      %1535 = vmatpush2.msra.mxu0 0.0
      %1536 = vmatprep.subr.mxu0 0.0
      %1537 = vmatpush2.msra.mxu0 0.0
      %1538 = vmatprep.subr.mxu0 0.0
      %1539 = vmatpush2.msra.mxu0 0.0
      %1540 = vmatprep.subr.mxu0 0.0
      %1541 = vmatpush2.msra.mxu0 0.0
      %1542 = vmatprep.subr.mxu0 0.0
      %1543 = vmatpush2.msra.mxu0 0.0
      %1544 = vmatprep.subr.mxu0 0.0
      %1545 = vmatpush2.msra.mxu0 0.0
      %1546 = vmatprep.subr.mxu0 0.0
      %1547 = vmatpush2.msra.mxu0 0.0
      %1548 = vmatprep.subr.mxu0 0.0
      %1549 = vmatpush2.msra.mxu0 0.0
      %1550 = vmatprep.subr.mxu0 0.0
      %1551 = vmatpush2.msra.mxu0 0.0
      %1552 = vmatprep.subr.mxu0 0.0
      %1553 = vmatpush2.msra.mxu0 0.0
      %1554 = vmatprep.subr.mxu0 0.0
      %1555 = vmatpush2.msra.mxu0 0.0
      %1556 = vmatprep.subr.mxu0 0.0
      %1557 = vmatpush2.msra.mxu0 0.0
      %1558 = vmatprep.subr.mxu0 0.0
      %1559 = vmatpush2.msra.mxu0 0.0
      %1560 = vmatprep.mubr.f32.mxu0 0.0
      %1561 = vmatmul.mubr.f32.gmra.mxu0 %v1491
      %v1562 = vpop.f32.mrf.mxu0
      %v1563 = vadd.f32 0.0, %v1562
      %v1564 = vpop.f32.mrf.mxu0
      %1565 = vmatprep.mubr.f32.mxu0 0.0
      %1566 = vmatmul.mubr.f32.gmra.mxu0 %v1494
      %v1567 = vpop.f32.mrf.mxu0
      %v1568 = vadd.f32 0.0, %v1567
      %v1569 = vpop.f32.mrf.mxu0
      %1570 = vdwg.mxu0
      %1573 = vrot.lane.b32.xlu0 %v1163, 8
      %v1574 = vpop.permute.xlu0 %1573
      %1575 = vrot.lane.b32.xlu0 %v1168, 8
      %v1576 = vpop.permute.xlu0 %1575
      %1581 = vrot.lane.b32.xlu0 %v1363, 16
      %v1582 = vpop.permute.xlu0 %1581
      %1583 = vrot.lane.b32.xlu0 %v1368, 16
      %v1584 = vpop.permute.xlu0 %1583
      %1589 = vrot.lane.b32.xlu0 %v1563, 24
      %v1590 = vpop.permute.xlu0 %1589
      %1591 = vrot.lane.b32.xlu0 %v1568, 24
      %v1592 = vpop.permute.xlu0 %1591
      %v1595 = vsel %vm777, %v961, %v1574
      %v1596 = vsel %vm777, %v966, %v1576
      %v1597 = vsel %vm865, %v1595, %v1582
      %v1598 = vsel %vm865, %v1596, %v1584
      %vm1599 = vcmask 195584
      %v1600 = vsel %vm1599, %v1597, %v1590
      %v1601 = vsel %vm1599, %v1598, %v1592
      %v1602 = vld [vmem:[%s4] sm:$0xff]
      %v1603 = vld [vmem:[%s4 + $0x8] sm:$0xff]
      %v1604 = vld [vmem:[%s4 + $0x10] sm:$0xff]
      %v1605 = vld [vmem:[%s4 + $0x18] sm:$0xff]
      %v1606 = vld [vmem:[%s5] sm:$0x1]
      %v1608 = vlaneseq
      %v1609 = vshrl.u32 %v1608, 7
      %v1610 = vsub.s32 0, %v1609
      %v1611 = vrot.slane %v1606, %v1610
      %v1614 = vsel %vm505, %v1600, 0
      %v1617 = vsel %vm505, %v1601, 0
      %1619 = vmatprep.subr.mxu0 0.0
      %1620 = vmatpush1.msra.mxu0 0.0
      %1621 = vmatprep.subr.mxu0 0.0
      %1622 = vmatpush1.msra.mxu0 0.0
      %1623 = vmatprep.subr.mxu0 0.0
      %1624 = vmatpush1.msra.mxu0 0.0
      %1625 = vmatprep.subr.mxu0 0.0
      %1626 = vmatpush1.msra.mxu0 0.0
      %1627 = vmatprep.subr.mxu0 0.0
      %1628 = vmatpush1.msra.mxu0 0.0
      %1629 = vmatprep.subr.mxu0 0.0
      %1630 = vmatpush1.msra.mxu0 0.0
      %1631 = vmatprep.subr.mxu0 0.0
      %1632 = vmatpush1.msra.mxu0 0.0
      %1633 = vmatprep.subr.mxu0 0.0
      %1634 = vmatpush1.msra.mxu0 0.0
      %1635 = vmatprep.subr.mxu0 0.0
      %1636 = vmatpush1.msra.mxu0 0.0
      %1637 = vmatprep.subr.mxu0 0.0
      %1638 = vmatpush1.msra.mxu0 0.0
      %1639 = vmatprep.subr.mxu0 0.0
      %1640 = vmatpush1.msra.mxu0 0.0
      %1641 = vmatprep.subr.mxu0 0.0
      %1642 = vmatpush1.msra.mxu0 0.0
      %1643 = vmatprep.subr.mxu0 0.0
      %1644 = vmatpush1.msra.mxu0 %v1605
      %1645 = vmatprep.subr.mxu0 0.0
      %1646 = vmatpush1.msra.mxu0 %v1604
      %1647 = vmatprep.subr.mxu0 0.0
      %1648 = vmatpush1.msra.mxu0 %v1603
      %1649 = vmatprep.subr.mxu0 0.0
      %1650 = vmatpush1.msra.mxu0 %v1602
      %1651 = vmatprep.subr.mxu0 0.0
      %1652 = vmatpush2.msra.mxu0 0.0
      %1653 = vmatprep.subr.mxu0 0.0
      %1654 = vmatpush2.msra.mxu0 0.0
      %1655 = vmatprep.subr.mxu0 0.0
      %1656 = vmatpush2.msra.mxu0 0.0
      %1657 = vmatprep.subr.mxu0 0.0
      %1658 = vmatpush2.msra.mxu0 0.0
      %1659 = vmatprep.subr.mxu0 0.0
      %1660 = vmatpush2.msra.mxu0 0.0
      %1661 = vmatprep.subr.mxu0 0.0
      %1662 = vmatpush2.msra.mxu0 0.0
      %1663 = vmatprep.subr.mxu0 0.0
      %1664 = vmatpush2.msra.mxu0 0.0
      %1665 = vmatprep.subr.mxu0 0.0
      %1666 = vmatpush2.msra.mxu0 0.0
      %1667 = vmatprep.subr.mxu0 0.0
      %1668 = vmatpush2.msra.mxu0 0.0
      %1669 = vmatprep.subr.mxu0 0.0
      %1670 = vmatpush2.msra.mxu0 0.0
      %1671 = vmatprep.subr.mxu0 0.0
      %1672 = vmatpush2.msra.mxu0 0.0
      %1673 = vmatprep.subr.mxu0 0.0
      %1674 = vmatpush2.msra.mxu0 0.0
      %1675 = vmatprep.subr.mxu0 0.0
      %1676 = vmatpush2.msra.mxu0 0.0
      %1677 = vmatprep.subr.mxu0 0.0
      %1678 = vmatpush2.msra.mxu0 0.0
      %1679 = vmatprep.subr.mxu0 0.0
      %1680 = vmatpush2.msra.mxu0 0.0
      %1681 = vmatprep.subr.mxu0 0.0
      %1682 = vmatpush2.msra.mxu0 0.0
      %1683 = vmatprep.mubr.f32.mxu0 0.0
      %1684 = vmatmul.mubr.f32.gmra.mxu0 %v1614
      %v1685 = vpop.f32.mrf.mxu0
      %v1686 = vadd.f32 %v1611, %v1685
      %v1687 = vpop.f32.mrf.mxu0
      %1688 = vmatprep.mubr.f32.mxu0 0.0
      %1689 = vmatmul.mubr.f32.gmra.mxu0 %v1617
      %v1690 = vpop.f32.mrf.mxu0
      %v1691 = vadd.f32 %v1611, %v1690
      %v1692 = vpop.f32.mrf.mxu0
      %1693 = vdwg.mxu0
      %v1694 = vadd.f32 %v488, %v1686
      %v1695 = vadd.f32 %v489, %v1691
      %v1696 = vld [vmem:[%s6] sm:$0x1]
      %v1697 = vld [vmem:[%s7] sm:$0x1]
      %v1698 = vsel %vm505, %v1694, 0.0
      %1699 = vadd.xlane.f32.xlu0 %v1698
      %v1700 = vpop.xlane.xlu0 %1699
      %v1701 = vsel %vm505, %v1695, 0.0
      %1702 = vadd.xlane.f32.xlu0 %v1701
      %v1703 = vpop.xlane.xlu0 %1702
      %v1704 = vrcp.pop 32.0
      %v1705 = vmul.f32 %v1700, %v1704
      %v1706 = vmul.f32 %v1703, %v1704
      %v1707 = vsub.f32 %v1694, %v1705
      %v1708 = vsub.f32 %v1695, %v1706
      %v1709 = vmul.f32 %v1707, %v1707
      %v1710 = vmul.f32 %v1708, %v1708
      %v1711 = vsel %vm505, %v1709, 0.0
      %1712 = vadd.xlane.f32.xlu0 %v1711
      %v1713 = vpop.xlane.xlu0 %1712
      %v1714 = vsel %vm505, %v1710, 0.0
      %1715 = vadd.xlane.f32.xlu0 %v1714
      %v1716 = vpop.xlane.xlu0 %1715
      %v1717 = vmul.f32 %v1713, %v1704
      %v1718 = vmul.f32 %v1716, %v1704
      %v1719 = vadd.f32 %v1717, 1e-05
      %v1720 = vadd.f32 %v1718, 1e-05
      %v1721 = vrsqrt.pop %v1719
      %v1722 = vrsqrt.pop %v1720
      %v1723 = vmul.f32 %v1707, %v1721
      %v1724 = vmul.f32 %v1708, %v1722
      %v1726 = vlaneseq
      %v1727 = vshrl.u32 %v1726, 7
      %v1728 = vsub.s32 0, %v1727
      %v1729 = vrot.slane %v1696, %v1728
      %v1731 = vmul.f32 %v1723, %v1729
      %v1732 = vmul.f32 %v1724, %v1729
      %v1734 = vlaneseq
      %v1735 = vshrl.u32 %v1734, 7
      %v1736 = vsub.s32 0, %v1735
      %v1737 = vrot.slane %v1697, %v1736
      %v1739 = vadd.f32 %v1731, %v1737
      %v1740 = vadd.f32 %v1732, %v1737
      %v1741 = vld [vmem:[%s8] sm:$0xff]
      %v1742 = vld [vmem:[%s8 + $0x8] sm:$0xff]
      %v1743 = vld [vmem:[%s8 + $0x10] sm:$0xff]
      %v1744 = vld [vmem:[%s8 + $0x18] sm:$0xff]
      %v1745 = vld [vmem:[%s9] sm:$0x1]
      %v1747 = vlaneseq
      %v1748 = vshrl.u32 %v1747, 7
      %v1749 = vsub.s32 0, %v1748
      %v1750 = vrot.slane %v1745, %v1749
      %v1753 = vsel %vm505, %v1739, 0
      %v1756 = vsel %vm505, %v1740, 0
      %1758 = vmatprep.subr.mxu0 0.0
      %1759 = vmatpush1.msra.mxu0 0.0
      %1760 = vmatprep.subr.mxu0 0.0
      %1761 = vmatpush1.msra.mxu0 0.0
      %1762 = vmatprep.subr.mxu0 0.0
      %1763 = vmatpush1.msra.mxu0 0.0
      %1764 = vmatprep.subr.mxu0 0.0
      %1765 = vmatpush1.msra.mxu0 0.0
      %1766 = vmatprep.subr.mxu0 0.0
      %1767 = vmatpush1.msra.mxu0 0.0
      %1768 = vmatprep.subr.mxu0 0.0
      %1769 = vmatpush1.msra.mxu0 0.0
      %1770 = vmatprep.subr.mxu0 0.0
      %1771 = vmatpush1.msra.mxu0 0.0
      %1772 = vmatprep.subr.mxu0 0.0
      %1773 = vmatpush1.msra.mxu0 0.0
      %1774 = vmatprep.subr.mxu0 0.0
      %1775 = vmatpush1.msra.mxu0 0.0
      %1776 = vmatprep.subr.mxu0 0.0
      %1777 = vmatpush1.msra.mxu0 0.0
      %1778 = vmatprep.subr.mxu0 0.0
      %1779 = vmatpush1.msra.mxu0 0.0
      %1780 = vmatprep.subr.mxu0 0.0
      %1781 = vmatpush1.msra.mxu0 0.0
      %1782 = vmatprep.subr.mxu0 0.0
      %1783 = vmatpush1.msra.mxu0 %v1744
      %1784 = vmatprep.subr.mxu0 0.0
      %1785 = vmatpush1.msra.mxu0 %v1743
      %1786 = vmatprep.subr.mxu0 0.0
      %1787 = vmatpush1.msra.mxu0 %v1742
      %1788 = vmatprep.subr.mxu0 0.0
      %1789 = vmatpush1.msra.mxu0 %v1741
      %1790 = vmatprep.subr.mxu0 0.0
      %1791 = vmatpush2.msra.mxu0 0.0
      %1792 = vmatprep.subr.mxu0 0.0
      %1793 = vmatpush2.msra.mxu0 0.0
      %1794 = vmatprep.subr.mxu0 0.0
      %1795 = vmatpush2.msra.mxu0 0.0
      %1796 = vmatprep.subr.mxu0 0.0
      %1797 = vmatpush2.msra.mxu0 0.0
      %1798 = vmatprep.subr.mxu0 0.0
      %1799 = vmatpush2.msra.mxu0 0.0
      %1800 = vmatprep.subr.mxu0 0.0
      %1801 = vmatpush2.msra.mxu0 0.0
      %1802 = vmatprep.subr.mxu0 0.0
      %1803 = vmatpush2.msra.mxu0 0.0
      %1804 = vmatprep.subr.mxu0 0.0
      %1805 = vmatpush2.msra.mxu0 0.0
      %1806 = vmatprep.subr.mxu0 0.0
      %1807 = vmatpush2.msra.mxu0 0.0
      %1808 = vmatprep.subr.mxu0 0.0
      %1809 = vmatpush2.msra.mxu0 0.0
      %1810 = vmatprep.subr.mxu0 0.0
      %1811 = vmatpush2.msra.mxu0 0.0
      %1812 = vmatprep.subr.mxu0 0.0
      %1813 = vmatpush2.msra.mxu0 0.0
      %1814 = vmatprep.subr.mxu0 0.0
      %1815 = vmatpush2.msra.mxu0 0.0
      %1816 = vmatprep.subr.mxu0 0.0
      %1817 = vmatpush2.msra.mxu0 0.0
      %1818 = vmatprep.subr.mxu0 0.0
      %1819 = vmatpush2.msra.mxu0 0.0
      %1820 = vmatprep.subr.mxu0 0.0
      %1821 = vmatpush2.msra.mxu0 0.0
      %1822 = vmatprep.mubr.f32.mxu0 0.0
      %1823 = vmatmul.mubr.f32.gmra.mxu0 %v1753
      %v1824 = vpop.f32.mrf.mxu0
      %v1825 = vadd.f32 %v1750, %v1824
      %v1826 = vpop.f32.mrf.mxu0
      %1827 = vmatprep.mubr.f32.mxu0 0.0
      %1828 = vmatmul.mubr.f32.gmra.mxu0 %v1756
      %v1829 = vpop.f32.mrf.mxu0
      %v1830 = vadd.f32 %v1750, %v1829
      %v1831 = vpop.f32.mrf.mxu0
      %1832 = vdwg.mxu0
      %v1833 = vmax.f32 %v1825, 0.0
      %v1834 = vmax.f32 %v1830, 0.0
      %v1835 = vld [vmem:[%s10] sm:$0xff]
      %v1836 = vld [vmem:[%s10 + $0x8] sm:$0xff]
      %v1837 = vld [vmem:[%s10 + $0x10] sm:$0xff]
      %v1838 = vld [vmem:[%s10 + $0x18] sm:$0xff]
      %v1839 = vld [vmem:[%s10 + $0x20] sm:$0xff]
      %v1840 = vld [vmem:[%s10 + $0x28] sm:$0xff]
      %v1841 = vld [vmem:[%s10 + $0x30] sm:$0xff]
      %v1842 = vld [vmem:[%s10 + $0x38] sm:$0xff]
      %v1843 = vld [vmem:[%s11] sm:$0x1]
      %v1845 = vlaneseq
      %v1846 = vshrl.u32 %v1845, 7
      %v1847 = vsub.s32 0, %v1846
      %v1848 = vrot.slane %v1843, %v1847
      %vm1850 = vcmask 523264
      %v1852 = vsel %vm1850, %v1833, 0
      %v1855 = vsel %vm1850, %v1834, 0
      %1857 = vmatprep.subr.mxu0 0.0
      %1858 = vmatpush1.msra.mxu0 0.0
      %1859 = vmatprep.subr.mxu0 0.0
      %1860 = vmatpush1.msra.mxu0 0.0
      %1861 = vmatprep.subr.mxu0 0.0
      %1862 = vmatpush1.msra.mxu0 0.0
      %1863 = vmatprep.subr.mxu0 0.0
      %1864 = vmatpush1.msra.mxu0 0.0
      %1865 = vmatprep.subr.mxu0 0.0
      %1866 = vmatpush1.msra.mxu0 0.0
      %1867 = vmatprep.subr.mxu0 0.0
      %1868 = vmatpush1.msra.mxu0 0.0
      %1869 = vmatprep.subr.mxu0 0.0
      %1870 = vmatpush1.msra.mxu0 0.0
      %1871 = vmatprep.subr.mxu0 0.0
      %1872 = vmatpush1.msra.mxu0 0.0
      %1873 = vmatprep.subr.mxu0 0.0
      %1874 = vmatpush1.msra.mxu0 %v1842
      %1875 = vmatprep.subr.mxu0 0.0
      %1876 = vmatpush1.msra.mxu0 %v1841
      %1877 = vmatprep.subr.mxu0 0.0
      %1878 = vmatpush1.msra.mxu0 %v1840
      %1879 = vmatprep.subr.mxu0 0.0
      %1880 = vmatpush1.msra.mxu0 %v1839
      %1881 = vmatprep.subr.mxu0 0.0
      %1882 = vmatpush1.msra.mxu0 %v1838
      %1883 = vmatprep.subr.mxu0 0.0
      %1884 = vmatpush1.msra.mxu0 %v1837
      %1885 = vmatprep.subr.mxu0 0.0
      %1886 = vmatpush1.msra.mxu0 %v1836
      %1887 = vmatprep.subr.mxu0 0.0
      %1888 = vmatpush1.msra.mxu0 %v1835
      %1889 = vmatprep.subr.mxu0 0.0
      %1890 = vmatpush2.msra.mxu0 0.0
      %1891 = vmatprep.subr.mxu0 0.0
      %1892 = vmatpush2.msra.mxu0 0.0
      %1893 = vmatprep.subr.mxu0 0.0
      %1894 = vmatpush2.msra.mxu0 0.0
      %1895 = vmatprep.subr.mxu0 0.0
      %1896 = vmatpush2.msra.mxu0 0.0
      %1897 = vmatprep.subr.mxu0 0.0
      %1898 = vmatpush2.msra.mxu0 0.0
      %1899 = vmatprep.subr.mxu0 0.0
      %1900 = vmatpush2.msra.mxu0 0.0
      %1901 = vmatprep.subr.mxu0 0.0
      %1902 = vmatpush2.msra.mxu0 0.0
      %1903 = vmatprep.subr.mxu0 0.0
      %1904 = vmatpush2.msra.mxu0 0.0
      %1905 = vmatprep.subr.mxu0 0.0
      %1906 = vmatpush2.msra.mxu0 0.0
      %1907 = vmatprep.subr.mxu0 0.0
      %1908 = vmatpush2.msra.mxu0 0.0
      %1909 = vmatprep.subr.mxu0 0.0
      %1910 = vmatpush2.msra.mxu0 0.0
      %1911 = vmatprep.subr.mxu0 0.0
      %1912 = vmatpush2.msra.mxu0 0.0
      %1913 = vmatprep.subr.mxu0 0.0
      %1914 = vmatpush2.msra.mxu0 0.0
      %1915 = vmatprep.subr.mxu0 0.0
      %1916 = vmatpush2.msra.mxu0 0.0
      %1917 = vmatprep.subr.mxu0 0.0
      %1918 = vmatpush2.msra.mxu0 0.0
      %1919 = vmatprep.subr.mxu0 0.0
      %1920 = vmatpush2.msra.mxu0 0.0
      %1921 = vmatprep.mubr.f32.mxu0 0.0
      %1922 = vmatmul.mubr.f32.gmra.mxu0 %v1852
      %v1923 = vpop.f32.mrf.mxu0
      %v1924 = vadd.f32 %v1848, %v1923
      %v1925 = vpop.f32.mrf.mxu0
      %1926 = vmatprep.mubr.f32.mxu0 0.0
      %1927 = vmatmul.mubr.f32.gmra.mxu0 %v1855
      %v1928 = vpop.f32.mrf.mxu0
      %v1929 = vadd.f32 %v1848, %v1928
      %v1930 = vpop.f32.mrf.mxu0
      %1931 = vdwg.mxu0
      %v1932 = vadd.f32 %v1739, %v1924
      %v1933 = vadd.f32 %v1740, %v1929
      %v1934 = vld [vmem:[%s12] sm:$0x1]
      %v1935 = vld [vmem:[%s13] sm:$0x1]
      %v1936 = vsel %vm505, %v1932, 0.0
      %1937 = vadd.xlane.f32.xlu0 %v1936
      %v1938 = vpop.xlane.xlu0 %1937
      %v1939 = vsel %vm505, %v1933, 0.0
      %1940 = vadd.xlane.f32.xlu0 %v1939
      %v1941 = vpop.xlane.xlu0 %1940
      %v1942 = vmul.f32 %v1938, %v1704
      %v1943 = vmul.f32 %v1941, %v1704
      %v1944 = vsub.f32 %v1932, %v1942
      %v1945 = vsub.f32 %v1933, %v1943
      %v1946 = vmul.f32 %v1944, %v1944
      %v1947 = vmul.f32 %v1945, %v1945
      %v1948 = vsel %vm505, %v1946, 0.0
      %1949 = vadd.xlane.f32.xlu0 %v1948
      %v1950 = vpop.xlane.xlu0 %1949
      %v1951 = vsel %vm505, %v1947, 0.0
      %1952 = vadd.xlane.f32.xlu0 %v1951
      %v1953 = vpop.xlane.xlu0 %1952
      %v1954 = vmul.f32 %v1950, %v1704
      %v1955 = vmul.f32 %v1953, %v1704
      %v1956 = vadd.f32 %v1954, 1e-05
      %v1957 = vadd.f32 %v1955, 1e-05
      %v1958 = vrsqrt.pop %v1956
      %v1959 = vrsqrt.pop %v1957
      %v1960 = vmul.f32 %v1944, %v1958
      %v1961 = vmul.f32 %v1945, %v1959
      %v1963 = vlaneseq
      %v1964 = vshrl.u32 %v1963, 7
      %v1965 = vsub.s32 0, %v1964
      %v1966 = vrot.slane %v1934, %v1965
      %v1968 = vmul.f32 %v1960, %v1966
      %v1969 = vmul.f32 %v1961, %v1966
      %v1971 = vlaneseq
      %v1972 = vshrl.u32 %v1971, 7
      %v1973 = vsub.s32 0, %v1972
      %v1974 = vrot.slane %v1935, %v1973
      %v1976 = vadd.f32 %v1968, %v1974
      %v1977 = vadd.f32 %v1969, %v1974
      %1978 = vst.msk [vmem:[%s487] sm:$0xff] %vm505, %v1976
      %1979 = vst.msk [vmem:[%s487 + $0x8] sm:$0xff] %vm505, %v1977
      %p1980 = scmp.lt.s32.totalorder %s25, 1
      %s1981 = scalar_select %p1980, %s25, 1
      %s1982 = smul.addr %s1981, 2
      %s1983 = smul.addr %s1982, 8
      %s1984 = scalar_lea.vmem %s14, %s1983
      // Predicated region
      $region77: #{transformer_forward.5} parent=75 // pred_check
        %p1985 = pneg %p347
      $region78: #{transformer_forward.5} parent=75 // pred_check_branch
        %1987 = sbr.rel (%p1985) target = $region80
      $region79: #{transformer_forward.5} parent=75 // pred_region
        _
      $region80: #{transformer_forward.5} parent=75 // pred_fallthru
        _
    $region76: #{transformer_forward.5} parent=5 // pred_fallthru
      _
    %p1988 = scmp.le.s32.totalorder 2, %s20
    // Predicated region
    $region81: #{transformer_forward.5} parent=5 // pred_check
      %p1989 = pneg %p1988
    $region82: #{transformer_forward.5} parent=5 // pred_check_branch
      %1991 = sbr.rel (%p1989) target = $region84
    $region83: #{transformer_forward.5} parent=5 // pred_region
      %s1992 = ssub.s32 %s20, 2
      // Predicated region
      $region85: #{transformer_forward.5} parent=83 // pred_check
        %p1993 = pneg %p353
      $region86: #{transformer_forward.5} parent=83 // pred_check_branch
        %1995 = sbr.rel (%p1993) target = $region88
      $region87: #{transformer_forward.5} parent=83 // pred_region
        %p1996 = scmp.lt.s32.totalorder %s26, 1
        %s1997 = scalar_select %p1996, %s26, 1
        %s1998 = smul.addr %s1997, 2
        %s1999 = smul.addr %s1998, 8
        %s2000 = scalar_lea.vmem %s14, %s1999
      $region88: #{transformer_forward.5} parent=83 // pred_fallthru
        _
    $region84: #{transformer_forward.5} parent=5 // pred_fallthru
      _
  $region6: #{transformer_forward.5} parent=0 // loop_footer
    %s24 = sadd.s32 1, %s20
  $region7: #{transformer_forward.5} parent=0 // loop_footer_branch
    %19 = sbr.rel target = $region3
  $region8: #{transformer_forward.5} parent=0 // loop_exit
    _

// kernel: transformer_forward.4
$region0: #{transformer_forward.4}
  #allocation0 [shape = 'u32[]', space=smem, size = 0x4, offset = 0x4, fixed_abs, tag = 'smem constant byte address 0x4 - core index']
  #allocation1 [shape = 'u32[144,128]{1,0:T(1,128)}', space=vmem, size = 0x12000, scoped, tag = 'internal scratch']
  %s0 = inlined_call_operand.vmem [shape: f32[2,16,32], index: 0, kind: input, shape index: {}]
  %s1 = inlined_call_operand.vmem [shape: f32[2,16,32], index: 1, kind: input, shape index: {}]
  %s2 = inlined_call_operand.vmem [shape: f32[32,96], index: 2, kind: input, shape index: {}]
  %s3 = inlined_call_operand.vmem [shape: f32[1,96], index: 3, kind: input, shape index: {}]
  %s4 = inlined_call_operand.vmem [shape: f32[32,32], index: 4, kind: input, shape index: {}]
  %s5 = inlined_call_operand.vmem [shape: f32[1,32], index: 5, kind: input, shape index: {}]
  %s6 = inlined_call_operand.vmem [shape: f32[1,32], index: 6, kind: input, shape index: {}]
  %s7 = inlined_call_operand.vmem [shape: f32[1,32], index: 7, kind: input, shape index: {}]
  %s8 = inlined_call_operand.hbm [shape: f32[32,64], index: 8, kind: input, shape index: {}]
  %s9 = inlined_call_operand.vmem [shape: f32[1,64], index: 9, kind: input, shape index: {}]
  %s10 = inlined_call_operand.vmem [shape: f32[64,32], index: 10, kind: input, shape index: {}]
  %s11 = inlined_call_operand.vmem [shape: f32[1,32], index: 11, kind: input, shape index: {}]
  %s12 = inlined_call_operand.vmem [shape: f32[1,32], index: 12, kind: input, shape index: {}]
  %s13 = inlined_call_operand.vmem [shape: f32[1,32], index: 13, kind: input, shape index: {}]
  %s14 = inlined_call_operand.vmem [shape: f32[2,16,32], index: 14, kind: output, shape index: {}]
  %s15 = sld [smem:[#allocation0]]
  $region93: #{transformer_forward.4} parent=0
    _
  %s17 = ssub.s32 1, %s15
  %s18 = scalar_select 0, %s17, %s15
  $region1: #{transformer_forward.4} parent=0
    #allocation2 [shape = 'u8[16384]{0}', space=vmem, size = 0x4000, scoped, tag = 'input window, operand 8, single buffered']
    #allocation3 [shape = 's32[2]{0}', space=sflag, size = 0x8, scoped, tag = 'scoped memory for transformer_forward.4']
    %19 = vsyncpa [#allocation3], 0
    loop: start=0, step=1, limit=4
    $region2: #{transformer_forward.4} parent=1 // loop_pre_header
      _
    $region3: #{transformer_forward.4} parent=1 // loop_header
      %s21 = sphi 0, %s25
      %p22 = scmp.ge.s32.totalorder %s21, 4
      %s31 = sphi 0, %s33
      %s34 = sphi 0, %s31
      %s35 = sphi 0, %s34
      %s51 = sphi 0, %s35
      %s57 = sphi 0, %s59
      %s60 = sphi 0, %s57
      %s61 = sphi 0, %s60
      %s77 = sphi 0, %s61
      %s81 = sphi 0, %s81
      %s83 = sphi 0, %s81
      %s84 = sphi 0, %s83
      %s98 = sphi 0, %s84
      %s102 = sphi 0, %s102
      %s104 = sphi 0, %s102
      %s105 = sphi 0, %s104
      %s119 = sphi 0, %s105
      %s123 = sphi 0, %s123
      %s125 = sphi 0, %s123
      %s126 = sphi 0, %s125
      %s140 = sphi 0, %s126
      %s144 = sphi 0, %s144
      %s146 = sphi 0, %s144
      %s147 = sphi 0, %s146
      %s161 = sphi 0, %s147
      %s165 = sphi 0, %s165
      %s167 = sphi 0, %s165
      %s168 = sphi 0, %s167
      %s182 = sphi 0, %s168
      %s186 = sphi 0, %s186
      %s188 = sphi 0, %s186
      %s189 = sphi 0, %s188
      %s203 = sphi 0, %s189
      %s207 = sphi 0, %s207
      %s209 = sphi 0, %s207
      %s210 = sphi 0, %s209
      %s224 = sphi 0, %s210
      %s228 = sphi 0, %s228
      %s230 = sphi 0, %s228
      %s231 = sphi 0, %s230
      %s245 = sphi 0, %s231
      %s249 = sphi 0, %s249
      %s251 = sphi 0, %s249
      %s252 = sphi 0, %s251
      %s266 = sphi 0, %s252
      %s270 = sphi 0, %s270
      %s272 = sphi 0, %s270
      %s273 = sphi 0, %s272
      %s287 = sphi 0, %s273
      %s291 = sphi 0, %s291
      %s293 = sphi 0, %s291
      %s294 = sphi 0, %s293
      %s308 = sphi 0, %s294
      %s312 = sphi 0, %s312
      %s314 = sphi 0, %s312
      %s315 = sphi 0, %s314
      %s329 = sphi 0, %s315
      %s335 = sphi 0, %s337
      %s338 = sphi 0, %s335
      %s339 = sphi 0, %s338
      %s355 = sphi 0, %s339
    $region4: #{transformer_forward.4} parent=1 // loop_header_branch
      %24 = sbr.rel (%p22) target = $region8
    $region5: #{transformer_forward.4} parent=1 // loop_body
      %s26 = ssub.s32 %s21, 1
      %s27 = ssub.s32 %s21, 2
      %s28 = sadd.s32 %s21, 1
      %s29 = ssub.s32 %s21, %s28
      %p30 = scmp.eq.s32.totalorder %s29, 0
      %s32 = sadd.s32 %s31, 1
      %s33 = scalar_select %p30, %s31, %s32
      %p36 = pneg %p30
      %p37 = scmp.eq.s32.totalorder %s21, 1
      %p38 = por %p36, %p37
      %p39 = scmp.ne.s32.totalorder %s31, %s34
      %p40 = scmp.eq.s32.totalorder %s21, 0
      %p41 = por %p39, %p40
      %p42 = scmp.ne.s32.totalorder %s31, %s34
      %p43 = scmp.eq.s32.totalorder %s26, 1
      %p44 = por %p42, %p43
      %p45 = scmp.ne.s32.totalorder %s34, %s35
      %p46 = scmp.eq.s32.totalorder %s26, 0
      %p47 = por %p45, %p46
      %p48 = scmp.ne.s32.totalorder %s34, %s35
      %p49 = scmp.eq.s32.totalorder %s27, 1
      %p50 = por %p48, %p49
      %p52 = scmp.ne.s32.totalorder %s35, %s51
      %p53 = scmp.eq.s32.totalorder %s27, 0
      %p54 = por %p52, %p53
      %s55 = ssub.s32 %s21, %s28
      %p56 = scmp.eq.s32.totalorder %s55, 0
      %s58 = sadd.s32 %s57, 1
      %s59 = scalar_select %p56, %s57, %s58
      %p62 = pneg %p56
      %p63 = scmp.eq.s32.totalorder %s21, 1
      %p64 = por %p62, %p63
      %p65 = scmp.ne.s32.totalorder %s57, %s60
      %p66 = scmp.eq.s32.totalorder %s21, 0
      %p67 = por %p65, %p66
      %p68 = scmp.ne.s32.totalorder %s57, %s60
      %p69 = scmp.eq.s32.totalorder %s26, 1
      %p70 = por %p68, %p69
      %p71 = scmp.ne.s32.totalorder %s60, %s61
      %p72 = scmp.eq.s32.totalorder %s26, 0
      %p73 = por %p71, %p72
      %p74 = scmp.ne.s32.totalorder %s60, %s61
      %p75 = scmp.eq.s32.totalorder %s27, 1
      %p76 = por %p74, %p75
      %p78 = scmp.ne.s32.totalorder %s61, %s77
      %p79 = scmp.eq.s32.totalorder %s27, 0
      %p80 = por %p78, %p79
      %s82 = sadd.s32 %s81, 1
      %p85 = scmp.eq.s32.totalorder %s21, 1
      %p86 = scmp.ne.s32.totalorder %s81, %s83
      %p87 = scmp.eq.s32.totalorder %s21, 0
      %p88 = por %p86, %p87
      %p89 = scmp.ne.s32.totalorder %s81, %s83
      %p90 = scmp.eq.s32.totalorder %s26, 1
      %p91 = por %p89, %p90
      %p92 = scmp.ne.s32.totalorder %s83, %s84
      %p93 = scmp.eq.s32.totalorder %s26, 0
      %p94 = por %p92, %p93
      %p95 = scmp.ne.s32.totalorder %s83, %s84
      %p96 = scmp.eq.s32.totalorder %s27, 1
      %p97 = por %p95, %p96
      %p99 = scmp.ne.s32.totalorder %s84, %s98
      %p100 = scmp.eq.s32.totalorder %s27, 0
      %p101 = por %p99, %p100
      %s103 = sadd.s32 %s102, 1
      %p106 = scmp.eq.s32.totalorder %s21, 1
      %p107 = scmp.ne.s32.totalorder %s102, %s104
      %p108 = scmp.eq.s32.totalorder %s21, 0
      %p109 = por %p107, %p108
      %p110 = scmp.ne.s32.totalorder %s102, %s104
      %p111 = scmp.eq.s32.totalorder %s26, 1
      %p112 = por %p110, %p111
      %p113 = scmp.ne.s32.totalorder %s104, %s105
      %p114 = scmp.eq.s32.totalorder %s26, 0
      %p115 = por %p113, %p114
      %p116 = scmp.ne.s32.totalorder %s104, %s105
      %p117 = scmp.eq.s32.totalorder %s27, 1
      %p118 = por %p116, %p117
      %p120 = scmp.ne.s32.totalorder %s105, %s119
      %p121 = scmp.eq.s32.totalorder %s27, 0
      %p122 = por %p120, %p121
      %s124 = sadd.s32 %s123, 1
      %p127 = scmp.eq.s32.totalorder %s21, 1
      %p128 = scmp.ne.s32.totalorder %s123, %s125
      %p129 = scmp.eq.s32.totalorder %s21, 0
      %p130 = por %p128, %p129
      %p131 = scmp.ne.s32.totalorder %s123, %s125
      %p132 = scmp.eq.s32.totalorder %s26, 1
      %p133 = por %p131, %p132
      %p134 = scmp.ne.s32.totalorder %s125, %s126
      %p135 = scmp.eq.s32.totalorder %s26, 0
      %p136 = por %p134, %p135
      %p137 = scmp.ne.s32.totalorder %s125, %s126
      %p138 = scmp.eq.s32.totalorder %s27, 1
      %p139 = por %p137, %p138
      %p141 = scmp.ne.s32.totalorder %s126, %s140
      %p142 = scmp.eq.s32.totalorder %s27, 0
      %p143 = por %p141, %p142
      %s145 = sadd.s32 %s144, 1
      %p148 = scmp.eq.s32.totalorder %s21, 1
      %p149 = scmp.ne.s32.totalorder %s144, %s146
      %p150 = scmp.eq.s32.totalorder %s21, 0
      %p151 = por %p149, %p150
      %p152 = scmp.ne.s32.totalorder %s144, %s146
      %p153 = scmp.eq.s32.totalorder %s26, 1
      %p154 = por %p152, %p153
      %p155 = scmp.ne.s32.totalorder %s146, %s147
      %p156 = scmp.eq.s32.totalorder %s26, 0
      %p157 = por %p155, %p156
      %p158 = scmp.ne.s32.totalorder %s146, %s147
      %p159 = scmp.eq.s32.totalorder %s27, 1
      %p160 = por %p158, %p159
      %p162 = scmp.ne.s32.totalorder %s147, %s161
      %p163 = scmp.eq.s32.totalorder %s27, 0
      %p164 = por %p162, %p163
      %s166 = sadd.s32 %s165, 1
      %p169 = scmp.eq.s32.totalorder %s21, 1
      %p170 = scmp.ne.s32.totalorder %s165, %s167
      %p171 = scmp.eq.s32.totalorder %s21, 0
      %p172 = por %p170, %p171
      %p173 = scmp.ne.s32.totalorder %s165, %s167
      %p174 = scmp.eq.s32.totalorder %s26, 1
      %p175 = por %p173, %p174
      %p176 = scmp.ne.s32.totalorder %s167, %s168
      %p177 = scmp.eq.s32.totalorder %s26, 0
      %p178 = por %p176, %p177
      %p179 = scmp.ne.s32.totalorder %s167, %s168
      %p180 = scmp.eq.s32.totalorder %s27, 1
      %p181 = por %p179, %p180
      %p183 = scmp.ne.s32.totalorder %s168, %s182
      %p184 = scmp.eq.s32.totalorder %s27, 0
      %p185 = por %p183, %p184
      %s187 = sadd.s32 %s186, 1
      %p190 = scmp.eq.s32.totalorder %s21, 1
      %p191 = scmp.ne.s32.totalorder %s186, %s188
      %p192 = scmp.eq.s32.totalorder %s21, 0
      %p193 = por %p191, %p192
      %p194 = scmp.ne.s32.totalorder %s186, %s188
      %p195 = scmp.eq.s32.totalorder %s26, 1
      %p196 = por %p194, %p195
      %p197 = scmp.ne.s32.totalorder %s188, %s189
      %p198 = scmp.eq.s32.totalorder %s26, 0
      %p199 = por %p197, %p198
      %p200 = scmp.ne.s32.totalorder %s188, %s189
      %p201 = scmp.eq.s32.totalorder %s27, 1
      %p202 = por %p200, %p201
      %p204 = scmp.ne.s32.totalorder %s189, %s203
      %p205 = scmp.eq.s32.totalorder %s27, 0
      %p206 = por %p204, %p205
      %s208 = sadd.s32 %s207, 1
      %p211 = scmp.eq.s32.totalorder %s21, 1
      %p212 = scmp.ne.s32.totalorder %s207, %s209
      %p213 = scmp.eq.s32.totalorder %s21, 0
      %p214 = por %p212, %p213
      %p215 = scmp.ne.s32.totalorder %s207, %s209
      %p216 = scmp.eq.s32.totalorder %s26, 1
      %p217 = por %p215, %p216
      %p218 = scmp.ne.s32.totalorder %s209, %s210
      %p219 = scmp.eq.s32.totalorder %s26, 0
      %p220 = por %p218, %p219
      %p221 = scmp.ne.s32.totalorder %s209, %s210
      %p222 = scmp.eq.s32.totalorder %s27, 1
      %p223 = por %p221, %p222
      %p225 = scmp.ne.s32.totalorder %s210, %s224
      %p226 = scmp.eq.s32.totalorder %s27, 0
      %p227 = por %p225, %p226
      %s229 = sadd.s32 %s228, 1
      %p232 = scmp.eq.s32.totalorder %s21, 1
      %p233 = scmp.ne.s32.totalorder %s228, %s230
      %p234 = scmp.eq.s32.totalorder %s21, 0
      %p235 = por %p233, %p234
      %p236 = scmp.ne.s32.totalorder %s228, %s230
      %p237 = scmp.eq.s32.totalorder %s26, 1
      %p238 = por %p236, %p237
      %p239 = scmp.ne.s32.totalorder %s230, %s231
      %p240 = scmp.eq.s32.totalorder %s26, 0
      %p241 = por %p239, %p240
      %p242 = scmp.ne.s32.totalorder %s230, %s231
      %p243 = scmp.eq.s32.totalorder %s27, 1
      %p244 = por %p242, %p243
      %p246 = scmp.ne.s32.totalorder %s231, %s245
      %p247 = scmp.eq.s32.totalorder %s27, 0
      %p248 = por %p246, %p247
      %s250 = sadd.s32 %s249, 1
      %p253 = scmp.eq.s32.totalorder %s21, 1
      %p254 = scmp.ne.s32.totalorder %s249, %s251
      %p255 = scmp.eq.s32.totalorder %s21, 0
      %p256 = por %p254, %p255
      %p257 = scmp.ne.s32.totalorder %s249, %s251
      %p258 = scmp.eq.s32.totalorder %s26, 1
      %p259 = por %p257, %p258
      %p260 = scmp.ne.s32.totalorder %s251, %s252
      %p261 = scmp.eq.s32.totalorder %s26, 0
      %p262 = por %p260, %p261
      %p263 = scmp.ne.s32.totalorder %s251, %s252
      %p264 = scmp.eq.s32.totalorder %s27, 1
      %p265 = por %p263, %p264
      %p267 = scmp.ne.s32.totalorder %s252, %s266
      %p268 = scmp.eq.s32.totalorder %s27, 0
      %p269 = por %p267, %p268
      %s271 = sadd.s32 %s270, 1
      %p274 = scmp.eq.s32.totalorder %s21, 1
      %p275 = scmp.ne.s32.totalorder %s270, %s272
      %p276 = scmp.eq.s32.totalorder %s21, 0
      %p277 = por %p275, %p276
      %p278 = scmp.ne.s32.totalorder %s270, %s272
      %p279 = scmp.eq.s32.totalorder %s26, 1
      %p280 = por %p278, %p279
      %p281 = scmp.ne.s32.totalorder %s272, %s273
      %p282 = scmp.eq.s32.totalorder %s26, 0
      %p283 = por %p281, %p282
      %p284 = scmp.ne.s32.totalorder %s272, %s273
      %p285 = scmp.eq.s32.totalorder %s27, 1
      %p286 = por %p284, %p285
      %p288 = scmp.ne.s32.totalorder %s273, %s287
      %p289 = scmp.eq.s32.totalorder %s27, 0
      %p290 = por %p288, %p289
      %s292 = sadd.s32 %s291, 1
      %p295 = scmp.eq.s32.totalorder %s21, 1
      %p296 = scmp.ne.s32.totalorder %s291, %s293
      %p297 = scmp.eq.s32.totalorder %s21, 0
      %p298 = por %p296, %p297
      %p299 = scmp.ne.s32.totalorder %s291, %s293
      %p300 = scmp.eq.s32.totalorder %s26, 1
      %p301 = por %p299, %p300
      %p302 = scmp.ne.s32.totalorder %s293, %s294
      %p303 = scmp.eq.s32.totalorder %s26, 0
      %p304 = por %p302, %p303
      %p305 = scmp.ne.s32.totalorder %s293, %s294
      %p306 = scmp.eq.s32.totalorder %s27, 1
      %p307 = por %p305, %p306
      %p309 = scmp.ne.s32.totalorder %s294, %s308
      %p310 = scmp.eq.s32.totalorder %s27, 0
      %p311 = por %p309, %p310
      %s313 = sadd.s32 %s312, 1
      %p316 = scmp.eq.s32.totalorder %s21, 1
      %p317 = scmp.ne.s32.totalorder %s312, %s314
      %p318 = scmp.eq.s32.totalorder %s21, 0
      %p319 = por %p317, %p318
      %p320 = scmp.ne.s32.totalorder %s312, %s314
      %p321 = scmp.eq.s32.totalorder %s26, 1
      %p322 = por %p320, %p321
      %p323 = scmp.ne.s32.totalorder %s314, %s315
      %p324 = scmp.eq.s32.totalorder %s26, 0
      %p325 = por %p323, %p324
      %p326 = scmp.ne.s32.totalorder %s314, %s315
      %p327 = scmp.eq.s32.totalorder %s27, 1
      %p328 = por %p326, %p327
      %p330 = scmp.ne.s32.totalorder %s315, %s329
      %p331 = scmp.eq.s32.totalorder %s27, 0
      %p332 = por %p330, %p331
      %s333 = ssub.s32 %s21, %s28
      %p334 = scmp.eq.s32.totalorder %s333, 0
      %s336 = sadd.s32 %s335, 1
      %s337 = scalar_select %p334, %s335, %s336
      %p340 = pneg %p334
      %p341 = scmp.eq.s32.totalorder %s21, 1
      %p342 = por %p340, %p341
      %p343 = scmp.ne.s32.totalorder %s335, %s338
      %p344 = scmp.eq.s32.totalorder %s21, 0
      %p345 = por %p343, %p344
      %p346 = scmp.ne.s32.totalorder %s335, %s338
      %p347 = scmp.eq.s32.totalorder %s26, 1
      %p348 = por %p346, %p347
      %p349 = scmp.ne.s32.totalorder %s338, %s339
      %p350 = scmp.eq.s32.totalorder %s26, 0
      %p351 = por %p349, %p350
      %p352 = scmp.ne.s32.totalorder %s338, %s339
      %p353 = scmp.eq.s32.totalorder %s27, 1
      %p354 = por %p352, %p353
      %p356 = scmp.ne.s32.totalorder %s339, %s355
      %p357 = scmp.eq.s32.totalorder %s27, 0
      %p358 = por %p356, %p357
      %p359 = scmp.le.s32.totalorder 1, %s21
      %p360 = scmp.lt.s32.totalorder %s21, 3
      %p361 = pnand %p359, %p360
      %p362 = pneg %p361
      // Predicated region
      $region9: #{transformer_forward.4} parent=5 // pred_check
        _
      $region10: #{transformer_forward.4} parent=5 // pred_check_branch
        %364 = sbr.rel (%p361) target = $region12
      $region11: #{transformer_forward.4} parent=5 // pred_region
        %s365 = ssub.s32 %s21, 1
        // Predicated region
        $region13: #{transformer_forward.4} parent=11 // pred_check
          %p366 = pneg %p94
        $region14: #{transformer_forward.4} parent=11 // pred_check_branch
          %368 = sbr.rel (%p366) target = $region16
        $region15: #{transformer_forward.4} parent=11 // pred_region
          _
        $region16: #{transformer_forward.4} parent=11 // pred_fallthru
          _
        // Predicated region
        $region17: #{transformer_forward.4} parent=11 // pred_check
          %p369 = pneg %p115
        $region18: #{transformer_forward.4} parent=11 // pred_check_branch
          %371 = sbr.rel (%p369) target = $region20
        $region19: #{transformer_forward.4} parent=11 // pred_region
          _
        $region20: #{transformer_forward.4} parent=11 // pred_fallthru
          _
        // Predicated region
        $region21: #{transformer_forward.4} parent=11 // pred_check
          %p372 = pneg %p136
        $region22: #{transformer_forward.4} parent=11 // pred_check_branch
          %374 = sbr.rel (%p372) target = $region24
        $region23: #{transformer_forward.4} parent=11 // pred_region
          _
        $region24: #{transformer_forward.4} parent=11 // pred_fallthru
          _
        // Predicated region
        $region25: #{transformer_forward.4} parent=11 // pred_check
          %p375 = pneg %p157
        $region26: #{transformer_forward.4} parent=11 // pred_check_branch
          %377 = sbr.rel (%p375) target = $region28
        $region27: #{transformer_forward.4} parent=11 // pred_region
          _
        $region28: #{transformer_forward.4} parent=11 // pred_fallthru
          _
        // Predicated region
        $region29: #{transformer_forward.4} parent=11 // pred_check
          %p378 = pneg %p178
        $region30: #{transformer_forward.4} parent=11 // pred_check_branch
          %380 = sbr.rel (%p378) target = $region32
        $region31: #{transformer_forward.4} parent=11 // pred_region
          _
        $region32: #{transformer_forward.4} parent=11 // pred_fallthru
          _
        // Predicated region
        $region33: #{transformer_forward.4} parent=11 // pred_check
          %p381 = pneg %p199
        $region34: #{transformer_forward.4} parent=11 // pred_check_branch
          %383 = sbr.rel (%p381) target = $region36
        $region35: #{transformer_forward.4} parent=11 // pred_region
          _
        $region36: #{transformer_forward.4} parent=11 // pred_fallthru
          _
        // Predicated region
        $region37: #{transformer_forward.4} parent=11 // pred_check
          %p384 = pneg %p220
        $region38: #{transformer_forward.4} parent=11 // pred_check_branch
          %386 = sbr.rel (%p384) target = $region40
        $region39: #{transformer_forward.4} parent=11 // pred_region
          %s388 = ssub.s32 512, 512
          %389 = vsyncadd [#allocation3], %s388
          %s390 = sshll.u32 [#allocation2], 4
          %s391 = int_to_ptr.vmem [resolvable:$true] %s390
          %396 = dma.hbm_to_vmem [thread:$0]  %s8, 512, %s391, [#allocation3], 128, 128, 8
        $region40: #{transformer_forward.4} parent=11 // pred_fallthru
          _
        // Predicated region
        $region41: #{transformer_forward.4} parent=11 // pred_check
          %p397 = pneg %p241
        $region42: #{transformer_forward.4} parent=11 // pred_check_branch
          %399 = sbr.rel (%p397) target = $region44
        $region43: #{transformer_forward.4} parent=11 // pred_region
          _
        $region44: #{transformer_forward.4} parent=11 // pred_fallthru
          _
        // Predicated region
        $region45: #{transformer_forward.4} parent=11 // pred_check
          %p400 = pneg %p262
        $region46: #{transformer_forward.4} parent=11 // pred_check_branch
          %402 = sbr.rel (%p400) target = $region48
        $region47: #{transformer_forward.4} parent=11 // pred_region
          _
        $region48: #{transformer_forward.4} parent=11 // pred_fallthru
          _
        // Predicated region
        $region49: #{transformer_forward.4} parent=11 // pred_check
          %p403 = pneg %p283
        $region50: #{transformer_forward.4} parent=11 // pred_check_branch
          %405 = sbr.rel (%p403) target = $region52
        $region51: #{transformer_forward.4} parent=11 // pred_region
          _
        $region52: #{transformer_forward.4} parent=11 // pred_fallthru
          _
        // Predicated region
        $region53: #{transformer_forward.4} parent=11 // pred_check
          %p406 = pneg %p304
        $region54: #{transformer_forward.4} parent=11 // pred_check_branch
          %408 = sbr.rel (%p406) target = $region56
        $region55: #{transformer_forward.4} parent=11 // pred_region
          _
        $region56: #{transformer_forward.4} parent=11 // pred_fallthru
          _
        // Predicated region
        $region57: #{transformer_forward.4} parent=11 // pred_check
          %p409 = pneg %p325
        $region58: #{transformer_forward.4} parent=11 // pred_check_branch
          %411 = sbr.rel (%p409) target = $region60
        $region59: #{transformer_forward.4} parent=11 // pred_region
          _
        $region60: #{transformer_forward.4} parent=11 // pred_fallthru
          _
      $region12: #{transformer_forward.4} parent=5 // pred_fallthru
        _
      %p412 = scmp.lt.s32.totalorder %s21, 2
      // Predicated region
      $region61: #{transformer_forward.4} parent=5 // pred_check
        %p413 = pneg %p412
      $region62: #{transformer_forward.4} parent=5 // pred_check_branch
        %415 = sbr.rel (%p413) target = $region64
      $region63: #{transformer_forward.4} parent=5 // pred_region
        // Predicated region
        $region65: #{transformer_forward.4} parent=63 // pred_check
          %p416 = pneg %p41
        $region66: #{transformer_forward.4} parent=63 // pred_check_branch
          %418 = sbr.rel (%p416) target = $region68
        $region67: #{transformer_forward.4} parent=63 // pred_region
          %p419 = scmp.lt.s32.totalorder %s21, 1
          %s420 = scalar_select %p419, %s21, 1
          %s421 = smul.addr %s420, 2
          %s422 = smul.addr %s421, 8
          %s423 = scalar_lea.vmem %s0, %s422
        $region68: #{transformer_forward.4} parent=63 // pred_fallthru
          _
        // Predicated region
        $region69: #{transformer_forward.4} parent=63 // pred_check
          %p424 = pneg %p67
        $region70: #{transformer_forward.4} parent=63 // pred_check_branch
          %426 = sbr.rel (%p424) target = $region72
        $region71: #{transformer_forward.4} parent=63 // pred_region
          %p427 = scmp.lt.s32.totalorder %s21, 1
          %s428 = scalar_select %p427, %s21, 1
          %s429 = smul.addr %s428, 2
          %s430 = smul.addr %s429, 8
          %s431 = scalar_lea.vmem %s1, %s430
        $region72: #{transformer_forward.4} parent=63 // pred_fallthru
          _
      $region64: #{transformer_forward.4} parent=5 // pred_fallthru
        _
      %p432 = scmp.le.s32.totalorder 1, %s21
      %p433 = scmp.lt.s32.totalorder %s21, 3
      %p434 = pnand %p432, %p433
      %p435 = pneg %p434
      // Predicated region
      $region73: #{transformer_forward.4} parent=5 // pred_check
        _
      $region74: #{transformer_forward.4} parent=5 // pred_check_branch
        %437 = sbr.rel (%p434) target = $region76
      $region75: #{transformer_forward.4} parent=5 // pred_region
        %s438 = ssub.s32 %s21, 1
        // Predicated region
        $region77: #{transformer_forward.4} parent=75 // pred_check
          %p439 = pneg %p220
        $region78: #{transformer_forward.4} parent=75 // pred_check_branch
          %441 = sbr.rel (%p439) target = $region80
        $region79: #{transformer_forward.4} parent=75 // pred_region
          %442 = dma.done [#allocation3], 512
        $region80: #{transformer_forward.4} parent=75 // pred_fallthru
          _
        %p443 = scmp.lt.s32.totalorder %s26, 1
        %s444 = scalar_select %p443, %s26, 1
        %s445 = smul.addr %s444, 2
        %s446 = smul.addr %s445, 8
        %s447 = scalar_lea.vmem %s0, %s446
        %p448 = pneg %p47
        %p449 = pneg %p44
        %p450 = scmp.lt.s32.totalorder %s26, 1
        %s451 = scalar_select %p450, %s26, 1
        %s452 = smul.addr %s451, 2
        %s453 = smul.addr %s452, 8
        %s454 = scalar_lea.vmem %s1, %s453
        %p455 = pneg %p73
        %p456 = pneg %p70
        %p457 = pneg %p94
        %p458 = pneg %p91
        %p459 = pneg %p115
        %p460 = pneg %p112
        %p461 = pneg %p136
        %p462 = pneg %p133
        %p463 = pneg %p157
        %p464 = pneg %p154
        %p465 = pneg %p178
        %p466 = pneg %p175
        %p467 = pneg %p199
        %p468 = pneg %p196
        %p469 = pneg %p220
        %p470 = pneg %p217
        %p471 = pneg %p241
        %p472 = pneg %p238
        %p473 = pneg %p262
        %p474 = pneg %p259
        %p475 = pneg %p283
        %p476 = pneg %p280
        %p477 = pneg %p304
        %p478 = pneg %p301
        %p479 = pneg %p325
        %p480 = pneg %p322
        %p481 = pneg %p351
        %p482 = pneg %p348
        %p483 = scmp.lt.s32.totalorder %s26, 1
        %s484 = scalar_select %p483, %s26, 1
        %s485 = smul.addr %s484, 2
        %s486 = smul.addr %s485, 8
        %s487 = scalar_lea.vmem %s14, %s486
        %p488 = scmp.lt.s32.totalorder %s26, 1
        %s489 = scalar_select %p488, %s26, 1
        %s490 = smul.addr %s489, 2
        %s491 = smul.addr %s490, 8
        %s492 = scalar_lea.vmem %s0, %s491
        %p493 = scmp.lt.s32.totalorder %s26, 1
        %s494 = scalar_select %p493, %s26, 1
        %s495 = smul.addr %s494, 2
        %s496 = smul.addr %s495, 8
        %s497 = scalar_lea.vmem %s1, %s496
        %p498 = scmp.lt.s32.totalorder %s26, 1
        %s499 = scalar_select %p498, %s26, 1
        %s500 = smul.addr %s499, 2
        %s501 = smul.addr %s500, 8
        %s502 = scalar_lea.vmem %s14, %s501
        %v503 = vld [vmem:[%s492] sm:$0xff]
        %v504 = vld [vmem:[%s492 + $0x8] sm:$0xff]
        %v505 = vld [vmem:[%s497] sm:$0xff]
        %v506 = vld [vmem:[%s497 + $0x8] sm:$0xff]
        %v507 = vadd.f32 %v503, %v505
        %v508 = vadd.f32 %v504, %v506
        %v509 = vld [vmem:[%s2] sm:$0xff]
        %v510 = vld [vmem:[%s2 + $0x8] sm:$0xff]
        %v511 = vld [vmem:[%s2 + $0x10] sm:$0xff]
        %v512 = vld [vmem:[%s2 + $0x18] sm:$0xff]
        %v513 = vld [vmem:[%s3] sm:$0x1]
        %v515 = vlaneseq
        %v516 = vshrl.u32 %v515, 7
        %v517 = vsub.s32 0, %v516
        %v518 = vrot.slane %v513, %v517
        %vm520 = vcmask 261120
        %v522 = vsel %vm520, %v507, 0
        %v525 = vsel %vm520, %v508, 0
        %527 = vmatprep.subr.mxu0 0.0
        %528 = vmatpush1.msra.mxu0 0.0
        %529 = vmatprep.subr.mxu0 0.0
        %530 = vmatpush1.msra.mxu0 0.0
        %531 = vmatprep.subr.mxu0 0.0
        %532 = vmatpush1.msra.mxu0 0.0
        %533 = vmatprep.subr.mxu0 0.0
        %534 = vmatpush1.msra.mxu0 0.0
        %535 = vmatprep.subr.mxu0 0.0
        %536 = vmatpush1.msra.mxu0 0.0
        %537 = vmatprep.subr.mxu0 0.0
        %538 = vmatpush1.msra.mxu0 0.0
        %539 = vmatprep.subr.mxu0 0.0
        %540 = vmatpush1.msra.mxu0 0.0
        %541 = vmatprep.subr.mxu0 0.0
        %542 = vmatpush1.msra.mxu0 0.0
        %543 = vmatprep.subr.mxu0 0.0
        %544 = vmatpush1.msra.mxu0 0.0
        %545 = vmatprep.subr.mxu0 0.0
        %546 = vmatpush1.msra.mxu0 0.0
        %547 = vmatprep.subr.mxu0 0.0
        %548 = vmatpush1.msra.mxu0 0.0
        %549 = vmatprep.subr.mxu0 0.0
        %550 = vmatpush1.msra.mxu0 0.0
        %551 = vmatprep.subr.mxu0 0.0
        %552 = vmatpush1.msra.mxu0 %v512
        %553 = vmatprep.subr.mxu0 0.0
        %554 = vmatpush1.msra.mxu0 %v511
        %555 = vmatprep.subr.mxu0 0.0
        %556 = vmatpush1.msra.mxu0 %v510
        %557 = vmatprep.subr.mxu0 0.0
        %558 = vmatpush1.msra.mxu0 %v509
        %559 = vmatprep.subr.mxu0 0.0
        %560 = vmatpush2.msra.mxu0 0.0
        %561 = vmatprep.subr.mxu0 0.0
        %562 = vmatpush2.msra.mxu0 0.0
        %563 = vmatprep.subr.mxu0 0.0
        %564 = vmatpush2.msra.mxu0 0.0
        %565 = vmatprep.subr.mxu0 0.0
        %566 = vmatpush2.msra.mxu0 0.0
        %567 = vmatprep.subr.mxu0 0.0
        %568 = vmatpush2.msra.mxu0 0.0
        %569 = vmatprep.subr.mxu0 0.0
        %570 = vmatpush2.msra.mxu0 0.0
        %571 = vmatprep.subr.mxu0 0.0
        %572 = vmatpush2.msra.mxu0 0.0
        %573 = vmatprep.subr.mxu0 0.0
        %574 = vmatpush2.msra.mxu0 0.0
        %575 = vmatprep.subr.mxu0 0.0
        %576 = vmatpush2.msra.mxu0 0.0
        %577 = vmatprep.subr.mxu0 0.0
        %578 = vmatpush2.msra.mxu0 0.0
        %579 = vmatprep.subr.mxu0 0.0
        %580 = vmatpush2.msra.mxu0 0.0
        %581 = vmatprep.subr.mxu0 0.0
        %582 = vmatpush2.msra.mxu0 0.0
        %583 = vmatprep.subr.mxu0 0.0
        %584 = vmatpush2.msra.mxu0 0.0
        %585 = vmatprep.subr.mxu0 0.0
        %586 = vmatpush2.msra.mxu0 0.0
        %587 = vmatprep.subr.mxu0 0.0
        %588 = vmatpush2.msra.mxu0 0.0
        %589 = vmatprep.subr.mxu0 0.0
        %590 = vmatpush2.msra.mxu0 0.0
        %591 = vmatprep.mubr.f32.mxu0 0.0
        %592 = vmatmul.mubr.f32.gmra.mxu0 %v522
        %v593 = vpop.f32.mrf.mxu0
        %v594 = vadd.f32 %v518, %v593
        %v595 = vpop.f32.mrf.mxu0
        %596 = vmatprep.mubr.f32.mxu0 0.0
        %597 = vmatmul.mubr.f32.gmra.mxu0 %v525
        %v598 = vpop.f32.mrf.mxu0
        %v599 = vadd.f32 %v518, %v598
        %v600 = vpop.f32.mrf.mxu0
        %601 = vdwg.mxu0
        %606 = vrot.lane.b32.xlu0 %v509, 96
        %v607 = vpop.permute.xlu0 %606
        %608 = vrot.lane.b32.xlu0 %v510, 96
        %v609 = vpop.permute.xlu0 %608
        %610 = vrot.lane.b32.xlu0 %v511, 96
        %v611 = vpop.permute.xlu0 %610
        %612 = vrot.lane.b32.xlu0 %v512, 96
        %v613 = vpop.permute.xlu0 %612
        %618 = vrot.lane.b32.xlu0 %v518, 96
        %v619 = vpop.permute.xlu0 %618
        %621 = vmatprep.subr.mxu0 0.0
        %622 = vmatpush1.msra.mxu0 0.0
        %623 = vmatprep.subr.mxu0 0.0
        %624 = vmatpush1.msra.mxu0 0.0
        %625 = vmatprep.subr.mxu0 0.0
        %626 = vmatpush1.msra.mxu0 0.0
        %627 = vmatprep.subr.mxu0 0.0
        %628 = vmatpush1.msra.mxu0 0.0
        %629 = vmatprep.subr.mxu0 0.0
        %630 = vmatpush1.msra.mxu0 0.0
        %631 = vmatprep.subr.mxu0 0.0
        %632 = vmatpush1.msra.mxu0 0.0
        %633 = vmatprep.subr.mxu0 0.0
        %634 = vmatpush1.msra.mxu0 0.0
        %635 = vmatprep.subr.mxu0 0.0
        %636 = vmatpush1.msra.mxu0 0.0
        %637 = vmatprep.subr.mxu0 0.0
        %638 = vmatpush1.msra.mxu0 0.0
        %639 = vmatprep.subr.mxu0 0.0
        %640 = vmatpush1.msra.mxu0 0.0
        %641 = vmatprep.subr.mxu0 0.0
        %642 = vmatpush1.msra.mxu0 0.0
        %643 = vmatprep.subr.mxu0 0.0
        %644 = vmatpush1.msra.mxu0 0.0
        %645 = vmatprep.subr.mxu0 0.0
        %646 = vmatpush1.msra.mxu0 %v613
        %647 = vmatprep.subr.mxu0 0.0
        %648 = vmatpush1.msra.mxu0 %v611
        %649 = vmatprep.subr.mxu0 0.0
        %650 = vmatpush1.msra.mxu0 %v609
        %651 = vmatprep.subr.mxu0 0.0
        %652 = vmatpush1.msra.mxu0 %v607
        %653 = vmatprep.subr.mxu0 0.0
        %654 = vmatpush2.msra.mxu0 0.0
        %655 = vmatprep.subr.mxu0 0.0
        %656 = vmatpush2.msra.mxu0 0.0
        %657 = vmatprep.subr.mxu0 0.0
        %658 = vmatpush2.msra.mxu0 0.0
        %659 = vmatprep.subr.mxu0 0.0
        %660 = vmatpush2.msra.mxu0 0.0
        %661 = vmatprep.subr.mxu0 0.0
        %662 = vmatpush2.msra.mxu0 0.0
        %663 = vmatprep.subr.mxu0 0.0
        %664 = vmatpush2.msra.mxu0 0.0
        %665 = vmatprep.subr.mxu0 0.0
        %666 = vmatpush2.msra.mxu0 0.0
        %667 = vmatprep.subr.mxu0 0.0
        %668 = vmatpush2.msra.mxu0 0.0
        %669 = vmatprep.subr.mxu0 0.0
        %670 = vmatpush2.msra.mxu0 0.0
        %671 = vmatprep.subr.mxu0 0.0
        %672 = vmatpush2.msra.mxu0 0.0
        %673 = vmatprep.subr.mxu0 0.0
        %674 = vmatpush2.msra.mxu0 0.0
        %675 = vmatprep.subr.mxu0 0.0
        %676 = vmatpush2.msra.mxu0 0.0
        %677 = vmatprep.subr.mxu0 0.0
        %678 = vmatpush2.msra.mxu0 0.0
        %679 = vmatprep.subr.mxu0 0.0
        %680 = vmatpush2.msra.mxu0 0.0
        %681 = vmatprep.subr.mxu0 0.0
        %682 = vmatpush2.msra.mxu0 0.0
        %683 = vmatprep.subr.mxu0 0.0
        %684 = vmatpush2.msra.mxu0 0.0
        %685 = vmatprep.mubr.f32.mxu0 0.0
        %686 = vmatmul.mubr.f32.gmra.mxu0 %v522
        %v687 = vpop.f32.mrf.mxu0
        %v688 = vadd.f32 %v619, %v687
        %v689 = vpop.f32.mrf.mxu0
        %690 = vmatprep.mubr.f32.mxu0 0.0
        %691 = vmatmul.mubr.f32.gmra.mxu0 %v525
        %v692 = vpop.f32.mrf.mxu0
        %v693 = vadd.f32 %v619, %v692
        %v694 = vpop.f32.mrf.mxu0
        %695 = vdwg.mxu0
        %696 = vrot.lane.b32.xlu0 %v509, 64
        %v697 = vpop.permute.xlu0 %696
        %698 = vrot.lane.b32.xlu0 %v510, 64
        %v699 = vpop.permute.xlu0 %698
        %700 = vrot.lane.b32.xlu0 %v511, 64
        %v701 = vpop.permute.xlu0 %700
        %702 = vrot.lane.b32.xlu0 %v512, 64
        %v703 = vpop.permute.xlu0 %702
        %708 = vrot.lane.b32.xlu0 %v518, 64
        %v709 = vpop.permute.xlu0 %708
        %v712 = vsel %vm520, %v503, 0
        %v715 = vsel %vm520, %v504, 0
        %717 = vmatprep.subr.mxu0 0.0
        %718 = vmatpush1.msra.mxu0 0.0
        %719 = vmatprep.subr.mxu0 0.0
        %720 = vmatpush1.msra.mxu0 0.0
        %721 = vmatprep.subr.mxu0 0.0
        %722 = vmatpush1.msra.mxu0 0.0
        %723 = vmatprep.subr.mxu0 0.0
        %724 = vmatpush1.msra.mxu0 0.0
        %725 = vmatprep.subr.mxu0 0.0
        %726 = vmatpush1.msra.mxu0 0.0
        %727 = vmatprep.subr.mxu0 0.0
        %728 = vmatpush1.msra.mxu0 0.0
        %729 = vmatprep.subr.mxu0 0.0
        %730 = vmatpush1.msra.mxu0 0.0
        %731 = vmatprep.subr.mxu0 0.0
        %732 = vmatpush1.msra.mxu0 0.0
        %733 = vmatprep.subr.mxu0 0.0
        %734 = vmatpush1.msra.mxu0 0.0
        %735 = vmatprep.subr.mxu0 0.0
        %736 = vmatpush1.msra.mxu0 0.0
        %737 = vmatprep.subr.mxu0 0.0
        %738 = vmatpush1.msra.mxu0 0.0
        %739 = vmatprep.subr.mxu0 0.0
        %740 = vmatpush1.msra.mxu0 0.0
        %741 = vmatprep.subr.mxu0 0.0
        %742 = vmatpush1.msra.mxu0 %v703
        %743 = vmatprep.subr.mxu0 0.0
        %744 = vmatpush1.msra.mxu0 %v701
        %745 = vmatprep.subr.mxu0 0.0
        %746 = vmatpush1.msra.mxu0 %v699
        %747 = vmatprep.subr.mxu0 0.0
        %748 = vmatpush1.msra.mxu0 %v697
        %749 = vmatprep.subr.mxu0 0.0
        %750 = vmatpush2.msra.mxu0 0.0
        %751 = vmatprep.subr.mxu0 0.0
        %752 = vmatpush2.msra.mxu0 0.0
        %753 = vmatprep.subr.mxu0 0.0
        %754 = vmatpush2.msra.mxu0 0.0
        %755 = vmatprep.subr.mxu0 0.0
        %756 = vmatpush2.msra.mxu0 0.0
        %757 = vmatprep.subr.mxu0 0.0
        %758 = vmatpush2.msra.mxu0 0.0
        %759 = vmatprep.subr.mxu0 0.0
        %760 = vmatpush2.msra.mxu0 0.0
        %761 = vmatprep.subr.mxu0 0.0
        %762 = vmatpush2.msra.mxu0 0.0
        %763 = vmatprep.subr.mxu0 0.0
        %764 = vmatpush2.msra.mxu0 0.0
        %765 = vmatprep.subr.mxu0 0.0
        %766 = vmatpush2.msra.mxu0 0.0
        %767 = vmatprep.subr.mxu0 0.0
        %768 = vmatpush2.msra.mxu0 0.0
        %769 = vmatprep.subr.mxu0 0.0
        %770 = vmatpush2.msra.mxu0 0.0
        %771 = vmatprep.subr.mxu0 0.0
        %772 = vmatpush2.msra.mxu0 0.0
        %773 = vmatprep.subr.mxu0 0.0
        %774 = vmatpush2.msra.mxu0 0.0
        %775 = vmatprep.subr.mxu0 0.0
        %776 = vmatpush2.msra.mxu0 0.0
        %777 = vmatprep.subr.mxu0 0.0
        %778 = vmatpush2.msra.mxu0 0.0
        %779 = vmatprep.subr.mxu0 0.0
        %780 = vmatpush2.msra.mxu0 0.0
        %781 = vmatprep.mubr.f32.mxu0 0.0
        %782 = vmatmul.mubr.f32.gmra.mxu0 %v712
        %v783 = vpop.f32.mrf.mxu0
        %v784 = vadd.f32 %v709, %v783
        %v785 = vpop.f32.mrf.mxu0
        %786 = vmatprep.mubr.f32.mxu0 0.0
        %787 = vmatmul.mubr.f32.gmra.mxu0 %v715
        %v788 = vpop.f32.mrf.mxu0
        %v789 = vadd.f32 %v709, %v788
        %v790 = vpop.f32.mrf.mxu0
        %791 = vdwg.mxu0
        %vm792 = vcmask 64512
        %v794 = vsel %vm792, %v594, 0
        %v797 = vsel %vm792, %v599, 0
        %v800 = vsel %vm792, %v688, 0
        %v803 = vsel %vm792, %v693, 0
        %805 = vmatprep.subr.mxu0 0.0
        %806 = vmatpush1.xpose.msra.mxu0 0.0
        %807 = vmatprep.subr.mxu0 0.0
        %808 = vmatpush1.xpose.msra.mxu0 0.0
        %809 = vmatprep.subr.mxu0 0.0
        %810 = vmatpush1.xpose.msra.mxu0 0.0
        %811 = vmatprep.subr.mxu0 0.0
        %812 = vmatpush1.xpose.msra.mxu0 0.0
        %813 = vmatprep.subr.mxu0 0.0
        %814 = vmatpush1.xpose.msra.mxu0 0.0
        %815 = vmatprep.subr.mxu0 0.0
        %816 = vmatpush1.xpose.msra.mxu0 0.0
        %817 = vmatprep.subr.mxu0 0.0
        %818 = vmatpush1.xpose.msra.mxu0 0.0
        %819 = vmatprep.subr.mxu0 0.0
        %820 = vmatpush1.xpose.msra.mxu0 0.0
        %821 = vmatprep.subr.mxu0 0.0
        %822 = vmatpush1.xpose.msra.mxu0 0.0
        %823 = vmatprep.subr.mxu0 0.0
        %824 = vmatpush1.xpose.msra.mxu0 0.0
        %825 = vmatprep.subr.mxu0 0.0
        %826 = vmatpush1.xpose.msra.mxu0 0.0
        %827 = vmatprep.subr.mxu0 0.0
        %828 = vmatpush1.xpose.msra.mxu0 0.0
        %829 = vmatprep.subr.mxu0 0.0
        %830 = vmatpush1.xpose.msra.mxu0 0.0
        %831 = vmatprep.subr.mxu0 0.0
        %832 = vmatpush1.xpose.msra.mxu0 0.0
        %833 = vmatprep.subr.mxu0 0.0
        %834 = vmatpush1.xpose.msra.mxu0 %v803
        %835 = vmatprep.subr.mxu0 0.0
        %836 = vmatpush1.xpose.msra.mxu0 %v800
        %837 = vmatprep.subr.mxu0 0.0
        %838 = vmatpush2.xpose.msra.mxu0 0.0
        %839 = vmatprep.subr.mxu0 0.0
        %840 = vmatpush2.xpose.msra.mxu0 0.0
        %841 = vmatprep.subr.mxu0 0.0
        %842 = vmatpush2.xpose.msra.mxu0 0.0
        %843 = vmatprep.subr.mxu0 0.0
        %844 = vmatpush2.xpose.msra.mxu0 0.0
        %845 = vmatprep.subr.mxu0 0.0
        %846 = vmatpush2.xpose.msra.mxu0 0.0
        %847 = vmatprep.subr.mxu0 0.0
        %848 = vmatpush2.xpose.msra.mxu0 0.0
        %849 = vmatprep.subr.mxu0 0.0
        %850 = vmatpush2.xpose.msra.mxu0 0.0
        %851 = vmatprep.subr.mxu0 0.0
        %852 = vmatpush2.xpose.msra.mxu0 0.0
        %853 = vmatprep.subr.mxu0 0.0
        %854 = vmatpush2.xpose.msra.mxu0 0.0
        %855 = vmatprep.subr.mxu0 0.0
        %856 = vmatpush2.xpose.msra.mxu0 0.0
        %857 = vmatprep.subr.mxu0 0.0
        %858 = vmatpush2.xpose.msra.mxu0 0.0
        %859 = vmatprep.subr.mxu0 0.0
        %860 = vmatpush2.xpose.msra.mxu0 0.0
        %861 = vmatprep.subr.mxu0 0.0
        %862 = vmatpush2.xpose.msra.mxu0 0.0
        %863 = vmatprep.subr.mxu0 0.0
        %864 = vmatpush2.xpose.msra.mxu0 0.0
        %865 = vmatprep.subr.mxu0 0.0
        %866 = vmatpush2.xpose.msra.mxu0 0.0
        %867 = vmatprep.subr.mxu0 0.0
        %868 = vmatpush2.xpose.msra.mxu0 0.0
        %869 = vmatprep.mubr.f32.mxu0 0.0
        %870 = vmatmul.mubr.f32.gmra.mxu0 %v794
        %v871 = vpop.f32.mrf.mxu0
        %v872 = vadd.f32 0.0, %v871
        %v873 = vpop.f32.mrf.mxu0
        %874 = vmatprep.mubr.f32.mxu0 0.0
        %875 = vmatmul.mubr.f32.gmra.mxu0 %v797
        %v876 = vpop.f32.mrf.mxu0
        %v877 = vadd.f32 0.0, %v876
        %v878 = vpop.f32.mrf.mxu0
        %879 = vdwg.mxu0
        %vm880 = vcmask 130048
        %v881 = vsel %vm880, %v872, -inf
        %882 = vmax.xlane.f32.xlu0 %v881
        %v883 = vpop.xlane.xlu0 %882
        %v884 = vsel %vm880, %v877, -inf
        %885 = vmax.xlane.f32.xlu0 %v884
        %v886 = vpop.xlane.xlu0 %885
        %v887 = vsub.f32 %v872, %v883
        %v888 = vsub.f32 %v877, %v886
        %v889 = vmul.f32 %v887, 1.442695
        %v890 = vpow.pop %v889
        %v891 = vmul.f32 %v888, 1.442695
        %v892 = vpow.pop %v891
        %v893 = vsel %vm880, %v890, 0.0
        %894 = vadd.xlane.f32.xlu0 %v893
        %v895 = vpop.xlane.xlu0 %894
        %v896 = vsel %vm880, %v892, 0.0
        %897 = vadd.xlane.f32.xlu0 %v896
        %v898 = vpop.xlane.xlu0 %897
        %v899 = vrcp.pop %v895
        %v900 = vrcp.pop %v898
        %v901 = vmul.f32 %v890, %v899
        %v902 = vmul.f32 %v892, %v900
        %v904 = vsel %vm880, %v901, 0
        %v907 = vsel %vm880, %v902, 0
        %909 = vmatprep.subr.mxu0 0.0
        %910 = vmatpush1.msra.mxu0 0.0
        %911 = vmatprep.subr.mxu0 0.0
        %912 = vmatpush1.msra.mxu0 0.0
        %913 = vmatprep.subr.mxu0 0.0
        %914 = vmatpush1.msra.mxu0 0.0
        %915 = vmatprep.subr.mxu0 0.0
        %916 = vmatpush1.msra.mxu0 0.0
        %917 = vmatprep.subr.mxu0 0.0
        %918 = vmatpush1.msra.mxu0 0.0
        %919 = vmatprep.subr.mxu0 0.0
        %920 = vmatpush1.msra.mxu0 0.0
        %921 = vmatprep.subr.mxu0 0.0
        %922 = vmatpush1.msra.mxu0 0.0
        %923 = vmatprep.subr.mxu0 0.0
        %924 = vmatpush1.msra.mxu0 0.0
        %925 = vmatprep.subr.mxu0 0.0
        %926 = vmatpush1.msra.mxu0 0.0
        %927 = vmatprep.subr.mxu0 0.0
        %928 = vmatpush1.msra.mxu0 0.0
        %929 = vmatprep.subr.mxu0 0.0
        %930 = vmatpush1.msra.mxu0 0.0
        %931 = vmatprep.subr.mxu0 0.0
        %932 = vmatpush1.msra.mxu0 0.0
        %933 = vmatprep.subr.mxu0 0.0
        %934 = vmatpush1.msra.mxu0 0.0
        %935 = vmatprep.subr.mxu0 0.0
        %936 = vmatpush1.msra.mxu0 0.0
        %937 = vmatprep.subr.mxu0 0.0
        %938 = vmatpush1.msra.mxu0 %v789
        %939 = vmatprep.subr.mxu0 0.0
        %940 = vmatpush1.msra.mxu0 %v784
        %941 = vmatprep.subr.mxu0 0.0
        %942 = vmatpush2.msra.mxu0 0.0
        %943 = vmatprep.subr.mxu0 0.0
        %944 = vmatpush2.msra.mxu0 0.0
        %945 = vmatprep.subr.mxu0 0.0
        %946 = vmatpush2.msra.mxu0 0.0
        %947 = vmatprep.subr.mxu0 0.0
        %948 = vmatpush2.msra.mxu0 0.0
        %949 = vmatprep.subr.mxu0 0.0
        %950 = vmatpush2.msra.mxu0 0.0
        %951 = vmatprep.subr.mxu0 0.0
        %952 = vmatpush2.msra.mxu0 0.0
        %953 = vmatprep.subr.mxu0 0.0
        %954 = vmatpush2.msra.mxu0 0.0
        %955 = vmatprep.subr.mxu0 0.0
        %956 = vmatpush2.msra.mxu0 0.0
        %957 = vmatprep.subr.mxu0 0.0
        %958 = vmatpush2.msra.mxu0 0.0
        %959 = vmatprep.subr.mxu0 0.0
        %960 = vmatpush2.msra.mxu0 0.0
        %961 = vmatprep.subr.mxu0 0.0
        %962 = vmatpush2.msra.mxu0 0.0
        %963 = vmatprep.subr.mxu0 0.0
        %964 = vmatpush2.msra.mxu0 0.0
        %965 = vmatprep.subr.mxu0 0.0
        %966 = vmatpush2.msra.mxu0 0.0
        %967 = vmatprep.subr.mxu0 0.0
        %968 = vmatpush2.msra.mxu0 0.0
        %969 = vmatprep.subr.mxu0 0.0
        %970 = vmatpush2.msra.mxu0 0.0
        %971 = vmatprep.subr.mxu0 0.0
        %972 = vmatpush2.msra.mxu0 0.0
        %973 = vmatprep.mubr.f32.mxu0 0.0
        %974 = vmatmul.mubr.f32.gmra.mxu0 %v904
        %v975 = vpop.f32.mrf.mxu0
        %v976 = vadd.f32 0.0, %v975
        %v977 = vpop.f32.mrf.mxu0
        %978 = vmatprep.mubr.f32.mxu0 0.0
        %979 = vmatmul.mubr.f32.gmra.mxu0 %v907
        %v980 = vpop.f32.mrf.mxu0
        %v981 = vadd.f32 0.0, %v980
        %v982 = vpop.f32.mrf.mxu0
        %983 = vdwg.mxu0
        %984 = vrot.lane.b32.xlu0 %v594, 120
        %v985 = vpop.permute.xlu0 %984
        %986 = vrot.lane.b32.xlu0 %v599, 120
        %v987 = vpop.permute.xlu0 %986
        %988 = vrot.lane.b32.xlu0 %v688, 120
        %v989 = vpop.permute.xlu0 %988
        %990 = vrot.lane.b32.xlu0 %v693, 120
        %v991 = vpop.permute.xlu0 %990
        %v992 = vsel %vm792, %v985, 0
        %v994 = vsel %vm792, %v987, 0
        %v996 = vsel %vm792, %v989, 0
        %v998 = vsel %vm792, %v991, 0
        %1000 = vmatprep.subr.mxu0 0.0
        %1001 = vmatpush1.xpose.msra.mxu0 0.0
        %1002 = vmatprep.subr.mxu0 0.0
        %1003 = vmatpush1.xpose.msra.mxu0 0.0
        %1004 = vmatprep.subr.mxu0 0.0
        %1005 = vmatpush1.xpose.msra.mxu0 0.0
        %1006 = vmatprep.subr.mxu0 0.0
        %1007 = vmatpush1.xpose.msra.mxu0 0.0
        %1008 = vmatprep.subr.mxu0 0.0
        %1009 = vmatpush1.xpose.msra.mxu0 0.0
        %1010 = vmatprep.subr.mxu0 0.0
        %1011 = vmatpush1.xpose.msra.mxu0 0.0
        %1012 = vmatprep.subr.mxu0 0.0
        %1013 = vmatpush1.xpose.msra.mxu0 0.0
        %1014 = vmatprep.subr.mxu0 0.0
        %1015 = vmatpush1.xpose.msra.mxu0 0.0
        %1016 = vmatprep.subr.mxu0 0.0
        %1017 = vmatpush1.xpose.msra.mxu0 0.0
        %1018 = vmatprep.subr.mxu0 0.0
        %1019 = vmatpush1.xpose.msra.mxu0 0.0
        %1020 = vmatprep.subr.mxu0 0.0
        %1021 = vmatpush1.xpose.msra.mxu0 0.0
        %1022 = vmatprep.subr.mxu0 0.0
        %1023 = vmatpush1.xpose.msra.mxu0 0.0
        %1024 = vmatprep.subr.mxu0 0.0
        %1025 = vmatpush1.xpose.msra.mxu0 0.0
        %1026 = vmatprep.subr.mxu0 0.0
        %1027 = vmatpush1.xpose.msra.mxu0 0.0
        %1028 = vmatprep.subr.mxu0 0.0
        %1029 = vmatpush1.xpose.msra.mxu0 %v998
        %1030 = vmatprep.subr.mxu0 0.0
        %1031 = vmatpush1.xpose.msra.mxu0 %v996
        %1032 = vmatprep.subr.mxu0 0.0
        %1033 = vmatpush2.xpose.msra.mxu0 0.0
        %1034 = vmatprep.subr.mxu0 0.0
        %1035 = vmatpush2.xpose.msra.mxu0 0.0
        %1036 = vmatprep.subr.mxu0 0.0
        %1037 = vmatpush2.xpose.msra.mxu0 0.0
        %1038 = vmatprep.subr.mxu0 0.0
        %1039 = vmatpush2.xpose.msra.mxu0 0.0
        %1040 = vmatprep.subr.mxu0 0.0
        %1041 = vmatpush2.xpose.msra.mxu0 0.0
        %1042 = vmatprep.subr.mxu0 0.0
        %1043 = vmatpush2.xpose.msra.mxu0 0.0
        %1044 = vmatprep.subr.mxu0 0.0
        %1045 = vmatpush2.xpose.msra.mxu0 0.0
        %1046 = vmatprep.subr.mxu0 0.0
        %1047 = vmatpush2.xpose.msra.mxu0 0.0
        %1048 = vmatprep.subr.mxu0 0.0
        %1049 = vmatpush2.xpose.msra.mxu0 0.0
        %1050 = vmatprep.subr.mxu0 0.0
        %1051 = vmatpush2.xpose.msra.mxu0 0.0
        %1052 = vmatprep.subr.mxu0 0.0
        %1053 = vmatpush2.xpose.msra.mxu0 0.0
        %1054 = vmatprep.subr.mxu0 0.0
        %1055 = vmatpush2.xpose.msra.mxu0 0.0
        %1056 = vmatprep.subr.mxu0 0.0
        %1057 = vmatpush2.xpose.msra.mxu0 0.0
        %1058 = vmatprep.subr.mxu0 0.0
        %1059 = vmatpush2.xpose.msra.mxu0 0.0
        %1060 = vmatprep.subr.mxu0 0.0
        %1061 = vmatpush2.xpose.msra.mxu0 0.0
        %1062 = vmatprep.subr.mxu0 0.0
        %1063 = vmatpush2.xpose.msra.mxu0 0.0
        %1064 = vmatprep.mubr.f32.mxu0 0.0
        %1065 = vmatmul.mubr.f32.gmra.mxu0 %v992
        %v1066 = vpop.f32.mrf.mxu0
        %v1067 = vadd.f32 0.0, %v1066
        %v1068 = vpop.f32.mrf.mxu0
        %1069 = vmatprep.mubr.f32.mxu0 0.0
        %1070 = vmatmul.mubr.f32.gmra.mxu0 %v994
        %v1071 = vpop.f32.mrf.mxu0
        %v1072 = vadd.f32 0.0, %v1071
        %v1073 = vpop.f32.mrf.mxu0
        %1074 = vdwg.mxu0
        %v1075 = vsel %vm880, %v1067, -inf
        %1076 = vmax.xlane.f32.xlu0 %v1075
        %v1077 = vpop.xlane.xlu0 %1076
        %v1078 = vsel %vm880, %v1072, -inf
        %1079 = vmax.xlane.f32.xlu0 %v1078
        %v1080 = vpop.xlane.xlu0 %1079
        %v1081 = vsub.f32 %v1067, %v1077
        %v1082 = vsub.f32 %v1072, %v1080
        %v1083 = vmul.f32 %v1081, 1.442695
        %v1084 = vpow.pop %v1083
        %v1085 = vmul.f32 %v1082, 1.442695
        %v1086 = vpow.pop %v1085
        %v1087 = vsel %vm880, %v1084, 0.0
        %1088 = vadd.xlane.f32.xlu0 %v1087
        %v1089 = vpop.xlane.xlu0 %1088
        %v1090 = vsel %vm880, %v1086, 0.0
        %1091 = vadd.xlane.f32.xlu0 %v1090
        %v1092 = vpop.xlane.xlu0 %1091
        %v1093 = vrcp.pop %v1089
        %v1094 = vrcp.pop %v1092
        %v1095 = vmul.f32 %v1084, %v1093
        %v1096 = vmul.f32 %v1086, %v1094
        %1099 = vrot.lane.b32.xlu0 %v784, 120
        %v1100 = vpop.permute.xlu0 %1099
        %1101 = vrot.lane.b32.xlu0 %v789, 120
        %v1102 = vpop.permute.xlu0 %1101
        %v1106 = vsel %vm880, %v1095, 0
        %v1109 = vsel %vm880, %v1096, 0
        %1111 = vmatprep.subr.mxu0 0.0
        %1112 = vmatpush1.msra.mxu0 0.0
        %1113 = vmatprep.subr.mxu0 0.0
        %1114 = vmatpush1.msra.mxu0 0.0
        %1115 = vmatprep.subr.mxu0 0.0
        %1116 = vmatpush1.msra.mxu0 0.0
        %1117 = vmatprep.subr.mxu0 0.0
        %1118 = vmatpush1.msra.mxu0 0.0
        %1119 = vmatprep.subr.mxu0 0.0
        %1120 = vmatpush1.msra.mxu0 0.0
        %1121 = vmatprep.subr.mxu0 0.0
        %1122 = vmatpush1.msra.mxu0 0.0
        %1123 = vmatprep.subr.mxu0 0.0
        %1124 = vmatpush1.msra.mxu0 0.0
        %1125 = vmatprep.subr.mxu0 0.0
        %1126 = vmatpush1.msra.mxu0 0.0
        %1127 = vmatprep.subr.mxu0 0.0
        %1128 = vmatpush1.msra.mxu0 0.0
        %1129 = vmatprep.subr.mxu0 0.0
        %1130 = vmatpush1.msra.mxu0 0.0
        %1131 = vmatprep.subr.mxu0 0.0
        %1132 = vmatpush1.msra.mxu0 0.0
        %1133 = vmatprep.subr.mxu0 0.0
        %1134 = vmatpush1.msra.mxu0 0.0
        %1135 = vmatprep.subr.mxu0 0.0
        %1136 = vmatpush1.msra.mxu0 0.0
        %1137 = vmatprep.subr.mxu0 0.0
        %1138 = vmatpush1.msra.mxu0 0.0
        %1139 = vmatprep.subr.mxu0 0.0
        %1140 = vmatpush1.msra.mxu0 %v1102
        %1141 = vmatprep.subr.mxu0 0.0
        %1142 = vmatpush1.msra.mxu0 %v1100
        %1143 = vmatprep.subr.mxu0 0.0
        %1144 = vmatpush2.msra.mxu0 0.0
        %1145 = vmatprep.subr.mxu0 0.0
        %1146 = vmatpush2.msra.mxu0 0.0
        %1147 = vmatprep.subr.mxu0 0.0
        %1148 = vmatpush2.msra.mxu0 0.0
        %1149 = vmatprep.subr.mxu0 0.0
        %1150 = vmatpush2.msra.mxu0 0.0
        %1151 = vmatprep.subr.mxu0 0.0
        %1152 = vmatpush2.msra.mxu0 0.0
        %1153 = vmatprep.subr.mxu0 0.0
        %1154 = vmatpush2.msra.mxu0 0.0
        %1155 = vmatprep.subr.mxu0 0.0
        %1156 = vmatpush2.msra.mxu0 0.0
        %1157 = vmatprep.subr.mxu0 0.0
        %1158 = vmatpush2.msra.mxu0 0.0
        %1159 = vmatprep.subr.mxu0 0.0
        %1160 = vmatpush2.msra.mxu0 0.0
        %1161 = vmatprep.subr.mxu0 0.0
        %1162 = vmatpush2.msra.mxu0 0.0
        %1163 = vmatprep.subr.mxu0 0.0
        %1164 = vmatpush2.msra.mxu0 0.0
        %1165 = vmatprep.subr.mxu0 0.0
        %1166 = vmatpush2.msra.mxu0 0.0
        %1167 = vmatprep.subr.mxu0 0.0
        %1168 = vmatpush2.msra.mxu0 0.0
        %1169 = vmatprep.subr.mxu0 0.0
        %1170 = vmatpush2.msra.mxu0 0.0
        %1171 = vmatprep.subr.mxu0 0.0
        %1172 = vmatpush2.msra.mxu0 0.0
        %1173 = vmatprep.subr.mxu0 0.0
        %1174 = vmatpush2.msra.mxu0 0.0
        %1175 = vmatprep.mubr.f32.mxu0 0.0
        %1176 = vmatmul.mubr.f32.gmra.mxu0 %v1106
        %v1177 = vpop.f32.mrf.mxu0
        %v1178 = vadd.f32 0.0, %v1177
        %v1179 = vpop.f32.mrf.mxu0
        %1180 = vmatprep.mubr.f32.mxu0 0.0
        %1181 = vmatmul.mubr.f32.gmra.mxu0 %v1109
        %v1182 = vpop.f32.mrf.mxu0
        %v1183 = vadd.f32 0.0, %v1182
        %v1184 = vpop.f32.mrf.mxu0
        %1185 = vdwg.mxu0
        %1186 = vrot.lane.b32.xlu0 %v594, 112
        %v1187 = vpop.permute.xlu0 %1186
        %1188 = vrot.lane.b32.xlu0 %v599, 112
        %v1189 = vpop.permute.xlu0 %1188
        %1190 = vrot.lane.b32.xlu0 %v688, 112
        %v1191 = vpop.permute.xlu0 %1190
        %1192 = vrot.lane.b32.xlu0 %v693, 112
        %v1193 = vpop.permute.xlu0 %1192
        %v1194 = vsel %vm792, %v1187, 0
        %v1196 = vsel %vm792, %v1189, 0
        %v1198 = vsel %vm792, %v1191, 0
        %v1200 = vsel %vm792, %v1193, 0
        %1202 = vmatprep.subr.mxu0 0.0
        %1203 = vmatpush1.xpose.msra.mxu0 0.0
        %1204 = vmatprep.subr.mxu0 0.0
        %1205 = vmatpush1.xpose.msra.mxu0 0.0
        %1206 = vmatprep.subr.mxu0 0.0
        %1207 = vmatpush1.xpose.msra.mxu0 0.0
        %1208 = vmatprep.subr.mxu0 0.0
        %1209 = vmatpush1.xpose.msra.mxu0 0.0
        %1210 = vmatprep.subr.mxu0 0.0
        %1211 = vmatpush1.xpose.msra.mxu0 0.0
        %1212 = vmatprep.subr.mxu0 0.0
        %1213 = vmatpush1.xpose.msra.mxu0 0.0
        %1214 = vmatprep.subr.mxu0 0.0
        %1215 = vmatpush1.xpose.msra.mxu0 0.0
        %1216 = vmatprep.subr.mxu0 0.0
        %1217 = vmatpush1.xpose.msra.mxu0 0.0
        %1218 = vmatprep.subr.mxu0 0.0
        %1219 = vmatpush1.xpose.msra.mxu0 0.0
        %1220 = vmatprep.subr.mxu0 0.0
        %1221 = vmatpush1.xpose.msra.mxu0 0.0
        %1222 = vmatprep.subr.mxu0 0.0
        %1223 = vmatpush1.xpose.msra.mxu0 0.0
        %1224 = vmatprep.subr.mxu0 0.0
        %1225 = vmatpush1.xpose.msra.mxu0 0.0
        %1226 = vmatprep.subr.mxu0 0.0
        %1227 = vmatpush1.xpose.msra.mxu0 0.0
        %1228 = vmatprep.subr.mxu0 0.0
        %1229 = vmatpush1.xpose.msra.mxu0 0.0
        %1230 = vmatprep.subr.mxu0 0.0
        %1231 = vmatpush1.xpose.msra.mxu0 %v1200
        %1232 = vmatprep.subr.mxu0 0.0
        %1233 = vmatpush1.xpose.msra.mxu0 %v1198
        %1234 = vmatprep.subr.mxu0 0.0
        %1235 = vmatpush2.xpose.msra.mxu0 0.0
        %1236 = vmatprep.subr.mxu0 0.0
        %1237 = vmatpush2.xpose.msra.mxu0 0.0
        %1238 = vmatprep.subr.mxu0 0.0
        %1239 = vmatpush2.xpose.msra.mxu0 0.0
        %1240 = vmatprep.subr.mxu0 0.0
        %1241 = vmatpush2.xpose.msra.mxu0 0.0
        %1242 = vmatprep.subr.mxu0 0.0
        %1243 = vmatpush2.xpose.msra.mxu0 0.0
        %1244 = vmatprep.subr.mxu0 0.0
        %1245 = vmatpush2.xpose.msra.mxu0 0.0
        %1246 = vmatprep.subr.mxu0 0.0
        %1247 = vmatpush2.xpose.msra.mxu0 0.0
        %1248 = vmatprep.subr.mxu0 0.0
        %1249 = vmatpush2.xpose.msra.mxu0 0.0
        %1250 = vmatprep.subr.mxu0 0.0
        %1251 = vmatpush2.xpose.msra.mxu0 0.0
        %1252 = vmatprep.subr.mxu0 0.0
        %1253 = vmatpush2.xpose.msra.mxu0 0.0
        %1254 = vmatprep.subr.mxu0 0.0
        %1255 = vmatpush2.xpose.msra.mxu0 0.0
        %1256 = vmatprep.subr.mxu0 0.0
        %1257 = vmatpush2.xpose.msra.mxu0 0.0
        %1258 = vmatprep.subr.mxu0 0.0
        %1259 = vmatpush2.xpose.msra.mxu0 0.0
        %1260 = vmatprep.subr.mxu0 0.0
        %1261 = vmatpush2.xpose.msra.mxu0 0.0
        %1262 = vmatprep.subr.mxu0 0.0
        %1263 = vmatpush2.xpose.msra.mxu0 0.0
        %1264 = vmatprep.subr.mxu0 0.0
        %1265 = vmatpush2.xpose.msra.mxu0 0.0
        %1266 = vmatprep.mubr.f32.mxu0 0.0
        %1267 = vmatmul.mubr.f32.gmra.mxu0 %v1194
        %v1268 = vpop.f32.mrf.mxu0
        %v1269 = vadd.f32 0.0, %v1268
        %v1270 = vpop.f32.mrf.mxu0
        %1271 = vmatprep.mubr.f32.mxu0 0.0
        %1272 = vmatmul.mubr.f32.gmra.mxu0 %v1196
        %v1273 = vpop.f32.mrf.mxu0
        %v1274 = vadd.f32 0.0, %v1273
        %v1275 = vpop.f32.mrf.mxu0
        %1276 = vdwg.mxu0
        %v1277 = vsel %vm880, %v1269, -inf
        %1278 = vmax.xlane.f32.xlu0 %v1277
        %v1279 = vpop.xlane.xlu0 %1278
        %v1280 = vsel %vm880, %v1274, -inf
        %1281 = vmax.xlane.f32.xlu0 %v1280
        %v1282 = vpop.xlane.xlu0 %1281
        %v1283 = vsub.f32 %v1269, %v1279
        %v1284 = vsub.f32 %v1274, %v1282
        %v1285 = vmul.f32 %v1283, 1.442695
        %v1286 = vpow.pop %v1285
        %v1287 = vmul.f32 %v1284, 1.442695
        %v1288 = vpow.pop %v1287
        %v1289 = vsel %vm880, %v1286, 0.0
        %1290 = vadd.xlane.f32.xlu0 %v1289
        %v1291 = vpop.xlane.xlu0 %1290
        %v1292 = vsel %vm880, %v1288, 0.0
        %1293 = vadd.xlane.f32.xlu0 %v1292
        %v1294 = vpop.xlane.xlu0 %1293
        %v1295 = vrcp.pop %v1291
        %v1296 = vrcp.pop %v1294
        %v1297 = vmul.f32 %v1286, %v1295
        %v1298 = vmul.f32 %v1288, %v1296
        %1299 = vrot.lane.b32.xlu0 %v784, 112
        %v1300 = vpop.permute.xlu0 %1299
        %1301 = vrot.lane.b32.xlu0 %v789, 112
        %v1302 = vpop.permute.xlu0 %1301
        %v1306 = vsel %vm880, %v1297, 0
        %v1309 = vsel %vm880, %v1298, 0
        %1311 = vmatprep.subr.mxu0 0.0
        %1312 = vmatpush1.msra.mxu0 0.0
        %1313 = vmatprep.subr.mxu0 0.0
        %1314 = vmatpush1.msra.mxu0 0.0
        %1315 = vmatprep.subr.mxu0 0.0
        %1316 = vmatpush1.msra.mxu0 0.0
        %1317 = vmatprep.subr.mxu0 0.0
        %1318 = vmatpush1.msra.mxu0 0.0
        %1319 = vmatprep.subr.mxu0 0.0
        %1320 = vmatpush1.msra.mxu0 0.0
        %1321 = vmatprep.subr.mxu0 0.0
        %1322 = vmatpush1.msra.mxu0 0.0
        %1323 = vmatprep.subr.mxu0 0.0
        %1324 = vmatpush1.msra.mxu0 0.0
        %1325 = vmatprep.subr.mxu0 0.0
        %1326 = vmatpush1.msra.mxu0 0.0
        %1327 = vmatprep.subr.mxu0 0.0
        %1328 = vmatpush1.msra.mxu0 0.0
        %1329 = vmatprep.subr.mxu0 0.0
        %1330 = vmatpush1.msra.mxu0 0.0
        %1331 = vmatprep.subr.mxu0 0.0
        %1332 = vmatpush1.msra.mxu0 0.0
        %1333 = vmatprep.subr.mxu0 0.0
        %1334 = vmatpush1.msra.mxu0 0.0
        %1335 = vmatprep.subr.mxu0 0.0
        %1336 = vmatpush1.msra.mxu0 0.0
        %1337 = vmatprep.subr.mxu0 0.0
        %1338 = vmatpush1.msra.mxu0 0.0
        %1339 = vmatprep.subr.mxu0 0.0
        %1340 = vmatpush1.msra.mxu0 %v1302
        %1341 = vmatprep.subr.mxu0 0.0
        %1342 = vmatpush1.msra.mxu0 %v1300
        %1343 = vmatprep.subr.mxu0 0.0
        %1344 = vmatpush2.msra.mxu0 0.0
        %1345 = vmatprep.subr.mxu0 0.0
        %1346 = vmatpush2.msra.mxu0 0.0
        %1347 = vmatprep.subr.mxu0 0.0
        %1348 = vmatpush2.msra.mxu0 0.0
        %1349 = vmatprep.subr.mxu0 0.0
        %1350 = vmatpush2.msra.mxu0 0.0
        %1351 = vmatprep.subr.mxu0 0.0
        %1352 = vmatpush2.msra.mxu0 0.0
        %1353 = vmatprep.subr.mxu0 0.0
        %1354 = vmatpush2.msra.mxu0 0.0
        %1355 = vmatprep.subr.mxu0 0.0
        %1356 = vmatpush2.msra.mxu0 0.0
        %1357 = vmatprep.subr.mxu0 0.0
        %1358 = vmatpush2.msra.mxu0 0.0
        %1359 = vmatprep.subr.mxu0 0.0
        %1360 = vmatpush2.msra.mxu0 0.0
        %1361 = vmatprep.subr.mxu0 0.0
        %1362 = vmatpush2.msra.mxu0 0.0
        %1363 = vmatprep.subr.mxu0 0.0
        %1364 = vmatpush2.msra.mxu0 0.0
        %1365 = vmatprep.subr.mxu0 0.0
        %1366 = vmatpush2.msra.mxu0 0.0
        %1367 = vmatprep.subr.mxu0 0.0
        %1368 = vmatpush2.msra.mxu0 0.0
        %1369 = vmatprep.subr.mxu0 0.0
        %1370 = vmatpush2.msra.mxu0 0.0
        %1371 = vmatprep.subr.mxu0 0.0
        %1372 = vmatpush2.msra.mxu0 0.0
        %1373 = vmatprep.subr.mxu0 0.0
        %1374 = vmatpush2.msra.mxu0 0.0
        %1375 = vmatprep.mubr.f32.mxu0 0.0
        %1376 = vmatmul.mubr.f32.gmra.mxu0 %v1306
        %v1377 = vpop.f32.mrf.mxu0
        %v1378 = vadd.f32 0.0, %v1377
        %v1379 = vpop.f32.mrf.mxu0
        %1380 = vmatprep.mubr.f32.mxu0 0.0
        %1381 = vmatmul.mubr.f32.gmra.mxu0 %v1309
        %v1382 = vpop.f32.mrf.mxu0
        %v1383 = vadd.f32 0.0, %v1382
        %v1384 = vpop.f32.mrf.mxu0
        %1385 = vdwg.mxu0
        %1386 = vrot.lane.b32.xlu0 %v594, 104
        %v1387 = vpop.permute.xlu0 %1386
        %1388 = vrot.lane.b32.xlu0 %v599, 104
        %v1389 = vpop.permute.xlu0 %1388
        %1390 = vrot.lane.b32.xlu0 %v688, 104
        %v1391 = vpop.permute.xlu0 %1390
        %1392 = vrot.lane.b32.xlu0 %v693, 104
        %v1393 = vpop.permute.xlu0 %1392
        %v1394 = vsel %vm792, %v1387, 0
        %v1396 = vsel %vm792, %v1389, 0
        %v1398 = vsel %vm792, %v1391, 0
        %v1400 = vsel %vm792, %v1393, 0
        %1402 = vmatprep.subr.mxu0 0.0
        %1403 = vmatpush1.xpose.msra.mxu0 0.0
        %1404 = vmatprep.subr.mxu0 0.0
        %1405 = vmatpush1.xpose.msra.mxu0 0.0
        %1406 = vmatprep.subr.mxu0 0.0
        %1407 = vmatpush1.xpose.msra.mxu0 0.0
        %1408 = vmatprep.subr.mxu0 0.0
        %1409 = vmatpush1.xpose.msra.mxu0 0.0
        %1410 = vmatprep.subr.mxu0 0.0
        %1411 = vmatpush1.xpose.msra.mxu0 0.0
        %1412 = vmatprep.subr.mxu0 0.0
        %1413 = vmatpush1.xpose.msra.mxu0 0.0
        %1414 = vmatprep.subr.mxu0 0.0
        %1415 = vmatpush1.xpose.msra.mxu0 0.0
        %1416 = vmatprep.subr.mxu0 0.0
        %1417 = vmatpush1.xpose.msra.mxu0 0.0
        %1418 = vmatprep.subr.mxu0 0.0
        %1419 = vmatpush1.xpose.msra.mxu0 0.0
        %1420 = vmatprep.subr.mxu0 0.0
        %1421 = vmatpush1.xpose.msra.mxu0 0.0
        %1422 = vmatprep.subr.mxu0 0.0
        %1423 = vmatpush1.xpose.msra.mxu0 0.0
        %1424 = vmatprep.subr.mxu0 0.0
        %1425 = vmatpush1.xpose.msra.mxu0 0.0
        %1426 = vmatprep.subr.mxu0 0.0
        %1427 = vmatpush1.xpose.msra.mxu0 0.0
        %1428 = vmatprep.subr.mxu0 0.0
        %1429 = vmatpush1.xpose.msra.mxu0 0.0
        %1430 = vmatprep.subr.mxu0 0.0
        %1431 = vmatpush1.xpose.msra.mxu0 %v1400
        %1432 = vmatprep.subr.mxu0 0.0
        %1433 = vmatpush1.xpose.msra.mxu0 %v1398
        %1434 = vmatprep.subr.mxu0 0.0
        %1435 = vmatpush2.xpose.msra.mxu0 0.0
        %1436 = vmatprep.subr.mxu0 0.0
        %1437 = vmatpush2.xpose.msra.mxu0 0.0
        %1438 = vmatprep.subr.mxu0 0.0
        %1439 = vmatpush2.xpose.msra.mxu0 0.0
        %1440 = vmatprep.subr.mxu0 0.0
        %1441 = vmatpush2.xpose.msra.mxu0 0.0
        %1442 = vmatprep.subr.mxu0 0.0
        %1443 = vmatpush2.xpose.msra.mxu0 0.0
        %1444 = vmatprep.subr.mxu0 0.0
        %1445 = vmatpush2.xpose.msra.mxu0 0.0
        %1446 = vmatprep.subr.mxu0 0.0
        %1447 = vmatpush2.xpose.msra.mxu0 0.0
        %1448 = vmatprep.subr.mxu0 0.0
        %1449 = vmatpush2.xpose.msra.mxu0 0.0
        %1450 = vmatprep.subr.mxu0 0.0
        %1451 = vmatpush2.xpose.msra.mxu0 0.0
        %1452 = vmatprep.subr.mxu0 0.0
        %1453 = vmatpush2.xpose.msra.mxu0 0.0
        %1454 = vmatprep.subr.mxu0 0.0
        %1455 = vmatpush2.xpose.msra.mxu0 0.0
        %1456 = vmatprep.subr.mxu0 0.0
        %1457 = vmatpush2.xpose.msra.mxu0 0.0
        %1458 = vmatprep.subr.mxu0 0.0
        %1459 = vmatpush2.xpose.msra.mxu0 0.0
        %1460 = vmatprep.subr.mxu0 0.0
        %1461 = vmatpush2.xpose.msra.mxu0 0.0
        %1462 = vmatprep.subr.mxu0 0.0
        %1463 = vmatpush2.xpose.msra.mxu0 0.0
        %1464 = vmatprep.subr.mxu0 0.0
        %1465 = vmatpush2.xpose.msra.mxu0 0.0
        %1466 = vmatprep.mubr.f32.mxu0 0.0
        %1467 = vmatmul.mubr.f32.gmra.mxu0 %v1394
        %v1468 = vpop.f32.mrf.mxu0
        %v1469 = vadd.f32 0.0, %v1468
        %v1470 = vpop.f32.mrf.mxu0
        %1471 = vmatprep.mubr.f32.mxu0 0.0
        %1472 = vmatmul.mubr.f32.gmra.mxu0 %v1396
        %v1473 = vpop.f32.mrf.mxu0
        %v1474 = vadd.f32 0.0, %v1473
        %v1475 = vpop.f32.mrf.mxu0
        %1476 = vdwg.mxu0
        %v1477 = vsel %vm880, %v1469, -inf
        %1478 = vmax.xlane.f32.xlu0 %v1477
        %v1479 = vpop.xlane.xlu0 %1478
        %v1480 = vsel %vm880, %v1474, -inf
        %1481 = vmax.xlane.f32.xlu0 %v1480
        %v1482 = vpop.xlane.xlu0 %1481
        %v1483 = vsub.f32 %v1469, %v1479
        %v1484 = vsub.f32 %v1474, %v1482
        %v1485 = vmul.f32 %v1483, 1.442695
        %v1486 = vpow.pop %v1485
        %v1487 = vmul.f32 %v1484, 1.442695
        %v1488 = vpow.pop %v1487
        %v1489 = vsel %vm880, %v1486, 0.0
        %1490 = vadd.xlane.f32.xlu0 %v1489
        %v1491 = vpop.xlane.xlu0 %1490
        %v1492 = vsel %vm880, %v1488, 0.0
        %1493 = vadd.xlane.f32.xlu0 %v1492
        %v1494 = vpop.xlane.xlu0 %1493
        %v1495 = vrcp.pop %v1491
        %v1496 = vrcp.pop %v1494
        %v1497 = vmul.f32 %v1486, %v1495
        %v1498 = vmul.f32 %v1488, %v1496
        %1499 = vrot.lane.b32.xlu0 %v784, 104
        %v1500 = vpop.permute.xlu0 %1499
        %1501 = vrot.lane.b32.xlu0 %v789, 104
        %v1502 = vpop.permute.xlu0 %1501
        %v1506 = vsel %vm880, %v1497, 0
        %v1509 = vsel %vm880, %v1498, 0
        %1511 = vmatprep.subr.mxu0 0.0
        %1512 = vmatpush1.msra.mxu0 0.0
        %1513 = vmatprep.subr.mxu0 0.0
        %1514 = vmatpush1.msra.mxu0 0.0
        %1515 = vmatprep.subr.mxu0 0.0
        %1516 = vmatpush1.msra.mxu0 0.0
        %1517 = vmatprep.subr.mxu0 0.0
        %1518 = vmatpush1.msra.mxu0 0.0
        %1519 = vmatprep.subr.mxu0 0.0
        %1520 = vmatpush1.msra.mxu0 0.0
        %1521 = vmatprep.subr.mxu0 0.0
        %1522 = vmatpush1.msra.mxu0 0.0
        %1523 = vmatprep.subr.mxu0 0.0
        %1524 = vmatpush1.msra.mxu0 0.0
        %1525 = vmatprep.subr.mxu0 0.0
        %1526 = vmatpush1.msra.mxu0 0.0
        %1527 = vmatprep.subr.mxu0 0.0
        %1528 = vmatpush1.msra.mxu0 0.0
        %1529 = vmatprep.subr.mxu0 0.0
        %1530 = vmatpush1.msra.mxu0 0.0
        %1531 = vmatprep.subr.mxu0 0.0
        %1532 = vmatpush1.msra.mxu0 0.0
        %1533 = vmatprep.subr.mxu0 0.0
        %1534 = vmatpush1.msra.mxu0 0.0
        %1535 = vmatprep.subr.mxu0 0.0
        %1536 = vmatpush1.msra.mxu0 0.0
        %1537 = vmatprep.subr.mxu0 0.0
        %1538 = vmatpush1.msra.mxu0 0.0
        %1539 = vmatprep.subr.mxu0 0.0
        %1540 = vmatpush1.msra.mxu0 %v1502
        %1541 = vmatprep.subr.mxu0 0.0
        %1542 = vmatpush1.msra.mxu0 %v1500
        %1543 = vmatprep.subr.mxu0 0.0
        %1544 = vmatpush2.msra.mxu0 0.0
        %1545 = vmatprep.subr.mxu0 0.0
        %1546 = vmatpush2.msra.mxu0 0.0
        %1547 = vmatprep.subr.mxu0 0.0
        %1548 = vmatpush2.msra.mxu0 0.0
        %1549 = vmatprep.subr.mxu0 0.0
        %1550 = vmatpush2.msra.mxu0 0.0
        %1551 = vmatprep.subr.mxu0 0.0
        %1552 = vmatpush2.msra.mxu0 0.0
        %1553 = vmatprep.subr.mxu0 0.0
        %1554 = vmatpush2.msra.mxu0 0.0
        %1555 = vmatprep.subr.mxu0 0.0
        %1556 = vmatpush2.msra.mxu0 0.0
        %1557 = vmatprep.subr.mxu0 0.0
        %1558 = vmatpush2.msra.mxu0 0.0
        %1559 = vmatprep.subr.mxu0 0.0
        %1560 = vmatpush2.msra.mxu0 0.0
        %1561 = vmatprep.subr.mxu0 0.0
        %1562 = vmatpush2.msra.mxu0 0.0
        %1563 = vmatprep.subr.mxu0 0.0
        %1564 = vmatpush2.msra.mxu0 0.0
        %1565 = vmatprep.subr.mxu0 0.0
        %1566 = vmatpush2.msra.mxu0 0.0
        %1567 = vmatprep.subr.mxu0 0.0
        %1568 = vmatpush2.msra.mxu0 0.0
        %1569 = vmatprep.subr.mxu0 0.0
        %1570 = vmatpush2.msra.mxu0 0.0
        %1571 = vmatprep.subr.mxu0 0.0
        %1572 = vmatpush2.msra.mxu0 0.0
        %1573 = vmatprep.subr.mxu0 0.0
        %1574 = vmatpush2.msra.mxu0 0.0
        %1575 = vmatprep.mubr.f32.mxu0 0.0
        %1576 = vmatmul.mubr.f32.gmra.mxu0 %v1506
        %v1577 = vpop.f32.mrf.mxu0
        %v1578 = vadd.f32 0.0, %v1577
        %v1579 = vpop.f32.mrf.mxu0
        %1580 = vmatprep.mubr.f32.mxu0 0.0
        %1581 = vmatmul.mubr.f32.gmra.mxu0 %v1509
        %v1582 = vpop.f32.mrf.mxu0
        %v1583 = vadd.f32 0.0, %v1582
        %v1584 = vpop.f32.mrf.mxu0
        %1585 = vdwg.mxu0
        %1588 = vrot.lane.b32.xlu0 %v1178, 8
        %v1589 = vpop.permute.xlu0 %1588
        %1590 = vrot.lane.b32.xlu0 %v1183, 8
        %v1591 = vpop.permute.xlu0 %1590
        %1596 = vrot.lane.b32.xlu0 %v1378, 16
        %v1597 = vpop.permute.xlu0 %1596
        %1598 = vrot.lane.b32.xlu0 %v1383, 16
        %v1599 = vpop.permute.xlu0 %1598
        %1604 = vrot.lane.b32.xlu0 %v1578, 24
        %v1605 = vpop.permute.xlu0 %1604
        %1606 = vrot.lane.b32.xlu0 %v1583, 24
        %v1607 = vpop.permute.xlu0 %1606
        %v1610 = vsel %vm792, %v976, %v1589
        %v1611 = vsel %vm792, %v981, %v1591
        %v1612 = vsel %vm880, %v1610, %v1597
        %v1613 = vsel %vm880, %v1611, %v1599
        %vm1614 = vcmask 195584
        %v1615 = vsel %vm1614, %v1612, %v1605
        %v1616 = vsel %vm1614, %v1613, %v1607
        %v1617 = vld [vmem:[%s4] sm:$0xff]
        %v1618 = vld [vmem:[%s4 + $0x8] sm:$0xff]
        %v1619 = vld [vmem:[%s4 + $0x10] sm:$0xff]
        %v1620 = vld [vmem:[%s4 + $0x18] sm:$0xff]
        %v1621 = vld [vmem:[%s5] sm:$0x1]
        %v1623 = vlaneseq
        %v1624 = vshrl.u32 %v1623, 7
        %v1625 = vsub.s32 0, %v1624
        %v1626 = vrot.slane %v1621, %v1625
        %v1629 = vsel %vm520, %v1615, 0
        %v1632 = vsel %vm520, %v1616, 0
        %1634 = vmatprep.subr.mxu0 0.0
        %1635 = vmatpush1.msra.mxu0 0.0
        %1636 = vmatprep.subr.mxu0 0.0
        %1637 = vmatpush1.msra.mxu0 0.0
        %1638 = vmatprep.subr.mxu0 0.0
        %1639 = vmatpush1.msra.mxu0 0.0
        %1640 = vmatprep.subr.mxu0 0.0
        %1641 = vmatpush1.msra.mxu0 0.0
        %1642 = vmatprep.subr.mxu0 0.0
        %1643 = vmatpush1.msra.mxu0 0.0
        %1644 = vmatprep.subr.mxu0 0.0
        %1645 = vmatpush1.msra.mxu0 0.0
        %1646 = vmatprep.subr.mxu0 0.0
        %1647 = vmatpush1.msra.mxu0 0.0
        %1648 = vmatprep.subr.mxu0 0.0
        %1649 = vmatpush1.msra.mxu0 0.0
        %1650 = vmatprep.subr.mxu0 0.0
        %1651 = vmatpush1.msra.mxu0 0.0
        %1652 = vmatprep.subr.mxu0 0.0
        %1653 = vmatpush1.msra.mxu0 0.0
        %1654 = vmatprep.subr.mxu0 0.0
        %1655 = vmatpush1.msra.mxu0 0.0
        %1656 = vmatprep.subr.mxu0 0.0
        %1657 = vmatpush1.msra.mxu0 0.0
        %1658 = vmatprep.subr.mxu0 0.0
        %1659 = vmatpush1.msra.mxu0 %v1620
        %1660 = vmatprep.subr.mxu0 0.0
        %1661 = vmatpush1.msra.mxu0 %v1619
        %1662 = vmatprep.subr.mxu0 0.0
        %1663 = vmatpush1.msra.mxu0 %v1618
        %1664 = vmatprep.subr.mxu0 0.0
        %1665 = vmatpush1.msra.mxu0 %v1617
        %1666 = vmatprep.subr.mxu0 0.0
        %1667 = vmatpush2.msra.mxu0 0.0
        %1668 = vmatprep.subr.mxu0 0.0
        %1669 = vmatpush2.msra.mxu0 0.0
        %1670 = vmatprep.subr.mxu0 0.0
        %1671 = vmatpush2.msra.mxu0 0.0
        %1672 = vmatprep.subr.mxu0 0.0
        %1673 = vmatpush2.msra.mxu0 0.0
        %1674 = vmatprep.subr.mxu0 0.0
        %1675 = vmatpush2.msra.mxu0 0.0
        %1676 = vmatprep.subr.mxu0 0.0
        %1677 = vmatpush2.msra.mxu0 0.0
        %1678 = vmatprep.subr.mxu0 0.0
        %1679 = vmatpush2.msra.mxu0 0.0
        %1680 = vmatprep.subr.mxu0 0.0
        %1681 = vmatpush2.msra.mxu0 0.0
        %1682 = vmatprep.subr.mxu0 0.0
        %1683 = vmatpush2.msra.mxu0 0.0
        %1684 = vmatprep.subr.mxu0 0.0
        %1685 = vmatpush2.msra.mxu0 0.0
        %1686 = vmatprep.subr.mxu0 0.0
        %1687 = vmatpush2.msra.mxu0 0.0
        %1688 = vmatprep.subr.mxu0 0.0
        %1689 = vmatpush2.msra.mxu0 0.0
        %1690 = vmatprep.subr.mxu0 0.0
        %1691 = vmatpush2.msra.mxu0 0.0
        %1692 = vmatprep.subr.mxu0 0.0
        %1693 = vmatpush2.msra.mxu0 0.0
        %1694 = vmatprep.subr.mxu0 0.0
        %1695 = vmatpush2.msra.mxu0 0.0
        %1696 = vmatprep.subr.mxu0 0.0
        %1697 = vmatpush2.msra.mxu0 0.0
        %1698 = vmatprep.mubr.f32.mxu0 0.0
        %1699 = vmatmul.mubr.f32.gmra.mxu0 %v1629
        %v1700 = vpop.f32.mrf.mxu0
        %v1701 = vadd.f32 %v1626, %v1700
        %v1702 = vpop.f32.mrf.mxu0
        %1703 = vmatprep.mubr.f32.mxu0 0.0
        %1704 = vmatmul.mubr.f32.gmra.mxu0 %v1632
        %v1705 = vpop.f32.mrf.mxu0
        %v1706 = vadd.f32 %v1626, %v1705
        %v1707 = vpop.f32.mrf.mxu0
        %1708 = vdwg.mxu0
        %v1709 = vadd.f32 %v503, %v1701
        %v1710 = vadd.f32 %v504, %v1706
        %v1711 = vld [vmem:[%s6] sm:$0x1]
        %v1712 = vld [vmem:[%s7] sm:$0x1]
        %v1713 = vsel %vm520, %v1709, 0.0
        %1714 = vadd.xlane.f32.xlu0 %v1713
        %v1715 = vpop.xlane.xlu0 %1714
        %v1716 = vsel %vm520, %v1710, 0.0
        %1717 = vadd.xlane.f32.xlu0 %v1716
        %v1718 = vpop.xlane.xlu0 %1717
        %v1719 = vrcp.pop 32.0
        %v1720 = vmul.f32 %v1715, %v1719
        %v1721 = vmul.f32 %v1718, %v1719
        %v1722 = vsub.f32 %v1709, %v1720
        %v1723 = vsub.f32 %v1710, %v1721
        %v1724 = vmul.f32 %v1722, %v1722
        %v1725 = vmul.f32 %v1723, %v1723
        %v1726 = vsel %vm520, %v1724, 0.0
        %1727 = vadd.xlane.f32.xlu0 %v1726
        %v1728 = vpop.xlane.xlu0 %1727
        %v1729 = vsel %vm520, %v1725, 0.0
        %1730 = vadd.xlane.f32.xlu0 %v1729
        %v1731 = vpop.xlane.xlu0 %1730
        %v1732 = vmul.f32 %v1728, %v1719
        %v1733 = vmul.f32 %v1731, %v1719
        %v1734 = vadd.f32 %v1732, 1e-05
        %v1735 = vadd.f32 %v1733, 1e-05
        %v1736 = vrsqrt.pop %v1734
        %v1737 = vrsqrt.pop %v1735
        %v1738 = vmul.f32 %v1722, %v1736
        %v1739 = vmul.f32 %v1723, %v1737
        %v1741 = vlaneseq
        %v1742 = vshrl.u32 %v1741, 7
        %v1743 = vsub.s32 0, %v1742
        %v1744 = vrot.slane %v1711, %v1743
        %v1746 = vmul.f32 %v1738, %v1744
        %v1747 = vmul.f32 %v1739, %v1744
        %v1749 = vlaneseq
        %v1750 = vshrl.u32 %v1749, 7
        %v1751 = vsub.s32 0, %v1750
        %v1752 = vrot.slane %v1712, %v1751
        %v1754 = vadd.f32 %v1746, %v1752
        %v1755 = vadd.f32 %v1747, %v1752
        %v1756 = vld [vmem:[#allocation2] sm:$0xff]
        %v1757 = vld [vmem:[#allocation2 + $0x8] sm:$0xff]
        %v1758 = vld [vmem:[#allocation2 + $0x10] sm:$0xff]
        %v1759 = vld [vmem:[#allocation2 + $0x18] sm:$0xff]
        %v1760 = vld [vmem:[%s9] sm:$0x1]
        %v1762 = vlaneseq
        %v1763 = vshrl.u32 %v1762, 7
        %v1764 = vsub.s32 0, %v1763
        %v1765 = vrot.slane %v1760, %v1764
        %v1768 = vsel %vm520, %v1754, 0
        %v1771 = vsel %vm520, %v1755, 0
        %1773 = vmatprep.subr.mxu0 0.0
        %1774 = vmatpush1.msra.mxu0 0.0
        %1775 = vmatprep.subr.mxu0 0.0
        %1776 = vmatpush1.msra.mxu0 0.0
        %1777 = vmatprep.subr.mxu0 0.0
        %1778 = vmatpush1.msra.mxu0 0.0
        %1779 = vmatprep.subr.mxu0 0.0
        %1780 = vmatpush1.msra.mxu0 0.0
        %1781 = vmatprep.subr.mxu0 0.0
        %1782 = vmatpush1.msra.mxu0 0.0
        %1783 = vmatprep.subr.mxu0 0.0
        %1784 = vmatpush1.msra.mxu0 0.0
        %1785 = vmatprep.subr.mxu0 0.0
        %1786 = vmatpush1.msra.mxu0 0.0
        %1787 = vmatprep.subr.mxu0 0.0
        %1788 = vmatpush1.msra.mxu0 0.0
        %1789 = vmatprep.subr.mxu0 0.0
        %1790 = vmatpush1.msra.mxu0 0.0
        %1791 = vmatprep.subr.mxu0 0.0
        %1792 = vmatpush1.msra.mxu0 0.0
        %1793 = vmatprep.subr.mxu0 0.0
        %1794 = vmatpush1.msra.mxu0 0.0
        %1795 = vmatprep.subr.mxu0 0.0
        %1796 = vmatpush1.msra.mxu0 0.0
        %1797 = vmatprep.subr.mxu0 0.0
        %1798 = vmatpush1.msra.mxu0 %v1759
        %1799 = vmatprep.subr.mxu0 0.0
        %1800 = vmatpush1.msra.mxu0 %v1758
        %1801 = vmatprep.subr.mxu0 0.0
        %1802 = vmatpush1.msra.mxu0 %v1757
        %1803 = vmatprep.subr.mxu0 0.0
        %1804 = vmatpush1.msra.mxu0 %v1756
        %1805 = vmatprep.subr.mxu0 0.0
        %1806 = vmatpush2.msra.mxu0 0.0
        %1807 = vmatprep.subr.mxu0 0.0
        %1808 = vmatpush2.msra.mxu0 0.0
        %1809 = vmatprep.subr.mxu0 0.0
        %1810 = vmatpush2.msra.mxu0 0.0
        %1811 = vmatprep.subr.mxu0 0.0
        %1812 = vmatpush2.msra.mxu0 0.0
        %1813 = vmatprep.subr.mxu0 0.0
        %1814 = vmatpush2.msra.mxu0 0.0
        %1815 = vmatprep.subr.mxu0 0.0
        %1816 = vmatpush2.msra.mxu0 0.0
        %1817 = vmatprep.subr.mxu0 0.0
        %1818 = vmatpush2.msra.mxu0 0.0
        %1819 = vmatprep.subr.mxu0 0.0
        %1820 = vmatpush2.msra.mxu0 0.0
        %1821 = vmatprep.subr.mxu0 0.0
        %1822 = vmatpush2.msra.mxu0 0.0
        %1823 = vmatprep.subr.mxu0 0.0
        %1824 = vmatpush2.msra.mxu0 0.0
        %1825 = vmatprep.subr.mxu0 0.0
        %1826 = vmatpush2.msra.mxu0 0.0
        %1827 = vmatprep.subr.mxu0 0.0
        %1828 = vmatpush2.msra.mxu0 0.0
        %1829 = vmatprep.subr.mxu0 0.0
        %1830 = vmatpush2.msra.mxu0 0.0
        %1831 = vmatprep.subr.mxu0 0.0
        %1832 = vmatpush2.msra.mxu0 0.0
        %1833 = vmatprep.subr.mxu0 0.0
        %1834 = vmatpush2.msra.mxu0 0.0
        %1835 = vmatprep.subr.mxu0 0.0
        %1836 = vmatpush2.msra.mxu0 0.0
        %1837 = vmatprep.mubr.f32.mxu0 0.0
        %1838 = vmatmul.mubr.f32.gmra.mxu0 %v1768
        %v1839 = vpop.f32.mrf.mxu0
        %v1840 = vadd.f32 %v1765, %v1839
        %v1841 = vpop.f32.mrf.mxu0
        %1842 = vmatprep.mubr.f32.mxu0 0.0
        %1843 = vmatmul.mubr.f32.gmra.mxu0 %v1771
        %v1844 = vpop.f32.mrf.mxu0
        %v1845 = vadd.f32 %v1765, %v1844
        %v1846 = vpop.f32.mrf.mxu0
        %1847 = vdwg.mxu0
        %v1848 = vmax.f32 %v1840, 0.0
        %v1849 = vmax.f32 %v1845, 0.0
        %v1850 = vld [vmem:[%s10] sm:$0xff]
        %v1851 = vld [vmem:[%s10 + $0x8] sm:$0xff]
        %v1852 = vld [vmem:[%s10 + $0x10] sm:$0xff]
        %v1853 = vld [vmem:[%s10 + $0x18] sm:$0xff]
        %v1854 = vld [vmem:[%s10 + $0x20] sm:$0xff]
        %v1855 = vld [vmem:[%s10 + $0x28] sm:$0xff]
        %v1856 = vld [vmem:[%s10 + $0x30] sm:$0xff]
        %v1857 = vld [vmem:[%s10 + $0x38] sm:$0xff]
        %v1858 = vld [vmem:[%s11] sm:$0x1]
        %v1860 = vlaneseq
        %v1861 = vshrl.u32 %v1860, 7
        %v1862 = vsub.s32 0, %v1861
        %v1863 = vrot.slane %v1858, %v1862
        %vm1865 = vcmask 523264
        %v1867 = vsel %vm1865, %v1848, 0
        %v1870 = vsel %vm1865, %v1849, 0
        %1872 = vmatprep.subr.mxu0 0.0
        %1873 = vmatpush1.msra.mxu0 0.0
        %1874 = vmatprep.subr.mxu0 0.0
        %1875 = vmatpush1.msra.mxu0 0.0
        %1876 = vmatprep.subr.mxu0 0.0
        %1877 = vmatpush1.msra.mxu0 0.0
        %1878 = vmatprep.subr.mxu0 0.0
        %1879 = vmatpush1.msra.mxu0 0.0
        %1880 = vmatprep.subr.mxu0 0.0
        %1881 = vmatpush1.msra.mxu0 0.0
        %1882 = vmatprep.subr.mxu0 0.0
        %1883 = vmatpush1.msra.mxu0 0.0
        %1884 = vmatprep.subr.mxu0 0.0
        %1885 = vmatpush1.msra.mxu0 0.0
        %1886 = vmatprep.subr.mxu0 0.0
        %1887 = vmatpush1.msra.mxu0 0.0
        %1888 = vmatprep.subr.mxu0 0.0
        %1889 = vmatpush1.msra.mxu0 %v1857
        %1890 = vmatprep.subr.mxu0 0.0
        %1891 = vmatpush1.msra.mxu0 %v1856
        %1892 = vmatprep.subr.mxu0 0.0
        %1893 = vmatpush1.msra.mxu0 %v1855
        %1894 = vmatprep.subr.mxu0 0.0
        %1895 = vmatpush1.msra.mxu0 %v1854
        %1896 = vmatprep.subr.mxu0 0.0
        %1897 = vmatpush1.msra.mxu0 %v1853
        %1898 = vmatprep.subr.mxu0 0.0
        %1899 = vmatpush1.msra.mxu0 %v1852
        %1900 = vmatprep.subr.mxu0 0.0
        %1901 = vmatpush1.msra.mxu0 %v1851
        %1902 = vmatprep.subr.mxu0 0.0
        %1903 = vmatpush1.msra.mxu0 %v1850
        %1904 = vmatprep.subr.mxu0 0.0
        %1905 = vmatpush2.msra.mxu0 0.0
        %1906 = vmatprep.subr.mxu0 0.0
        %1907 = vmatpush2.msra.mxu0 0.0
        %1908 = vmatprep.subr.mxu0 0.0
        %1909 = vmatpush2.msra.mxu0 0.0
        %1910 = vmatprep.subr.mxu0 0.0
        %1911 = vmatpush2.msra.mxu0 0.0
        %1912 = vmatprep.subr.mxu0 0.0
        %1913 = vmatpush2.msra.mxu0 0.0
        %1914 = vmatprep.subr.mxu0 0.0
        %1915 = vmatpush2.msra.mxu0 0.0
        %1916 = vmatprep.subr.mxu0 0.0
        %1917 = vmatpush2.msra.mxu0 0.0
        %1918 = vmatprep.subr.mxu0 0.0
        %1919 = vmatpush2.msra.mxu0 0.0
        %1920 = vmatprep.subr.mxu0 0.0
        %1921 = vmatpush2.msra.mxu0 0.0
        %1922 = vmatprep.subr.mxu0 0.0
        %1923 = vmatpush2.msra.mxu0 0.0
        %1924 = vmatprep.subr.mxu0 0.0
        %1925 = vmatpush2.msra.mxu0 0.0
        %1926 = vmatprep.subr.mxu0 0.0
        %1927 = vmatpush2.msra.mxu0 0.0
        %1928 = vmatprep.subr.mxu0 0.0
        %1929 = vmatpush2.msra.mxu0 0.0
        %1930 = vmatprep.subr.mxu0 0.0
        %1931 = vmatpush2.msra.mxu0 0.0
        %1932 = vmatprep.subr.mxu0 0.0
        %1933 = vmatpush2.msra.mxu0 0.0
        %1934 = vmatprep.subr.mxu0 0.0
        %1935 = vmatpush2.msra.mxu0 0.0
        %1936 = vmatprep.mubr.f32.mxu0 0.0
        %1937 = vmatmul.mubr.f32.gmra.mxu0 %v1867
        %v1938 = vpop.f32.mrf.mxu0
        %v1939 = vadd.f32 %v1863, %v1938
        %v1940 = vpop.f32.mrf.mxu0
        %1941 = vmatprep.mubr.f32.mxu0 0.0
        %1942 = vmatmul.mubr.f32.gmra.mxu0 %v1870
        %v1943 = vpop.f32.mrf.mxu0
        %v1944 = vadd.f32 %v1863, %v1943
        %v1945 = vpop.f32.mrf.mxu0
        %1946 = vdwg.mxu0
        %v1947 = vadd.f32 %v1754, %v1939
        %v1948 = vadd.f32 %v1755, %v1944
        %v1949 = vld [vmem:[%s12] sm:$0x1]
        %v1950 = vld [vmem:[%s13] sm:$0x1]
        %v1951 = vsel %vm520, %v1947, 0.0
        %1952 = vadd.xlane.f32.xlu0 %v1951
        %v1953 = vpop.xlane.xlu0 %1952
        %v1954 = vsel %vm520, %v1948, 0.0
        %1955 = vadd.xlane.f32.xlu0 %v1954
        %v1956 = vpop.xlane.xlu0 %1955
        %v1957 = vmul.f32 %v1953, %v1719
        %v1958 = vmul.f32 %v1956, %v1719
        %v1959 = vsub.f32 %v1947, %v1957
        %v1960 = vsub.f32 %v1948, %v1958
        %v1961 = vmul.f32 %v1959, %v1959
        %v1962 = vmul.f32 %v1960, %v1960
        %v1963 = vsel %vm520, %v1961, 0.0
        %1964 = vadd.xlane.f32.xlu0 %v1963
        %v1965 = vpop.xlane.xlu0 %1964
        %v1966 = vsel %vm520, %v1962, 0.0
        %1967 = vadd.xlane.f32.xlu0 %v1966
        %v1968 = vpop.xlane.xlu0 %1967
        %v1969 = vmul.f32 %v1965, %v1719
        %v1970 = vmul.f32 %v1968, %v1719
        %v1971 = vadd.f32 %v1969, 1e-05
        %v1972 = vadd.f32 %v1970, 1e-05
        %v1973 = vrsqrt.pop %v1971
        %v1974 = vrsqrt.pop %v1972
        %v1975 = vmul.f32 %v1959, %v1973
        %v1976 = vmul.f32 %v1960, %v1974
        %v1978 = vlaneseq
        %v1979 = vshrl.u32 %v1978, 7
        %v1980 = vsub.s32 0, %v1979
        %v1981 = vrot.slane %v1949, %v1980
        %v1983 = vmul.f32 %v1975, %v1981
        %v1984 = vmul.f32 %v1976, %v1981
        %v1986 = vlaneseq
        %v1987 = vshrl.u32 %v1986, 7
        %v1988 = vsub.s32 0, %v1987
        %v1989 = vrot.slane %v1950, %v1988
        %v1991 = vadd.f32 %v1983, %v1989
        %v1992 = vadd.f32 %v1984, %v1989
        %1993 = vst.msk [vmem:[%s502] sm:$0xff] %vm520, %v1991
        %1994 = vst.msk [vmem:[%s502 + $0x8] sm:$0xff] %vm520, %v1992
        %p1995 = scmp.lt.s32.totalorder %s26, 1
        %s1996 = scalar_select %p1995, %s26, 1
        %s1997 = smul.addr %s1996, 2
        %s1998 = smul.addr %s1997, 8
        %s1999 = scalar_lea.vmem %s14, %s1998
        // Predicated region
        $region81: #{transformer_forward.4} parent=75 // pred_check
          %p2000 = pneg %p348
        $region82: #{transformer_forward.4} parent=75 // pred_check_branch
          %2002 = sbr.rel (%p2000) target = $region84
        $region83: #{transformer_forward.4} parent=75 // pred_region
          _
        $region84: #{transformer_forward.4} parent=75 // pred_fallthru
          _
      $region76: #{transformer_forward.4} parent=5 // pred_fallthru
        _
      %p2003 = scmp.le.s32.totalorder 2, %s21
      // Predicated region
      $region85: #{transformer_forward.4} parent=5 // pred_check
        %p2004 = pneg %p2003
      $region86: #{transformer_forward.4} parent=5 // pred_check_branch
        %2006 = sbr.rel (%p2004) target = $region88
      $region87: #{transformer_forward.4} parent=5 // pred_region
        %s2007 = ssub.s32 %s21, 2
        // Predicated region
        $region89: #{transformer_forward.4} parent=87 // pred_check
          %p2008 = pneg %p354
        $region90: #{transformer_forward.4} parent=87 // pred_check_branch
          %2010 = sbr.rel (%p2008) target = $region92
        $region91: #{transformer_forward.4} parent=87 // pred_region
          %p2011 = scmp.lt.s32.totalorder %s27, 1
          %s2012 = scalar_select %p2011, %s27, 1
          %s2013 = smul.addr %s2012, 2
          %s2014 = smul.addr %s2013, 8
          %s2015 = scalar_lea.vmem %s14, %s2014
        $region92: #{transformer_forward.4} parent=87 // pred_fallthru
          _
      $region88: #{transformer_forward.4} parent=5 // pred_fallthru
        _
    $region6: #{transformer_forward.4} parent=1 // loop_footer
      %s25 = sadd.s32 1, %s21
    $region7: #{transformer_forward.4} parent=1 // loop_footer_branch
      %20 = sbr.rel target = $region3
    $region8: #{transformer_forward.4} parent=1 // loop_exit
      _
    %2016 = vsyncpa [#allocation3], 1
    %s2017 = scalar_lea.sflag [#allocation3], 1
    %2018 = vsyncpa %s2017, 1

// kernel: transformer_forward.6
$region0: #{transformer_forward.6}
  #allocation0 [shape = 'u32[]', space=smem, size = 0x4, offset = 0x4, fixed_abs, tag = 'smem constant byte address 0x4 - core index']
  #allocation1 [shape = 'u32[144,128]{1,0:T(1,128)}', space=vmem, size = 0x12000, scoped, tag = 'internal scratch']
  %s0 = inlined_call_operand.vmem [shape: f32[2,8,32], index: 0, kind: input, shape index: {}]
  %s1 = inlined_call_operand.vmem [shape: f32[2,16,32], index: 1, kind: input, shape index: {}]
  %s2 = inlined_call_operand.vmem [shape: f32[2,8,32], index: 2, kind: input, shape index: {}]
  %s3 = inlined_call_operand.vmem [shape: f32[2,16,32], index: 3, kind: input, shape index: {}]
  %s4 = inlined_call_operand.vmem [shape: f32[32,96], index: 4, kind: input, shape index: {}]
  %s5 = inlined_call_operand.vmem [shape: f32[1,96], index: 5, kind: input, shape index: {}]
  %s6 = inlined_call_operand.vmem [shape: f32[32,32], index: 6, kind: input, shape index: {}]
  %s7 = inlined_call_operand.vmem [shape: f32[1,32], index: 7, kind: input, shape index: {}]
  %s8 = inlined_call_operand.vmem [shape: f32[32,96], index: 8, kind: input, shape index: {}]
  %s9 = inlined_call_operand.vmem [shape: f32[1,96], index: 9, kind: input, shape index: {}]
  %s10 = inlined_call_operand.vmem [shape: f32[32,32], index: 10, kind: input, shape index: {}]
  %s11 = inlined_call_operand.vmem [shape: f32[1,32], index: 11, kind: input, shape index: {}]
  %s12 = inlined_call_operand.vmem [shape: f32[1,32], index: 12, kind: input, shape index: {}]
  %s13 = inlined_call_operand.vmem [shape: f32[1,32], index: 13, kind: input, shape index: {}]
  %s14 = inlined_call_operand.vmem [shape: f32[1,32], index: 14, kind: input, shape index: {}]
  %s15 = inlined_call_operand.vmem [shape: f32[1,32], index: 15, kind: input, shape index: {}]
  %s16 = inlined_call_operand.vmem [shape: f32[1,32], index: 16, kind: input, shape index: {}]
  %s17 = inlined_call_operand.vmem [shape: f32[1,32], index: 17, kind: input, shape index: {}]
  %s18 = inlined_call_operand.vmem [shape: f32[32,64], index: 18, kind: input, shape index: {}]
  %s19 = inlined_call_operand.vmem [shape: f32[1,64], index: 19, kind: input, shape index: {}]
  %s20 = inlined_call_operand.vmem [shape: f32[64,32], index: 20, kind: input, shape index: {}]
  %s21 = inlined_call_operand.vmem [shape: f32[1,32], index: 21, kind: input, shape index: {}]
  %s22 = inlined_call_operand.vmem [shape: f32[2,8,32], index: 22, kind: output, shape index: {}]
  %s23 = sld [smem:[#allocation0]]
  $region121: #{transformer_forward.6} parent=0
    _
  %s25 = ssub.s32 1, %s23
  %s26 = scalar_select 0, %s25, %s23
  loop: start=0, step=1, limit=4
  $region2: #{transformer_forward.6} parent=0 // loop_pre_header
    _
  $region3: #{transformer_forward.6} parent=0 // loop_header
    %s28 = sphi 0, %s32
    %p29 = scmp.ge.s32.totalorder %s28, 4
    %s38 = sphi 0, %s40
    %s41 = sphi 0, %s38
    %s42 = sphi 0, %s41
    %s58 = sphi 0, %s42
    %s64 = sphi 0, %s66
    %s67 = sphi 0, %s64
    %s68 = sphi 0, %s67
    %s84 = sphi 0, %s68
    %s90 = sphi 0, %s92
    %s93 = sphi 0, %s90
    %s94 = sphi 0, %s93
    %s110 = sphi 0, %s94
    %s116 = sphi 0, %s118
    %s119 = sphi 0, %s116
    %s120 = sphi 0, %s119
    %s136 = sphi 0, %s120
    %s140 = sphi 0, %s140
    %s142 = sphi 0, %s140
    %s143 = sphi 0, %s142
    %s157 = sphi 0, %s143
    %s161 = sphi 0, %s161
    %s163 = sphi 0, %s161
    %s164 = sphi 0, %s163
    %s178 = sphi 0, %s164
    %s182 = sphi 0, %s182
    %s184 = sphi 0, %s182
    %s185 = sphi 0, %s184
    %s199 = sphi 0, %s185
    %s203 = sphi 0, %s203
    %s205 = sphi 0, %s203
    %s206 = sphi 0, %s205
    %s220 = sphi 0, %s206
    %s224 = sphi 0, %s224
    %s226 = sphi 0, %s224
    %s227 = sphi 0, %s226
    %s241 = sphi 0, %s227
    %s245 = sphi 0, %s245
    %s247 = sphi 0, %s245
    %s248 = sphi 0, %s247
    %s262 = sphi 0, %s248
    %s266 = sphi 0, %s266
    %s268 = sphi 0, %s266
    %s269 = sphi 0, %s268
    %s283 = sphi 0, %s269
    %s287 = sphi 0, %s287
    %s289 = sphi 0, %s287
    %s290 = sphi 0, %s289
    %s304 = sphi 0, %s290
    %s308 = sphi 0, %s308
    %s310 = sphi 0, %s308
    %s311 = sphi 0, %s310
    %s325 = sphi 0, %s311
    %s329 = sphi 0, %s329
    %s331 = sphi 0, %s329
    %s332 = sphi 0, %s331
    %s346 = sphi 0, %s332
    %s350 = sphi 0, %s350
    %s352 = sphi 0, %s350
    %s353 = sphi 0, %s352
    %s367 = sphi 0, %s353
    %s371 = sphi 0, %s371
    %s373 = sphi 0, %s371
    %s374 = sphi 0, %s373
    %s388 = sphi 0, %s374
    %s392 = sphi 0, %s392
    %s394 = sphi 0, %s392
    %s395 = sphi 0, %s394
    %s409 = sphi 0, %s395
    %s413 = sphi 0, %s413
    %s415 = sphi 0, %s413
    %s416 = sphi 0, %s415
    %s430 = sphi 0, %s416
    %s434 = sphi 0, %s434
    %s436 = sphi 0, %s434
    %s437 = sphi 0, %s436
    %s451 = sphi 0, %s437
    %s455 = sphi 0, %s455
    %s457 = sphi 0, %s455
    %s458 = sphi 0, %s457
    %s472 = sphi 0, %s458
    %s476 = sphi 0, %s476
    %s478 = sphi 0, %s476
    %s479 = sphi 0, %s478
    %s493 = sphi 0, %s479
    %s497 = sphi 0, %s497
    %s499 = sphi 0, %s497
    %s500 = sphi 0, %s499
    %s514 = sphi 0, %s500
    %s520 = sphi 0, %s522
    %s523 = sphi 0, %s520
    %s524 = sphi 0, %s523
    %s540 = sphi 0, %s524
  $region4: #{transformer_forward.6} parent=0 // loop_header_branch
    %31 = sbr.rel (%p29) target = $region8
  $region5: #{transformer_forward.6} parent=0 // loop_body
    %s33 = ssub.s32 %s28, 1
    %s34 = ssub.s32 %s28, 2
    %s35 = sadd.s32 %s28, 1
    %s36 = ssub.s32 %s28, %s35
    %p37 = scmp.eq.s32.totalorder %s36, 0
    %s39 = sadd.s32 %s38, 1
    %s40 = scalar_select %p37, %s38, %s39
    %p43 = pneg %p37
    %p44 = scmp.eq.s32.totalorder %s28, 1
    %p45 = por %p43, %p44
    %p46 = scmp.ne.s32.totalorder %s38, %s41
    %p47 = scmp.eq.s32.totalorder %s28, 0
    %p48 = por %p46, %p47
    %p49 = scmp.ne.s32.totalorder %s38, %s41
    %p50 = scmp.eq.s32.totalorder %s33, 1
    %p51 = por %p49, %p50
    %p52 = scmp.ne.s32.totalorder %s41, %s42
    %p53 = scmp.eq.s32.totalorder %s33, 0
    %p54 = por %p52, %p53
    %p55 = scmp.ne.s32.totalorder %s41, %s42
    %p56 = scmp.eq.s32.totalorder %s34, 1
    %p57 = por %p55, %p56
    %p59 = scmp.ne.s32.totalorder %s42, %s58
    %p60 = scmp.eq.s32.totalorder %s34, 0
    %p61 = por %p59, %p60
    %s62 = ssub.s32 %s28, %s35
    %p63 = scmp.eq.s32.totalorder %s62, 0
    %s65 = sadd.s32 %s64, 1
    %s66 = scalar_select %p63, %s64, %s65
    %p69 = pneg %p63
    %p70 = scmp.eq.s32.totalorder %s28, 1
    %p71 = por %p69, %p70
    %p72 = scmp.ne.s32.totalorder %s64, %s67
    %p73 = scmp.eq.s32.totalorder %s28, 0
    %p74 = por %p72, %p73
    %p75 = scmp.ne.s32.totalorder %s64, %s67
    %p76 = scmp.eq.s32.totalorder %s33, 1
    %p77 = por %p75, %p76
    %p78 = scmp.ne.s32.totalorder %s67, %s68
    %p79 = scmp.eq.s32.totalorder %s33, 0
    %p80 = por %p78, %p79
    %p81 = scmp.ne.s32.totalorder %s67, %s68
    %p82 = scmp.eq.s32.totalorder %s34, 1
    %p83 = por %p81, %p82
    %p85 = scmp.ne.s32.totalorder %s68, %s84
    %p86 = scmp.eq.s32.totalorder %s34, 0
    %p87 = por %p85, %p86
    %s88 = ssub.s32 %s28, %s35
    %p89 = scmp.eq.s32.totalorder %s88, 0
    %s91 = sadd.s32 %s90, 1
    %s92 = scalar_select %p89, %s90, %s91
    %p95 = pneg %p89
    %p96 = scmp.eq.s32.totalorder %s28, 1
    %p97 = por %p95, %p96
    %p98 = scmp.ne.s32.totalorder %s90, %s93
    %p99 = scmp.eq.s32.totalorder %s28, 0
    %p100 = por %p98, %p99
    %p101 = scmp.ne.s32.totalorder %s90, %s93
    %p102 = scmp.eq.s32.totalorder %s33, 1
    %p103 = por %p101, %p102
    %p104 = scmp.ne.s32.totalorder %s93, %s94
    %p105 = scmp.eq.s32.totalorder %s33, 0
    %p106 = por %p104, %p105
    %p107 = scmp.ne.s32.totalorder %s93, %s94
    %p108 = scmp.eq.s32.totalorder %s34, 1
    %p109 = por %p107, %p108
    %p111 = scmp.ne.s32.totalorder %s94, %s110
    %p112 = scmp.eq.s32.totalorder %s34, 0
    %p113 = por %p111, %p112
    %s114 = ssub.s32 %s28, %s35
    %p115 = scmp.eq.s32.totalorder %s114, 0
    %s117 = sadd.s32 %s116, 1
    %s118 = scalar_select %p115, %s116, %s117
    %p121 = pneg %p115
    %p122 = scmp.eq.s32.totalorder %s28, 1
    %p123 = por %p121, %p122
    %p124 = scmp.ne.s32.totalorder %s116, %s119
    %p125 = scmp.eq.s32.totalorder %s28, 0
    %p126 = por %p124, %p125
    %p127 = scmp.ne.s32.totalorder %s116, %s119
    %p128 = scmp.eq.s32.totalorder %s33, 1
    %p129 = por %p127, %p128
    %p130 = scmp.ne.s32.totalorder %s119, %s120
    %p131 = scmp.eq.s32.totalorder %s33, 0
    %p132 = por %p130, %p131
    %p133 = scmp.ne.s32.totalorder %s119, %s120
    %p134 = scmp.eq.s32.totalorder %s34, 1
    %p135 = por %p133, %p134
    %p137 = scmp.ne.s32.totalorder %s120, %s136
    %p138 = scmp.eq.s32.totalorder %s34, 0
    %p139 = por %p137, %p138
    %s141 = sadd.s32 %s140, 1
    %p144 = scmp.eq.s32.totalorder %s28, 1
    %p145 = scmp.ne.s32.totalorder %s140, %s142
    %p146 = scmp.eq.s32.totalorder %s28, 0
    %p147 = por %p145, %p146
    %p148 = scmp.ne.s32.totalorder %s140, %s142
    %p149 = scmp.eq.s32.totalorder %s33, 1
    %p150 = por %p148, %p149
    %p151 = scmp.ne.s32.totalorder %s142, %s143
    %p152 = scmp.eq.s32.totalorder %s33, 0
    %p153 = por %p151, %p152
    %p154 = scmp.ne.s32.totalorder %s142, %s143
    %p155 = scmp.eq.s32.totalorder %s34, 1
    %p156 = por %p154, %p155
    %p158 = scmp.ne.s32.totalorder %s143, %s157
    %p159 = scmp.eq.s32.totalorder %s34, 0
    %p160 = por %p158, %p159
    %s162 = sadd.s32 %s161, 1
    %p165 = scmp.eq.s32.totalorder %s28, 1
    %p166 = scmp.ne.s32.totalorder %s161, %s163
    %p167 = scmp.eq.s32.totalorder %s28, 0
    %p168 = por %p166, %p167
    %p169 = scmp.ne.s32.totalorder %s161, %s163
    %p170 = scmp.eq.s32.totalorder %s33, 1
    %p171 = por %p169, %p170
    %p172 = scmp.ne.s32.totalorder %s163, %s164
    %p173 = scmp.eq.s32.totalorder %s33, 0
    %p174 = por %p172, %p173
    %p175 = scmp.ne.s32.totalorder %s163, %s164
    %p176 = scmp.eq.s32.totalorder %s34, 1
    %p177 = por %p175, %p176
    %p179 = scmp.ne.s32.totalorder %s164, %s178
    %p180 = scmp.eq.s32.totalorder %s34, 0
    %p181 = por %p179, %p180
    %s183 = sadd.s32 %s182, 1
    %p186 = scmp.eq.s32.totalorder %s28, 1
    %p187 = scmp.ne.s32.totalorder %s182, %s184
    %p188 = scmp.eq.s32.totalorder %s28, 0
    %p189 = por %p187, %p188
    %p190 = scmp.ne.s32.totalorder %s182, %s184
    %p191 = scmp.eq.s32.totalorder %s33, 1
    %p192 = por %p190, %p191
    %p193 = scmp.ne.s32.totalorder %s184, %s185
    %p194 = scmp.eq.s32.totalorder %s33, 0
    %p195 = por %p193, %p194
    %p196 = scmp.ne.s32.totalorder %s184, %s185
    %p197 = scmp.eq.s32.totalorder %s34, 1
    %p198 = por %p196, %p197
    %p200 = scmp.ne.s32.totalorder %s185, %s199
    %p201 = scmp.eq.s32.totalorder %s34, 0
    %p202 = por %p200, %p201
    %s204 = sadd.s32 %s203, 1
    %p207 = scmp.eq.s32.totalorder %s28, 1
    %p208 = scmp.ne.s32.totalorder %s203, %s205
    %p209 = scmp.eq.s32.totalorder %s28, 0
    %p210 = por %p208, %p209
    %p211 = scmp.ne.s32.totalorder %s203, %s205
    %p212 = scmp.eq.s32.totalorder %s33, 1
    %p213 = por %p211, %p212
    %p214 = scmp.ne.s32.totalorder %s205, %s206
    %p215 = scmp.eq.s32.totalorder %s33, 0
    %p216 = por %p214, %p215
    %p217 = scmp.ne.s32.totalorder %s205, %s206
    %p218 = scmp.eq.s32.totalorder %s34, 1
    %p219 = por %p217, %p218
    %p221 = scmp.ne.s32.totalorder %s206, %s220
    %p222 = scmp.eq.s32.totalorder %s34, 0
    %p223 = por %p221, %p222
    %s225 = sadd.s32 %s224, 1
    %p228 = scmp.eq.s32.totalorder %s28, 1
    %p229 = scmp.ne.s32.totalorder %s224, %s226
    %p230 = scmp.eq.s32.totalorder %s28, 0
    %p231 = por %p229, %p230
    %p232 = scmp.ne.s32.totalorder %s224, %s226
    %p233 = scmp.eq.s32.totalorder %s33, 1
    %p234 = por %p232, %p233
    %p235 = scmp.ne.s32.totalorder %s226, %s227
    %p236 = scmp.eq.s32.totalorder %s33, 0
    %p237 = por %p235, %p236
    %p238 = scmp.ne.s32.totalorder %s226, %s227
    %p239 = scmp.eq.s32.totalorder %s34, 1
    %p240 = por %p238, %p239
    %p242 = scmp.ne.s32.totalorder %s227, %s241
    %p243 = scmp.eq.s32.totalorder %s34, 0
    %p244 = por %p242, %p243
    %s246 = sadd.s32 %s245, 1
    %p249 = scmp.eq.s32.totalorder %s28, 1
    %p250 = scmp.ne.s32.totalorder %s245, %s247
    %p251 = scmp.eq.s32.totalorder %s28, 0
    %p252 = por %p250, %p251
    %p253 = scmp.ne.s32.totalorder %s245, %s247
    %p254 = scmp.eq.s32.totalorder %s33, 1
    %p255 = por %p253, %p254
    %p256 = scmp.ne.s32.totalorder %s247, %s248
    %p257 = scmp.eq.s32.totalorder %s33, 0
    %p258 = por %p256, %p257
    %p259 = scmp.ne.s32.totalorder %s247, %s248
    %p260 = scmp.eq.s32.totalorder %s34, 1
    %p261 = por %p259, %p260
    %p263 = scmp.ne.s32.totalorder %s248, %s262
    %p264 = scmp.eq.s32.totalorder %s34, 0
    %p265 = por %p263, %p264
    %s267 = sadd.s32 %s266, 1
    %p270 = scmp.eq.s32.totalorder %s28, 1
    %p271 = scmp.ne.s32.totalorder %s266, %s268
    %p272 = scmp.eq.s32.totalorder %s28, 0
    %p273 = por %p271, %p272
    %p274 = scmp.ne.s32.totalorder %s266, %s268
    %p275 = scmp.eq.s32.totalorder %s33, 1
    %p276 = por %p274, %p275
    %p277 = scmp.ne.s32.totalorder %s268, %s269
    %p278 = scmp.eq.s32.totalorder %s33, 0
    %p279 = por %p277, %p278
    %p280 = scmp.ne.s32.totalorder %s268, %s269
    %p281 = scmp.eq.s32.totalorder %s34, 1
    %p282 = por %p280, %p281
    %p284 = scmp.ne.s32.totalorder %s269, %s283
    %p285 = scmp.eq.s32.totalorder %s34, 0
    %p286 = por %p284, %p285
    %s288 = sadd.s32 %s287, 1
    %p291 = scmp.eq.s32.totalorder %s28, 1
    %p292 = scmp.ne.s32.totalorder %s287, %s289
    %p293 = scmp.eq.s32.totalorder %s28, 0
    %p294 = por %p292, %p293
    %p295 = scmp.ne.s32.totalorder %s287, %s289
    %p296 = scmp.eq.s32.totalorder %s33, 1
    %p297 = por %p295, %p296
    %p298 = scmp.ne.s32.totalorder %s289, %s290
    %p299 = scmp.eq.s32.totalorder %s33, 0
    %p300 = por %p298, %p299
    %p301 = scmp.ne.s32.totalorder %s289, %s290
    %p302 = scmp.eq.s32.totalorder %s34, 1
    %p303 = por %p301, %p302
    %p305 = scmp.ne.s32.totalorder %s290, %s304
    %p306 = scmp.eq.s32.totalorder %s34, 0
    %p307 = por %p305, %p306
    %s309 = sadd.s32 %s308, 1
    %p312 = scmp.eq.s32.totalorder %s28, 1
    %p313 = scmp.ne.s32.totalorder %s308, %s310
    %p314 = scmp.eq.s32.totalorder %s28, 0
    %p315 = por %p313, %p314
    %p316 = scmp.ne.s32.totalorder %s308, %s310
    %p317 = scmp.eq.s32.totalorder %s33, 1
    %p318 = por %p316, %p317
    %p319 = scmp.ne.s32.totalorder %s310, %s311
    %p320 = scmp.eq.s32.totalorder %s33, 0
    %p321 = por %p319, %p320
    %p322 = scmp.ne.s32.totalorder %s310, %s311
    %p323 = scmp.eq.s32.totalorder %s34, 1
    %p324 = por %p322, %p323
    %p326 = scmp.ne.s32.totalorder %s311, %s325
    %p327 = scmp.eq.s32.totalorder %s34, 0
    %p328 = por %p326, %p327
    %s330 = sadd.s32 %s329, 1
    %p333 = scmp.eq.s32.totalorder %s28, 1
    %p334 = scmp.ne.s32.totalorder %s329, %s331
    %p335 = scmp.eq.s32.totalorder %s28, 0
    %p336 = por %p334, %p335
    %p337 = scmp.ne.s32.totalorder %s329, %s331
    %p338 = scmp.eq.s32.totalorder %s33, 1
    %p339 = por %p337, %p338
    %p340 = scmp.ne.s32.totalorder %s331, %s332
    %p341 = scmp.eq.s32.totalorder %s33, 0
    %p342 = por %p340, %p341
    %p343 = scmp.ne.s32.totalorder %s331, %s332
    %p344 = scmp.eq.s32.totalorder %s34, 1
    %p345 = por %p343, %p344
    %p347 = scmp.ne.s32.totalorder %s332, %s346
    %p348 = scmp.eq.s32.totalorder %s34, 0
    %p349 = por %p347, %p348
    %s351 = sadd.s32 %s350, 1
    %p354 = scmp.eq.s32.totalorder %s28, 1
    %p355 = scmp.ne.s32.totalorder %s350, %s352
    %p356 = scmp.eq.s32.totalorder %s28, 0
    %p357 = por %p355, %p356
    %p358 = scmp.ne.s32.totalorder %s350, %s352
    %p359 = scmp.eq.s32.totalorder %s33, 1
    %p360 = por %p358, %p359
    %p361 = scmp.ne.s32.totalorder %s352, %s353
    %p362 = scmp.eq.s32.totalorder %s33, 0
    %p363 = por %p361, %p362
    %p364 = scmp.ne.s32.totalorder %s352, %s353
    %p365 = scmp.eq.s32.totalorder %s34, 1
    %p366 = por %p364, %p365
    %p368 = scmp.ne.s32.totalorder %s353, %s367
    %p369 = scmp.eq.s32.totalorder %s34, 0
    %p370 = por %p368, %p369
    %s372 = sadd.s32 %s371, 1
    %p375 = scmp.eq.s32.totalorder %s28, 1
    %p376 = scmp.ne.s32.totalorder %s371, %s373
    %p377 = scmp.eq.s32.totalorder %s28, 0
    %p378 = por %p376, %p377
    %p379 = scmp.ne.s32.totalorder %s371, %s373
    %p380 = scmp.eq.s32.totalorder %s33, 1
    %p381 = por %p379, %p380
    %p382 = scmp.ne.s32.totalorder %s373, %s374
    %p383 = scmp.eq.s32.totalorder %s33, 0
    %p384 = por %p382, %p383
    %p385 = scmp.ne.s32.totalorder %s373, %s374
    %p386 = scmp.eq.s32.totalorder %s34, 1
    %p387 = por %p385, %p386
    %p389 = scmp.ne.s32.totalorder %s374, %s388
    %p390 = scmp.eq.s32.totalorder %s34, 0
    %p391 = por %p389, %p390
    %s393 = sadd.s32 %s392, 1
    %p396 = scmp.eq.s32.totalorder %s28, 1
    %p397 = scmp.ne.s32.totalorder %s392, %s394
    %p398 = scmp.eq.s32.totalorder %s28, 0
    %p399 = por %p397, %p398
    %p400 = scmp.ne.s32.totalorder %s392, %s394
    %p401 = scmp.eq.s32.totalorder %s33, 1
    %p402 = por %p400, %p401
    %p403 = scmp.ne.s32.totalorder %s394, %s395
    %p404 = scmp.eq.s32.totalorder %s33, 0
    %p405 = por %p403, %p404
    %p406 = scmp.ne.s32.totalorder %s394, %s395
    %p407 = scmp.eq.s32.totalorder %s34, 1
    %p408 = por %p406, %p407
    %p410 = scmp.ne.s32.totalorder %s395, %s409
    %p411 = scmp.eq.s32.totalorder %s34, 0
    %p412 = por %p410, %p411
    %s414 = sadd.s32 %s413, 1
    %p417 = scmp.eq.s32.totalorder %s28, 1
    %p418 = scmp.ne.s32.totalorder %s413, %s415
    %p419 = scmp.eq.s32.totalorder %s28, 0
    %p420 = por %p418, %p419
    %p421 = scmp.ne.s32.totalorder %s413, %s415
    %p422 = scmp.eq.s32.totalorder %s33, 1
    %p423 = por %p421, %p422
    %p424 = scmp.ne.s32.totalorder %s415, %s416
    %p425 = scmp.eq.s32.totalorder %s33, 0
    %p426 = por %p424, %p425
    %p427 = scmp.ne.s32.totalorder %s415, %s416
    %p428 = scmp.eq.s32.totalorder %s34, 1
    %p429 = por %p427, %p428
    %p431 = scmp.ne.s32.totalorder %s416, %s430
    %p432 = scmp.eq.s32.totalorder %s34, 0
    %p433 = por %p431, %p432
    %s435 = sadd.s32 %s434, 1
    %p438 = scmp.eq.s32.totalorder %s28, 1
    %p439 = scmp.ne.s32.totalorder %s434, %s436
    %p440 = scmp.eq.s32.totalorder %s28, 0
    %p441 = por %p439, %p440
    %p442 = scmp.ne.s32.totalorder %s434, %s436
    %p443 = scmp.eq.s32.totalorder %s33, 1
    %p444 = por %p442, %p443
    %p445 = scmp.ne.s32.totalorder %s436, %s437
    %p446 = scmp.eq.s32.totalorder %s33, 0
    %p447 = por %p445, %p446
    %p448 = scmp.ne.s32.totalorder %s436, %s437
    %p449 = scmp.eq.s32.totalorder %s34, 1
    %p450 = por %p448, %p449
    %p452 = scmp.ne.s32.totalorder %s437, %s451
    %p453 = scmp.eq.s32.totalorder %s34, 0
    %p454 = por %p452, %p453
    %s456 = sadd.s32 %s455, 1
    %p459 = scmp.eq.s32.totalorder %s28, 1
    %p460 = scmp.ne.s32.totalorder %s455, %s457
    %p461 = scmp.eq.s32.totalorder %s28, 0
    %p462 = por %p460, %p461
    %p463 = scmp.ne.s32.totalorder %s455, %s457
    %p464 = scmp.eq.s32.totalorder %s33, 1
    %p465 = por %p463, %p464
    %p466 = scmp.ne.s32.totalorder %s457, %s458
    %p467 = scmp.eq.s32.totalorder %s33, 0
    %p468 = por %p466, %p467
    %p469 = scmp.ne.s32.totalorder %s457, %s458
    %p470 = scmp.eq.s32.totalorder %s34, 1
    %p471 = por %p469, %p470
    %p473 = scmp.ne.s32.totalorder %s458, %s472
    %p474 = scmp.eq.s32.totalorder %s34, 0
    %p475 = por %p473, %p474
    %s477 = sadd.s32 %s476, 1
    %p480 = scmp.eq.s32.totalorder %s28, 1
    %p481 = scmp.ne.s32.totalorder %s476, %s478
    %p482 = scmp.eq.s32.totalorder %s28, 0
    %p483 = por %p481, %p482
    %p484 = scmp.ne.s32.totalorder %s476, %s478
    %p485 = scmp.eq.s32.totalorder %s33, 1
    %p486 = por %p484, %p485
    %p487 = scmp.ne.s32.totalorder %s478, %s479
    %p488 = scmp.eq.s32.totalorder %s33, 0
    %p489 = por %p487, %p488
    %p490 = scmp.ne.s32.totalorder %s478, %s479
    %p491 = scmp.eq.s32.totalorder %s34, 1
    %p492 = por %p490, %p491
    %p494 = scmp.ne.s32.totalorder %s479, %s493
    %p495 = scmp.eq.s32.totalorder %s34, 0
    %p496 = por %p494, %p495
    %s498 = sadd.s32 %s497, 1
    %p501 = scmp.eq.s32.totalorder %s28, 1
    %p502 = scmp.ne.s32.totalorder %s497, %s499
    %p503 = scmp.eq.s32.totalorder %s28, 0
    %p504 = por %p502, %p503
    %p505 = scmp.ne.s32.totalorder %s497, %s499
    %p506 = scmp.eq.s32.totalorder %s33, 1
    %p507 = por %p505, %p506
    %p508 = scmp.ne.s32.totalorder %s499, %s500
    %p509 = scmp.eq.s32.totalorder %s33, 0
    %p510 = por %p508, %p509
    %p511 = scmp.ne.s32.totalorder %s499, %s500
    %p512 = scmp.eq.s32.totalorder %s34, 1
    %p513 = por %p511, %p512
    %p515 = scmp.ne.s32.totalorder %s500, %s514
    %p516 = scmp.eq.s32.totalorder %s34, 0
    %p517 = por %p515, %p516
    %s518 = ssub.s32 %s28, %s35
    %p519 = scmp.eq.s32.totalorder %s518, 0
    %s521 = sadd.s32 %s520, 1
    %s522 = scalar_select %p519, %s520, %s521
    %p525 = pneg %p519
    %p526 = scmp.eq.s32.totalorder %s28, 1
    %p527 = por %p525, %p526
    %p528 = scmp.ne.s32.totalorder %s520, %s523
    %p529 = scmp.eq.s32.totalorder %s28, 0
    %p530 = por %p528, %p529
    %p531 = scmp.ne.s32.totalorder %s520, %s523
    %p532 = scmp.eq.s32.totalorder %s33, 1
    %p533 = por %p531, %p532
    %p534 = scmp.ne.s32.totalorder %s523, %s524
    %p535 = scmp.eq.s32.totalorder %s33, 0
    %p536 = por %p534, %p535
    %p537 = scmp.ne.s32.totalorder %s523, %s524
    %p538 = scmp.eq.s32.totalorder %s34, 1
    %p539 = por %p537, %p538
    %p541 = scmp.ne.s32.totalorder %s524, %s540
    %p542 = scmp.eq.s32.totalorder %s34, 0
    %p543 = por %p541, %p542
    %p544 = scmp.le.s32.totalorder 1, %s28
    %p545 = scmp.lt.s32.totalorder %s28, 3
    %p546 = pnand %p544, %p545
    %p547 = pneg %p546
    // Predicated region
    $region9: #{transformer_forward.6} parent=5 // pred_check
      _
    $region10: #{transformer_forward.6} parent=5 // pred_check_branch
      %549 = sbr.rel (%p546) target = $region12
    $region11: #{transformer_forward.6} parent=5 // pred_region
      %s550 = ssub.s32 %s28, 1
      // Predicated region
      $region13: #{transformer_forward.6} parent=11 // pred_check
        %p551 = pneg %p153
      $region14: #{transformer_forward.6} parent=11 // pred_check_branch
        %553 = sbr.rel (%p551) target = $region16
      $region15: #{transformer_forward.6} parent=11 // pred_region
        _
      $region16: #{transformer_forward.6} parent=11 // pred_fallthru
        _
      // Predicated region
      $region17: #{transformer_forward.6} parent=11 // pred_check
        %p554 = pneg %p174
      $region18: #{transformer_forward.6} parent=11 // pred_check_branch
        %556 = sbr.rel (%p554) target = $region20
      $region19: #{transformer_forward.6} parent=11 // pred_region
        _
      $region20: #{transformer_forward.6} parent=11 // pred_fallthru
        _
      // Predicated region
      $region21: #{transformer_forward.6} parent=11 // pred_check
        %p557 = pneg %p195
      $region22: #{transformer_forward.6} parent=11 // pred_check_branch
        %559 = sbr.rel (%p557) target = $region24
      $region23: #{transformer_forward.6} parent=11 // pred_region
        _
      $region24: #{transformer_forward.6} parent=11 // pred_fallthru
        _
      // Predicated region
      $region25: #{transformer_forward.6} parent=11 // pred_check
        %p560 = pneg %p216
      $region26: #{transformer_forward.6} parent=11 // pred_check_branch
        %562 = sbr.rel (%p560) target = $region28
      $region27: #{transformer_forward.6} parent=11 // pred_region
        _
      $region28: #{transformer_forward.6} parent=11 // pred_fallthru
        _
      // Predicated region
      $region29: #{transformer_forward.6} parent=11 // pred_check
        %p563 = pneg %p237
      $region30: #{transformer_forward.6} parent=11 // pred_check_branch
        %565 = sbr.rel (%p563) target = $region32
      $region31: #{transformer_forward.6} parent=11 // pred_region
        _
      $region32: #{transformer_forward.6} parent=11 // pred_fallthru
        _
      // Predicated region
      $region33: #{transformer_forward.6} parent=11 // pred_check
        %p566 = pneg %p258
      $region34: #{transformer_forward.6} parent=11 // pred_check_branch
        %568 = sbr.rel (%p566) target = $region36
      $region35: #{transformer_forward.6} parent=11 // pred_region
        _
      $region36: #{transformer_forward.6} parent=11 // pred_fallthru
        _
      // Predicated region
      $region37: #{transformer_forward.6} parent=11 // pred_check
        %p569 = pneg %p279
      $region38: #{transformer_forward.6} parent=11 // pred_check_branch
        %571 = sbr.rel (%p569) target = $region40
      $region39: #{transformer_forward.6} parent=11 // pred_region
        _
      $region40: #{transformer_forward.6} parent=11 // pred_fallthru
        _
      // Predicated region
      $region41: #{transformer_forward.6} parent=11 // pred_check
        %p572 = pneg %p300
      $region42: #{transformer_forward.6} parent=11 // pred_check_branch
        %574 = sbr.rel (%p572) target = $region44
      $region43: #{transformer_forward.6} parent=11 // pred_region
        _
      $region44: #{transformer_forward.6} parent=11 // pred_fallthru
        _
      // Predicated region
      $region45: #{transformer_forward.6} parent=11 // pred_check
        %p575 = pneg %p321
      $region46: #{transformer_forward.6} parent=11 // pred_check_branch
        %577 = sbr.rel (%p575) target = $region48
      $region47: #{transformer_forward.6} parent=11 // pred_region
        _
      $region48: #{transformer_forward.6} parent=11 // pred_fallthru
        _
      // Predicated region
      $region49: #{transformer_forward.6} parent=11 // pred_check
        %p578 = pneg %p342
      $region50: #{transformer_forward.6} parent=11 // pred_check_branch
        %580 = sbr.rel (%p578) target = $region52
      $region51: #{transformer_forward.6} parent=11 // pred_region
        _
      $region52: #{transformer_forward.6} parent=11 // pred_fallthru
        _
      // Predicated region
      $region53: #{transformer_forward.6} parent=11 // pred_check
        %p581 = pneg %p363
      $region54: #{transformer_forward.6} parent=11 // pred_check_branch
        %583 = sbr.rel (%p581) target = $region56
      $region55: #{transformer_forward.6} parent=11 // pred_region
        _
      $region56: #{transformer_forward.6} parent=11 // pred_fallthru
        _
      // Predicated region
      $region57: #{transformer_forward.6} parent=11 // pred_check
        %p584 = pneg %p384
      $region58: #{transformer_forward.6} parent=11 // pred_check_branch
        %586 = sbr.rel (%p584) target = $region60
      $region59: #{transformer_forward.6} parent=11 // pred_region
        _
      $region60: #{transformer_forward.6} parent=11 // pred_fallthru
        _
      // Predicated region
      $region61: #{transformer_forward.6} parent=11 // pred_check
        %p587 = pneg %p405
      $region62: #{transformer_forward.6} parent=11 // pred_check_branch
        %589 = sbr.rel (%p587) target = $region64
      $region63: #{transformer_forward.6} parent=11 // pred_region
        _
      $region64: #{transformer_forward.6} parent=11 // pred_fallthru
        _
      // Predicated region
      $region65: #{transformer_forward.6} parent=11 // pred_check
        %p590 = pneg %p426
      $region66: #{transformer_forward.6} parent=11 // pred_check_branch
        %592 = sbr.rel (%p590) target = $region68
      $region67: #{transformer_forward.6} parent=11 // pred_region
        _
      $region68: #{transformer_forward.6} parent=11 // pred_fallthru
        _
      // Predicated region
      $region69: #{transformer_forward.6} parent=11 // pred_check
        %p593 = pneg %p447
      $region70: #{transformer_forward.6} parent=11 // pred_check_branch
        %595 = sbr.rel (%p593) target = $region72
      $region71: #{transformer_forward.6} parent=11 // pred_region
        _
      $region72: #{transformer_forward.6} parent=11 // pred_fallthru
        _
      // Predicated region
      $region73: #{transformer_forward.6} parent=11 // pred_check
        %p596 = pneg %p468
      $region74: #{transformer_forward.6} parent=11 // pred_check_branch
        %598 = sbr.rel (%p596) target = $region76
      $region75: #{transformer_forward.6} parent=11 // pred_region
        _
      $region76: #{transformer_forward.6} parent=11 // pred_fallthru
        _
      // Predicated region
      $region77: #{transformer_forward.6} parent=11 // pred_check
        %p599 = pneg %p489
      $region78: #{transformer_forward.6} parent=11 // pred_check_branch
        %601 = sbr.rel (%p599) target = $region80
      $region79: #{transformer_forward.6} parent=11 // pred_region
        _
      $region80: #{transformer_forward.6} parent=11 // pred_fallthru
        _
      // Predicated region
      $region81: #{transformer_forward.6} parent=11 // pred_check
        %p602 = pneg %p510
      $region82: #{transformer_forward.6} parent=11 // pred_check_branch
        %604 = sbr.rel (%p602) target = $region84
      $region83: #{transformer_forward.6} parent=11 // pred_region
        _
      $region84: #{transformer_forward.6} parent=11 // pred_fallthru
        _
    $region12: #{transformer_forward.6} parent=5 // pred_fallthru
      _
    %p605 = scmp.lt.s32.totalorder %s28, 2
    // Predicated region
    $region85: #{transformer_forward.6} parent=5 // pred_check
      %p606 = pneg %p605
    $region86: #{transformer_forward.6} parent=5 // pred_check_branch
      %608 = sbr.rel (%p606) target = $region88
    $region87: #{transformer_forward.6} parent=5 // pred_region
      // Predicated region
      $region89: #{transformer_forward.6} parent=87 // pred_check
        %p609 = pneg %p48
      $region90: #{transformer_forward.6} parent=87 // pred_check_branch
        %611 = sbr.rel (%p609) target = $region92
      $region91: #{transformer_forward.6} parent=87 // pred_region
        %p612 = scmp.lt.s32.totalorder %s28, 1
        %s613 = scalar_select %p612, %s28, 1
        %s614 = smul.addr %s613, 8
        %s615 = scalar_lea.vmem %s0, %s614
      $region92: #{transformer_forward.6} parent=87 // pred_fallthru
        _
      // Predicated region
      $region93: #{transformer_forward.6} parent=87 // pred_check
        %p616 = pneg %p74
      $region94: #{transformer_forward.6} parent=87 // pred_check_branch
        %618 = sbr.rel (%p616) target = $region96
      $region95: #{transformer_forward.6} parent=87 // pred_region
        %p619 = scmp.lt.s32.totalorder %s28, 1
        %s620 = scalar_select %p619, %s28, 1
        %s621 = smul.addr %s620, 2
        %s622 = smul.addr %s621, 8
        %s623 = scalar_lea.vmem %s1, %s622
      $region96: #{transformer_forward.6} parent=87 // pred_fallthru
        _
      // Predicated region
      $region97: #{transformer_forward.6} parent=87 // pred_check
        %p624 = pneg %p100
      $region98: #{transformer_forward.6} parent=87 // pred_check_branch
        %626 = sbr.rel (%p624) target = $region100
      $region99: #{transformer_forward.6} parent=87 // pred_region
        %p627 = scmp.lt.s32.totalorder %s28, 1
        %s628 = scalar_select %p627, %s28, 1
        %s629 = smul.addr %s628, 8
        %s630 = scalar_lea.vmem %s2, %s629
      $region100: #{transformer_forward.6} parent=87 // pred_fallthru
        _
      // Predicated region
      $region101: #{transformer_forward.6} parent=87 // pred_check
        %p631 = pneg %p126
      $region102: #{transformer_forward.6} parent=87 // pred_check_branch
        %633 = sbr.rel (%p631) target = $region104
      $region103: #{transformer_forward.6} parent=87 // pred_region
        %p634 = scmp.lt.s32.totalorder %s28, 1
        %s635 = scalar_select %p634, %s28, 1
        %s636 = smul.addr %s635, 2
        %s637 = smul.addr %s636, 8
        %s638 = scalar_lea.vmem %s3, %s637
      $region104: #{transformer_forward.6} parent=87 // pred_fallthru
        _
    $region88: #{transformer_forward.6} parent=5 // pred_fallthru
      _
    %p639 = scmp.le.s32.totalorder 1, %s28
    %p640 = scmp.lt.s32.totalorder %s28, 3
    %p641 = pnand %p639, %p640
    %p642 = pneg %p641
    // Predicated region
    $region105: #{transformer_forward.6} parent=5 // pred_check
      _
    $region106: #{transformer_forward.6} parent=5 // pred_check_branch
      %644 = sbr.rel (%p641) target = $region108
    $region107: #{transformer_forward.6} parent=5 // pred_region
      %s645 = ssub.s32 %s28, 1
      %p646 = scmp.lt.s32.totalorder %s33, 1
      %s647 = scalar_select %p646, %s33, 1
      %s648 = smul.addr %s647, 8
      %s649 = scalar_lea.vmem %s0, %s648
      %p650 = pneg %p54
      %p651 = pneg %p51
      %p652 = scmp.lt.s32.totalorder %s33, 1
      %s653 = scalar_select %p652, %s33, 1
      %s654 = smul.addr %s653, 2
      %s655 = smul.addr %s654, 8
      %s656 = scalar_lea.vmem %s1, %s655
      %p657 = pneg %p80
      %p658 = pneg %p77
      %p659 = scmp.lt.s32.totalorder %s33, 1
      %s660 = scalar_select %p659, %s33, 1
      %s661 = smul.addr %s660, 8
      %s662 = scalar_lea.vmem %s2, %s661
      %p663 = pneg %p106
      %p664 = pneg %p103
      %p665 = scmp.lt.s32.totalorder %s33, 1
      %s666 = scalar_select %p665, %s33, 1
      %s667 = smul.addr %s666, 2
      %s668 = smul.addr %s667, 8
      %s669 = scalar_lea.vmem %s3, %s668
      %p670 = pneg %p132
      %p671 = pneg %p129
      %p672 = pneg %p153
      %p673 = pneg %p150
      %p674 = pneg %p174
      %p675 = pneg %p171
      %p676 = pneg %p195
      %p677 = pneg %p192
      %p678 = pneg %p216
      %p679 = pneg %p213
      %p680 = pneg %p237
      %p681 = pneg %p234
      %p682 = pneg %p258
      %p683 = pneg %p255
      %p684 = pneg %p279
      %p685 = pneg %p276
      %p686 = pneg %p300
      %p687 = pneg %p297
      %p688 = pneg %p321
      %p689 = pneg %p318
      %p690 = pneg %p342
      %p691 = pneg %p339
      %p692 = pneg %p363
      %p693 = pneg %p360
      %p694 = pneg %p384
      %p695 = pneg %p381
      %p696 = pneg %p405
      %p697 = pneg %p402
      %p698 = pneg %p426
      %p699 = pneg %p423
      %p700 = pneg %p447
      %p701 = pneg %p444
      %p702 = pneg %p468
      %p703 = pneg %p465
      %p704 = pneg %p489
      %p705 = pneg %p486
      %p706 = pneg %p510
      %p707 = pneg %p507
      %p708 = pneg %p536
      %p709 = pneg %p533
      %p710 = scmp.lt.s32.totalorder %s33, 1
      %s711 = scalar_select %p710, %s33, 1
      %s712 = smul.addr %s711, 8
      %s713 = scalar_lea.vmem %s22, %s712
      %p714 = scmp.lt.s32.totalorder %s33, 1
      %s715 = scalar_select %p714, %s33, 1
      %s716 = smul.addr %s715, 8
      %s717 = scalar_lea.vmem %s0, %s716
      %p718 = scmp.lt.s32.totalorder %s33, 1
      %s719 = scalar_select %p718, %s33, 1
      %s720 = smul.addr %s719, 2
      %s721 = smul.addr %s720, 8
      %s722 = scalar_lea.vmem %s1, %s721
      %p723 = scmp.lt.s32.totalorder %s33, 1
      %s724 = scalar_select %p723, %s33, 1
      %s725 = smul.addr %s724, 8
      %s726 = scalar_lea.vmem %s2, %s725
      %p727 = scmp.lt.s32.totalorder %s33, 1
      %s728 = scalar_select %p727, %s33, 1
      %s729 = smul.addr %s728, 2
      %s730 = smul.addr %s729, 8
      %s731 = scalar_lea.vmem %s3, %s730
      %p732 = scmp.lt.s32.totalorder %s33, 1
      %s733 = scalar_select %p732, %s33, 1
      %s734 = smul.addr %s733, 8
      %s735 = scalar_lea.vmem %s22, %s734
      %v736 = vld [vmem:[%s717] sm:$0xff]
      %v737 = vld [vmem:[%s722] sm:$0xff]
      %v738 = vld [vmem:[%s722 + $0x8] sm:$0xff]
      %v739 = vld [vmem:[%s726] sm:$0xff]
      %v740 = vld [vmem:[%s731] sm:$0xff]
      %v741 = vld [vmem:[%s731 + $0x8] sm:$0xff]
      %v742 = vadd.f32 %v736, %v739
      %v743 = vld [vmem:[%s4] sm:$0xff]
      %v744 = vld [vmem:[%s4 + $0x8] sm:$0xff]
      %v745 = vld [vmem:[%s4 + $0x10] sm:$0xff]
      %v746 = vld [vmem:[%s4 + $0x18] sm:$0xff]
      %v747 = vld [vmem:[%s5] sm:$0x1]
      %v749 = vlaneseq
      %v750 = vshrl.u32 %v749, 7
      %v751 = vsub.s32 0, %v750
      %v752 = vrot.slane %v747, %v751
      %vm754 = vcmask 261120
      %v756 = vsel %vm754, %v742, 0
      %758 = vmatprep.subr.mxu0 0.0
      %759 = vmatpush1.msra.mxu0 0.0
      %760 = vmatprep.subr.mxu0 0.0
      %761 = vmatpush1.msra.mxu0 0.0
      %762 = vmatprep.subr.mxu0 0.0
      %763 = vmatpush1.msra.mxu0 0.0
      %764 = vmatprep.subr.mxu0 0.0
      %765 = vmatpush1.msra.mxu0 0.0
      %766 = vmatprep.subr.mxu0 0.0
      %767 = vmatpush1.msra.mxu0 0.0
      %768 = vmatprep.subr.mxu0 0.0
      %769 = vmatpush1.msra.mxu0 0.0
      %770 = vmatprep.subr.mxu0 0.0
      %771 = vmatpush1.msra.mxu0 0.0
      %772 = vmatprep.subr.mxu0 0.0
      %773 = vmatpush1.msra.mxu0 0.0
      %774 = vmatprep.subr.mxu0 0.0
      %775 = vmatpush1.msra.mxu0 0.0
      %776 = vmatprep.subr.mxu0 0.0
      %777 = vmatpush1.msra.mxu0 0.0
      %778 = vmatprep.subr.mxu0 0.0
      %779 = vmatpush1.msra.mxu0 0.0
      %780 = vmatprep.subr.mxu0 0.0
      %781 = vmatpush1.msra.mxu0 0.0
      %782 = vmatprep.subr.mxu0 0.0
      %783 = vmatpush1.msra.mxu0 %v746
      %784 = vmatprep.subr.mxu0 0.0
      %785 = vmatpush1.msra.mxu0 %v745
      %786 = vmatprep.subr.mxu0 0.0
      %787 = vmatpush1.msra.mxu0 %v744
      %788 = vmatprep.subr.mxu0 0.0
      %789 = vmatpush1.msra.mxu0 %v743
      %790 = vmatprep.subr.mxu0 0.0
      %791 = vmatpush2.msra.mxu0 0.0
      %792 = vmatprep.subr.mxu0 0.0
      %793 = vmatpush2.msra.mxu0 0.0
      %794 = vmatprep.subr.mxu0 0.0
      %795 = vmatpush2.msra.mxu0 0.0
      %796 = vmatprep.subr.mxu0 0.0
      %797 = vmatpush2.msra.mxu0 0.0
      %798 = vmatprep.subr.mxu0 0.0
      %799 = vmatpush2.msra.mxu0 0.0
      %800 = vmatprep.subr.mxu0 0.0
      %801 = vmatpush2.msra.mxu0 0.0
      %802 = vmatprep.subr.mxu0 0.0
      %803 = vmatpush2.msra.mxu0 0.0
      %804 = vmatprep.subr.mxu0 0.0
      %805 = vmatpush2.msra.mxu0 0.0
      %806 = vmatprep.subr.mxu0 0.0
      %807 = vmatpush2.msra.mxu0 0.0
      %808 = vmatprep.subr.mxu0 0.0
      %809 = vmatpush2.msra.mxu0 0.0
      %810 = vmatprep.subr.mxu0 0.0
      %811 = vmatpush2.msra.mxu0 0.0
      %812 = vmatprep.subr.mxu0 0.0
      %813 = vmatpush2.msra.mxu0 0.0
      %814 = vmatprep.subr.mxu0 0.0
      %815 = vmatpush2.msra.mxu0 0.0
      %816 = vmatprep.subr.mxu0 0.0
      %817 = vmatpush2.msra.mxu0 0.0
      %818 = vmatprep.subr.mxu0 0.0
      %819 = vmatpush2.msra.mxu0 0.0
      %820 = vmatprep.subr.mxu0 0.0
      %821 = vmatpush2.msra.mxu0 0.0
      %822 = vmatprep.mubr.f32.mxu0 0.0
      %823 = vmatmul.mubr.f32.gmra.mxu0 %v756
      %v824 = vpop.f32.mrf.mxu0
      %v825 = vadd.f32 %v752, %v824
      %v826 = vpop.f32.mrf.mxu0
      %827 = vdwg.mxu0
      %832 = vrot.lane.b32.xlu0 %v743, 96
      %v833 = vpop.permute.xlu0 %832
      %834 = vrot.lane.b32.xlu0 %v744, 96
      %v835 = vpop.permute.xlu0 %834
      %836 = vrot.lane.b32.xlu0 %v745, 96
      %v837 = vpop.permute.xlu0 %836
      %838 = vrot.lane.b32.xlu0 %v746, 96
      %v839 = vpop.permute.xlu0 %838
      %844 = vrot.lane.b32.xlu0 %v752, 96
      %v845 = vpop.permute.xlu0 %844
      %847 = vmatprep.subr.mxu0 0.0
      %848 = vmatpush1.msra.mxu0 0.0
      %849 = vmatprep.subr.mxu0 0.0
      %850 = vmatpush1.msra.mxu0 0.0
      %851 = vmatprep.subr.mxu0 0.0
      %852 = vmatpush1.msra.mxu0 0.0
      %853 = vmatprep.subr.mxu0 0.0
      %854 = vmatpush1.msra.mxu0 0.0
      %855 = vmatprep.subr.mxu0 0.0
      %856 = vmatpush1.msra.mxu0 0.0
      %857 = vmatprep.subr.mxu0 0.0
      %858 = vmatpush1.msra.mxu0 0.0
      %859 = vmatprep.subr.mxu0 0.0
      %860 = vmatpush1.msra.mxu0 0.0
      %861 = vmatprep.subr.mxu0 0.0
      %862 = vmatpush1.msra.mxu0 0.0
      %863 = vmatprep.subr.mxu0 0.0
      %864 = vmatpush1.msra.mxu0 0.0
      %865 = vmatprep.subr.mxu0 0.0
      %866 = vmatpush1.msra.mxu0 0.0
      %867 = vmatprep.subr.mxu0 0.0
      %868 = vmatpush1.msra.mxu0 0.0
      %869 = vmatprep.subr.mxu0 0.0
      %870 = vmatpush1.msra.mxu0 0.0
      %871 = vmatprep.subr.mxu0 0.0
      %872 = vmatpush1.msra.mxu0 %v839
      %873 = vmatprep.subr.mxu0 0.0
      %874 = vmatpush1.msra.mxu0 %v837
      %875 = vmatprep.subr.mxu0 0.0
      %876 = vmatpush1.msra.mxu0 %v835
      %877 = vmatprep.subr.mxu0 0.0
      %878 = vmatpush1.msra.mxu0 %v833
      %879 = vmatprep.subr.mxu0 0.0
      %880 = vmatpush2.msra.mxu0 0.0
      %881 = vmatprep.subr.mxu0 0.0
      %882 = vmatpush2.msra.mxu0 0.0
      %883 = vmatprep.subr.mxu0 0.0
      %884 = vmatpush2.msra.mxu0 0.0
      %885 = vmatprep.subr.mxu0 0.0
      %886 = vmatpush2.msra.mxu0 0.0
      %887 = vmatprep.subr.mxu0 0.0
      %888 = vmatpush2.msra.mxu0 0.0
      %889 = vmatprep.subr.mxu0 0.0
      %890 = vmatpush2.msra.mxu0 0.0
      %891 = vmatprep.subr.mxu0 0.0
      %892 = vmatpush2.msra.mxu0 0.0
      %893 = vmatprep.subr.mxu0 0.0
      %894 = vmatpush2.msra.mxu0 0.0
      %895 = vmatprep.subr.mxu0 0.0
      %896 = vmatpush2.msra.mxu0 0.0
      %897 = vmatprep.subr.mxu0 0.0
      %898 = vmatpush2.msra.mxu0 0.0
      %899 = vmatprep.subr.mxu0 0.0
      %900 = vmatpush2.msra.mxu0 0.0
      %901 = vmatprep.subr.mxu0 0.0
      %902 = vmatpush2.msra.mxu0 0.0
      %903 = vmatprep.subr.mxu0 0.0
      %904 = vmatpush2.msra.mxu0 0.0
      %905 = vmatprep.subr.mxu0 0.0
      %906 = vmatpush2.msra.mxu0 0.0
      %907 = vmatprep.subr.mxu0 0.0
      %908 = vmatpush2.msra.mxu0 0.0
      %909 = vmatprep.subr.mxu0 0.0
      %910 = vmatpush2.msra.mxu0 0.0
      %911 = vmatprep.mubr.f32.mxu0 0.0
      %912 = vmatmul.mubr.f32.gmra.mxu0 %v756
      %v913 = vpop.f32.mrf.mxu0
      %v914 = vadd.f32 %v845, %v913
      %v915 = vpop.f32.mrf.mxu0
      %916 = vdwg.mxu0
      %917 = vrot.lane.b32.xlu0 %v743, 64
      %v918 = vpop.permute.xlu0 %917
      %919 = vrot.lane.b32.xlu0 %v744, 64
      %v920 = vpop.permute.xlu0 %919
      %921 = vrot.lane.b32.xlu0 %v745, 64
      %v922 = vpop.permute.xlu0 %921
      %923 = vrot.lane.b32.xlu0 %v746, 64
      %v924 = vpop.permute.xlu0 %923
      %929 = vrot.lane.b32.xlu0 %v752, 64
      %v930 = vpop.permute.xlu0 %929
      %v933 = vsel %vm754, %v736, 0
      %935 = vmatprep.subr.mxu0 0.0
      %936 = vmatpush1.msra.mxu0 0.0
      %937 = vmatprep.subr.mxu0 0.0
      %938 = vmatpush1.msra.mxu0 0.0
      %939 = vmatprep.subr.mxu0 0.0
      %940 = vmatpush1.msra.mxu0 0.0
      %941 = vmatprep.subr.mxu0 0.0
      %942 = vmatpush1.msra.mxu0 0.0
      %943 = vmatprep.subr.mxu0 0.0
      %944 = vmatpush1.msra.mxu0 0.0
      %945 = vmatprep.subr.mxu0 0.0
      %946 = vmatpush1.msra.mxu0 0.0
      %947 = vmatprep.subr.mxu0 0.0
      %948 = vmatpush1.msra.mxu0 0.0
      %949 = vmatprep.subr.mxu0 0.0
      %950 = vmatpush1.msra.mxu0 0.0
      %951 = vmatprep.subr.mxu0 0.0
      %952 = vmatpush1.msra.mxu0 0.0
      %953 = vmatprep.subr.mxu0 0.0
      %954 = vmatpush1.msra.mxu0 0.0
      %955 = vmatprep.subr.mxu0 0.0
      %956 = vmatpush1.msra.mxu0 0.0
      %957 = vmatprep.subr.mxu0 0.0
      %958 = vmatpush1.msra.mxu0 0.0
      %959 = vmatprep.subr.mxu0 0.0
      %960 = vmatpush1.msra.mxu0 %v924
      %961 = vmatprep.subr.mxu0 0.0
      %962 = vmatpush1.msra.mxu0 %v922
      %963 = vmatprep.subr.mxu0 0.0
      %964 = vmatpush1.msra.mxu0 %v920
      %965 = vmatprep.subr.mxu0 0.0
      %966 = vmatpush1.msra.mxu0 %v918
      %967 = vmatprep.subr.mxu0 0.0
      %968 = vmatpush2.msra.mxu0 0.0
      %969 = vmatprep.subr.mxu0 0.0
      %970 = vmatpush2.msra.mxu0 0.0
      %971 = vmatprep.subr.mxu0 0.0
      %972 = vmatpush2.msra.mxu0 0.0
      %973 = vmatprep.subr.mxu0 0.0
      %974 = vmatpush2.msra.mxu0 0.0
      %975 = vmatprep.subr.mxu0 0.0
      %976 = vmatpush2.msra.mxu0 0.0
      %977 = vmatprep.subr.mxu0 0.0
      %978 = vmatpush2.msra.mxu0 0.0
      %979 = vmatprep.subr.mxu0 0.0
      %980 = vmatpush2.msra.mxu0 0.0
      %981 = vmatprep.subr.mxu0 0.0
      %982 = vmatpush2.msra.mxu0 0.0
      %983 = vmatprep.subr.mxu0 0.0
      %984 = vmatpush2.msra.mxu0 0.0
      %985 = vmatprep.subr.mxu0 0.0
      %986 = vmatpush2.msra.mxu0 0.0
      %987 = vmatprep.subr.mxu0 0.0
      %988 = vmatpush2.msra.mxu0 0.0
      %989 = vmatprep.subr.mxu0 0.0
      %990 = vmatpush2.msra.mxu0 0.0
      %991 = vmatprep.subr.mxu0 0.0
      %992 = vmatpush2.msra.mxu0 0.0
      %993 = vmatprep.subr.mxu0 0.0
      %994 = vmatpush2.msra.mxu0 0.0
      %995 = vmatprep.subr.mxu0 0.0
      %996 = vmatpush2.msra.mxu0 0.0
      %997 = vmatprep.subr.mxu0 0.0
      %998 = vmatpush2.msra.mxu0 0.0
      %999 = vmatprep.mubr.f32.mxu0 0.0
      %1000 = vmatmul.mubr.f32.gmra.mxu0 %v933
      %v1001 = vpop.f32.mrf.mxu0
      %v1002 = vadd.f32 %v930, %v1001
      %v1003 = vpop.f32.mrf.mxu0
      %1004 = vdwg.mxu0
      %vm1005 = vcmask 64512
      %v1007 = vsel %vm1005, %v825, 0
      %v1010 = vsel %vm1005, %v914, 0
      %1012 = vmatprep.subr.mxu0 0.0
      %1013 = vmatpush1.xpose.msra.mxu0 0.0
      %1014 = vmatprep.subr.mxu0 0.0
      %1015 = vmatpush1.xpose.msra.mxu0 0.0
      %1016 = vmatprep.subr.mxu0 0.0
      %1017 = vmatpush1.xpose.msra.mxu0 0.0
      %1018 = vmatprep.subr.mxu0 0.0
      %1019 = vmatpush1.xpose.msra.mxu0 0.0
      %1020 = vmatprep.subr.mxu0 0.0
      %1021 = vmatpush1.xpose.msra.mxu0 0.0
      %1022 = vmatprep.subr.mxu0 0.0
      %1023 = vmatpush1.xpose.msra.mxu0 0.0
      %1024 = vmatprep.subr.mxu0 0.0
      %1025 = vmatpush1.xpose.msra.mxu0 0.0
      %1026 = vmatprep.subr.mxu0 0.0
      %1027 = vmatpush1.xpose.msra.mxu0 0.0
      %1028 = vmatprep.subr.mxu0 0.0
      %1029 = vmatpush1.xpose.msra.mxu0 0.0
      %1030 = vmatprep.subr.mxu0 0.0
      %1031 = vmatpush1.xpose.msra.mxu0 0.0
      %1032 = vmatprep.subr.mxu0 0.0
      %1033 = vmatpush1.xpose.msra.mxu0 0.0
      %1034 = vmatprep.subr.mxu0 0.0
      %1035 = vmatpush1.xpose.msra.mxu0 0.0
      %1036 = vmatprep.subr.mxu0 0.0
      %1037 = vmatpush1.xpose.msra.mxu0 0.0
      %1038 = vmatprep.subr.mxu0 0.0
      %1039 = vmatpush1.xpose.msra.mxu0 0.0
      %1040 = vmatprep.subr.mxu0 0.0
      %1041 = vmatpush1.xpose.msra.mxu0 0.0
      %1042 = vmatprep.subr.mxu0 0.0
      %1043 = vmatpush1.xpose.msra.mxu0 %v1010
      %1044 = vmatprep.subr.mxu0 0.0
      %1045 = vmatpush2.xpose.msra.mxu0 0.0
      %1046 = vmatprep.subr.mxu0 0.0
      %1047 = vmatpush2.xpose.msra.mxu0 0.0
      %1048 = vmatprep.subr.mxu0 0.0
      %1049 = vmatpush2.xpose.msra.mxu0 0.0
      %1050 = vmatprep.subr.mxu0 0.0
      %1051 = vmatpush2.xpose.msra.mxu0 0.0
      %1052 = vmatprep.subr.mxu0 0.0
      %1053 = vmatpush2.xpose.msra.mxu0 0.0
      %1054 = vmatprep.subr.mxu0 0.0
      %1055 = vmatpush2.xpose.msra.mxu0 0.0
      %1056 = vmatprep.subr.mxu0 0.0
      %1057 = vmatpush2.xpose.msra.mxu0 0.0
      %1058 = vmatprep.subr.mxu0 0.0
      %1059 = vmatpush2.xpose.msra.mxu0 0.0
      %1060 = vmatprep.subr.mxu0 0.0
      %1061 = vmatpush2.xpose.msra.mxu0 0.0
      %1062 = vmatprep.subr.mxu0 0.0
      %1063 = vmatpush2.xpose.msra.mxu0 0.0
      %1064 = vmatprep.subr.mxu0 0.0
      %1065 = vmatpush2.xpose.msra.mxu0 0.0
      %1066 = vmatprep.subr.mxu0 0.0
      %1067 = vmatpush2.xpose.msra.mxu0 0.0
      %1068 = vmatprep.subr.mxu0 0.0
      %1069 = vmatpush2.xpose.msra.mxu0 0.0
      %1070 = vmatprep.subr.mxu0 0.0
      %1071 = vmatpush2.xpose.msra.mxu0 0.0
      %1072 = vmatprep.subr.mxu0 0.0
      %1073 = vmatpush2.xpose.msra.mxu0 0.0
      %1074 = vmatprep.subr.mxu0 0.0
      %1075 = vmatpush2.xpose.msra.mxu0 0.0
      %1076 = vmatprep.mubr.f32.mxu0 0.0
      %1077 = vmatmul.mubr.f32.gmra.mxu0 %v1007
      %v1078 = vpop.f32.mrf.mxu0
      %v1079 = vadd.f32 0.0, %v1078
      %v1080 = vpop.f32.mrf.mxu0
      %1081 = vdwg.mxu0
      %v1082 = vsel %vm1005, %v1079, -inf
      %1083 = vmax.xlane.f32.xlu0 %v1082
      %v1084 = vpop.xlane.xlu0 %1083
      %v1085 = vsub.f32 %v1079, %v1084
      %v1086 = vmul.f32 %v1085, 1.442695
      %v1087 = vpow.pop %v1086
      %v1088 = vsel %vm1005, %v1087, 0.0
      %1089 = vadd.xlane.f32.xlu0 %v1088
      %v1090 = vpop.xlane.xlu0 %1089
      %v1091 = vrcp.pop %v1090
      %v1092 = vmul.f32 %v1087, %v1091
      %v1094 = vsel %vm1005, %v1092, 0
      %1096 = vmatprep.subr.mxu0 0.0
      %1097 = vmatpush1.msra.mxu0 0.0
      %1098 = vmatprep.subr.mxu0 0.0
      %1099 = vmatpush1.msra.mxu0 0.0
      %1100 = vmatprep.subr.mxu0 0.0
      %1101 = vmatpush1.msra.mxu0 0.0
      %1102 = vmatprep.subr.mxu0 0.0
      %1103 = vmatpush1.msra.mxu0 0.0
      %1104 = vmatprep.subr.mxu0 0.0
      %1105 = vmatpush1.msra.mxu0 0.0
      %1106 = vmatprep.subr.mxu0 0.0
      %1107 = vmatpush1.msra.mxu0 0.0
      %1108 = vmatprep.subr.mxu0 0.0
      %1109 = vmatpush1.msra.mxu0 0.0
      %1110 = vmatprep.subr.mxu0 0.0
      %1111 = vmatpush1.msra.mxu0 0.0
      %1112 = vmatprep.subr.mxu0 0.0
      %1113 = vmatpush1.msra.mxu0 0.0
      %1114 = vmatprep.subr.mxu0 0.0
      %1115 = vmatpush1.msra.mxu0 0.0
      %1116 = vmatprep.subr.mxu0 0.0
      %1117 = vmatpush1.msra.mxu0 0.0
      %1118 = vmatprep.subr.mxu0 0.0
      %1119 = vmatpush1.msra.mxu0 0.0
      %1120 = vmatprep.subr.mxu0 0.0
      %1121 = vmatpush1.msra.mxu0 0.0
      %1122 = vmatprep.subr.mxu0 0.0
      %1123 = vmatpush1.msra.mxu0 0.0
      %1124 = vmatprep.subr.mxu0 0.0
      %1125 = vmatpush1.msra.mxu0 0.0
      %1126 = vmatprep.subr.mxu0 0.0
      %1127 = vmatpush1.msra.mxu0 %v1002
      %1128 = vmatprep.subr.mxu0 0.0
      %1129 = vmatpush2.msra.mxu0 0.0
      %1130 = vmatprep.subr.mxu0 0.0
      %1131 = vmatpush2.msra.mxu0 0.0
      %1132 = vmatprep.subr.mxu0 0.0
      %1133 = vmatpush2.msra.mxu0 0.0
      %1134 = vmatprep.subr.mxu0 0.0
      %1135 = vmatpush2.msra.mxu0 0.0
      %1136 = vmatprep.subr.mxu0 0.0
      %1137 = vmatpush2.msra.mxu0 0.0
      %1138 = vmatprep.subr.mxu0 0.0
      %1139 = vmatpush2.msra.mxu0 0.0
      %1140 = vmatprep.subr.mxu0 0.0
      %1141 = vmatpush2.msra.mxu0 0.0
      %1142 = vmatprep.subr.mxu0 0.0
      %1143 = vmatpush2.msra.mxu0 0.0
      %1144 = vmatprep.subr.mxu0 0.0
      %1145 = vmatpush2.msra.mxu0 0.0
      %1146 = vmatprep.subr.mxu0 0.0
      %1147 = vmatpush2.msra.mxu0 0.0
      %1148 = vmatprep.subr.mxu0 0.0
      %1149 = vmatpush2.msra.mxu0 0.0
      %1150 = vmatprep.subr.mxu0 0.0
      %1151 = vmatpush2.msra.mxu0 0.0
      %1152 = vmatprep.subr.mxu0 0.0
      %1153 = vmatpush2.msra.mxu0 0.0
      %1154 = vmatprep.subr.mxu0 0.0
      %1155 = vmatpush2.msra.mxu0 0.0
      %1156 = vmatprep.subr.mxu0 0.0
      %1157 = vmatpush2.msra.mxu0 0.0
      %1158 = vmatprep.subr.mxu0 0.0
      %1159 = vmatpush2.msra.mxu0 0.0
      %1160 = vmatprep.mubr.f32.mxu0 0.0
      %1161 = vmatmul.mubr.f32.gmra.mxu0 %v1094
      %v1162 = vpop.f32.mrf.mxu0
      %v1163 = vadd.f32 0.0, %v1162
      %v1164 = vpop.f32.mrf.mxu0
      %1165 = vdwg.mxu0
      %1166 = vrot.lane.b32.xlu0 %v825, 120
      %v1167 = vpop.permute.xlu0 %1166
      %1168 = vrot.lane.b32.xlu0 %v914, 120
      %v1169 = vpop.permute.xlu0 %1168
      %v1170 = vsel %vm1005, %v1167, 0
      %v1172 = vsel %vm1005, %v1169, 0
      %1174 = vmatprep.subr.mxu0 0.0
      %1175 = vmatpush1.xpose.msra.mxu0 0.0
      %1176 = vmatprep.subr.mxu0 0.0
      %1177 = vmatpush1.xpose.msra.mxu0 0.0
      %1178 = vmatprep.subr.mxu0 0.0
      %1179 = vmatpush1.xpose.msra.mxu0 0.0
      %1180 = vmatprep.subr.mxu0 0.0
      %1181 = vmatpush1.xpose.msra.mxu0 0.0
      %1182 = vmatprep.subr.mxu0 0.0
      %1183 = vmatpush1.xpose.msra.mxu0 0.0
      %1184 = vmatprep.subr.mxu0 0.0
      %1185 = vmatpush1.xpose.msra.mxu0 0.0
      %1186 = vmatprep.subr.mxu0 0.0
      %1187 = vmatpush1.xpose.msra.mxu0 0.0
      %1188 = vmatprep.subr.mxu0 0.0
      %1189 = vmatpush1.xpose.msra.mxu0 0.0
      %1190 = vmatprep.subr.mxu0 0.0
      %1191 = vmatpush1.xpose.msra.mxu0 0.0
      %1192 = vmatprep.subr.mxu0 0.0
      %1193 = vmatpush1.xpose.msra.mxu0 0.0
      %1194 = vmatprep.subr.mxu0 0.0
      %1195 = vmatpush1.xpose.msra.mxu0 0.0
      %1196 = vmatprep.subr.mxu0 0.0
      %1197 = vmatpush1.xpose.msra.mxu0 0.0
      %1198 = vmatprep.subr.mxu0 0.0
      %1199 = vmatpush1.xpose.msra.mxu0 0.0
      %1200 = vmatprep.subr.mxu0 0.0
      %1201 = vmatpush1.xpose.msra.mxu0 0.0
      %1202 = vmatprep.subr.mxu0 0.0
      %1203 = vmatpush1.xpose.msra.mxu0 0.0
      %1204 = vmatprep.subr.mxu0 0.0
      %1205 = vmatpush1.xpose.msra.mxu0 %v1172
      %1206 = vmatprep.subr.mxu0 0.0
      %1207 = vmatpush2.xpose.msra.mxu0 0.0
      %1208 = vmatprep.subr.mxu0 0.0
      %1209 = vmatpush2.xpose.msra.mxu0 0.0
      %1210 = vmatprep.subr.mxu0 0.0
      %1211 = vmatpush2.xpose.msra.mxu0 0.0
      %1212 = vmatprep.subr.mxu0 0.0
      %1213 = vmatpush2.xpose.msra.mxu0 0.0
      %1214 = vmatprep.subr.mxu0 0.0
      %1215 = vmatpush2.xpose.msra.mxu0 0.0
      %1216 = vmatprep.subr.mxu0 0.0
      %1217 = vmatpush2.xpose.msra.mxu0 0.0
      %1218 = vmatprep.subr.mxu0 0.0
      %1219 = vmatpush2.xpose.msra.mxu0 0.0
      %1220 = vmatprep.subr.mxu0 0.0
      %1221 = vmatpush2.xpose.msra.mxu0 0.0
      %1222 = vmatprep.subr.mxu0 0.0
      %1223 = vmatpush2.xpose.msra.mxu0 0.0
      %1224 = vmatprep.subr.mxu0 0.0
      %1225 = vmatpush2.xpose.msra.mxu0 0.0
      %1226 = vmatprep.subr.mxu0 0.0
      %1227 = vmatpush2.xpose.msra.mxu0 0.0
      %1228 = vmatprep.subr.mxu0 0.0
      %1229 = vmatpush2.xpose.msra.mxu0 0.0
      %1230 = vmatprep.subr.mxu0 0.0
      %1231 = vmatpush2.xpose.msra.mxu0 0.0
      %1232 = vmatprep.subr.mxu0 0.0
      %1233 = vmatpush2.xpose.msra.mxu0 0.0
      %1234 = vmatprep.subr.mxu0 0.0
      %1235 = vmatpush2.xpose.msra.mxu0 0.0
      %1236 = vmatprep.subr.mxu0 0.0
      %1237 = vmatpush2.xpose.msra.mxu0 0.0
      %1238 = vmatprep.mubr.f32.mxu0 0.0
      %1239 = vmatmul.mubr.f32.gmra.mxu0 %v1170
      %v1240 = vpop.f32.mrf.mxu0
      %v1241 = vadd.f32 0.0, %v1240
      %v1242 = vpop.f32.mrf.mxu0
      %1243 = vdwg.mxu0
      %v1244 = vsel %vm1005, %v1241, -inf
      %1245 = vmax.xlane.f32.xlu0 %v1244
      %v1246 = vpop.xlane.xlu0 %1245
      %v1247 = vsub.f32 %v1241, %v1246
      %v1248 = vmul.f32 %v1247, 1.442695
      %v1249 = vpow.pop %v1248
      %v1250 = vsel %vm1005, %v1249, 0.0
      %1251 = vadd.xlane.f32.xlu0 %v1250
      %v1252 = vpop.xlane.xlu0 %1251
      %v1253 = vrcp.pop %v1252
      %v1254 = vmul.f32 %v1249, %v1253
      %1256 = vrot.lane.b32.xlu0 %v1002, 120
      %v1257 = vpop.permute.xlu0 %1256
      %v1260 = vsel %vm1005, %v1254, 0
      %1262 = vmatprep.subr.mxu0 0.0
      %1263 = vmatpush1.msra.mxu0 0.0
      %1264 = vmatprep.subr.mxu0 0.0
      %1265 = vmatpush1.msra.mxu0 0.0
      %1266 = vmatprep.subr.mxu0 0.0
      %1267 = vmatpush1.msra.mxu0 0.0
      %1268 = vmatprep.subr.mxu0 0.0
      %1269 = vmatpush1.msra.mxu0 0.0
      %1270 = vmatprep.subr.mxu0 0.0
      %1271 = vmatpush1.msra.mxu0 0.0
      %1272 = vmatprep.subr.mxu0 0.0
      %1273 = vmatpush1.msra.mxu0 0.0
      %1274 = vmatprep.subr.mxu0 0.0
      %1275 = vmatpush1.msra.mxu0 0.0
      %1276 = vmatprep.subr.mxu0 0.0
      %1277 = vmatpush1.msra.mxu0 0.0
      %1278 = vmatprep.subr.mxu0 0.0
      %1279 = vmatpush1.msra.mxu0 0.0
      %1280 = vmatprep.subr.mxu0 0.0
      %1281 = vmatpush1.msra.mxu0 0.0
      %1282 = vmatprep.subr.mxu0 0.0
      %1283 = vmatpush1.msra.mxu0 0.0
      %1284 = vmatprep.subr.mxu0 0.0
      %1285 = vmatpush1.msra.mxu0 0.0
      %1286 = vmatprep.subr.mxu0 0.0
      %1287 = vmatpush1.msra.mxu0 0.0
      %1288 = vmatprep.subr.mxu0 0.0
      %1289 = vmatpush1.msra.mxu0 0.0
      %1290 = vmatprep.subr.mxu0 0.0
      %1291 = vmatpush1.msra.mxu0 0.0
      %1292 = vmatprep.subr.mxu0 0.0
      %1293 = vmatpush1.msra.mxu0 %v1257
      %1294 = vmatprep.subr.mxu0 0.0
      %1295 = vmatpush2.msra.mxu0 0.0
      %1296 = vmatprep.subr.mxu0 0.0
      %1297 = vmatpush2.msra.mxu0 0.0
      %1298 = vmatprep.subr.mxu0 0.0
      %1299 = vmatpush2.msra.mxu0 0.0
      %1300 = vmatprep.subr.mxu0 0.0
      %1301 = vmatpush2.msra.mxu0 0.0
      %1302 = vmatprep.subr.mxu0 0.0
      %1303 = vmatpush2.msra.mxu0 0.0
      %1304 = vmatprep.subr.mxu0 0.0
      %1305 = vmatpush2.msra.mxu0 0.0
      %1306 = vmatprep.subr.mxu0 0.0
      %1307 = vmatpush2.msra.mxu0 0.0
      %1308 = vmatprep.subr.mxu0 0.0
      %1309 = vmatpush2.msra.mxu0 0.0
      %1310 = vmatprep.subr.mxu0 0.0
      %1311 = vmatpush2.msra.mxu0 0.0
      %1312 = vmatprep.subr.mxu0 0.0
      %1313 = vmatpush2.msra.mxu0 0.0
      %1314 = vmatprep.subr.mxu0 0.0
      %1315 = vmatpush2.msra.mxu0 0.0
      %1316 = vmatprep.subr.mxu0 0.0
      %1317 = vmatpush2.msra.mxu0 0.0
      %1318 = vmatprep.subr.mxu0 0.0
      %1319 = vmatpush2.msra.mxu0 0.0
      %1320 = vmatprep.subr.mxu0 0.0
      %1321 = vmatpush2.msra.mxu0 0.0
      %1322 = vmatprep.subr.mxu0 0.0
      %1323 = vmatpush2.msra.mxu0 0.0
      %1324 = vmatprep.subr.mxu0 0.0
      %1325 = vmatpush2.msra.mxu0 0.0
      %1326 = vmatprep.mubr.f32.mxu0 0.0
      %1327 = vmatmul.mubr.f32.gmra.mxu0 %v1260
      %v1328 = vpop.f32.mrf.mxu0
      %v1329 = vadd.f32 0.0, %v1328
      %v1330 = vpop.f32.mrf.mxu0
      %1331 = vdwg.mxu0
      %1332 = vrot.lane.b32.xlu0 %v825, 112
      %v1333 = vpop.permute.xlu0 %1332
      %1334 = vrot.lane.b32.xlu0 %v914, 112
      %v1335 = vpop.permute.xlu0 %1334
      %v1336 = vsel %vm1005, %v1333, 0
      %v1338 = vsel %vm1005, %v1335, 0
      %1340 = vmatprep.subr.mxu0 0.0
      %1341 = vmatpush1.xpose.msra.mxu0 0.0
      %1342 = vmatprep.subr.mxu0 0.0
      %1343 = vmatpush1.xpose.msra.mxu0 0.0
      %1344 = vmatprep.subr.mxu0 0.0
      %1345 = vmatpush1.xpose.msra.mxu0 0.0
      %1346 = vmatprep.subr.mxu0 0.0
      %1347 = vmatpush1.xpose.msra.mxu0 0.0
      %1348 = vmatprep.subr.mxu0 0.0
      %1349 = vmatpush1.xpose.msra.mxu0 0.0
      %1350 = vmatprep.subr.mxu0 0.0
      %1351 = vmatpush1.xpose.msra.mxu0 0.0
      %1352 = vmatprep.subr.mxu0 0.0
      %1353 = vmatpush1.xpose.msra.mxu0 0.0
      %1354 = vmatprep.subr.mxu0 0.0
      %1355 = vmatpush1.xpose.msra.mxu0 0.0
      %1356 = vmatprep.subr.mxu0 0.0
      %1357 = vmatpush1.xpose.msra.mxu0 0.0
      %1358 = vmatprep.subr.mxu0 0.0
      %1359 = vmatpush1.xpose.msra.mxu0 0.0
      %1360 = vmatprep.subr.mxu0 0.0
      %1361 = vmatpush1.xpose.msra.mxu0 0.0
      %1362 = vmatprep.subr.mxu0 0.0
      %1363 = vmatpush1.xpose.msra.mxu0 0.0
      %1364 = vmatprep.subr.mxu0 0.0
      %1365 = vmatpush1.xpose.msra.mxu0 0.0
      %1366 = vmatprep.subr.mxu0 0.0
      %1367 = vmatpush1.xpose.msra.mxu0 0.0
      %1368 = vmatprep.subr.mxu0 0.0
      %1369 = vmatpush1.xpose.msra.mxu0 0.0
      %1370 = vmatprep.subr.mxu0 0.0
      %1371 = vmatpush1.xpose.msra.mxu0 %v1338
      %1372 = vmatprep.subr.mxu0 0.0
      %1373 = vmatpush2.xpose.msra.mxu0 0.0
      %1374 = vmatprep.subr.mxu0 0.0
      %1375 = vmatpush2.xpose.msra.mxu0 0.0
      %1376 = vmatprep.subr.mxu0 0.0
      %1377 = vmatpush2.xpose.msra.mxu0 0.0
      %1378 = vmatprep.subr.mxu0 0.0
      %1379 = vmatpush2.xpose.msra.mxu0 0.0
      %1380 = vmatprep.subr.mxu0 0.0
      %1381 = vmatpush2.xpose.msra.mxu0 0.0
      %1382 = vmatprep.subr.mxu0 0.0
      %1383 = vmatpush2.xpose.msra.mxu0 0.0
      %1384 = vmatprep.subr.mxu0 0.0
      %1385 = vmatpush2.xpose.msra.mxu0 0.0
      %1386 = vmatprep.subr.mxu0 0.0
      %1387 = vmatpush2.xpose.msra.mxu0 0.0
      %1388 = vmatprep.subr.mxu0 0.0
      %1389 = vmatpush2.xpose.msra.mxu0 0.0
      %1390 = vmatprep.subr.mxu0 0.0
      %1391 = vmatpush2.xpose.msra.mxu0 0.0
      %1392 = vmatprep.subr.mxu0 0.0
      %1393 = vmatpush2.xpose.msra.mxu0 0.0
      %1394 = vmatprep.subr.mxu0 0.0
      %1395 = vmatpush2.xpose.msra.mxu0 0.0
      %1396 = vmatprep.subr.mxu0 0.0
      %1397 = vmatpush2.xpose.msra.mxu0 0.0
      %1398 = vmatprep.subr.mxu0 0.0
      %1399 = vmatpush2.xpose.msra.mxu0 0.0
      %1400 = vmatprep.subr.mxu0 0.0
      %1401 = vmatpush2.xpose.msra.mxu0 0.0
      %1402 = vmatprep.subr.mxu0 0.0
      %1403 = vmatpush2.xpose.msra.mxu0 0.0
      %1404 = vmatprep.mubr.f32.mxu0 0.0
      %1405 = vmatmul.mubr.f32.gmra.mxu0 %v1336
      %v1406 = vpop.f32.mrf.mxu0
      %v1407 = vadd.f32 0.0, %v1406
      %v1408 = vpop.f32.mrf.mxu0
      %1409 = vdwg.mxu0
      %v1410 = vsel %vm1005, %v1407, -inf
      %1411 = vmax.xlane.f32.xlu0 %v1410
      %v1412 = vpop.xlane.xlu0 %1411
      %v1413 = vsub.f32 %v1407, %v1412
      %v1414 = vmul.f32 %v1413, 1.442695
      %v1415 = vpow.pop %v1414
      %v1416 = vsel %vm1005, %v1415, 0.0
      %1417 = vadd.xlane.f32.xlu0 %v1416
      %v1418 = vpop.xlane.xlu0 %1417
      %v1419 = vrcp.pop %v1418
      %v1420 = vmul.f32 %v1415, %v1419
      %1421 = vrot.lane.b32.xlu0 %v1002, 112
      %v1422 = vpop.permute.xlu0 %1421
      %v1425 = vsel %vm1005, %v1420, 0
      %1427 = vmatprep.subr.mxu0 0.0
      %1428 = vmatpush1.msra.mxu0 0.0
      %1429 = vmatprep.subr.mxu0 0.0
      %1430 = vmatpush1.msra.mxu0 0.0
      %1431 = vmatprep.subr.mxu0 0.0
      %1432 = vmatpush1.msra.mxu0 0.0
      %1433 = vmatprep.subr.mxu0 0.0
      %1434 = vmatpush1.msra.mxu0 0.0
      %1435 = vmatprep.subr.mxu0 0.0
      %1436 = vmatpush1.msra.mxu0 0.0
      %1437 = vmatprep.subr.mxu0 0.0
      %1438 = vmatpush1.msra.mxu0 0.0
      %1439 = vmatprep.subr.mxu0 0.0
      %1440 = vmatpush1.msra.mxu0 0.0
      %1441 = vmatprep.subr.mxu0 0.0
      %1442 = vmatpush1.msra.mxu0 0.0
      %1443 = vmatprep.subr.mxu0 0.0
      %1444 = vmatpush1.msra.mxu0 0.0
      %1445 = vmatprep.subr.mxu0 0.0
      %1446 = vmatpush1.msra.mxu0 0.0
      %1447 = vmatprep.subr.mxu0 0.0
      %1448 = vmatpush1.msra.mxu0 0.0
      %1449 = vmatprep.subr.mxu0 0.0
      %1450 = vmatpush1.msra.mxu0 0.0
      %1451 = vmatprep.subr.mxu0 0.0
      %1452 = vmatpush1.msra.mxu0 0.0
      %1453 = vmatprep.subr.mxu0 0.0
      %1454 = vmatpush1.msra.mxu0 0.0
      %1455 = vmatprep.subr.mxu0 0.0
      %1456 = vmatpush1.msra.mxu0 0.0
      %1457 = vmatprep.subr.mxu0 0.0
      %1458 = vmatpush1.msra.mxu0 %v1422
      %1459 = vmatprep.subr.mxu0 0.0
      %1460 = vmatpush2.msra.mxu0 0.0
      %1461 = vmatprep.subr.mxu0 0.0
      %1462 = vmatpush2.msra.mxu0 0.0
      %1463 = vmatprep.subr.mxu0 0.0
      %1464 = vmatpush2.msra.mxu0 0.0
      %1465 = vmatprep.subr.mxu0 0.0
      %1466 = vmatpush2.msra.mxu0 0.0
      %1467 = vmatprep.subr.mxu0 0.0
      %1468 = vmatpush2.msra.mxu0 0.0
      %1469 = vmatprep.subr.mxu0 0.0
      %1470 = vmatpush2.msra.mxu0 0.0
      %1471 = vmatprep.subr.mxu0 0.0
      %1472 = vmatpush2.msra.mxu0 0.0
      %1473 = vmatprep.subr.mxu0 0.0
      %1474 = vmatpush2.msra.mxu0 0.0
      %1475 = vmatprep.subr.mxu0 0.0
      %1476 = vmatpush2.msra.mxu0 0.0
      %1477 = vmatprep.subr.mxu0 0.0
      %1478 = vmatpush2.msra.mxu0 0.0
      %1479 = vmatprep.subr.mxu0 0.0
      %1480 = vmatpush2.msra.mxu0 0.0
      %1481 = vmatprep.subr.mxu0 0.0
      %1482 = vmatpush2.msra.mxu0 0.0
      %1483 = vmatprep.subr.mxu0 0.0
      %1484 = vmatpush2.msra.mxu0 0.0
      %1485 = vmatprep.subr.mxu0 0.0
      %1486 = vmatpush2.msra.mxu0 0.0
      %1487 = vmatprep.subr.mxu0 0.0
      %1488 = vmatpush2.msra.mxu0 0.0
      %1489 = vmatprep.subr.mxu0 0.0
      %1490 = vmatpush2.msra.mxu0 0.0
      %1491 = vmatprep.mubr.f32.mxu0 0.0
      %1492 = vmatmul.mubr.f32.gmra.mxu0 %v1425
      %v1493 = vpop.f32.mrf.mxu0
      %v1494 = vadd.f32 0.0, %v1493
      %v1495 = vpop.f32.mrf.mxu0
      %1496 = vdwg.mxu0
      %1497 = vrot.lane.b32.xlu0 %v825, 104
      %v1498 = vpop.permute.xlu0 %1497
      %1499 = vrot.lane.b32.xlu0 %v914, 104
      %v1500 = vpop.permute.xlu0 %1499
      %v1501 = vsel %vm1005, %v1498, 0
      %v1503 = vsel %vm1005, %v1500, 0
      %1505 = vmatprep.subr.mxu0 0.0
      %1506 = vmatpush1.xpose.msra.mxu0 0.0
      %1507 = vmatprep.subr.mxu0 0.0
      %1508 = vmatpush1.xpose.msra.mxu0 0.0
      %1509 = vmatprep.subr.mxu0 0.0
      %1510 = vmatpush1.xpose.msra.mxu0 0.0
      %1511 = vmatprep.subr.mxu0 0.0
      %1512 = vmatpush1.xpose.msra.mxu0 0.0
      %1513 = vmatprep.subr.mxu0 0.0
      %1514 = vmatpush1.xpose.msra.mxu0 0.0
      %1515 = vmatprep.subr.mxu0 0.0
      %1516 = vmatpush1.xpose.msra.mxu0 0.0
      %1517 = vmatprep.subr.mxu0 0.0
      %1518 = vmatpush1.xpose.msra.mxu0 0.0
      %1519 = vmatprep.subr.mxu0 0.0
      %1520 = vmatpush1.xpose.msra.mxu0 0.0
      %1521 = vmatprep.subr.mxu0 0.0
      %1522 = vmatpush1.xpose.msra.mxu0 0.0
      %1523 = vmatprep.subr.mxu0 0.0
      %1524 = vmatpush1.xpose.msra.mxu0 0.0
      %1525 = vmatprep.subr.mxu0 0.0
      %1526 = vmatpush1.xpose.msra.mxu0 0.0
      %1527 = vmatprep.subr.mxu0 0.0
      %1528 = vmatpush1.xpose.msra.mxu0 0.0
      %1529 = vmatprep.subr.mxu0 0.0
      %1530 = vmatpush1.xpose.msra.mxu0 0.0
      %1531 = vmatprep.subr.mxu0 0.0
      %1532 = vmatpush1.xpose.msra.mxu0 0.0
      %1533 = vmatprep.subr.mxu0 0.0
      %1534 = vmatpush1.xpose.msra.mxu0 0.0
      %1535 = vmatprep.subr.mxu0 0.0
      %1536 = vmatpush1.xpose.msra.mxu0 %v1503
      %1537 = vmatprep.subr.mxu0 0.0
      %1538 = vmatpush2.xpose.msra.mxu0 0.0
      %1539 = vmatprep.subr.mxu0 0.0
      %1540 = vmatpush2.xpose.msra.mxu0 0.0
      %1541 = vmatprep.subr.mxu0 0.0
      %1542 = vmatpush2.xpose.msra.mxu0 0.0
      %1543 = vmatprep.subr.mxu0 0.0
      %1544 = vmatpush2.xpose.msra.mxu0 0.0
      %1545 = vmatprep.subr.mxu0 0.0
      %1546 = vmatpush2.xpose.msra.mxu0 0.0
      %1547 = vmatprep.subr.mxu0 0.0
      %1548 = vmatpush2.xpose.msra.mxu0 0.0
      %1549 = vmatprep.subr.mxu0 0.0
      %1550 = vmatpush2.xpose.msra.mxu0 0.0
      %1551 = vmatprep.subr.mxu0 0.0
      %1552 = vmatpush2.xpose.msra.mxu0 0.0
      %1553 = vmatprep.subr.mxu0 0.0
      %1554 = vmatpush2.xpose.msra.mxu0 0.0
      %1555 = vmatprep.subr.mxu0 0.0
      %1556 = vmatpush2.xpose.msra.mxu0 0.0
      %1557 = vmatprep.subr.mxu0 0.0
      %1558 = vmatpush2.xpose.msra.mxu0 0.0
      %1559 = vmatprep.subr.mxu0 0.0
      %1560 = vmatpush2.xpose.msra.mxu0 0.0
      %1561 = vmatprep.subr.mxu0 0.0
      %1562 = vmatpush2.xpose.msra.mxu0 0.0
      %1563 = vmatprep.subr.mxu0 0.0
      %1564 = vmatpush2.xpose.msra.mxu0 0.0
      %1565 = vmatprep.subr.mxu0 0.0
      %1566 = vmatpush2.xpose.msra.mxu0 0.0
      %1567 = vmatprep.subr.mxu0 0.0
      %1568 = vmatpush2.xpose.msra.mxu0 0.0
      %1569 = vmatprep.mubr.f32.mxu0 0.0
      %1570 = vmatmul.mubr.f32.gmra.mxu0 %v1501
      %v1571 = vpop.f32.mrf.mxu0
      %v1572 = vadd.f32 0.0, %v1571
      %v1573 = vpop.f32.mrf.mxu0
      %1574 = vdwg.mxu0
      %v1575 = vsel %vm1005, %v1572, -inf
      %1576 = vmax.xlane.f32.xlu0 %v1575
      %v1577 = vpop.xlane.xlu0 %1576
      %v1578 = vsub.f32 %v1572, %v1577
      %v1579 = vmul.f32 %v1578, 1.442695
      %v1580 = vpow.pop %v1579
      %v1581 = vsel %vm1005, %v1580, 0.0
      %1582 = vadd.xlane.f32.xlu0 %v1581
      %v1583 = vpop.xlane.xlu0 %1582
      %v1584 = vrcp.pop %v1583
      %v1585 = vmul.f32 %v1580, %v1584
      %1586 = vrot.lane.b32.xlu0 %v1002, 104
      %v1587 = vpop.permute.xlu0 %1586
      %v1590 = vsel %vm1005, %v1585, 0
      %1592 = vmatprep.subr.mxu0 0.0
      %1593 = vmatpush1.msra.mxu0 0.0
      %1594 = vmatprep.subr.mxu0 0.0
      %1595 = vmatpush1.msra.mxu0 0.0
      %1596 = vmatprep.subr.mxu0 0.0
      %1597 = vmatpush1.msra.mxu0 0.0
      %1598 = vmatprep.subr.mxu0 0.0
      %1599 = vmatpush1.msra.mxu0 0.0
      %1600 = vmatprep.subr.mxu0 0.0
      %1601 = vmatpush1.msra.mxu0 0.0
      %1602 = vmatprep.subr.mxu0 0.0
      %1603 = vmatpush1.msra.mxu0 0.0
      %1604 = vmatprep.subr.mxu0 0.0
      %1605 = vmatpush1.msra.mxu0 0.0
      %1606 = vmatprep.subr.mxu0 0.0
      %1607 = vmatpush1.msra.mxu0 0.0
      %1608 = vmatprep.subr.mxu0 0.0
      %1609 = vmatpush1.msra.mxu0 0.0
      %1610 = vmatprep.subr.mxu0 0.0
      %1611 = vmatpush1.msra.mxu0 0.0
      %1612 = vmatprep.subr.mxu0 0.0
      %1613 = vmatpush1.msra.mxu0 0.0
      %1614 = vmatprep.subr.mxu0 0.0
      %1615 = vmatpush1.msra.mxu0 0.0
      %1616 = vmatprep.subr.mxu0 0.0
      %1617 = vmatpush1.msra.mxu0 0.0
      %1618 = vmatprep.subr.mxu0 0.0
      %1619 = vmatpush1.msra.mxu0 0.0
      %1620 = vmatprep.subr.mxu0 0.0
      %1621 = vmatpush1.msra.mxu0 0.0
      %1622 = vmatprep.subr.mxu0 0.0
      %1623 = vmatpush1.msra.mxu0 %v1587
      %1624 = vmatprep.subr.mxu0 0.0
      %1625 = vmatpush2.msra.mxu0 0.0
      %1626 = vmatprep.subr.mxu0 0.0
      %1627 = vmatpush2.msra.mxu0 0.0
      %1628 = vmatprep.subr.mxu0 0.0
      %1629 = vmatpush2.msra.mxu0 0.0
      %1630 = vmatprep.subr.mxu0 0.0
      %1631 = vmatpush2.msra.mxu0 0.0
      %1632 = vmatprep.subr.mxu0 0.0
      %1633 = vmatpush2.msra.mxu0 0.0
      %1634 = vmatprep.subr.mxu0 0.0
      %1635 = vmatpush2.msra.mxu0 0.0
      %1636 = vmatprep.subr.mxu0 0.0
      %1637 = vmatpush2.msra.mxu0 0.0
      %1638 = vmatprep.subr.mxu0 0.0
      %1639 = vmatpush2.msra.mxu0 0.0
      %1640 = vmatprep.subr.mxu0 0.0
      %1641 = vmatpush2.msra.mxu0 0.0
      %1642 = vmatprep.subr.mxu0 0.0
      %1643 = vmatpush2.msra.mxu0 0.0
      %1644 = vmatprep.subr.mxu0 0.0
      %1645 = vmatpush2.msra.mxu0 0.0
      %1646 = vmatprep.subr.mxu0 0.0
      %1647 = vmatpush2.msra.mxu0 0.0
      %1648 = vmatprep.subr.mxu0 0.0
      %1649 = vmatpush2.msra.mxu0 0.0
      %1650 = vmatprep.subr.mxu0 0.0
      %1651 = vmatpush2.msra.mxu0 0.0
      %1652 = vmatprep.subr.mxu0 0.0
      %1653 = vmatpush2.msra.mxu0 0.0
      %1654 = vmatprep.subr.mxu0 0.0
      %1655 = vmatpush2.msra.mxu0 0.0
      %1656 = vmatprep.mubr.f32.mxu0 0.0
      %1657 = vmatmul.mubr.f32.gmra.mxu0 %v1590
      %v1658 = vpop.f32.mrf.mxu0
      %v1659 = vadd.f32 0.0, %v1658
      %v1660 = vpop.f32.mrf.mxu0
      %1661 = vdwg.mxu0
      %1663 = vrot.lane.b32.xlu0 %v1329, 8
      %v1664 = vpop.permute.xlu0 %1663
      %1667 = vrot.lane.b32.xlu0 %v1494, 16
      %v1668 = vpop.permute.xlu0 %1667
      %1671 = vrot.lane.b32.xlu0 %v1659, 24
      %v1672 = vpop.permute.xlu0 %1671
      %v1674 = vsel %vm1005, %v1163, %v1664
      %vm1675 = vcmask 130048
      %v1676 = vsel %vm1675, %v1674, %v1668
      %vm1677 = vcmask 195584
      %v1678 = vsel %vm1677, %v1676, %v1672
      %v1679 = vld [vmem:[%s6] sm:$0xff]
      %v1680 = vld [vmem:[%s6 + $0x8] sm:$0xff]
      %v1681 = vld [vmem:[%s6 + $0x10] sm:$0xff]
      %v1682 = vld [vmem:[%s6 + $0x18] sm:$0xff]
      %v1683 = vld [vmem:[%s7] sm:$0x1]
      %v1685 = vlaneseq
      %v1686 = vshrl.u32 %v1685, 7
      %v1687 = vsub.s32 0, %v1686
      %v1688 = vrot.slane %v1683, %v1687
      %v1691 = vsel %vm754, %v1678, 0
      %1693 = vmatprep.subr.mxu0 0.0
      %1694 = vmatpush1.msra.mxu0 0.0
      %1695 = vmatprep.subr.mxu0 0.0
      %1696 = vmatpush1.msra.mxu0 0.0
      %1697 = vmatprep.subr.mxu0 0.0
      %1698 = vmatpush1.msra.mxu0 0.0
      %1699 = vmatprep.subr.mxu0 0.0
      %1700 = vmatpush1.msra.mxu0 0.0
      %1701 = vmatprep.subr.mxu0 0.0
      %1702 = vmatpush1.msra.mxu0 0.0
      %1703 = vmatprep.subr.mxu0 0.0
      %1704 = vmatpush1.msra.mxu0 0.0
      %1705 = vmatprep.subr.mxu0 0.0
      %1706 = vmatpush1.msra.mxu0 0.0
      %1707 = vmatprep.subr.mxu0 0.0
      %1708 = vmatpush1.msra.mxu0 0.0
      %1709 = vmatprep.subr.mxu0 0.0
      %1710 = vmatpush1.msra.mxu0 0.0
      %1711 = vmatprep.subr.mxu0 0.0
      %1712 = vmatpush1.msra.mxu0 0.0
      %1713 = vmatprep.subr.mxu0 0.0
      %1714 = vmatpush1.msra.mxu0 0.0
      %1715 = vmatprep.subr.mxu0 0.0
      %1716 = vmatpush1.msra.mxu0 0.0
      %1717 = vmatprep.subr.mxu0 0.0
      %1718 = vmatpush1.msra.mxu0 %v1682
      %1719 = vmatprep.subr.mxu0 0.0
      %1720 = vmatpush1.msra.mxu0 %v1681
      %1721 = vmatprep.subr.mxu0 0.0
      %1722 = vmatpush1.msra.mxu0 %v1680
      %1723 = vmatprep.subr.mxu0 0.0
      %1724 = vmatpush1.msra.mxu0 %v1679
      %1725 = vmatprep.subr.mxu0 0.0
      %1726 = vmatpush2.msra.mxu0 0.0
      %1727 = vmatprep.subr.mxu0 0.0
      %1728 = vmatpush2.msra.mxu0 0.0
      %1729 = vmatprep.subr.mxu0 0.0
      %1730 = vmatpush2.msra.mxu0 0.0
      %1731 = vmatprep.subr.mxu0 0.0
      %1732 = vmatpush2.msra.mxu0 0.0
      %1733 = vmatprep.subr.mxu0 0.0
      %1734 = vmatpush2.msra.mxu0 0.0
      %1735 = vmatprep.subr.mxu0 0.0
      %1736 = vmatpush2.msra.mxu0 0.0
      %1737 = vmatprep.subr.mxu0 0.0
      %1738 = vmatpush2.msra.mxu0 0.0
      %1739 = vmatprep.subr.mxu0 0.0
      %1740 = vmatpush2.msra.mxu0 0.0
      %1741 = vmatprep.subr.mxu0 0.0
      %1742 = vmatpush2.msra.mxu0 0.0
      %1743 = vmatprep.subr.mxu0 0.0
      %1744 = vmatpush2.msra.mxu0 0.0
      %1745 = vmatprep.subr.mxu0 0.0
      %1746 = vmatpush2.msra.mxu0 0.0
      %1747 = vmatprep.subr.mxu0 0.0
      %1748 = vmatpush2.msra.mxu0 0.0
      %1749 = vmatprep.subr.mxu0 0.0
      %1750 = vmatpush2.msra.mxu0 0.0
      %1751 = vmatprep.subr.mxu0 0.0
      %1752 = vmatpush2.msra.mxu0 0.0
      %1753 = vmatprep.subr.mxu0 0.0
      %1754 = vmatpush2.msra.mxu0 0.0
      %1755 = vmatprep.subr.mxu0 0.0
      %1756 = vmatpush2.msra.mxu0 0.0
      %1757 = vmatprep.mubr.f32.mxu0 0.0
      %1758 = vmatmul.mubr.f32.gmra.mxu0 %v1691
      %v1759 = vpop.f32.mrf.mxu0
      %v1760 = vadd.f32 %v1688, %v1759
      %v1761 = vpop.f32.mrf.mxu0
      %1762 = vdwg.mxu0
      %v1763 = vadd.f32 %v736, %v1760
      %v1764 = vld [vmem:[%s12] sm:$0x1]
      %v1765 = vld [vmem:[%s13] sm:$0x1]
      %v1766 = vsel %vm754, %v1763, 0.0
      %1767 = vadd.xlane.f32.xlu0 %v1766
      %v1768 = vpop.xlane.xlu0 %1767
      %v1769 = vrcp.pop 32.0
      %v1770 = vmul.f32 %v1768, %v1769
      %v1771 = vsub.f32 %v1763, %v1770
      %v1772 = vmul.f32 %v1771, %v1771
      %v1773 = vsel %vm754, %v1772, 0.0
      %1774 = vadd.xlane.f32.xlu0 %v1773
      %v1775 = vpop.xlane.xlu0 %1774
      %v1776 = vmul.f32 %v1775, %v1769
      %v1777 = vadd.f32 %v1776, 1e-05
      %v1778 = vrsqrt.pop %v1777
      %v1779 = vmul.f32 %v1771, %v1778
      %v1781 = vlaneseq
      %v1782 = vshrl.u32 %v1781, 7
      %v1783 = vsub.s32 0, %v1782
      %v1784 = vrot.slane %v1764, %v1783
      %v1786 = vmul.f32 %v1779, %v1784
      %v1788 = vlaneseq
      %v1789 = vshrl.u32 %v1788, 7
      %v1790 = vsub.s32 0, %v1789
      %v1791 = vrot.slane %v1765, %v1790
      %v1793 = vadd.f32 %v1786, %v1791
      %v1794 = vadd.f32 %v737, %v740
      %v1795 = vadd.f32 %v738, %v741
      %v1796 = vadd.f32 %v1793, %v739
      %v1797 = vld [vmem:[%s8] sm:$0xff]
      %v1798 = vld [vmem:[%s8 + $0x8] sm:$0xff]
      %v1799 = vld [vmem:[%s8 + $0x10] sm:$0xff]
      %v1800 = vld [vmem:[%s8 + $0x18] sm:$0xff]
      %v1801 = vld [vmem:[%s9] sm:$0x1]
      %v1803 = vlaneseq
      %v1804 = vshrl.u32 %v1803, 7
      %v1805 = vsub.s32 0, %v1804
      %v1806 = vrot.slane %v1801, %v1805
      %v1809 = vsel %vm754, %v1796, 0
      %1811 = vmatprep.subr.mxu0 0.0
      %1812 = vmatpush1.msra.mxu0 0.0
      %1813 = vmatprep.subr.mxu0 0.0
      %1814 = vmatpush1.msra.mxu0 0.0
      %1815 = vmatprep.subr.mxu0 0.0
      %1816 = vmatpush1.msra.mxu0 0.0
      %1817 = vmatprep.subr.mxu0 0.0
      %1818 = vmatpush1.msra.mxu0 0.0
      %1819 = vmatprep.subr.mxu0 0.0
      %1820 = vmatpush1.msra.mxu0 0.0
      %1821 = vmatprep.subr.mxu0 0.0
      %1822 = vmatpush1.msra.mxu0 0.0
      %1823 = vmatprep.subr.mxu0 0.0
      %1824 = vmatpush1.msra.mxu0 0.0
      %1825 = vmatprep.subr.mxu0 0.0
      %1826 = vmatpush1.msra.mxu0 0.0
      %1827 = vmatprep.subr.mxu0 0.0
      %1828 = vmatpush1.msra.mxu0 0.0
      %1829 = vmatprep.subr.mxu0 0.0
      %1830 = vmatpush1.msra.mxu0 0.0
      %1831 = vmatprep.subr.mxu0 0.0
      %1832 = vmatpush1.msra.mxu0 0.0
      %1833 = vmatprep.subr.mxu0 0.0
      %1834 = vmatpush1.msra.mxu0 0.0
      %1835 = vmatprep.subr.mxu0 0.0
      %1836 = vmatpush1.msra.mxu0 %v1800
      %1837 = vmatprep.subr.mxu0 0.0
      %1838 = vmatpush1.msra.mxu0 %v1799
      %1839 = vmatprep.subr.mxu0 0.0
      %1840 = vmatpush1.msra.mxu0 %v1798
      %1841 = vmatprep.subr.mxu0 0.0
      %1842 = vmatpush1.msra.mxu0 %v1797
      %1843 = vmatprep.subr.mxu0 0.0
      %1844 = vmatpush2.msra.mxu0 0.0
      %1845 = vmatprep.subr.mxu0 0.0
      %1846 = vmatpush2.msra.mxu0 0.0
      %1847 = vmatprep.subr.mxu0 0.0
      %1848 = vmatpush2.msra.mxu0 0.0
      %1849 = vmatprep.subr.mxu0 0.0
      %1850 = vmatpush2.msra.mxu0 0.0
      %1851 = vmatprep.subr.mxu0 0.0
      %1852 = vmatpush2.msra.mxu0 0.0
      %1853 = vmatprep.subr.mxu0 0.0
      %1854 = vmatpush2.msra.mxu0 0.0
      %1855 = vmatprep.subr.mxu0 0.0
      %1856 = vmatpush2.msra.mxu0 0.0
      %1857 = vmatprep.subr.mxu0 0.0
      %1858 = vmatpush2.msra.mxu0 0.0
      %1859 = vmatprep.subr.mxu0 0.0
      %1860 = vmatpush2.msra.mxu0 0.0
      %1861 = vmatprep.subr.mxu0 0.0
      %1862 = vmatpush2.msra.mxu0 0.0
      %1863 = vmatprep.subr.mxu0 0.0
      %1864 = vmatpush2.msra.mxu0 0.0
      %1865 = vmatprep.subr.mxu0 0.0
      %1866 = vmatpush2.msra.mxu0 0.0
      %1867 = vmatprep.subr.mxu0 0.0
      %1868 = vmatpush2.msra.mxu0 0.0
      %1869 = vmatprep.subr.mxu0 0.0
      %1870 = vmatpush2.msra.mxu0 0.0
      %1871 = vmatprep.subr.mxu0 0.0
      %1872 = vmatpush2.msra.mxu0 0.0
      %1873 = vmatprep.subr.mxu0 0.0
      %1874 = vmatpush2.msra.mxu0 0.0
      %1875 = vmatprep.mubr.f32.mxu0 0.0
      %1876 = vmatmul.mubr.f32.gmra.mxu0 %v1809
      %v1877 = vpop.f32.mrf.mxu0
      %v1878 = vadd.f32 %v1806, %v1877
      %v1879 = vpop.f32.mrf.mxu0
      %1880 = vdwg.mxu0
      %1885 = vrot.lane.b32.xlu0 %v1797, 96
      %v1886 = vpop.permute.xlu0 %1885
      %1887 = vrot.lane.b32.xlu0 %v1798, 96
      %v1888 = vpop.permute.xlu0 %1887
      %1889 = vrot.lane.b32.xlu0 %v1799, 96
      %v1890 = vpop.permute.xlu0 %1889
      %1891 = vrot.lane.b32.xlu0 %v1800, 96
      %v1892 = vpop.permute.xlu0 %1891
      %1897 = vrot.lane.b32.xlu0 %v1806, 96
      %v1898 = vpop.permute.xlu0 %1897
      %v1901 = vsel %vm754, %v1794, 0
      %v1904 = vsel %vm754, %v1795, 0
      %1906 = vmatprep.subr.mxu0 0.0
      %1907 = vmatpush1.msra.mxu0 0.0
      %1908 = vmatprep.subr.mxu0 0.0
      %1909 = vmatpush1.msra.mxu0 0.0
      %1910 = vmatprep.subr.mxu0 0.0
      %1911 = vmatpush1.msra.mxu0 0.0
      %1912 = vmatprep.subr.mxu0 0.0
      %1913 = vmatpush1.msra.mxu0 0.0
      %1914 = vmatprep.subr.mxu0 0.0
      %1915 = vmatpush1.msra.mxu0 0.0
      %1916 = vmatprep.subr.mxu0 0.0
      %1917 = vmatpush1.msra.mxu0 0.0
      %1918 = vmatprep.subr.mxu0 0.0
      %1919 = vmatpush1.msra.mxu0 0.0
      %1920 = vmatprep.subr.mxu0 0.0
      %1921 = vmatpush1.msra.mxu0 0.0
      %1922 = vmatprep.subr.mxu0 0.0
      %1923 = vmatpush1.msra.mxu0 0.0
      %1924 = vmatprep.subr.mxu0 0.0
      %1925 = vmatpush1.msra.mxu0 0.0
      %1926 = vmatprep.subr.mxu0 0.0
      %1927 = vmatpush1.msra.mxu0 0.0
      %1928 = vmatprep.subr.mxu0 0.0
      %1929 = vmatpush1.msra.mxu0 0.0
      %1930 = vmatprep.subr.mxu0 0.0
      %1931 = vmatpush1.msra.mxu0 %v1892
      %1932 = vmatprep.subr.mxu0 0.0
      %1933 = vmatpush1.msra.mxu0 %v1890
      %1934 = vmatprep.subr.mxu0 0.0
      %1935 = vmatpush1.msra.mxu0 %v1888
      %1936 = vmatprep.subr.mxu0 0.0
      %1937 = vmatpush1.msra.mxu0 %v1886
      %1938 = vmatprep.subr.mxu0 0.0
      %1939 = vmatpush2.msra.mxu0 0.0
      %1940 = vmatprep.subr.mxu0 0.0
      %1941 = vmatpush2.msra.mxu0 0.0
      %1942 = vmatprep.subr.mxu0 0.0
      %1943 = vmatpush2.msra.mxu0 0.0
      %1944 = vmatprep.subr.mxu0 0.0
      %1945 = vmatpush2.msra.mxu0 0.0
      %1946 = vmatprep.subr.mxu0 0.0
      %1947 = vmatpush2.msra.mxu0 0.0
      %1948 = vmatprep.subr.mxu0 0.0
      %1949 = vmatpush2.msra.mxu0 0.0
      %1950 = vmatprep.subr.mxu0 0.0
      %1951 = vmatpush2.msra.mxu0 0.0
      %1952 = vmatprep.subr.mxu0 0.0
      %1953 = vmatpush2.msra.mxu0 0.0
      %1954 = vmatprep.subr.mxu0 0.0
      %1955 = vmatpush2.msra.mxu0 0.0
      %1956 = vmatprep.subr.mxu0 0.0
      %1957 = vmatpush2.msra.mxu0 0.0
      %1958 = vmatprep.subr.mxu0 0.0
      %1959 = vmatpush2.msra.mxu0 0.0
      %1960 = vmatprep.subr.mxu0 0.0
      %1961 = vmatpush2.msra.mxu0 0.0
      %1962 = vmatprep.subr.mxu0 0.0
      %1963 = vmatpush2.msra.mxu0 0.0
      %1964 = vmatprep.subr.mxu0 0.0
      %1965 = vmatpush2.msra.mxu0 0.0
      %1966 = vmatprep.subr.mxu0 0.0
      %1967 = vmatpush2.msra.mxu0 0.0
      %1968 = vmatprep.subr.mxu0 0.0
      %1969 = vmatpush2.msra.mxu0 0.0
      %1970 = vmatprep.mubr.f32.mxu0 0.0
      %1971 = vmatmul.mubr.f32.gmra.mxu0 %v1901
      %v1972 = vpop.f32.mrf.mxu0
      %v1973 = vadd.f32 %v1898, %v1972
      %v1974 = vpop.f32.mrf.mxu0
      %1975 = vmatprep.mubr.f32.mxu0 0.0
      %1976 = vmatmul.mubr.f32.gmra.mxu0 %v1904
      %v1977 = vpop.f32.mrf.mxu0
      %v1978 = vadd.f32 %v1898, %v1977
      %v1979 = vpop.f32.mrf.mxu0
      %1980 = vdwg.mxu0
      %1981 = vrot.lane.b32.xlu0 %v1797, 64
      %v1982 = vpop.permute.xlu0 %1981
      %1983 = vrot.lane.b32.xlu0 %v1798, 64
      %v1984 = vpop.permute.xlu0 %1983
      %1985 = vrot.lane.b32.xlu0 %v1799, 64
      %v1986 = vpop.permute.xlu0 %1985
      %1987 = vrot.lane.b32.xlu0 %v1800, 64
      %v1988 = vpop.permute.xlu0 %1987
      %1993 = vrot.lane.b32.xlu0 %v1806, 64
      %v1994 = vpop.permute.xlu0 %1993
      %v1997 = vsel %vm754, %v737, 0
      %v2000 = vsel %vm754, %v738, 0
      %2002 = vmatprep.subr.mxu0 0.0
      %2003 = vmatpush1.msra.mxu0 0.0
      %2004 = vmatprep.subr.mxu0 0.0
      %2005 = vmatpush1.msra.mxu0 0.0
      %2006 = vmatprep.subr.mxu0 0.0
      %2007 = vmatpush1.msra.mxu0 0.0
      %2008 = vmatprep.subr.mxu0 0.0
      %2009 = vmatpush1.msra.mxu0 0.0
      %2010 = vmatprep.subr.mxu0 0.0
      %2011 = vmatpush1.msra.mxu0 0.0
      %2012 = vmatprep.subr.mxu0 0.0
      %2013 = vmatpush1.msra.mxu0 0.0
      %2014 = vmatprep.subr.mxu0 0.0
      %2015 = vmatpush1.msra.mxu0 0.0
      %2016 = vmatprep.subr.mxu0 0.0
      %2017 = vmatpush1.msra.mxu0 0.0
      %2018 = vmatprep.subr.mxu0 0.0
      %2019 = vmatpush1.msra.mxu0 0.0
      %2020 = vmatprep.subr.mxu0 0.0
      %2021 = vmatpush1.msra.mxu0 0.0
      %2022 = vmatprep.subr.mxu0 0.0
      %2023 = vmatpush1.msra.mxu0 0.0
      %2024 = vmatprep.subr.mxu0 0.0
      %2025 = vmatpush1.msra.mxu0 0.0
      %2026 = vmatprep.subr.mxu0 0.0
      %2027 = vmatpush1.msra.mxu0 %v1988
      %2028 = vmatprep.subr.mxu0 0.0
      %2029 = vmatpush1.msra.mxu0 %v1986
      %2030 = vmatprep.subr.mxu0 0.0
      %2031 = vmatpush1.msra.mxu0 %v1984
      %2032 = vmatprep.subr.mxu0 0.0
      %2033 = vmatpush1.msra.mxu0 %v1982
      %2034 = vmatprep.subr.mxu0 0.0
      %2035 = vmatpush2.msra.mxu0 0.0
      %2036 = vmatprep.subr.mxu0 0.0
      %2037 = vmatpush2.msra.mxu0 0.0
      %2038 = vmatprep.subr.mxu0 0.0
      %2039 = vmatpush2.msra.mxu0 0.0
      %2040 = vmatprep.subr.mxu0 0.0
      %2041 = vmatpush2.msra.mxu0 0.0
      %2042 = vmatprep.subr.mxu0 0.0
      %2043 = vmatpush2.msra.mxu0 0.0
      %2044 = vmatprep.subr.mxu0 0.0
      %2045 = vmatpush2.msra.mxu0 0.0
      %2046 = vmatprep.subr.mxu0 0.0
      %2047 = vmatpush2.msra.mxu0 0.0
      %2048 = vmatprep.subr.mxu0 0.0
      %2049 = vmatpush2.msra.mxu0 0.0
      %2050 = vmatprep.subr.mxu0 0.0
      %2051 = vmatpush2.msra.mxu0 0.0
      %2052 = vmatprep.subr.mxu0 0.0
      %2053 = vmatpush2.msra.mxu0 0.0
      %2054 = vmatprep.subr.mxu0 0.0
      %2055 = vmatpush2.msra.mxu0 0.0
      %2056 = vmatprep.subr.mxu0 0.0
      %2057 = vmatpush2.msra.mxu0 0.0
      %2058 = vmatprep.subr.mxu0 0.0
      %2059 = vmatpush2.msra.mxu0 0.0
      %2060 = vmatprep.subr.mxu0 0.0
      %2061 = vmatpush2.msra.mxu0 0.0
      %2062 = vmatprep.subr.mxu0 0.0
      %2063 = vmatpush2.msra.mxu0 0.0
      %2064 = vmatprep.subr.mxu0 0.0
      %2065 = vmatpush2.msra.mxu0 0.0
      %2066 = vmatprep.mubr.f32.mxu0 0.0
      %2067 = vmatmul.mubr.f32.gmra.mxu0 %v1997
      %v2068 = vpop.f32.mrf.mxu0
      %v2069 = vadd.f32 %v1994, %v2068
      %v2070 = vpop.f32.mrf.mxu0
      %2071 = vmatprep.mubr.f32.mxu0 0.0
      %2072 = vmatmul.mubr.f32.gmra.mxu0 %v2000
      %v2073 = vpop.f32.mrf.mxu0
      %v2074 = vadd.f32 %v1994, %v2073
      %v2075 = vpop.f32.mrf.mxu0
      %2076 = vdwg.mxu0
      %v2078 = vsel %vm1005, %v1878, 0
      %v2081 = vsel %vm1005, %v1973, 0
      %v2084 = vsel %vm1005, %v1978, 0
      %2086 = vmatprep.subr.mxu0 0.0
      %2087 = vmatpush1.xpose.msra.mxu0 0.0
      %2088 = vmatprep.subr.mxu0 0.0
      %2089 = vmatpush1.xpose.msra.mxu0 0.0
      %2090 = vmatprep.subr.mxu0 0.0
      %2091 = vmatpush1.xpose.msra.mxu0 0.0
      %2092 = vmatprep.subr.mxu0 0.0
      %2093 = vmatpush1.xpose.msra.mxu0 0.0
      %2094 = vmatprep.subr.mxu0 0.0
      %2095 = vmatpush1.xpose.msra.mxu0 0.0
      %2096 = vmatprep.subr.mxu0 0.0
      %2097 = vmatpush1.xpose.msra.mxu0 0.0
      %2098 = vmatprep.subr.mxu0 0.0
      %2099 = vmatpush1.xpose.msra.mxu0 0.0
      %2100 = vmatprep.subr.mxu0 0.0
      %2101 = vmatpush1.xpose.msra.mxu0 0.0
      %2102 = vmatprep.subr.mxu0 0.0
      %2103 = vmatpush1.xpose.msra.mxu0 0.0
      %2104 = vmatprep.subr.mxu0 0.0
      %2105 = vmatpush1.xpose.msra.mxu0 0.0
      %2106 = vmatprep.subr.mxu0 0.0
      %2107 = vmatpush1.xpose.msra.mxu0 0.0
      %2108 = vmatprep.subr.mxu0 0.0
      %2109 = vmatpush1.xpose.msra.mxu0 0.0
      %2110 = vmatprep.subr.mxu0 0.0
      %2111 = vmatpush1.xpose.msra.mxu0 0.0
      %2112 = vmatprep.subr.mxu0 0.0
      %2113 = vmatpush1.xpose.msra.mxu0 0.0
      %2114 = vmatprep.subr.mxu0 0.0
      %2115 = vmatpush1.xpose.msra.mxu0 %v2084
      %2116 = vmatprep.subr.mxu0 0.0
      %2117 = vmatpush1.xpose.msra.mxu0 %v2081
      %2118 = vmatprep.subr.mxu0 0.0
      %2119 = vmatpush2.xpose.msra.mxu0 0.0
      %2120 = vmatprep.subr.mxu0 0.0
      %2121 = vmatpush2.xpose.msra.mxu0 0.0
      %2122 = vmatprep.subr.mxu0 0.0
      %2123 = vmatpush2.xpose.msra.mxu0 0.0
      %2124 = vmatprep.subr.mxu0 0.0
      %2125 = vmatpush2.xpose.msra.mxu0 0.0
      %2126 = vmatprep.subr.mxu0 0.0
      %2127 = vmatpush2.xpose.msra.mxu0 0.0
      %2128 = vmatprep.subr.mxu0 0.0
      %2129 = vmatpush2.xpose.msra.mxu0 0.0
      %2130 = vmatprep.subr.mxu0 0.0
      %2131 = vmatpush2.xpose.msra.mxu0 0.0
      %2132 = vmatprep.subr.mxu0 0.0
      %2133 = vmatpush2.xpose.msra.mxu0 0.0
      %2134 = vmatprep.subr.mxu0 0.0
      %2135 = vmatpush2.xpose.msra.mxu0 0.0
      %2136 = vmatprep.subr.mxu0 0.0
      %2137 = vmatpush2.xpose.msra.mxu0 0.0
      %2138 = vmatprep.subr.mxu0 0.0
      %2139 = vmatpush2.xpose.msra.mxu0 0.0
      %2140 = vmatprep.subr.mxu0 0.0
      %2141 = vmatpush2.xpose.msra.mxu0 0.0
      %2142 = vmatprep.subr.mxu0 0.0
      %2143 = vmatpush2.xpose.msra.mxu0 0.0
      %2144 = vmatprep.subr.mxu0 0.0
      %2145 = vmatpush2.xpose.msra.mxu0 0.0
      %2146 = vmatprep.subr.mxu0 0.0
      %2147 = vmatpush2.xpose.msra.mxu0 0.0
      %2148 = vmatprep.subr.mxu0 0.0
      %2149 = vmatpush2.xpose.msra.mxu0 0.0
      %2150 = vmatprep.mubr.f32.mxu0 0.0
      %2151 = vmatmul.mubr.f32.gmra.mxu0 %v2078
      %v2152 = vpop.f32.mrf.mxu0
      %v2153 = vadd.f32 0.0, %v2152
      %v2154 = vpop.f32.mrf.mxu0
      %2155 = vdwg.mxu0
      %v2156 = vsel %vm1675, %v2153, -inf
      %2157 = vmax.xlane.f32.xlu0 %v2156
      %v2158 = vpop.xlane.xlu0 %2157
      %v2159 = vsub.f32 %v2153, %v2158
      %v2160 = vmul.f32 %v2159, 1.442695
      %v2161 = vpow.pop %v2160
      %v2162 = vsel %vm1675, %v2161, 0.0
      %2163 = vadd.xlane.f32.xlu0 %v2162
      %v2164 = vpop.xlane.xlu0 %2163
      %v2165 = vrcp.pop %v2164
      %v2166 = vmul.f32 %v2161, %v2165
      %v2168 = vsel %vm1675, %v2166, 0
      %2170 = vmatprep.subr.mxu0 0.0
      %2171 = vmatpush1.msra.mxu0 0.0
      %2172 = vmatprep.subr.mxu0 0.0
      %2173 = vmatpush1.msra.mxu0 0.0
      %2174 = vmatprep.subr.mxu0 0.0
      %2175 = vmatpush1.msra.mxu0 0.0
      %2176 = vmatprep.subr.mxu0 0.0
      %2177 = vmatpush1.msra.mxu0 0.0
      %2178 = vmatprep.subr.mxu0 0.0
      %2179 = vmatpush1.msra.mxu0 0.0
      %2180 = vmatprep.subr.mxu0 0.0
      %2181 = vmatpush1.msra.mxu0 0.0
      %2182 = vmatprep.subr.mxu0 0.0
      %2183 = vmatpush1.msra.mxu0 0.0
      %2184 = vmatprep.subr.mxu0 0.0
      %2185 = vmatpush1.msra.mxu0 0.0
      %2186 = vmatprep.subr.mxu0 0.0
      %2187 = vmatpush1.msra.mxu0 0.0
      %2188 = vmatprep.subr.mxu0 0.0
      %2189 = vmatpush1.msra.mxu0 0.0
      %2190 = vmatprep.subr.mxu0 0.0
      %2191 = vmatpush1.msra.mxu0 0.0
      %2192 = vmatprep.subr.mxu0 0.0
      %2193 = vmatpush1.msra.mxu0 0.0
      %2194 = vmatprep.subr.mxu0 0.0
      %2195 = vmatpush1.msra.mxu0 0.0
      %2196 = vmatprep.subr.mxu0 0.0
      %2197 = vmatpush1.msra.mxu0 0.0
      %2198 = vmatprep.subr.mxu0 0.0
      %2199 = vmatpush1.msra.mxu0 %v2074
      %2200 = vmatprep.subr.mxu0 0.0
      %2201 = vmatpush1.msra.mxu0 %v2069
      %2202 = vmatprep.subr.mxu0 0.0
      %2203 = vmatpush2.msra.mxu0 0.0
      %2204 = vmatprep.subr.mxu0 0.0
      %2205 = vmatpush2.msra.mxu0 0.0
      %2206 = vmatprep.subr.mxu0 0.0
      %2207 = vmatpush2.msra.mxu0 0.0
      %2208 = vmatprep.subr.mxu0 0.0
      %2209 = vmatpush2.msra.mxu0 0.0
      %2210 = vmatprep.subr.mxu0 0.0
      %2211 = vmatpush2.msra.mxu0 0.0
      %2212 = vmatprep.subr.mxu0 0.0
      %2213 = vmatpush2.msra.mxu0 0.0
      %2214 = vmatprep.subr.mxu0 0.0
      %2215 = vmatpush2.msra.mxu0 0.0
      %2216 = vmatprep.subr.mxu0 0.0
      %2217 = vmatpush2.msra.mxu0 0.0
      %2218 = vmatprep.subr.mxu0 0.0
      %2219 = vmatpush2.msra.mxu0 0.0
      %2220 = vmatprep.subr.mxu0 0.0
      %2221 = vmatpush2.msra.mxu0 0.0
      %2222 = vmatprep.subr.mxu0 0.0
      %2223 = vmatpush2.msra.mxu0 0.0
      %2224 = vmatprep.subr.mxu0 0.0
      %2225 = vmatpush2.msra.mxu0 0.0
      %2226 = vmatprep.subr.mxu0 0.0
      %2227 = vmatpush2.msra.mxu0 0.0
      %2228 = vmatprep.subr.mxu0 0.0
      %2229 = vmatpush2.msra.mxu0 0.0
      %2230 = vmatprep.subr.mxu0 0.0
      %2231 = vmatpush2.msra.mxu0 0.0
      %2232 = vmatprep.subr.mxu0 0.0
      %2233 = vmatpush2.msra.mxu0 0.0
      %2234 = vmatprep.mubr.f32.mxu0 0.0
      %2235 = vmatmul.mubr.f32.gmra.mxu0 %v2168
      %v2236 = vpop.f32.mrf.mxu0
      %v2237 = vadd.f32 0.0, %v2236
      %v2238 = vpop.f32.mrf.mxu0
      %2239 = vdwg.mxu0
      %2240 = vrot.lane.b32.xlu0 %v1878, 120
      %v2241 = vpop.permute.xlu0 %2240
      %2242 = vrot.lane.b32.xlu0 %v1973, 120
      %v2243 = vpop.permute.xlu0 %2242
      %2244 = vrot.lane.b32.xlu0 %v1978, 120
      %v2245 = vpop.permute.xlu0 %2244
      %v2246 = vsel %vm1005, %v2241, 0
      %v2248 = vsel %vm1005, %v2243, 0
      %v2250 = vsel %vm1005, %v2245, 0
      %2252 = vmatprep.subr.mxu0 0.0
      %2253 = vmatpush1.xpose.msra.mxu0 0.0
      %2254 = vmatprep.subr.mxu0 0.0
      %2255 = vmatpush1.xpose.msra.mxu0 0.0
      %2256 = vmatprep.subr.mxu0 0.0
      %2257 = vmatpush1.xpose.msra.mxu0 0.0
      %2258 = vmatprep.subr.mxu0 0.0
      %2259 = vmatpush1.xpose.msra.mxu0 0.0
      %2260 = vmatprep.subr.mxu0 0.0
      %2261 = vmatpush1.xpose.msra.mxu0 0.0
      %2262 = vmatprep.subr.mxu0 0.0
      %2263 = vmatpush1.xpose.msra.mxu0 0.0
      %2264 = vmatprep.subr.mxu0 0.0
      %2265 = vmatpush1.xpose.msra.mxu0 0.0
      %2266 = vmatprep.subr.mxu0 0.0
      %2267 = vmatpush1.xpose.msra.mxu0 0.0
      %2268 = vmatprep.subr.mxu0 0.0
      %2269 = vmatpush1.xpose.msra.mxu0 0.0
      %2270 = vmatprep.subr.mxu0 0.0
      %2271 = vmatpush1.xpose.msra.mxu0 0.0
      %2272 = vmatprep.subr.mxu0 0.0
      %2273 = vmatpush1.xpose.msra.mxu0 0.0
      %2274 = vmatprep.subr.mxu0 0.0
      %2275 = vmatpush1.xpose.msra.mxu0 0.0
      %2276 = vmatprep.subr.mxu0 0.0
      %2277 = vmatpush1.xpose.msra.mxu0 0.0
      %2278 = vmatprep.subr.mxu0 0.0
      %2279 = vmatpush1.xpose.msra.mxu0 0.0
      %2280 = vmatprep.subr.mxu0 0.0
      %2281 = vmatpush1.xpose.msra.mxu0 %v2250
      %2282 = vmatprep.subr.mxu0 0.0
      %2283 = vmatpush1.xpose.msra.mxu0 %v2248
      %2284 = vmatprep.subr.mxu0 0.0
      %2285 = vmatpush2.xpose.msra.mxu0 0.0
      %2286 = vmatprep.subr.mxu0 0.0
      %2287 = vmatpush2.xpose.msra.mxu0 0.0
      %2288 = vmatprep.subr.mxu0 0.0
      %2289 = vmatpush2.xpose.msra.mxu0 0.0
      %2290 = vmatprep.subr.mxu0 0.0
      %2291 = vmatpush2.xpose.msra.mxu0 0.0
      %2292 = vmatprep.subr.mxu0 0.0
      %2293 = vmatpush2.xpose.msra.mxu0 0.0
      %2294 = vmatprep.subr.mxu0 0.0
      %2295 = vmatpush2.xpose.msra.mxu0 0.0
      %2296 = vmatprep.subr.mxu0 0.0
      %2297 = vmatpush2.xpose.msra.mxu0 0.0
      %2298 = vmatprep.subr.mxu0 0.0
      %2299 = vmatpush2.xpose.msra.mxu0 0.0
      %2300 = vmatprep.subr.mxu0 0.0
      %2301 = vmatpush2.xpose.msra.mxu0 0.0
      %2302 = vmatprep.subr.mxu0 0.0
      %2303 = vmatpush2.xpose.msra.mxu0 0.0
      %2304 = vmatprep.subr.mxu0 0.0
      %2305 = vmatpush2.xpose.msra.mxu0 0.0
      %2306 = vmatprep.subr.mxu0 0.0
      %2307 = vmatpush2.xpose.msra.mxu0 0.0
      %2308 = vmatprep.subr.mxu0 0.0
      %2309 = vmatpush2.xpose.msra.mxu0 0.0
      %2310 = vmatprep.subr.mxu0 0.0
      %2311 = vmatpush2.xpose.msra.mxu0 0.0
      %2312 = vmatprep.subr.mxu0 0.0
      %2313 = vmatpush2.xpose.msra.mxu0 0.0
      %2314 = vmatprep.subr.mxu0 0.0
      %2315 = vmatpush2.xpose.msra.mxu0 0.0
      %2316 = vmatprep.mubr.f32.mxu0 0.0
      %2317 = vmatmul.mubr.f32.gmra.mxu0 %v2246
      %v2318 = vpop.f32.mrf.mxu0
      %v2319 = vadd.f32 0.0, %v2318
      %v2320 = vpop.f32.mrf.mxu0
      %2321 = vdwg.mxu0
      %v2322 = vsel %vm1675, %v2319, -inf
      %2323 = vmax.xlane.f32.xlu0 %v2322
      %v2324 = vpop.xlane.xlu0 %2323
      %v2325 = vsub.f32 %v2319, %v2324
      %v2326 = vmul.f32 %v2325, 1.442695
      %v2327 = vpow.pop %v2326
      %v2328 = vsel %vm1675, %v2327, 0.0
      %2329 = vadd.xlane.f32.xlu0 %v2328
      %v2330 = vpop.xlane.xlu0 %2329
      %v2331 = vrcp.pop %v2330
      %v2332 = vmul.f32 %v2327, %v2331
      %2335 = vrot.lane.b32.xlu0 %v2069, 120
      %v2336 = vpop.permute.xlu0 %2335
      %2337 = vrot.lane.b32.xlu0 %v2074, 120
      %v2338 = vpop.permute.xlu0 %2337
      %v2342 = vsel %vm1675, %v2332, 0
      %2344 = vmatprep.subr.mxu0 0.0
      %2345 = vmatpush1.msra.mxu0 0.0
      %2346 = vmatprep.subr.mxu0 0.0
      %2347 = vmatpush1.msra.mxu0 0.0
      %2348 = vmatprep.subr.mxu0 0.0
      %2349 = vmatpush1.msra.mxu0 0.0
      %2350 = vmatprep.subr.mxu0 0.0
      %2351 = vmatpush1.msra.mxu0 0.0
      %2352 = vmatprep.subr.mxu0 0.0
      %2353 = vmatpush1.msra.mxu0 0.0
      %2354 = vmatprep.subr.mxu0 0.0
      %2355 = vmatpush1.msra.mxu0 0.0
      %2356 = vmatprep.subr.mxu0 0.0
      %2357 = vmatpush1.msra.mxu0 0.0
      %2358 = vmatprep.subr.mxu0 0.0
      %2359 = vmatpush1.msra.mxu0 0.0
      %2360 = vmatprep.subr.mxu0 0.0
      %2361 = vmatpush1.msra.mxu0 0.0
      %2362 = vmatprep.subr.mxu0 0.0
      %2363 = vmatpush1.msra.mxu0 0.0
      %2364 = vmatprep.subr.mxu0 0.0
      %2365 = vmatpush1.msra.mxu0 0.0
      %2366 = vmatprep.subr.mxu0 0.0
      %2367 = vmatpush1.msra.mxu0 0.0
      %2368 = vmatprep.subr.mxu0 0.0
      %2369 = vmatpush1.msra.mxu0 0.0
      %2370 = vmatprep.subr.mxu0 0.0
      %2371 = vmatpush1.msra.mxu0 0.0
      %2372 = vmatprep.subr.mxu0 0.0
      %2373 = vmatpush1.msra.mxu0 %v2338
      %2374 = vmatprep.subr.mxu0 0.0
      %2375 = vmatpush1.msra.mxu0 %v2336
      %2376 = vmatprep.subr.mxu0 0.0
      %2377 = vmatpush2.msra.mxu0 0.0
      %2378 = vmatprep.subr.mxu0 0.0
      %2379 = vmatpush2.msra.mxu0 0.0
      %2380 = vmatprep.subr.mxu0 0.0
      %2381 = vmatpush2.msra.mxu0 0.0
      %2382 = vmatprep.subr.mxu0 0.0
      %2383 = vmatpush2.msra.mxu0 0.0
      %2384 = vmatprep.subr.mxu0 0.0
      %2385 = vmatpush2.msra.mxu0 0.0
      %2386 = vmatprep.subr.mxu0 0.0
      %2387 = vmatpush2.msra.mxu0 0.0
      %2388 = vmatprep.subr.mxu0 0.0
      %2389 = vmatpush2.msra.mxu0 0.0
      %2390 = vmatprep.subr.mxu0 0.0
      %2391 = vmatpush2.msra.mxu0 0.0
      %2392 = vmatprep.subr.mxu0 0.0
      %2393 = vmatpush2.msra.mxu0 0.0
      %2394 = vmatprep.subr.mxu0 0.0
      %2395 = vmatpush2.msra.mxu0 0.0
      %2396 = vmatprep.subr.mxu0 0.0
      %2397 = vmatpush2.msra.mxu0 0.0
      %2398 = vmatprep.subr.mxu0 0.0
      %2399 = vmatpush2.msra.mxu0 0.0
      %2400 = vmatprep.subr.mxu0 0.0
      %2401 = vmatpush2.msra.mxu0 0.0
      %2402 = vmatprep.subr.mxu0 0.0
      %2403 = vmatpush2.msra.mxu0 0.0
      %2404 = vmatprep.subr.mxu0 0.0
      %2405 = vmatpush2.msra.mxu0 0.0
      %2406 = vmatprep.subr.mxu0 0.0
      %2407 = vmatpush2.msra.mxu0 0.0
      %2408 = vmatprep.mubr.f32.mxu0 0.0
      %2409 = vmatmul.mubr.f32.gmra.mxu0 %v2342
      %v2410 = vpop.f32.mrf.mxu0
      %v2411 = vadd.f32 0.0, %v2410
      %v2412 = vpop.f32.mrf.mxu0
      %2413 = vdwg.mxu0
      %2414 = vrot.lane.b32.xlu0 %v1878, 112
      %v2415 = vpop.permute.xlu0 %2414
      %2416 = vrot.lane.b32.xlu0 %v1973, 112
      %v2417 = vpop.permute.xlu0 %2416
      %2418 = vrot.lane.b32.xlu0 %v1978, 112
      %v2419 = vpop.permute.xlu0 %2418
      %v2420 = vsel %vm1005, %v2415, 0
      %v2422 = vsel %vm1005, %v2417, 0
      %v2424 = vsel %vm1005, %v2419, 0
      %2426 = vmatprep.subr.mxu0 0.0
      %2427 = vmatpush1.xpose.msra.mxu0 0.0
      %2428 = vmatprep.subr.mxu0 0.0
      %2429 = vmatpush1.xpose.msra.mxu0 0.0
      %2430 = vmatprep.subr.mxu0 0.0
      %2431 = vmatpush1.xpose.msra.mxu0 0.0
      %2432 = vmatprep.subr.mxu0 0.0
      %2433 = vmatpush1.xpose.msra.mxu0 0.0
      %2434 = vmatprep.subr.mxu0 0.0
      %2435 = vmatpush1.xpose.msra.mxu0 0.0
      %2436 = vmatprep.subr.mxu0 0.0
      %2437 = vmatpush1.xpose.msra.mxu0 0.0
      %2438 = vmatprep.subr.mxu0 0.0
      %2439 = vmatpush1.xpose.msra.mxu0 0.0
      %2440 = vmatprep.subr.mxu0 0.0
      %2441 = vmatpush1.xpose.msra.mxu0 0.0
      %2442 = vmatprep.subr.mxu0 0.0
      %2443 = vmatpush1.xpose.msra.mxu0 0.0
      %2444 = vmatprep.subr.mxu0 0.0
      %2445 = vmatpush1.xpose.msra.mxu0 0.0
      %2446 = vmatprep.subr.mxu0 0.0
      %2447 = vmatpush1.xpose.msra.mxu0 0.0
      %2448 = vmatprep.subr.mxu0 0.0
      %2449 = vmatpush1.xpose.msra.mxu0 0.0
      %2450 = vmatprep.subr.mxu0 0.0
      %2451 = vmatpush1.xpose.msra.mxu0 0.0
      %2452 = vmatprep.subr.mxu0 0.0
      %2453 = vmatpush1.xpose.msra.mxu0 0.0
      %2454 = vmatprep.subr.mxu0 0.0
      %2455 = vmatpush1.xpose.msra.mxu0 %v2424
      %2456 = vmatprep.subr.mxu0 0.0
      %2457 = vmatpush1.xpose.msra.mxu0 %v2422
      %2458 = vmatprep.subr.mxu0 0.0
      %2459 = vmatpush2.xpose.msra.mxu0 0.0
      %2460 = vmatprep.subr.mxu0 0.0
      %2461 = vmatpush2.xpose.msra.mxu0 0.0
      %2462 = vmatprep.subr.mxu0 0.0
      %2463 = vmatpush2.xpose.msra.mxu0 0.0
      %2464 = vmatprep.subr.mxu0 0.0
      %2465 = vmatpush2.xpose.msra.mxu0 0.0
      %2466 = vmatprep.subr.mxu0 0.0
      %2467 = vmatpush2.xpose.msra.mxu0 0.0
      %2468 = vmatprep.subr.mxu0 0.0
      %2469 = vmatpush2.xpose.msra.mxu0 0.0
      %2470 = vmatprep.subr.mxu0 0.0
      %2471 = vmatpush2.xpose.msra.mxu0 0.0
      %2472 = vmatprep.subr.mxu0 0.0
      %2473 = vmatpush2.xpose.msra.mxu0 0.0
      %2474 = vmatprep.subr.mxu0 0.0
      %2475 = vmatpush2.xpose.msra.mxu0 0.0
      %2476 = vmatprep.subr.mxu0 0.0
      %2477 = vmatpush2.xpose.msra.mxu0 0.0
      %2478 = vmatprep.subr.mxu0 0.0
      %2479 = vmatpush2.xpose.msra.mxu0 0.0
      %2480 = vmatprep.subr.mxu0 0.0
      %2481 = vmatpush2.xpose.msra.mxu0 0.0
      %2482 = vmatprep.subr.mxu0 0.0
      %2483 = vmatpush2.xpose.msra.mxu0 0.0
      %2484 = vmatprep.subr.mxu0 0.0
      %2485 = vmatpush2.xpose.msra.mxu0 0.0
      %2486 = vmatprep.subr.mxu0 0.0
      %2487 = vmatpush2.xpose.msra.mxu0 0.0
      %2488 = vmatprep.subr.mxu0 0.0
      %2489 = vmatpush2.xpose.msra.mxu0 0.0
      %2490 = vmatprep.mubr.f32.mxu0 0.0
      %2491 = vmatmul.mubr.f32.gmra.mxu0 %v2420
      %v2492 = vpop.f32.mrf.mxu0
      %v2493 = vadd.f32 0.0, %v2492
      %v2494 = vpop.f32.mrf.mxu0
      %2495 = vdwg.mxu0
      %v2496 = vsel %vm1675, %v2493, -inf
      %2497 = vmax.xlane.f32.xlu0 %v2496
      %v2498 = vpop.xlane.xlu0 %2497
      %v2499 = vsub.f32 %v2493, %v2498
      %v2500 = vmul.f32 %v2499, 1.442695
      %v2501 = vpow.pop %v2500
      %v2502 = vsel %vm1675, %v2501, 0.0
      %2503 = vadd.xlane.f32.xlu0 %v2502
      %v2504 = vpop.xlane.xlu0 %2503
      %v2505 = vrcp.pop %v2504
      %v2506 = vmul.f32 %v2501, %v2505
      %2507 = vrot.lane.b32.xlu0 %v2069, 112
      %v2508 = vpop.permute.xlu0 %2507
      %2509 = vrot.lane.b32.xlu0 %v2074, 112
      %v2510 = vpop.permute.xlu0 %2509
      %v2514 = vsel %vm1675, %v2506, 0
      %2516 = vmatprep.subr.mxu0 0.0
      %2517 = vmatpush1.msra.mxu0 0.0
      %2518 = vmatprep.subr.mxu0 0.0
      %2519 = vmatpush1.msra.mxu0 0.0
      %2520 = vmatprep.subr.mxu0 0.0
      %2521 = vmatpush1.msra.mxu0 0.0
      %2522 = vmatprep.subr.mxu0 0.0
      %2523 = vmatpush1.msra.mxu0 0.0
      %2524 = vmatprep.subr.mxu0 0.0
      %2525 = vmatpush1.msra.mxu0 0.0
      %2526 = vmatprep.subr.mxu0 0.0
      %2527 = vmatpush1.msra.mxu0 0.0
      %2528 = vmatprep.subr.mxu0 0.0
      %2529 = vmatpush1.msra.mxu0 0.0
      %2530 = vmatprep.subr.mxu0 0.0
      %2531 = vmatpush1.msra.mxu0 0.0
      %2532 = vmatprep.subr.mxu0 0.0
      %2533 = vmatpush1.msra.mxu0 0.0
      %2534 = vmatprep.subr.mxu0 0.0
      %2535 = vmatpush1.msra.mxu0 0.0
      %2536 = vmatprep.subr.mxu0 0.0
      %2537 = vmatpush1.msra.mxu0 0.0
      %2538 = vmatprep.subr.mxu0 0.0
      %2539 = vmatpush1.msra.mxu0 0.0
      %2540 = vmatprep.subr.mxu0 0.0
      %2541 = vmatpush1.msra.mxu0 0.0
      %2542 = vmatprep.subr.mxu0 0.0
      %2543 = vmatpush1.msra.mxu0 0.0
      %2544 = vmatprep.subr.mxu0 0.0
      %2545 = vmatpush1.msra.mxu0 %v2510
      %2546 = vmatprep.subr.mxu0 0.0
      %2547 = vmatpush1.msra.mxu0 %v2508
      %2548 = vmatprep.subr.mxu0 0.0
      %2549 = vmatpush2.msra.mxu0 0.0
      %2550 = vmatprep.subr.mxu0 0.0
      %2551 = vmatpush2.msra.mxu0 0.0
      %2552 = vmatprep.subr.mxu0 0.0
      %2553 = vmatpush2.msra.mxu0 0.0
      %2554 = vmatprep.subr.mxu0 0.0
      %2555 = vmatpush2.msra.mxu0 0.0
      %2556 = vmatprep.subr.mxu0 0.0
      %2557 = vmatpush2.msra.mxu0 0.0
      %2558 = vmatprep.subr.mxu0 0.0
      %2559 = vmatpush2.msra.mxu0 0.0
      %2560 = vmatprep.subr.mxu0 0.0
      %2561 = vmatpush2.msra.mxu0 0.0
      %2562 = vmatprep.subr.mxu0 0.0
      %2563 = vmatpush2.msra.mxu0 0.0
      %2564 = vmatprep.subr.mxu0 0.0
      %2565 = vmatpush2.msra.mxu0 0.0
      %2566 = vmatprep.subr.mxu0 0.0
      %2567 = vmatpush2.msra.mxu0 0.0
      %2568 = vmatprep.subr.mxu0 0.0
      %2569 = vmatpush2.msra.mxu0 0.0
      %2570 = vmatprep.subr.mxu0 0.0
      %2571 = vmatpush2.msra.mxu0 0.0
      %2572 = vmatprep.subr.mxu0 0.0
      %2573 = vmatpush2.msra.mxu0 0.0
      %2574 = vmatprep.subr.mxu0 0.0
      %2575 = vmatpush2.msra.mxu0 0.0
      %2576 = vmatprep.subr.mxu0 0.0
      %2577 = vmatpush2.msra.mxu0 0.0
      %2578 = vmatprep.subr.mxu0 0.0
      %2579 = vmatpush2.msra.mxu0 0.0
      %2580 = vmatprep.mubr.f32.mxu0 0.0
      %2581 = vmatmul.mubr.f32.gmra.mxu0 %v2514
      %v2582 = vpop.f32.mrf.mxu0
      %v2583 = vadd.f32 0.0, %v2582
      %v2584 = vpop.f32.mrf.mxu0
      %2585 = vdwg.mxu0
      %2586 = vrot.lane.b32.xlu0 %v1878, 104
      %v2587 = vpop.permute.xlu0 %2586
      %2588 = vrot.lane.b32.xlu0 %v1973, 104
      %v2589 = vpop.permute.xlu0 %2588
      %2590 = vrot.lane.b32.xlu0 %v1978, 104
      %v2591 = vpop.permute.xlu0 %2590
      %v2592 = vsel %vm1005, %v2587, 0
      %v2594 = vsel %vm1005, %v2589, 0
      %v2596 = vsel %vm1005, %v2591, 0
      %2598 = vmatprep.subr.mxu0 0.0
      %2599 = vmatpush1.xpose.msra.mxu0 0.0
      %2600 = vmatprep.subr.mxu0 0.0
      %2601 = vmatpush1.xpose.msra.mxu0 0.0
      %2602 = vmatprep.subr.mxu0 0.0
      %2603 = vmatpush1.xpose.msra.mxu0 0.0
      %2604 = vmatprep.subr.mxu0 0.0
      %2605 = vmatpush1.xpose.msra.mxu0 0.0
      %2606 = vmatprep.subr.mxu0 0.0
      %2607 = vmatpush1.xpose.msra.mxu0 0.0
      %2608 = vmatprep.subr.mxu0 0.0
      %2609 = vmatpush1.xpose.msra.mxu0 0.0
      %2610 = vmatprep.subr.mxu0 0.0
      %2611 = vmatpush1.xpose.msra.mxu0 0.0
      %2612 = vmatprep.subr.mxu0 0.0
      %2613 = vmatpush1.xpose.msra.mxu0 0.0
      %2614 = vmatprep.subr.mxu0 0.0
      %2615 = vmatpush1.xpose.msra.mxu0 0.0
      %2616 = vmatprep.subr.mxu0 0.0
      %2617 = vmatpush1.xpose.msra.mxu0 0.0
      %2618 = vmatprep.subr.mxu0 0.0
      %2619 = vmatpush1.xpose.msra.mxu0 0.0
      %2620 = vmatprep.subr.mxu0 0.0
      %2621 = vmatpush1.xpose.msra.mxu0 0.0
      %2622 = vmatprep.subr.mxu0 0.0
      %2623 = vmatpush1.xpose.msra.mxu0 0.0
      %2624 = vmatprep.subr.mxu0 0.0
      %2625 = vmatpush1.xpose.msra.mxu0 0.0
      %2626 = vmatprep.subr.mxu0 0.0
      %2627 = vmatpush1.xpose.msra.mxu0 %v2596
      %2628 = vmatprep.subr.mxu0 0.0
      %2629 = vmatpush1.xpose.msra.mxu0 %v2594
      %2630 = vmatprep.subr.mxu0 0.0
      %2631 = vmatpush2.xpose.msra.mxu0 0.0
      %2632 = vmatprep.subr.mxu0 0.0
      %2633 = vmatpush2.xpose.msra.mxu0 0.0
      %2634 = vmatprep.subr.mxu0 0.0
      %2635 = vmatpush2.xpose.msra.mxu0 0.0
      %2636 = vmatprep.subr.mxu0 0.0
      %2637 = vmatpush2.xpose.msra.mxu0 0.0
      %2638 = vmatprep.subr.mxu0 0.0
      %2639 = vmatpush2.xpose.msra.mxu0 0.0
      %2640 = vmatprep.subr.mxu0 0.0
      %2641 = vmatpush2.xpose.msra.mxu0 0.0
      %2642 = vmatprep.subr.mxu0 0.0
      %2643 = vmatpush2.xpose.msra.mxu0 0.0
      %2644 = vmatprep.subr.mxu0 0.0
      %2645 = vmatpush2.xpose.msra.mxu0 0.0
      %2646 = vmatprep.subr.mxu0 0.0
      %2647 = vmatpush2.xpose.msra.mxu0 0.0
      %2648 = vmatprep.subr.mxu0 0.0
      %2649 = vmatpush2.xpose.msra.mxu0 0.0
      %2650 = vmatprep.subr.mxu0 0.0
      %2651 = vmatpush2.xpose.msra.mxu0 0.0
      %2652 = vmatprep.subr.mxu0 0.0
      %2653 = vmatpush2.xpose.msra.mxu0 0.0
      %2654 = vmatprep.subr.mxu0 0.0
      %2655 = vmatpush2.xpose.msra.mxu0 0.0
      %2656 = vmatprep.subr.mxu0 0.0
      %2657 = vmatpush2.xpose.msra.mxu0 0.0
      %2658 = vmatprep.subr.mxu0 0.0
      %2659 = vmatpush2.xpose.msra.mxu0 0.0
      %2660 = vmatprep.subr.mxu0 0.0
      %2661 = vmatpush2.xpose.msra.mxu0 0.0
      %2662 = vmatprep.mubr.f32.mxu0 0.0
      %2663 = vmatmul.mubr.f32.gmra.mxu0 %v2592
      %v2664 = vpop.f32.mrf.mxu0
      %v2665 = vadd.f32 0.0, %v2664
      %v2666 = vpop.f32.mrf.mxu0
      %2667 = vdwg.mxu0
      %v2668 = vsel %vm1675, %v2665, -inf
      %2669 = vmax.xlane.f32.xlu0 %v2668
      %v2670 = vpop.xlane.xlu0 %2669
      %v2671 = vsub.f32 %v2665, %v2670
      %v2672 = vmul.f32 %v2671, 1.442695
      %v2673 = vpow.pop %v2672
      %v2674 = vsel %vm1675, %v2673, 0.0
      %2675 = vadd.xlane.f32.xlu0 %v2674
      %v2676 = vpop.xlane.xlu0 %2675
      %v2677 = vrcp.pop %v2676
      %v2678 = vmul.f32 %v2673, %v2677
      %2679 = vrot.lane.b32.xlu0 %v2069, 104
      %v2680 = vpop.permute.xlu0 %2679
      %2681 = vrot.lane.b32.xlu0 %v2074, 104
      %v2682 = vpop.permute.xlu0 %2681
      %v2686 = vsel %vm1675, %v2678, 0
      %2688 = vmatprep.subr.mxu0 0.0
      %2689 = vmatpush1.msra.mxu0 0.0
      %2690 = vmatprep.subr.mxu0 0.0
      %2691 = vmatpush1.msra.mxu0 0.0
      %2692 = vmatprep.subr.mxu0 0.0
      %2693 = vmatpush1.msra.mxu0 0.0
      %2694 = vmatprep.subr.mxu0 0.0
      %2695 = vmatpush1.msra.mxu0 0.0
      %2696 = vmatprep.subr.mxu0 0.0
      %2697 = vmatpush1.msra.mxu0 0.0
      %2698 = vmatprep.subr.mxu0 0.0
      %2699 = vmatpush1.msra.mxu0 0.0
      %2700 = vmatprep.subr.mxu0 0.0
      %2701 = vmatpush1.msra.mxu0 0.0
      %2702 = vmatprep.subr.mxu0 0.0
      %2703 = vmatpush1.msra.mxu0 0.0
      %2704 = vmatprep.subr.mxu0 0.0
      %2705 = vmatpush1.msra.mxu0 0.0
      %2706 = vmatprep.subr.mxu0 0.0
      %2707 = vmatpush1.msra.mxu0 0.0
      %2708 = vmatprep.subr.mxu0 0.0
      %2709 = vmatpush1.msra.mxu0 0.0
      %2710 = vmatprep.subr.mxu0 0.0
      %2711 = vmatpush1.msra.mxu0 0.0
      %2712 = vmatprep.subr.mxu0 0.0
      %2713 = vmatpush1.msra.mxu0 0.0
      %2714 = vmatprep.subr.mxu0 0.0
      %2715 = vmatpush1.msra.mxu0 0.0
      %2716 = vmatprep.subr.mxu0 0.0
      %2717 = vmatpush1.msra.mxu0 %v2682
      %2718 = vmatprep.subr.mxu0 0.0
      %2719 = vmatpush1.msra.mxu0 %v2680
      %2720 = vmatprep.subr.mxu0 0.0
      %2721 = vmatpush2.msra.mxu0 0.0
      %2722 = vmatprep.subr.mxu0 0.0
      %2723 = vmatpush2.msra.mxu0 0.0
      %2724 = vmatprep.subr.mxu0 0.0
      %2725 = vmatpush2.msra.mxu0 0.0
      %2726 = vmatprep.subr.mxu0 0.0
      %2727 = vmatpush2.msra.mxu0 0.0
      %2728 = vmatprep.subr.mxu0 0.0
      %2729 = vmatpush2.msra.mxu0 0.0
      %2730 = vmatprep.subr.mxu0 0.0
      %2731 = vmatpush2.msra.mxu0 0.0
      %2732 = vmatprep.subr.mxu0 0.0
      %2733 = vmatpush2.msra.mxu0 0.0
      %2734 = vmatprep.subr.mxu0 0.0
      %2735 = vmatpush2.msra.mxu0 0.0
      %2736 = vmatprep.subr.mxu0 0.0
      %2737 = vmatpush2.msra.mxu0 0.0
      %2738 = vmatprep.subr.mxu0 0.0
      %2739 = vmatpush2.msra.mxu0 0.0
      %2740 = vmatprep.subr.mxu0 0.0
      %2741 = vmatpush2.msra.mxu0 0.0
      %2742 = vmatprep.subr.mxu0 0.0
      %2743 = vmatpush2.msra.mxu0 0.0
      %2744 = vmatprep.subr.mxu0 0.0
      %2745 = vmatpush2.msra.mxu0 0.0
      %2746 = vmatprep.subr.mxu0 0.0
      %2747 = vmatpush2.msra.mxu0 0.0
      %2748 = vmatprep.subr.mxu0 0.0
      %2749 = vmatpush2.msra.mxu0 0.0
      %2750 = vmatprep.subr.mxu0 0.0
      %2751 = vmatpush2.msra.mxu0 0.0
      %2752 = vmatprep.mubr.f32.mxu0 0.0
      %2753 = vmatmul.mubr.f32.gmra.mxu0 %v2686
      %v2754 = vpop.f32.mrf.mxu0
      %v2755 = vadd.f32 0.0, %v2754
      %v2756 = vpop.f32.mrf.mxu0
      %2757 = vdwg.mxu0
      %2759 = vrot.lane.b32.xlu0 %v2411, 8
      %v2760 = vpop.permute.xlu0 %2759
      %2763 = vrot.lane.b32.xlu0 %v2583, 16
      %v2764 = vpop.permute.xlu0 %2763
      %2767 = vrot.lane.b32.xlu0 %v2755, 24
      %v2768 = vpop.permute.xlu0 %2767
      %v2770 = vsel %vm1005, %v2237, %v2760
      %v2771 = vsel %vm1675, %v2770, %v2764
      %v2772 = vsel %vm1677, %v2771, %v2768
      %v2773 = vld [vmem:[%s10] sm:$0xff]
      %v2774 = vld [vmem:[%s10 + $0x8] sm:$0xff]
      %v2775 = vld [vmem:[%s10 + $0x10] sm:$0xff]
      %v2776 = vld [vmem:[%s10 + $0x18] sm:$0xff]
      %v2777 = vld [vmem:[%s11] sm:$0x1]
      %v2779 = vlaneseq
      %v2780 = vshrl.u32 %v2779, 7
      %v2781 = vsub.s32 0, %v2780
      %v2782 = vrot.slane %v2777, %v2781
      %v2785 = vsel %vm754, %v2772, 0
      %2787 = vmatprep.subr.mxu0 0.0
      %2788 = vmatpush1.msra.mxu0 0.0
      %2789 = vmatprep.subr.mxu0 0.0
      %2790 = vmatpush1.msra.mxu0 0.0
      %2791 = vmatprep.subr.mxu0 0.0
      %2792 = vmatpush1.msra.mxu0 0.0
      %2793 = vmatprep.subr.mxu0 0.0
      %2794 = vmatpush1.msra.mxu0 0.0
      %2795 = vmatprep.subr.mxu0 0.0
      %2796 = vmatpush1.msra.mxu0 0.0
      %2797 = vmatprep.subr.mxu0 0.0
      %2798 = vmatpush1.msra.mxu0 0.0
      %2799 = vmatprep.subr.mxu0 0.0
      %2800 = vmatpush1.msra.mxu0 0.0
      %2801 = vmatprep.subr.mxu0 0.0
      %2802 = vmatpush1.msra.mxu0 0.0
      %2803 = vmatprep.subr.mxu0 0.0
      %2804 = vmatpush1.msra.mxu0 0.0
      %2805 = vmatprep.subr.mxu0 0.0
      %2806 = vmatpush1.msra.mxu0 0.0
      %2807 = vmatprep.subr.mxu0 0.0
      %2808 = vmatpush1.msra.mxu0 0.0
      %2809 = vmatprep.subr.mxu0 0.0
      %2810 = vmatpush1.msra.mxu0 0.0
      %2811 = vmatprep.subr.mxu0 0.0
      %2812 = vmatpush1.msra.mxu0 %v2776
      %2813 = vmatprep.subr.mxu0 0.0
      %2814 = vmatpush1.msra.mxu0 %v2775
      %2815 = vmatprep.subr.mxu0 0.0
      %2816 = vmatpush1.msra.mxu0 %v2774
      %2817 = vmatprep.subr.mxu0 0.0
      %2818 = vmatpush1.msra.mxu0 %v2773
      %2819 = vmatprep.subr.mxu0 0.0
      %2820 = vmatpush2.msra.mxu0 0.0
      %2821 = vmatprep.subr.mxu0 0.0
      %2822 = vmatpush2.msra.mxu0 0.0
      %2823 = vmatprep.subr.mxu0 0.0
      %2824 = vmatpush2.msra.mxu0 0.0
      %2825 = vmatprep.subr.mxu0 0.0
      %2826 = vmatpush2.msra.mxu0 0.0
      %2827 = vmatprep.subr.mxu0 0.0
      %2828 = vmatpush2.msra.mxu0 0.0
      %2829 = vmatprep.subr.mxu0 0.0
      %2830 = vmatpush2.msra.mxu0 0.0
      %2831 = vmatprep.subr.mxu0 0.0
      %2832 = vmatpush2.msra.mxu0 0.0
      %2833 = vmatprep.subr.mxu0 0.0
      %2834 = vmatpush2.msra.mxu0 0.0
      %2835 = vmatprep.subr.mxu0 0.0
      %2836 = vmatpush2.msra.mxu0 0.0
      %2837 = vmatprep.subr.mxu0 0.0
      %2838 = vmatpush2.msra.mxu0 0.0
      %2839 = vmatprep.subr.mxu0 0.0
      %2840 = vmatpush2.msra.mxu0 0.0
      %2841 = vmatprep.subr.mxu0 0.0
      %2842 = vmatpush2.msra.mxu0 0.0
      %2843 = vmatprep.subr.mxu0 0.0
      %2844 = vmatpush2.msra.mxu0 0.0
      %2845 = vmatprep.subr.mxu0 0.0
      %2846 = vmatpush2.msra.mxu0 0.0
      %2847 = vmatprep.subr.mxu0 0.0
      %2848 = vmatpush2.msra.mxu0 0.0
      %2849 = vmatprep.subr.mxu0 0.0
      %2850 = vmatpush2.msra.mxu0 0.0
      %2851 = vmatprep.mubr.f32.mxu0 0.0
      %2852 = vmatmul.mubr.f32.gmra.mxu0 %v2785
      %v2853 = vpop.f32.mrf.mxu0
      %v2854 = vadd.f32 %v2782, %v2853
      %v2855 = vpop.f32.mrf.mxu0
      %2856 = vdwg.mxu0
      %v2857 = vadd.f32 %v1793, %v2854
      %v2858 = vld [vmem:[%s14] sm:$0x1]
      %v2859 = vld [vmem:[%s15] sm:$0x1]
      %v2860 = vsel %vm754, %v2857, 0.0
      %2861 = vadd.xlane.f32.xlu0 %v2860
      %v2862 = vpop.xlane.xlu0 %2861
      %v2863 = vmul.f32 %v2862, %v1769
      %v2864 = vsub.f32 %v2857, %v2863
      %v2865 = vmul.f32 %v2864, %v2864
      %v2866 = vsel %vm754, %v2865, 0.0
      %2867 = vadd.xlane.f32.xlu0 %v2866
      %v2868 = vpop.xlane.xlu0 %2867
      %v2869 = vmul.f32 %v2868, %v1769
      %v2870 = vadd.f32 %v2869, 1e-05
      %v2871 = vrsqrt.pop %v2870
      %v2872 = vmul.f32 %v2864, %v2871
      %v2874 = vlaneseq
      %v2875 = vshrl.u32 %v2874, 7
      %v2876 = vsub.s32 0, %v2875
      %v2877 = vrot.slane %v2858, %v2876
      %v2879 = vmul.f32 %v2872, %v2877
      %v2881 = vlaneseq
      %v2882 = vshrl.u32 %v2881, 7
      %v2883 = vsub.s32 0, %v2882
      %v2884 = vrot.slane %v2859, %v2883
      %v2886 = vadd.f32 %v2879, %v2884
      %v2887 = vld [vmem:[%s18] sm:$0xff]
      %v2888 = vld [vmem:[%s18 + $0x8] sm:$0xff]
      %v2889 = vld [vmem:[%s18 + $0x10] sm:$0xff]
      %v2890 = vld [vmem:[%s18 + $0x18] sm:$0xff]
      %v2891 = vld [vmem:[%s19] sm:$0x1]
      %v2893 = vlaneseq
      %v2894 = vshrl.u32 %v2893, 7
      %v2895 = vsub.s32 0, %v2894
      %v2896 = vrot.slane %v2891, %v2895
      %v2899 = vsel %vm754, %v2886, 0
      %2901 = vmatprep.subr.mxu0 0.0
      %2902 = vmatpush1.msra.mxu0 0.0
      %2903 = vmatprep.subr.mxu0 0.0
      %2904 = vmatpush1.msra.mxu0 0.0
      %2905 = vmatprep.subr.mxu0 0.0
      %2906 = vmatpush1.msra.mxu0 0.0
      %2907 = vmatprep.subr.mxu0 0.0
      %2908 = vmatpush1.msra.mxu0 0.0
      %2909 = vmatprep.subr.mxu0 0.0
      %2910 = vmatpush1.msra.mxu0 0.0
      %2911 = vmatprep.subr.mxu0 0.0
      %2912 = vmatpush1.msra.mxu0 0.0
      %2913 = vmatprep.subr.mxu0 0.0
      %2914 = vmatpush1.msra.mxu0 0.0
      %2915 = vmatprep.subr.mxu0 0.0
      %2916 = vmatpush1.msra.mxu0 0.0
      %2917 = vmatprep.subr.mxu0 0.0
      %2918 = vmatpush1.msra.mxu0 0.0
      %2919 = vmatprep.subr.mxu0 0.0
      %2920 = vmatpush1.msra.mxu0 0.0
      %2921 = vmatprep.subr.mxu0 0.0
      %2922 = vmatpush1.msra.mxu0 0.0
      %2923 = vmatprep.subr.mxu0 0.0
      %2924 = vmatpush1.msra.mxu0 0.0
      %2925 = vmatprep.subr.mxu0 0.0
      %2926 = vmatpush1.msra.mxu0 %v2890
      %2927 = vmatprep.subr.mxu0 0.0
      %2928 = vmatpush1.msra.mxu0 %v2889
      %2929 = vmatprep.subr.mxu0 0.0
      %2930 = vmatpush1.msra.mxu0 %v2888
      %2931 = vmatprep.subr.mxu0 0.0
      %2932 = vmatpush1.msra.mxu0 %v2887
      %2933 = vmatprep.subr.mxu0 0.0
      %2934 = vmatpush2.msra.mxu0 0.0
      %2935 = vmatprep.subr.mxu0 0.0
      %2936 = vmatpush2.msra.mxu0 0.0
      %2937 = vmatprep.subr.mxu0 0.0
      %2938 = vmatpush2.msra.mxu0 0.0
      %2939 = vmatprep.subr.mxu0 0.0
      %2940 = vmatpush2.msra.mxu0 0.0
      %2941 = vmatprep.subr.mxu0 0.0
      %2942 = vmatpush2.msra.mxu0 0.0
      %2943 = vmatprep.subr.mxu0 0.0
      %2944 = vmatpush2.msra.mxu0 0.0
      %2945 = vmatprep.subr.mxu0 0.0
      %2946 = vmatpush2.msra.mxu0 0.0
      %2947 = vmatprep.subr.mxu0 0.0
      %2948 = vmatpush2.msra.mxu0 0.0
      %2949 = vmatprep.subr.mxu0 0.0
      %2950 = vmatpush2.msra.mxu0 0.0
      %2951 = vmatprep.subr.mxu0 0.0
      %2952 = vmatpush2.msra.mxu0 0.0
      %2953 = vmatprep.subr.mxu0 0.0
      %2954 = vmatpush2.msra.mxu0 0.0
      %2955 = vmatprep.subr.mxu0 0.0
      %2956 = vmatpush2.msra.mxu0 0.0
      %2957 = vmatprep.subr.mxu0 0.0
      %2958 = vmatpush2.msra.mxu0 0.0
      %2959 = vmatprep.subr.mxu0 0.0
      %2960 = vmatpush2.msra.mxu0 0.0
      %2961 = vmatprep.subr.mxu0 0.0
      %2962 = vmatpush2.msra.mxu0 0.0
      %2963 = vmatprep.subr.mxu0 0.0
      %2964 = vmatpush2.msra.mxu0 0.0
      %2965 = vmatprep.mubr.f32.mxu0 0.0
      %2966 = vmatmul.mubr.f32.gmra.mxu0 %v2899
      %v2967 = vpop.f32.mrf.mxu0
      %v2968 = vadd.f32 %v2896, %v2967
      %v2969 = vpop.f32.mrf.mxu0
      %2970 = vdwg.mxu0
      %v2971 = vmax.f32 %v2968, 0.0
      %v2972 = vld [vmem:[%s20] sm:$0xff]
      %v2973 = vld [vmem:[%s20 + $0x8] sm:$0xff]
      %v2974 = vld [vmem:[%s20 + $0x10] sm:$0xff]
      %v2975 = vld [vmem:[%s20 + $0x18] sm:$0xff]
      %v2976 = vld [vmem:[%s20 + $0x20] sm:$0xff]
      %v2977 = vld [vmem:[%s20 + $0x28] sm:$0xff]
      %v2978 = vld [vmem:[%s20 + $0x30] sm:$0xff]
      %v2979 = vld [vmem:[%s20 + $0x38] sm:$0xff]
      %v2980 = vld [vmem:[%s21] sm:$0x1]
      %v2982 = vlaneseq
      %v2983 = vshrl.u32 %v2982, 7
      %v2984 = vsub.s32 0, %v2983
      %v2985 = vrot.slane %v2980, %v2984
      %vm2987 = vcmask 523264
      %v2989 = vsel %vm2987, %v2971, 0
      %2991 = vmatprep.subr.mxu0 0.0
      %2992 = vmatpush1.msra.mxu0 0.0
      %2993 = vmatprep.subr.mxu0 0.0
      %2994 = vmatpush1.msra.mxu0 0.0
      %2995 = vmatprep.subr.mxu0 0.0
      %2996 = vmatpush1.msra.mxu0 0.0
      %2997 = vmatprep.subr.mxu0 0.0
      %2998 = vmatpush1.msra.mxu0 0.0
      %2999 = vmatprep.subr.mxu0 0.0
      %3000 = vmatpush1.msra.mxu0 0.0
      %3001 = vmatprep.subr.mxu0 0.0
      %3002 = vmatpush1.msra.mxu0 0.0
      %3003 = vmatprep.subr.mxu0 0.0
      %3004 = vmatpush1.msra.mxu0 0.0
      %3005 = vmatprep.subr.mxu0 0.0
      %3006 = vmatpush1.msra.mxu0 0.0
      %3007 = vmatprep.subr.mxu0 0.0
      %3008 = vmatpush1.msra.mxu0 %v2979
      %3009 = vmatprep.subr.mxu0 0.0
      %3010 = vmatpush1.msra.mxu0 %v2978
      %3011 = vmatprep.subr.mxu0 0.0
      %3012 = vmatpush1.msra.mxu0 %v2977
      %3013 = vmatprep.subr.mxu0 0.0
      %3014 = vmatpush1.msra.mxu0 %v2976
      %3015 = vmatprep.subr.mxu0 0.0
      %3016 = vmatpush1.msra.mxu0 %v2975
      %3017 = vmatprep.subr.mxu0 0.0
      %3018 = vmatpush1.msra.mxu0 %v2974
      %3019 = vmatprep.subr.mxu0 0.0
      %3020 = vmatpush1.msra.mxu0 %v2973
      %3021 = vmatprep.subr.mxu0 0.0
      %3022 = vmatpush1.msra.mxu0 %v2972
      %3023 = vmatprep.subr.mxu0 0.0
      %3024 = vmatpush2.msra.mxu0 0.0
      %3025 = vmatprep.subr.mxu0 0.0
      %3026 = vmatpush2.msra.mxu0 0.0
      %3027 = vmatprep.subr.mxu0 0.0
      %3028 = vmatpush2.msra.mxu0 0.0
      %3029 = vmatprep.subr.mxu0 0.0
      %3030 = vmatpush2.msra.mxu0 0.0
      %3031 = vmatprep.subr.mxu0 0.0
      %3032 = vmatpush2.msra.mxu0 0.0
      %3033 = vmatprep.subr.mxu0 0.0
      %3034 = vmatpush2.msra.mxu0 0.0
      %3035 = vmatprep.subr.mxu0 0.0
      %3036 = vmatpush2.msra.mxu0 0.0
      %3037 = vmatprep.subr.mxu0 0.0
      %3038 = vmatpush2.msra.mxu0 0.0
      %3039 = vmatprep.subr.mxu0 0.0
      %3040 = vmatpush2.msra.mxu0 0.0
      %3041 = vmatprep.subr.mxu0 0.0
      %3042 = vmatpush2.msra.mxu0 0.0
      %3043 = vmatprep.subr.mxu0 0.0
      %3044 = vmatpush2.msra.mxu0 0.0
      %3045 = vmatprep.subr.mxu0 0.0
      %3046 = vmatpush2.msra.mxu0 0.0
      %3047 = vmatprep.subr.mxu0 0.0
      %3048 = vmatpush2.msra.mxu0 0.0
      %3049 = vmatprep.subr.mxu0 0.0
      %3050 = vmatpush2.msra.mxu0 0.0
      %3051 = vmatprep.subr.mxu0 0.0
      %3052 = vmatpush2.msra.mxu0 0.0
      %3053 = vmatprep.subr.mxu0 0.0
      %3054 = vmatpush2.msra.mxu0 0.0
      %3055 = vmatprep.mubr.f32.mxu0 0.0
      %3056 = vmatmul.mubr.f32.gmra.mxu0 %v2989
      %v3057 = vpop.f32.mrf.mxu0
      %v3058 = vadd.f32 %v2985, %v3057
      %v3059 = vpop.f32.mrf.mxu0
      %3060 = vdwg.mxu0
      %v3061 = vadd.f32 %v2886, %v3058
      %v3062 = vld [vmem:[%s16] sm:$0x1]
      %v3063 = vld [vmem:[%s17] sm:$0x1]
      %v3064 = vsel %vm754, %v3061, 0.0
      %3065 = vadd.xlane.f32.xlu0 %v3064
      %v3066 = vpop.xlane.xlu0 %3065
      %v3067 = vmul.f32 %v3066, %v1769
      %v3068 = vsub.f32 %v3061, %v3067
      %v3069 = vmul.f32 %v3068, %v3068
      %v3070 = vsel %vm754, %v3069, 0.0
      %3071 = vadd.xlane.f32.xlu0 %v3070
      %v3072 = vpop.xlane.xlu0 %3071
      %v3073 = vmul.f32 %v3072, %v1769
      %v3074 = vadd.f32 %v3073, 1e-05
      %v3075 = vrsqrt.pop %v3074
      %v3076 = vmul.f32 %v3068, %v3075
      %v3078 = vlaneseq
      %v3079 = vshrl.u32 %v3078, 7
      %v3080 = vsub.s32 0, %v3079
      %v3081 = vrot.slane %v3062, %v3080
      %v3083 = vmul.f32 %v3076, %v3081
      %v3085 = vlaneseq
      %v3086 = vshrl.u32 %v3085, 7
      %v3087 = vsub.s32 0, %v3086
      %v3088 = vrot.slane %v3063, %v3087
      %v3090 = vadd.f32 %v3083, %v3088
      %3091 = vst.msk [vmem:[%s735] sm:$0xff] %vm754, %v3090
      %p3092 = scmp.lt.s32.totalorder %s33, 1
      %s3093 = scalar_select %p3092, %s33, 1
      %s3094 = smul.addr %s3093, 8
      %s3095 = scalar_lea.vmem %s22, %s3094
      // Predicated region
      $region109: #{transformer_forward.6} parent=107 // pred_check
        %p3096 = pneg %p533
      $region110: #{transformer_forward.6} parent=107 // pred_check_branch
        %3098 = sbr.rel (%p3096) target = $region112
      $region111: #{transformer_forward.6} parent=107 // pred_region
        _
      $region112: #{transformer_forward.6} parent=107 // pred_fallthru
        _
    $region108: #{transformer_forward.6} parent=5 // pred_fallthru
      _
    %p3099 = scmp.le.s32.totalorder 2, %s28
    // Predicated region
    $region113: #{transformer_forward.6} parent=5 // pred_check
      %p3100 = pneg %p3099
    $region114: #{transformer_forward.6} parent=5 // pred_check_branch
      %3102 = sbr.rel (%p3100) target = $region116
    $region115: #{transformer_forward.6} parent=5 // pred_region
      %s3103 = ssub.s32 %s28, 2
      // Predicated region
      $region117: #{transformer_forward.6} parent=115 // pred_check
        %p3104 = pneg %p539
      $region118: #{transformer_forward.6} parent=115 // pred_check_branch
        %3106 = sbr.rel (%p3104) target = $region120
      $region119: #{transformer_forward.6} parent=115 // pred_region
        %p3107 = scmp.lt.s32.totalorder %s34, 1
        %s3108 = scalar_select %p3107, %s34, 1
        %s3109 = smul.addr %s3108, 8
        %s3110 = scalar_lea.vmem %s22, %s3109
      $region120: #{transformer_forward.6} parent=115 // pred_fallthru
        _
    $region116: #{transformer_forward.6} parent=5 // pred_fallthru
      _
  $region6: #{transformer_forward.6} parent=0 // loop_footer
    %s32 = sadd.s32 1, %s28
  $region7: #{transformer_forward.6} parent=0 // loop_footer_branch
    %27 = sbr.rel target = $region3
  $region8: #{transformer_forward.6} parent=0 // loop_exit
    _

</llo_original>
